<compile_context>
chip_gen: v7x
topology: tpu7x:2x2x1
jax: 0.10.0
libtpu: 0.0.40
codegen_flags: <defaults>
</compile_context>

<pallas_src>
import functools

import jax
import jax.numpy as jnp
from jax.experimental import pallas as pl
from jax.experimental.pallas import tpu as pltpu

# ---- synthetic contents of model_config.json (small, deterministic) ----
MODEL_CONFIG = dict(
    embedding_dim=8,
    char_filters=[2, 3],
    char_features=[8, 8],
    linear1_dim=16,
    linear2_dim=16,
    gru_hidden=16,
    gru_bidirectional=True,
    use_dropout=False,          # dropout is identity for inference
    dropout_keep_prob=0.9,
)
VOCAB_LEN = 32


# ============================================================================
# Fused kernel: im2col conv + BN + folded linear12 + biGRU + linear3 + sigmoid
#   xcols : (T*B, K*E) im2col slab, time-major rows (t*B + b)
#   out   : (B, T)
# ============================================================================
def spacing_kernel(xcols_ref, wc_ref, bc_ref, gamma_ref, beta_ref,
                   w12_ref, b12_ref,
                   wihf_ref, bihf_ref, wihb_ref, bihb_ref,
                   whhf_ref, bhhf_ref, whhb_ref, bhhb_ref,
                   w3f_ref, w3b_ref, b3_ref, mask_ref,
                   out_ref,
                   gif_ref, gib_ref, lf_ref, lb_ref,
                   *, T, B, H):
    f32 = jnp.float32

    # --- CharConv as one im2col matmul + BatchNorm1d (biased batch stats) ---
    conv = jnp.dot(xcols_ref[...], wc_ref[...],
                   preferred_element_type=f32) + bc_ref[...]          # (T*B, F)
    mean = jnp.mean(conv, axis=0, keepdims=True)
    var = jnp.mean((conv - mean) ** 2, axis=0, keepdims=True)
    y = (conv - mean) * jax.lax.rsqrt(var + 1e-5) * gamma_ref[...] + beta_ref[...]

    # --- folded linear1 @ linear2 ---
    h2 = jnp.dot(y, w12_ref[...], preferred_element_type=f32) + b12_ref[...]

    # --- GRU input projections hoisted out of the recurrence (1 matmul/dir) ---
    gif_ref[...] = (jnp.dot(h2, wihf_ref[...], preferred_element_type=f32)
                    + bihf_ref[...])                                  # (T*B, 3H)
    gib_ref[...] = (jnp.dot(h2, wihb_ref[...], preferred_element_type=f32)
                    + bihb_ref[...])

    whh_f = whhf_ref[...]
    bhh_f = bhhf_ref[...]
    whh_b = whhb_ref[...]
    bhh_b = bhhb_ref[...]
    w3f = w3f_ref[...]                                                # (1, H)
    w3b = w3b_ref[...]                                                # (1, H)

    def gates(gi, gh, h):
        # PyTorch GRU gate order: r | z | n
        r = jax.nn.sigmoid(gi[:, :H] + gh[:, :H])
        z = jax.nn.sigmoid(gi[:, H:2 * H] + gh[:, H:2 * H])
        n = jnp.tanh(gi[:, 2 * H:] + r * gh[:, 2 * H:])
        return (1.0 - z) * n + z * h

    h_f = jnp.zeros((B, H), f32)
    h_b = jnp.zeros((B, H), f32)

    # Fully unrolled; fwd step i and bwd step T-1-i share an iteration so their
    # independent recurrent matmuls / gate transcendentals can be co-scheduled.
    for i in range(T):
        tf = i
        tb = T - 1 - i
        m_f = mask_ref[tf]                                            # (B, H) f32
        m_b = mask_ref[tb]
        gi_f = gif_ref[tf * B:(tf + 1) * B, :]                        # (B, 3H)
        gi_b = gib_ref[tb * B:(tb + 1) * B, :]
        gh_f = jnp.dot(h_f, whh_f, preferred_element_type=f32) + bhh_f
        gh_b = jnp.dot(h_b, whh_b, preferred_element_type=f32) + bhh_b
        hn_f = gates(gi_f, gh_f, h_f)
        hn_b = gates(gi_b, gh_b, h_b)
        # hidden state frozen past each sequence's length (packed-seq semantics)
        h_f = h_f + m_f * (hn_f - h_f)
        h_b = h_b + m_b * (hn_b - h_b)
        # per-step linear3 contribution (off the recurrence critical path);
        # outputs past length are zero, matching pad_packed_sequence
        lf_ref[:, tf:tf + 1] = jnp.sum((m_f * hn_f) * w3f, axis=-1, keepdims=True)
        lb_ref[:, tb:tb + 1] = jnp.sum((m_b * hn_b) * w3b, axis=-1, keepdims=True)

    # linear3 bias + sigmoid, lane-dense (B, T) store
    out_ref[...] = jax.nn.sigmoid(lf_ref[...] + lb_ref[...] + b3_ref[...])


# ============================================================================
# Wrapper (glue: embedding gather, im2col slab, weight folding, masks)
# ============================================================================
def spacing_forward(x_idx, lengths, params, cfg):
    B, T = x_idx.shape
    E = cfg["embedding_dim"]
    filters = cfg["char_filters"]
    features = cfg["char_features"]
    F = sum(features)
    H = cfg["gru_hidden"]
    f32 = jnp.float32

    # embedding gather (glue)
    emb = params["embedding"][x_idx].astype(f32)                      # (B, T, E)

    # shared max left/right padding, im2col slab with time-major rows (t*B + b)
    max_pl = max((k - 1) // 2 for k in filters)
    max_pr = max((k - 1) - (k - 1) // 2 for k in filters)
    K = max_pl + max_pr + 1
    emb_pad = jnp.pad(emb, ((0, 0), (max_pl, max_pr), (0, 0)))        # (B, T+K-1, E)
    cols = [emb_pad[:, j:j + T, :] for j in range(K)]                 # offset j-max_pl
    xcols = (jnp.concatenate(cols, axis=-1)                           # (B, T, K*E)
             .transpose(1, 0, 2).reshape(T * B, K * E))

    # combined conv weight (K*E, F): block for filter i / tap j at slab block
    # (tap - pad_left_i + max_pl); zero elsewhere
    wc = jnp.zeros((K * E, F), f32)
    col = 0
    for i, k in enumerate(filters):
        pl_i = (k - 1) // 2
        for tap in range(k):
            j = tap - pl_i + max_pl
            wc = wc.at[j * E:(j + 1) * E, col:col + features[i]].set(
                params["conv_w"][i][tap])
        col += features[i]
    bc = jnp.concatenate([params["conv_b"][i] for i in range(len(filters))],
                         axis=-1)                                     # (1, F)

    # fold linear1 @ linear2 offline (no nonlinearity between them)
    w12 = params["w1"] @ params["w2"]                                 # (F, L2)
    b12 = params["b1"] @ params["w2"] + params["b2"]                  # (1, L2)

    w3f = params["w3"][:, :H]                                         # (1, H)
    w3b = params["w3"][:, H:]                                         # (1, H)

    # validity mask, precomputed & pre-broadcast to hidden width (f32 0/1)
    mask = (jnp.arange(T)[:, None, None] < lengths[None, :, None]).astype(f32)
    mask = jnp.broadcast_to(mask, (T, B, H))

    vmem = pl.BlockSpec(memory_space=pltpu.MemorySpace.VMEM)
    inputs = [xcols, wc, bc, params["gamma"], params["beta"], w12, b12,
              params["wih_f"], params["bih_f"], params["wih_b"], params["bih_b"],
              params["whh_f"], params["bhh_f"], params["whh_b"], params["bhh_b"],
              w3f, w3b, params["b3"], mask]

    kernel = functools.partial(spacing_kernel, T=T, B=B, H=H)
    out = pl.pallas_call(
        kernel,
        out_shape=jax.ShapeDtypeStruct((B, T), f32),
        in_specs=[vmem] * len(inputs),
        out_specs=vmem,
        scratch_shapes=[pltpu.VMEM((T * B, 3 * H), f32),    # fwd input proj
                        pltpu.VMEM((T * B, 3 * H), f32),    # bwd input proj
                        pltpu.VMEM((B, T), f32),            # fwd logit contrib
                        pltpu.VMEM((B, T), f32)],           # bwd logit contrib
    )(*inputs)
    # TODO(synk): nn.Dropout skipped (use_dropout=False / identity at inference).
    return out, lengths


# ============================================================================
# Pure-JAX reference (mirrors PyTorch semantics) for a correctness check
# ============================================================================
def reference_forward(x_idx, lengths, params, cfg):
    E = cfg["embedding_dim"]
    filters, features = cfg["char_filters"], cfg["char_features"]
    H = cfg["gru_hidden"]
    emb = params["embedding"][x_idx].astype(jnp.float32)
    B, T, _ = emb.shape

    outs = []
    for i, k in enumerate(filters):
        p_l = (k - 1) // 2
        p_r = (k - 1) - p_l
        xp = jnp.pad(emb, ((0, 0), (p_l, p_r), (0, 0)))
        acc = jnp.zeros((B, T, features[i]), jnp.float32)
        for tap in range(k):
            acc = acc + jnp.einsum("bte,eo->bto", xp[:, tap:tap + T, :],
                                   params["conv_w"][i][tap])
        outs.append(acc + params["conv_b"][i][0])
    c = jnp.concatenate(outs, axis=-1)                                # (B, T, F)

    mean = c.mean(axis=(0, 1))
    var = ((c - mean) ** 2).mean(axis=(0, 1))
    cn = (c - mean) / jnp.sqrt(var + 1e-5) * params["gamma"][0] + params["beta"][0]
    h1 = cn @ params["w1"] + params["b1"][0]
    h2 = h1 @ params["w2"] + params["b2"][0]
    xs = h2.transpose(1, 0, 2)                                        # (T, B, L2)

    def cell(x_t, h, wih, whh, bih, bhh):
        gi = x_t @ wih + bih[0]
        gh = h @ whh + bhh[0]
        r = jax.nn.sigmoid(gi[:, :H] + gh[:, :H])
        z = jax.nn.sigmoid(gi[:, H:2 * H] + gh[:, H:2 * H])
        n = jnp.tanh(gi[:, 2 * H:] + r * gh[:, 2 * H:])
        return (1 - z) * n + z * h

    lens = lengths[:, None]
    hf = jnp.zeros((B, H), jnp.float32)
    outf = []
    for t in range(T):
        hn = cell(xs[t], hf, params["wih_f"], params["whh_f"],
                  params["bih_f"], params["bhh_f"])
        valid = t < lens
        hf = jnp.where(valid, hn, hf)
        outf.append(jnp.where(valid, hn, 0.0))
    hb = jnp.zeros((B, H), jnp.float32)
    outb = [None] * T
    for t in range(T - 1, -1, -1):
        hn = cell(xs[t], hb, params["wih_b"], params["whh_b"],
                  params["bih_b"], params["bhh_b"])
        valid = t < lens
        hb = jnp.where(valid, hn, hb)
        outb[t] = jnp.where(valid, hn, 0.0)
    hcat = jnp.concatenate([jnp.stack(outf), jnp.stack(outb)], axis=-1)  # (T,B,2H)
    logit = jnp.einsum("tbh,oh->tbo", hcat, params["w3"]) + params["b3"][0]
    y = jax.nn.sigmoid(logit)[..., 0]                                 # (T, B)
    return y.T, lengths


# ============================================================================
def make_params(cfg, vocab_len):
    E = cfg["embedding_dim"]
    filters, features = cfg["char_filters"], cfg["char_features"]
    F = sum(features)
    L1, L2, H = cfg["linear1_dim"], cfg["linear2_dim"], cfg["gru_hidden"]

    keys = jax.random.split(jax.random.PRNGKey(0), 24)

    def init(k, shape, scale=0.2):
        return (scale * jax.random.normal(k, shape)).astype(jnp.float32)

    params = dict(
        embedding=init(keys[0], (vocab_len, E), 1.0),
        conv_w=[init(keys[1], (filters[0], E, features[0])),
                init(keys[2], (filters[1], E, features[1]))],
        conv_b=[init(keys[3], (1, features[0])),
                init(keys[4], (1, features[1]))],
        gamma=(1.0 + init(keys[5], (1, F), 0.1)).astype(jnp.float32),
        beta=init(keys[6], (1, F), 0.1),
        w1=init(keys[7], (F, L1)), b1=init(keys[8], (1, L1)),
        w2=init(keys[9], (L1, L2)), b2=init(keys[10], (1, L2)),
        wih_f=init(keys[11], (L2, 3 * H)), whh_f=init(keys[12], (H, 3 * H)),
        bih_f=init(keys[13], (1, 3 * H)), bhh_f=init(keys[14], (1, 3 * H)),
        wih_b=init(keys[15], (L2, 3 * H)), whh_b=init(keys[16], (H, 3 * H)),
        bih_b=init(keys[17], (1, 3 * H)), bhh_b=init(keys[18], (1, 3 * H)),
        w3=init(keys[19], (1, 2 * H)), b3=init(keys[20], (1, 1)),
    )
    return params


if __name__ == "__main__":
    cfg = MODEL_CONFIG
    B, T = 2, 16
    params = make_params(cfg, VOCAB_LEN)

    key = jax.random.PRNGKey(0)
    x_idx = jax.random.randint(key, (B, T), 0, VOCAB_LEN, dtype=jnp.int32)
    lengths = jnp.array([16, 12], dtype=jnp.int32)   # descending (pack_padded req.)

    out, out_len = spacing_forward(x_idx, lengths, params, cfg)
    out = jax.block_until_ready(out)

    ref_out, _ = reference_forward(x_idx, lengths, params, cfg)
    ref_out = jax.block_until_ready(ref_out)

    assert out.shape == (B, T) and out.dtype == jnp.float32
    # Tolerance accounts for default (bf16-pass) MXU precision on both paths
    # plus the mathematically-exact but differently-rounded refactorings
    # (im2col conv, folded linear1@linear2, hoisted GRU input projection).
    assert jnp.allclose(out, ref_out, atol=1e-2, rtol=1e-2), "mismatch vs reference"
    print("KERNEL_OK")
</pallas_src>

<mosaic_0001>
module attributes {stable_mosaic.version = 11 : i64} {
  func.func @spacing_kernel(%arg0: memref<32x24xf32, #tpu.memory_space<vmem>>, %arg1: memref<24x16xf32, #tpu.memory_space<vmem>>, %arg2: memref<1x16xf32, #tpu.memory_space<vmem>>, %arg3: memref<1x16xf32, #tpu.memory_space<vmem>>, %arg4: memref<1x16xf32, #tpu.memory_space<vmem>>, %arg5: memref<16x16xf32, #tpu.memory_space<vmem>>, %arg6: memref<1x16xf32, #tpu.memory_space<vmem>>, %arg7: memref<16x48xf32, #tpu.memory_space<vmem>>, %arg8: memref<1x48xf32, #tpu.memory_space<vmem>>, %arg9: memref<16x48xf32, #tpu.memory_space<vmem>>, %arg10: memref<1x48xf32, #tpu.memory_space<vmem>>, %arg11: memref<16x48xf32, #tpu.memory_space<vmem>>, %arg12: memref<1x48xf32, #tpu.memory_space<vmem>>, %arg13: memref<16x48xf32, #tpu.memory_space<vmem>>, %arg14: memref<1x48xf32, #tpu.memory_space<vmem>>, %arg15: memref<1x16xf32, #tpu.memory_space<vmem>>, %arg16: memref<1x16xf32, #tpu.memory_space<vmem>>, %arg17: memref<1x1xf32, #tpu.memory_space<vmem>>, %arg18: memref<16x2x16xf32, #tpu.memory_space<vmem>>, %arg19: memref<2x16xf32, #tpu.memory_space<vmem>>, %arg20: memref<32x48xf32, #tpu.memory_space<vmem>>, %arg21: memref<32x48xf32, #tpu.memory_space<vmem>>, %arg22: memref<2x16xf32, #tpu.memory_space<vmem>>, %arg23: memref<2x16xf32, #tpu.memory_space<vmem>>) attributes {dimension_semantics = [], scalar_prefetch = 0 : i64, scratch_operands = 4 : i64, tpu.core_type = #tpu.core_type<tc>} {
    %c0 = arith.constant 0 : index
    %c0_0 = arith.constant 0 : index
    %0 = vector.load %arg0[%c0, %c0_0] : memref<32x24xf32, #tpu.memory_space<vmem>>, vector<32x24xf32>
    %c0_1 = arith.constant 0 : index
    %c0_2 = arith.constant 0 : index
    %1 = vector.load %arg1[%c0_1, %c0_2] : memref<24x16xf32, #tpu.memory_space<vmem>>, vector<24x16xf32>
    %cst = arith.constant dense<0.000000e+00> : vector<32x16xf32>
    %2 = tpu.matmul %0, %1, %cst {dimension_numbers = #tpu.dot_dimension_numbers<[1], [0], [0], [1], [0, 0, 1, 1], [], []>} : vector<32x24xf32>, vector<24x16xf32>, vector<32x16xf32> -> vector<32x16xf32>
    %c0_3 = arith.constant 0 : index
    %c0_4 = arith.constant 0 : index
    %3 = vector.load %arg2[%c0_3, %c0_4] : memref<1x16xf32, #tpu.memory_space<vmem>>, vector<1x16xf32>
    %4 = vector.broadcast %3 : vector<1x16xf32> to vector<32x16xf32>
    %5 = arith.addf %2, %4 : vector<32x16xf32>
    %cst_5 = arith.constant dense<0.000000e+00> : vector<16xf32>
    %6 = vector.multi_reduction <add>, %5, %cst_5 [0] : vector<32x16xf32> to vector<16xf32>
    %7 = vector.shape_cast %6 : vector<16xf32> to vector<1x16xf32>
    %cst_6 = arith.constant 3.200000e+01 : f32
    %8 = vector.broadcast %cst_6 : f32 to vector<1x16xf32>
    %9 = arith.divf %7, %8 : vector<1x16xf32>
    %10 = vector.broadcast %9 : vector<1x16xf32> to vector<32x16xf32>
    %11 = arith.subf %5, %10 : vector<32x16xf32>
    %12 = arith.mulf %11, %11 : vector<32x16xf32>
    %cst_7 = arith.constant dense<0.000000e+00> : vector<16xf32>
    %13 = vector.multi_reduction <add>, %12, %cst_7 [0] : vector<32x16xf32> to vector<16xf32>
    %14 = vector.shape_cast %13 : vector<16xf32> to vector<1x16xf32>
    %cst_8 = arith.constant 3.200000e+01 : f32
    %15 = vector.broadcast %cst_8 : f32 to vector<1x16xf32>
    %16 = arith.divf %14, %15 : vector<1x16xf32>
    %17 = vector.broadcast %9 : vector<1x16xf32> to vector<32x16xf32>
    %18 = arith.subf %5, %17 : vector<32x16xf32>
    %cst_9 = arith.constant 9.99999974E-6 : f32
    %19 = vector.broadcast %cst_9 : f32 to vector<1x16xf32>
    %20 = arith.addf %16, %19 : vector<1x16xf32>
    %21 = math.rsqrt %20 : vector<1x16xf32>
    %22 = vector.broadcast %21 : vector<1x16xf32> to vector<32x16xf32>
    %23 = arith.mulf %18, %22 : vector<32x16xf32>
    %c0_10 = arith.constant 0 : index
    %c0_11 = arith.constant 0 : index
    %24 = vector.load %arg3[%c0_10, %c0_11] : memref<1x16xf32, #tpu.memory_space<vmem>>, vector<1x16xf32>
    %25 = vector.broadcast %24 : vector<1x16xf32> to vector<32x16xf32>
    %26 = arith.mulf %23, %25 : vector<32x16xf32>
    %c0_12 = arith.constant 0 : index
    %c0_13 = arith.constant 0 : index
    %27 = vector.load %arg4[%c0_12, %c0_13] : memref<1x16xf32, #tpu.memory_space<vmem>>, vector<1x16xf32>
    %28 = vector.broadcast %27 : vector<1x16xf32> to vector<32x16xf32>
    %29 = arith.addf %26, %28 : vector<32x16xf32>
    %c0_14 = arith.constant 0 : index
    %c0_15 = arith.constant 0 : index
    %30 = vector.load %arg5[%c0_14, %c0_15] : memref<16x16xf32, #tpu.memory_space<vmem>>, vector<16x16xf32>
    %cst_16 = arith.constant dense<0.000000e+00> : vector<32x16xf32>
    %31 = tpu.matmul %29, %30, %cst_16 {dimension_numbers = #tpu.dot_dimension_numbers<[1], [0], [0], [1], [0, 0, 1, 1], [], []>} : vector<32x16xf32>, vector<16x16xf32>, vector<32x16xf32> -> vector<32x16xf32>
    %c0_17 = arith.constant 0 : index
    %c0_18 = arith.constant 0 : index
    %32 = vector.load %arg6[%c0_17, %c0_18] : memref<1x16xf32, #tpu.memory_space<vmem>>, vector<1x16xf32>
    %33 = vector.broadcast %32 : vector<1x16xf32> to vector<32x16xf32>
    %34 = arith.addf %31, %33 : vector<32x16xf32>
    %c0_19 = arith.constant 0 : index
    %c0_20 = arith.constant 0 : index
    %35 = vector.load %arg7[%c0_19, %c0_20] : memref<16x48xf32, #tpu.memory_space<vmem>>, vector<16x48xf32>
    %cst_21 = arith.constant dense<0.000000e+00> : vector<32x48xf32>
    %36 = tpu.matmul %34, %35, %cst_21 {dimension_numbers = #tpu.dot_dimension_numbers<[1], [0], [0], [1], [0, 0, 1, 1], [], []>} : vector<32x16xf32>, vector<16x48xf32>, vector<32x48xf32> -> vector<32x48xf32>
    %c0_22 = arith.constant 0 : index
    %c0_23 = arith.constant 0 : index
    %37 = vector.load %arg8[%c0_22, %c0_23] : memref<1x48xf32, #tpu.memory_space<vmem>>, vector<1x48xf32>
    %38 = vector.broadcast %37 : vector<1x48xf32> to vector<32x48xf32>
    %39 = arith.addf %36, %38 : vector<32x48xf32>
    %c0_24 = arith.constant 0 : index
    %c0_25 = arith.constant 0 : index
    %40 = vector.load %arg20[%c0_24, %c0_25] : memref<32x48xf32, #tpu.memory_space<vmem>>, vector<32x48xf32>
    tpu.vector_store %arg20[%c0_24, %c0_25], %39 {strides = array<i32>} : memref<32x48xf32, #tpu.memory_space<vmem>>, vector<32x48xf32>,
    %c0_26 = arith.constant 0 : index
    %c0_27 = arith.constant 0 : index
    %41 = vector.load %arg9[%c0_26, %c0_27] : memref<16x48xf32, #tpu.memory_space<vmem>>, vector<16x48xf32>
    %cst_28 = arith.constant dense<0.000000e+00> : vector<32x48xf32>
    %42 = tpu.matmul %34, %41, %cst_28 {dimension_numbers = #tpu.dot_dimension_numbers<[1], [0], [0], [1], [0, 0, 1, 1], [], []>} : vector<32x16xf32>, vector<16x48xf32>, vector<32x48xf32> -> vector<32x48xf32>
    %c0_29 = arith.constant 0 : index
    %c0_30 = arith.constant 0 : index
    %43 = vector.load %arg10[%c0_29, %c0_30] : memref<1x48xf32, #tpu.memory_space<vmem>>, vector<1x48xf32>
    %44 = vector.broadcast %43 : vector<1x48xf32> to vector<32x48xf32>
    %45 = arith.addf %42, %44 : vector<32x48xf32>
    %c0_31 = arith.constant 0 : index
    %c0_32 = arith.constant 0 : index
    %46 = vector.load %arg21[%c0_31, %c0_32] : memref<32x48xf32, #tpu.memory_space<vmem>>, vector<32x48xf32>
    tpu.vector_store %arg21[%c0_31, %c0_32], %45 {strides = array<i32>} : memref<32x48xf32, #tpu.memory_space<vmem>>, vector<32x48xf32>,
    %c0_33 = arith.constant 0 : index
    %c0_34 = arith.constant 0 : index
    %47 = vector.load %arg11[%c0_33, %c0_34] : memref<16x48xf32, #tpu.memory_space<vmem>>, vector<16x48xf32>
    %c0_35 = arith.constant 0 : index
    %c0_36 = arith.constant 0 : index
    %48 = vector.load %arg12[%c0_35, %c0_36] : memref<1x48xf32, #tpu.memory_space<vmem>>, vector<1x48xf32>
    %c0_37 = arith.constant 0 : index
    %c0_38 = arith.constant 0 : index
    %49 = vector.load %arg13[%c0_37, %c0_38] : memref<16x48xf32, #tpu.memory_space<vmem>>, vector<16x48xf32>
    %c0_39 = arith.constant 0 : index
    %c0_40 = arith.constant 0 : index
    %50 = vector.load %arg14[%c0_39, %c0_40] : memref<1x48xf32, #tpu.memory_space<vmem>>, vector<1x48xf32>
    %c0_41 = arith.constant 0 : index
    %c0_42 = arith.constant 0 : index
    %51 = vector.load %arg15[%c0_41, %c0_42] : memref<1x16xf32, #tpu.memory_space<vmem>>, vector<1x16xf32>
    %c0_43 = arith.constant 0 : index
    %c0_44 = arith.constant 0 : index
    %52 = vector.load %arg16[%c0_43, %c0_44] : memref<1x16xf32, #tpu.memory_space<vmem>>, vector<1x16xf32>
    %cst_45 = arith.constant 0.000000e+00 : f32
    %53 = vector.broadcast %cst_45 : f32 to vector<2x16xf32>
    %cst_46 = arith.constant 0.000000e+00 : f32
    %54 = vector.broadcast %cst_46 : f32 to vector<2x16xf32>
    %c0_47 = arith.constant 0 : index
    %c0_48 = arith.constant 0 : index
    %c0_49 = arith.constant 0 : index
    %55 = vector.load %arg18[%c0_47, %c0_48, %c0_49] : memref<16x2x16xf32, #tpu.memory_space<vmem>>, vector<1x2x16xf32>
    %56 = vector.shape_cast %55 : vector<1x2x16xf32> to vector<2x16xf32>
    %c15 = arith.constant 15 : index
    %c0_50 = arith.constant 0 : index
    %c0_51 = arith.constant 0 : index
    %57 = vector.load %arg18[%c15, %c0_50, %c0_51] : memref<16x2x16xf32, #tpu.memory_space<vmem>>, vector<1x2x16xf32>
    %58 = vector.shape_cast %57 : vector<1x2x16xf32> to vector<2x16xf32>
    %c0_52 = arith.constant 0 : index
    %c0_53 = arith.constant 0 : index
    %59 = vector.load %arg20[%c0_52, %c0_53] : memref<32x48xf32, #tpu.memory_space<vmem>>, vector<2x48xf32>
    %c30 = arith.constant 30 : index
    %c0_54 = arith.constant 0 : index
    %60 = vector.load %arg21[%c30, %c0_54] : memref<32x48xf32, #tpu.memory_space<vmem>>, vector<2x48xf32>
    %cst_55 = arith.constant dense<0.000000e+00> : vector<2x48xf32>
    %61 = tpu.matmul %53, %47, %cst_55 {dimension_numbers = #tpu.dot_dimension_numbers<[1], [0], [0], [1], [0, 0, 1, 1], [], []>} : vector<2x16xf32>, vector<16x48xf32>, vector<2x48xf32> -> vector<2x48xf32>
    %62 = vector.broadcast %48 : vector<1x48xf32> to vector<2x48xf32>
    %63 = arith.addf %61, %62 : vector<2x48xf32>
    %cst_56 = arith.constant dense<0.000000e+00> : vector<2x48xf32>
    %64 = tpu.matmul %54, %49, %cst_56 {dimension_numbers = #tpu.dot_dimension_numbers<[1], [0], [0], [1], [0, 0, 1, 1], [], []>} : vector<2x16xf32>, vector<16x48xf32>, vector<2x48xf32> -> vector<2x48xf32>
    %65 = vector.broadcast %50 : vector<1x48xf32> to vector<2x48xf32>
    %66 = arith.addf %64, %65 : vector<2x48xf32>
    %67 = vector.extract_strided_slice %59 {offsets = [0, 0], sizes = [2, 16], strides = [1, 1]} : vector<2x48xf32> to vector<2x16xf32>
    %68 = vector.extract_strided_slice %63 {offsets = [0, 0], sizes = [2, 16], strides = [1, 1]} : vector<2x48xf32> to vector<2x16xf32>
    %69 = arith.addf %67, %68 : vector<2x16xf32>
    %70 = arith.negf %69 : vector<2x16xf32>
    %71 = math.exp %70 : vector<2x16xf32>
    %cst_57 = arith.constant 1.000000e+00 : f32
    %72 = vector.broadcast %cst_57 : f32 to vector<2x16xf32>
    %73 = arith.addf %72, %71 : vector<2x16xf32>
    %74 = arith.divf %72, %73 : vector<2x16xf32>
    %75 = vector.extract_strided_slice %59 {offsets = [0, 16], sizes = [2, 16], strides = [1, 1]} : vector<2x48xf32> to vector<2x16xf32>
    %76 = vector.extract_strided_slice %63 {offsets = [0, 16], sizes = [2, 16], strides = [1, 1]} : vector<2x48xf32> to vector<2x16xf32>
    %77 = arith.addf %75, %76 : vector<2x16xf32>
    %78 = arith.negf %77 : vector<2x16xf32>
    %79 = math.exp %78 : vector<2x16xf32>
    %cst_58 = arith.constant 1.000000e+00 : f32
    %80 = vector.broadcast %cst_58 : f32 to vector<2x16xf32>
    %81 = arith.addf %80, %79 : vector<2x16xf32>
    %82 = arith.divf %80, %81 : vector<2x16xf32>
    %83 = vector.extract_strided_slice %59 {offsets = [0, 32], sizes = [2, 16], strides = [1, 1]} : vector<2x48xf32> to vector<2x16xf32>
    %84 = vector.extract_strided_slice %63 {offsets = [0, 32], sizes = [2, 16], strides = [1, 1]} : vector<2x48xf32> to vector<2x16xf32>
    %85 = arith.mulf %74, %84 : vector<2x16xf32>
    %86 = arith.addf %83, %85 : vector<2x16xf32>
    %87 = math.tanh %86 : vector<2x16xf32>
    %cst_59 = arith.constant 1.000000e+00 : f32
    %88 = vector.broadcast %cst_59 : f32 to vector<2x16xf32>
    %89 = arith.subf %88, %82 : vector<2x16xf32>
    %90 = arith.mulf %89, %87 : vector<2x16xf32>
    %91 = arith.mulf %82, %53 : vector<2x16xf32>
    %92 = arith.addf %90, %91 : vector<2x16xf32>
    %93 = vector.extract_strided_slice %60 {offsets = [0, 0], sizes = [2, 16], strides = [1, 1]} : vector<2x48xf32> to vector<2x16xf32>
    %94 = vector.extract_strided_slice %66 {offsets = [0, 0], sizes = [2, 16], strides = [1, 1]} : vector<2x48xf32> to vector<2x16xf32>
    %95 = arith.addf %93, %94 : vector<2x16xf32>
    %96 = arith.negf %95 : vector<2x16xf32>
    %97 = math.exp %96 : vector<2x16xf32>
    %cst_60 = arith.constant 1.000000e+00 : f32
    %98 = vector.broadcast %cst_60 : f32 to vector<2x16xf32>
    %99 = arith.addf %98, %97 : vector<2x16xf32>
    %100 = arith.divf %98, %99 : vector<2x16xf32>
    %101 = vector.extract_strided_slice %60 {offsets = [0, 16], sizes = [2, 16], strides = [1, 1]} : vector<2x48xf32> to vector<2x16xf32>
    %102 = vector.extract_strided_slice %66 {offsets = [0, 16], sizes = [2, 16], strides = [1, 1]} : vector<2x48xf32> to vector<2x16xf32>
    %103 = arith.addf %101, %102 : vector<2x16xf32>
    %104 = arith.negf %103 : vector<2x16xf32>
    %105 = math.exp %104 : vector<2x16xf32>
    %cst_61 = arith.constant 1.000000e+00 : f32
    %106 = vector.broadcast %cst_61 : f32 to vector<2x16xf32>
    %107 = arith.addf %106, %105 : vector<2x16xf32>
    %108 = arith.divf %106, %107 : vector<2x16xf32>
    %109 = vector.extract_strided_slice %60 {offsets = [0, 32], sizes = [2, 16], strides = [1, 1]} : vector<2x48xf32> to vector<2x16xf32>
    %110 = vector.extract_strided_slice %66 {offsets = [0, 32], sizes = [2, 16], strides = [1, 1]} : vector<2x48xf32> to vector<2x16xf32>
    %111 = arith.mulf %100, %110 : vector<2x16xf32>
    %112 = arith.addf %109, %111 : vector<2x16xf32>
    %113 = math.tanh %112 : vector<2x16xf32>
    %cst_62 = arith.constant 1.000000e+00 : f32
    %114 = vector.broadcast %cst_62 : f32 to vector<2x16xf32>
    %115 = arith.subf %114, %108 : vector<2x16xf32>
    %116 = arith.mulf %115, %113 : vector<2x16xf32>
    %117 = arith.mulf %108, %54 : vector<2x16xf32>
    %118 = arith.addf %116, %117 : vector<2x16xf32>
    %119 = arith.subf %92, %53 : vector<2x16xf32>
    %120 = arith.mulf %56, %119 : vector<2x16xf32>
    %121 = arith.addf %53, %120 : vector<2x16xf32>
    %122 = arith.subf %118, %54 : vector<2x16xf32>
    %123 = arith.mulf %58, %122 : vector<2x16xf32>
    %124 = arith.addf %54, %123 : vector<2x16xf32>
    %125 = arith.mulf %56, %92 : vector<2x16xf32>
    %126 = vector.broadcast %51 : vector<1x16xf32> to vector<2x16xf32>
    %127 = arith.mulf %125, %126 : vector<2x16xf32>
    %cst_63 = arith.constant dense<0.000000e+00> : vector<2xf32>
    %128 = vector.multi_reduction <add>, %127, %cst_63 [1] : vector<2x16xf32> to vector<2xf32>
    %129 = vector.shape_cast %128 : vector<2xf32> to vector<2x1xf32>
    %c0_64 = arith.constant 0 : index
    %c0_65 = arith.constant 0 : index
    %130 = vector.load %arg22[%c0_64, %c0_65] : memref<2x16xf32, #tpu.memory_space<vmem>>, vector<2x1xf32>
    tpu.vector_store %arg22[%c0_64, %c0_65], %129 {strides = array<i32>} : memref<2x16xf32, #tpu.memory_space<vmem>>, vector<2x1xf32>,
    %131 = arith.mulf %58, %118 : vector<2x16xf32>
    %132 = vector.broadcast %52 : vector<1x16xf32> to vector<2x16xf32>
    %133 = arith.mulf %131, %132 : vector<2x16xf32>
    %cst_66 = arith.constant dense<0.000000e+00> : vector<2xf32>
    %134 = vector.multi_reduction <add>, %133, %cst_66 [1] : vector<2x16xf32> to vector<2xf32>
    %135 = vector.shape_cast %134 : vector<2xf32> to vector<2x1xf32>
    %c0_67 = arith.constant 0 : index
    %c15_68 = arith.constant 15 : index
    %136 = vector.load %arg23[%c0_67, %c15_68] : memref<2x16xf32, #tpu.memory_space<vmem>>, vector<2x1xf32>
    tpu.vector_store %arg23[%c0_67, %c15_68], %135 {strides = array<i32>} : memref<2x16xf32, #tpu.memory_space<vmem>>, vector<2x1xf32>,
    %c1 = arith.constant 1 : index
    %c0_69 = arith.constant 0 : index
    %c0_70 = arith.constant 0 : index
    %137 = vector.load %arg18[%c1, %c0_69, %c0_70] : memref<16x2x16xf32, #tpu.memory_space<vmem>>, vector<1x2x16xf32>
    %138 = vector.shape_cast %137 : vector<1x2x16xf32> to vector<2x16xf32>
    %c14 = arith.constant 14 : index
    %c0_71 = arith.constant 0 : index
    %c0_72 = arith.constant 0 : index
    %139 = vector.load %arg18[%c14, %c0_71, %c0_72] : memref<16x2x16xf32, #tpu.memory_space<vmem>>, vector<1x2x16xf32>
    %140 = vector.shape_cast %139 : vector<1x2x16xf32> to vector<2x16xf32>
    %c2 = arith.constant 2 : index
    %c0_73 = arith.constant 0 : index
    %141 = vector.load %arg20[%c2, %c0_73] : memref<32x48xf32, #tpu.memory_space<vmem>>, vector<2x48xf32>
    %c28 = arith.constant 28 : index
    %c0_74 = arith.constant 0 : index
    %142 = vector.load %arg21[%c28, %c0_74] : memref<32x48xf32, #tpu.memory_space<vmem>>, vector<2x48xf32>
    %cst_75 = arith.constant dense<0.000000e+00> : vector<2x48xf32>
    %143 = tpu.matmul %121, %47, %cst_75 {dimension_numbers = #tpu.dot_dimension_numbers<[1], [0], [0], [1], [0, 0, 1, 1], [], []>} : vector<2x16xf32>, vector<16x48xf32>, vector<2x48xf32> -> vector<2x48xf32>
    %144 = vector.broadcast %48 : vector<1x48xf32> to vector<2x48xf32>
    %145 = arith.addf %143, %144 : vector<2x48xf32>
    %cst_76 = arith.constant dense<0.000000e+00> : vector<2x48xf32>
    %146 = tpu.matmul %124, %49, %cst_76 {dimension_numbers = #tpu.dot_dimension_numbers<[1], [0], [0], [1], [0, 0, 1, 1], [], []>} : vector<2x16xf32>, vector<16x48xf32>, vector<2x48xf32> -> vector<2x48xf32>
    %147 = vector.broadcast %50 : vector<1x48xf32> to vector<2x48xf32>
    %148 = arith.addf %146, %147 : vector<2x48xf32>
    %149 = vector.extract_strided_slice %141 {offsets = [0, 0], sizes = [2, 16], strides = [1, 1]} : vector<2x48xf32> to vector<2x16xf32>
    %150 = vector.extract_strided_slice %145 {offsets = [0, 0], sizes = [2, 16], strides = [1, 1]} : vector<2x48xf32> to vector<2x16xf32>
    %151 = arith.addf %149, %150 : vector<2x16xf32>
    %152 = arith.negf %151 : vector<2x16xf32>
    %153 = math.exp %152 : vector<2x16xf32>
    %cst_77 = arith.constant 1.000000e+00 : f32
    %154 = vector.broadcast %cst_77 : f32 to vector<2x16xf32>
    %155 = arith.addf %154, %153 : vector<2x16xf32>
    %156 = arith.divf %154, %155 : vector<2x16xf32>
    %157 = vector.extract_strided_slice %141 {offsets = [0, 16], sizes = [2, 16], strides = [1, 1]} : vector<2x48xf32> to vector<2x16xf32>
    %158 = vector.extract_strided_slice %145 {offsets = [0, 16], sizes = [2, 16], strides = [1, 1]} : vector<2x48xf32> to vector<2x16xf32>
    %159 = arith.addf %157, %158 : vector<2x16xf32>
    %160 = arith.negf %159 : vector<2x16xf32>
    %161 = math.exp %160 : vector<2x16xf32>
    %cst_78 = arith.constant 1.000000e+00 : f32
    %162 = vector.broadcast %cst_78 : f32 to vector<2x16xf32>
    %163 = arith.addf %162, %161 : vector<2x16xf32>
    %164 = arith.divf %162, %163 : vector<2x16xf32>
    %165 = vector.extract_strided_slice %141 {offsets = [0, 32], sizes = [2, 16], strides = [1, 1]} : vector<2x48xf32> to vector<2x16xf32>
    %166 = vector.extract_strided_slice %145 {offsets = [0, 32], sizes = [2, 16], strides = [1, 1]} : vector<2x48xf32> to vector<2x16xf32>
    %167 = arith.mulf %156, %166 : vector<2x16xf32>
    %168 = arith.addf %165, %167 : vector<2x16xf32>
    %169 = math.tanh %168 : vector<2x16xf32>
    %cst_79 = arith.constant 1.000000e+00 : f32
    %170 = vector.broadcast %cst_79 : f32 to vector<2x16xf32>
    %171 = arith.subf %170, %164 : vector<2x16xf32>
    %172 = arith.mulf %171, %169 : vector<2x16xf32>
    %173 = arith.mulf %164, %121 : vector<2x16xf32>
    %174 = arith.addf %172, %173 : vector<2x16xf32>
    %175 = vector.extract_strided_slice %142 {offsets = [0, 0], sizes = [2, 16], strides = [1, 1]} : vector<2x48xf32> to vector<2x16xf32>
    %176 = vector.extract_strided_slice %148 {offsets = [0, 0], sizes = [2, 16], strides = [1, 1]} : vector<2x48xf32> to vector<2x16xf32>
    %177 = arith.addf %175, %176 : vector<2x16xf32>
    %178 = arith.negf %177 : vector<2x16xf32>
    %179 = math.exp %178 : vector<2x16xf32>
    %cst_80 = arith.constant 1.000000e+00 : f32
    %180 = vector.broadcast %cst_80 : f32 to vector<2x16xf32>
    %181 = arith.addf %180, %179 : vector<2x16xf32>
    %182 = arith.divf %180, %181 : vector<2x16xf32>
    %183 = vector.extract_strided_slice %142 {offsets = [0, 16], sizes = [2, 16], strides = [1, 1]} : vector<2x48xf32> to vector<2x16xf32>
    %184 = vector.extract_strided_slice %148 {offsets = [0, 16], sizes = [2, 16], strides = [1, 1]} : vector<2x48xf32> to vector<2x16xf32>
    %185 = arith.addf %183, %184 : vector<2x16xf32>
    %186 = arith.negf %185 : vector<2x16xf32>
    %187 = math.exp %186 : vector<2x16xf32>
    %cst_81 = arith.constant 1.000000e+00 : f32
    %188 = vector.broadcast %cst_81 : f32 to vector<2x16xf32>
    %189 = arith.addf %188, %187 : vector<2x16xf32>
    %190 = arith.divf %188, %189 : vector<2x16xf32>
    %191 = vector.extract_strided_slice %142 {offsets = [0, 32], sizes = [2, 16], strides = [1, 1]} : vector<2x48xf32> to vector<2x16xf32>
    %192 = vector.extract_strided_slice %148 {offsets = [0, 32], sizes = [2, 16], strides = [1, 1]} : vector<2x48xf32> to vector<2x16xf32>
    %193 = arith.mulf %182, %192 : vector<2x16xf32>
    %194 = arith.addf %191, %193 : vector<2x16xf32>
    %195 = math.tanh %194 : vector<2x16xf32>
    %cst_82 = arith.constant 1.000000e+00 : f32
    %196 = vector.broadcast %cst_82 : f32 to vector<2x16xf32>
    %197 = arith.subf %196, %190 : vector<2x16xf32>
    %198 = arith.mulf %197, %195 : vector<2x16xf32>
    %199 = arith.mulf %190, %124 : vector<2x16xf32>
    %200 = arith.addf %198, %199 : vector<2x16xf32>
    %201 = arith.subf %174, %121 : vector<2x16xf32>
    %202 = arith.mulf %138, %201 : vector<2x16xf32>
    %203 = arith.addf %121, %202 : vector<2x16xf32>
    %204 = arith.subf %200, %124 : vector<2x16xf32>
    %205 = arith.mulf %140, %204 : vector<2x16xf32>
    %206 = arith.addf %124, %205 : vector<2x16xf32>
    %207 = arith.mulf %138, %174 : vector<2x16xf32>
    %208 = vector.broadcast %51 : vector<1x16xf32> to vector<2x16xf32>
    %209 = arith.mulf %207, %208 : vector<2x16xf32>
    %cst_83 = arith.constant dense<0.000000e+00> : vector<2xf32>
    %210 = vector.multi_reduction <add>, %209, %cst_83 [1] : vector<2x16xf32> to vector<2xf32>
    %211 = vector.shape_cast %210 : vector<2xf32> to vector<2x1xf32>
    %c0_84 = arith.constant 0 : index
    %c1_85 = arith.constant 1 : index
    %212 = vector.load %arg22[%c0_84, %c1_85] : memref<2x16xf32, #tpu.memory_space<vmem>>, vector<2x1xf32>
    tpu.vector_store %arg22[%c0_84, %c1_85], %211 {strides = array<i32>} : memref<2x16xf32, #tpu.memory_space<vmem>>, vector<2x1xf32>,
    %213 = arith.mulf %140, %200 : vector<2x16xf32>
    %214 = vector.broadcast %52 : vector<1x16xf32> to vector<2x16xf32>
    %215 = arith.mulf %213, %214 : vector<2x16xf32>
    %cst_86 = arith.constant dense<0.000000e+00> : vector<2xf32>
    %216 = vector.multi_reduction <add>, %215, %cst_86 [1] : vector<2x16xf32> to vector<2xf32>
    %217 = vector.shape_cast %216 : vector<2xf32> to vector<2x1xf32>
    %c0_87 = arith.constant 0 : index
    %c14_88 = arith.constant 14 : index
    %218 = vector.load %arg23[%c0_87, %c14_88] : memref<2x16xf32, #tpu.memory_space<vmem>>, vector<2x1xf32>
    tpu.vector_store %arg23[%c0_87, %c14_88], %217 {strides = array<i32>} : memref<2x16xf32, #tpu.memory_space<vmem>>, vector<2x1xf32>,
    %c2_89 = arith.constant 2 : index
    %c0_90 = arith.constant 0 : index
    %c0_91 = arith.constant 0 : index
    %219 = vector.load %arg18[%c2_89, %c0_90, %c0_91] : memref<16x2x16xf32, #tpu.memory_space<vmem>>, vector<1x2x16xf32>
    %220 = vector.shape_cast %219 : vector<1x2x16xf32> to vector<2x16xf32>
    %c13 = arith.constant 13 : index
    %c0_92 = arith.constant 0 : index
    %c0_93 = arith.constant 0 : index
    %221 = vector.load %arg18[%c13, %c0_92, %c0_93] : memref<16x2x16xf32, #tpu.memory_space<vmem>>, vector<1x2x16xf32>
    %222 = vector.shape_cast %221 : vector<1x2x16xf32> to vector<2x16xf32>
    %c4 = arith.constant 4 : index
    %c0_94 = arith.constant 0 : index
    %223 = vector.load %arg20[%c4, %c0_94] : memref<32x48xf32, #tpu.memory_space<vmem>>, vector<2x48xf32>
    %c26 = arith.constant 26 : index
    %c0_95 = arith.constant 0 : index
    %224 = vector.load %arg21[%c26, %c0_95] : memref<32x48xf32, #tpu.memory_space<vmem>>, vector<2x48xf32>
    %cst_96 = arith.constant dense<0.000000e+00> : vector<2x48xf32>
    %225 = tpu.matmul %203, %47, %cst_96 {dimension_numbers = #tpu.dot_dimension_numbers<[1], [0], [0], [1], [0, 0, 1, 1], [], []>} : vector<2x16xf32>, vector<16x48xf32>, vector<2x48xf32> -> vector<2x48xf32>
    %226 = vector.broadcast %48 : vector<1x48xf32> to vector<2x48xf32>
    %227 = arith.addf %225, %226 : vector<2x48xf32>
    %cst_97 = arith.constant dense<0.000000e+00> : vector<2x48xf32>
    %228 = tpu.matmul %206, %49, %cst_97 {dimension_numbers = #tpu.dot_dimension_numbers<[1], [0], [0], [1], [0, 0, 1, 1], [], []>} : vector<2x16xf32>, vector<16x48xf32>, vector<2x48xf32> -> vector<2x48xf32>
    %229 = vector.broadcast %50 : vector<1x48xf32> to vector<2x48xf32>
    %230 = arith.addf %228, %229 : vector<2x48xf32>
    %231 = vector.extract_strided_slice %223 {offsets = [0, 0], sizes = [2, 16], strides = [1, 1]} : vector<2x48xf32> to vector<2x16xf32>
    %232 = vector.extract_strided_slice %227 {offsets = [0, 0], sizes = [2, 16], strides = [1, 1]} : vector<2x48xf32> to vector<2x16xf32>
    %233 = arith.addf %231, %232 : vector<2x16xf32>
    %234 = arith.negf %233 : vector<2x16xf32>
    %235 = math.exp %234 : vector<2x16xf32>
    %cst_98 = arith.constant 1.000000e+00 : f32
    %236 = vector.broadcast %cst_98 : f32 to vector<2x16xf32>
    %237 = arith.addf %236, %235 : vector<2x16xf32>
    %238 = arith.divf %236, %237 : vector<2x16xf32>
    %239 = vector.extract_strided_slice %223 {offsets = [0, 16], sizes = [2, 16], strides = [1, 1]} : vector<2x48xf32> to vector<2x16xf32>
    %240 = vector.extract_strided_slice %227 {offsets = [0, 16], sizes = [2, 16], strides = [1, 1]} : vector<2x48xf32> to vector<2x16xf32>
    %241 = arith.addf %239, %240 : vector<2x16xf32>
    %242 = arith.negf %241 : vector<2x16xf32>
    %243 = math.exp %242 : vector<2x16xf32>
    %cst_99 = arith.constant 1.000000e+00 : f32
    %244 = vector.broadcast %cst_99 : f32 to vector<2x16xf32>
    %245 = arith.addf %244, %243 : vector<2x16xf32>
    %246 = arith.divf %244, %245 : vector<2x16xf32>
    %247 = vector.extract_strided_slice %223 {offsets = [0, 32], sizes = [2, 16], strides = [1, 1]} : vector<2x48xf32> to vector<2x16xf32>
    %248 = vector.extract_strided_slice %227 {offsets = [0, 32], sizes = [2, 16], strides = [1, 1]} : vector<2x48xf32> to vector<2x16xf32>
    %249 = arith.mulf %238, %248 : vector<2x16xf32>
    %250 = arith.addf %247, %249 : vector<2x16xf32>
    %251 = math.tanh %250 : vector<2x16xf32>
    %cst_100 = arith.constant 1.000000e+00 : f32
    %252 = vector.broadcast %cst_100 : f32 to vector<2x16xf32>
    %253 = arith.subf %252, %246 : vector<2x16xf32>
    %254 = arith.mulf %253, %251 : vector<2x16xf32>
    %255 = arith.mulf %246, %203 : vector<2x16xf32>
    %256 = arith.addf %254, %255 : vector<2x16xf32>
    %257 = vector.extract_strided_slice %224 {offsets = [0, 0], sizes = [2, 16], strides = [1, 1]} : vector<2x48xf32> to vector<2x16xf32>
    %258 = vector.extract_strided_slice %230 {offsets = [0, 0], sizes = [2, 16], strides = [1, 1]} : vector<2x48xf32> to vector<2x16xf32>
    %259 = arith.addf %257, %258 : vector<2x16xf32>
    %260 = arith.negf %259 : vector<2x16xf32>
    %261 = math.exp %260 : vector<2x16xf32>
    %cst_101 = arith.constant 1.000000e+00 : f32
    %262 = vector.broadcast %cst_101 : f32 to vector<2x16xf32>
    %263 = arith.addf %262, %261 : vector<2x16xf32>
    %264 = arith.divf %262, %263 : vector<2x16xf32>
    %265 = vector.extract_strided_slice %224 {offsets = [0, 16], sizes = [2, 16], strides = [1, 1]} : vector<2x48xf32> to vector<2x16xf32>
    %266 = vector.extract_strided_slice %230 {offsets = [0, 16], sizes = [2, 16], strides = [1, 1]} : vector<2x48xf32> to vector<2x16xf32>
    %267 = arith.addf %265, %266 : vector<2x16xf32>
    %268 = arith.negf %267 : vector<2x16xf32>
    %269 = math.exp %268 : vector<2x16xf32>
    %cst_102 = arith.constant 1.000000e+00 : f32
    %270 = vector.broadcast %cst_102 : f32 to vector<2x16xf32>
    %271 = arith.addf %270, %269 : vector<2x16xf32>
    %272 = arith.divf %270, %271 : vector<2x16xf32>
    %273 = vector.extract_strided_slice %224 {offsets = [0, 32], sizes = [2, 16], strides = [1, 1]} : vector<2x48xf32> to vector<2x16xf32>
    %274 = vector.extract_strided_slice %230 {offsets = [0, 32], sizes = [2, 16], strides = [1, 1]} : vector<2x48xf32> to vector<2x16xf32>
    %275 = arith.mulf %264, %274 : vector<2x16xf32>
    %276 = arith.addf %273, %275 : vector<2x16xf32>
    %277 = math.tanh %276 : vector<2x16xf32>
    %cst_103 = arith.constant 1.000000e+00 : f32
    %278 = vector.broadcast %cst_103 : f32 to vector<2x16xf32>
    %279 = arith.subf %278, %272 : vector<2x16xf32>
    %280 = arith.mulf %279, %277 : vector<2x16xf32>
    %281 = arith.mulf %272, %206 : vector<2x16xf32>
    %282 = arith.addf %280, %281 : vector<2x16xf32>
    %283 = arith.subf %256, %203 : vector<2x16xf32>
    %284 = arith.mulf %220, %283 : vector<2x16xf32>
    %285 = arith.addf %203, %284 : vector<2x16xf32>
    %286 = arith.subf %282, %206 : vector<2x16xf32>
    %287 = arith.mulf %222, %286 : vector<2x16xf32>
    %288 = arith.addf %206, %287 : vector<2x16xf32>
    %289 = arith.mulf %220, %256 : vector<2x16xf32>
    %290 = vector.broadcast %51 : vector<1x16xf32> to vector<2x16xf32>
    %291 = arith.mulf %289, %290 : vector<2x16xf32>
    %cst_104 = arith.constant dense<0.000000e+00> : vector<2xf32>
    %292 = vector.multi_reduction <add>, %291, %cst_104 [1] : vector<2x16xf32> to vector<2xf32>
    %293 = vector.shape_cast %292 : vector<2xf32> to vector<2x1xf32>
    %c0_105 = arith.constant 0 : index
    %c2_106 = arith.constant 2 : index
    %294 = vector.load %arg22[%c0_105, %c2_106] : memref<2x16xf32, #tpu.memory_space<vmem>>, vector<2x1xf32>
    tpu.vector_store %arg22[%c0_105, %c2_106], %293 {strides = array<i32>} : memref<2x16xf32, #tpu.memory_space<vmem>>, vector<2x1xf32>,
    %295 = arith.mulf %222, %282 : vector<2x16xf32>
    %296 = vector.broadcast %52 : vector<1x16xf32> to vector<2x16xf32>
    %297 = arith.mulf %295, %296 : vector<2x16xf32>
    %cst_107 = arith.constant dense<0.000000e+00> : vector<2xf32>
    %298 = vector.multi_reduction <add>, %297, %cst_107 [1] : vector<2x16xf32> to vector<2xf32>
    %299 = vector.shape_cast %298 : vector<2xf32> to vector<2x1xf32>
    %c0_108 = arith.constant 0 : index
    %c13_109 = arith.constant 13 : index
    %300 = vector.load %arg23[%c0_108, %c13_109] : memref<2x16xf32, #tpu.memory_space<vmem>>, vector<2x1xf32>
    tpu.vector_store %arg23[%c0_108, %c13_109], %299 {strides = array<i32>} : memref<2x16xf32, #tpu.memory_space<vmem>>, vector<2x1xf32>,
    %c3 = arith.constant 3 : index
    %c0_110 = arith.constant 0 : index
    %c0_111 = arith.constant 0 : index
    %301 = vector.load %arg18[%c3, %c0_110, %c0_111] : memref<16x2x16xf32, #tpu.memory_space<vmem>>, vector<1x2x16xf32>
    %302 = vector.shape_cast %301 : vector<1x2x16xf32> to vector<2x16xf32>
    %c12 = arith.constant 12 : index
    %c0_112 = arith.constant 0 : index
    %c0_113 = arith.constant 0 : index
    %303 = vector.load %arg18[%c12, %c0_112, %c0_113] : memref<16x2x16xf32, #tpu.memory_space<vmem>>, vector<1x2x16xf32>
    %304 = vector.shape_cast %303 : vector<1x2x16xf32> to vector<2x16xf32>
    %c6 = arith.constant 6 : index
    %c0_114 = arith.constant 0 : index
    %305 = vector.load %arg20[%c6, %c0_114] : memref<32x48xf32, #tpu.memory_space<vmem>>, vector<2x48xf32>
    %c24 = arith.constant 24 : index
    %c0_115 = arith.constant 0 : index
    %306 = vector.load %arg21[%c24, %c0_115] : memref<32x48xf32, #tpu.memory_space<vmem>>, vector<2x48xf32>
    %cst_116 = arith.constant dense<0.000000e+00> : vector<2x48xf32>
    %307 = tpu.matmul %285, %47, %cst_116 {dimension_numbers = #tpu.dot_dimension_numbers<[1], [0], [0], [1], [0, 0, 1, 1], [], []>} : vector<2x16xf32>, vector<16x48xf32>, vector<2x48xf32> -> vector<2x48xf32>
    %308 = vector.broadcast %48 : vector<1x48xf32> to vector<2x48xf32>
    %309 = arith.addf %307, %308 : vector<2x48xf32>
    %cst_117 = arith.constant dense<0.000000e+00> : vector<2x48xf32>
    %310 = tpu.matmul %288, %49, %cst_117 {dimension_numbers = #tpu.dot_dimension_numbers<[1], [0], [0], [1], [0, 0, 1, 1], [], []>} : vector<2x16xf32>, vector<16x48xf32>, vector<2x48xf32> -> vector<2x48xf32>
    %311 = vector.broadcast %50 : vector<1x48xf32> to vector<2x48xf32>
    %312 = arith.addf %310, %311 : vector<2x48xf32>
    %313 = vector.extract_strided_slice %305 {offsets = [0, 0], sizes = [2, 16], strides = [1, 1]} : vector<2x48xf32> to vector<2x16xf32>
    %314 = vector.extract_strided_slice %309 {offsets = [0, 0], sizes = [2, 16], strides = [1, 1]} : vector<2x48xf32> to vector<2x16xf32>
    %315 = arith.addf %313, %314 : vector<2x16xf32>
    %316 = arith.negf %315 : vector<2x16xf32>
    %317 = math.exp %316 : vector<2x16xf32>
    %cst_118 = arith.constant 1.000000e+00 : f32
    %318 = vector.broadcast %cst_118 : f32 to vector<2x16xf32>
    %319 = arith.addf %318, %317 : vector<2x16xf32>
    %320 = arith.divf %318, %319 : vector<2x16xf32>
    %321 = vector.extract_strided_slice %305 {offsets = [0, 16], sizes = [2, 16], strides = [1, 1]} : vector<2x48xf32> to vector<2x16xf32>
    %322 = vector.extract_strided_slice %309 {offsets = [0, 16], sizes = [2, 16], strides = [1, 1]} : vector<2x48xf32> to vector<2x16xf32>
    %323 = arith.addf %321, %322 : vector<2x16xf32>
    %324 = arith.negf %323 : vector<2x16xf32>
    %325 = math.exp %324 : vector<2x16xf32>
    %cst_119 = arith.constant 1.000000e+00 : f32
    %326 = vector.broadcast %cst_119 : f32 to vector<2x16xf32>
    %327 = arith.addf %326, %325 : vector<2x16xf32>
    %328 = arith.divf %326, %327 : vector<2x16xf32>
    %329 = vector.extract_strided_slice %305 {offsets = [0, 32], sizes = [2, 16], strides = [1, 1]} : vector<2x48xf32> to vector<2x16xf32>
    %330 = vector.extract_strided_slice %309 {offsets = [0, 32], sizes = [2, 16], strides = [1, 1]} : vector<2x48xf32> to vector<2x16xf32>
    %331 = arith.mulf %320, %330 : vector<2x16xf32>
    %332 = arith.addf %329, %331 : vector<2x16xf32>
    %333 = math.tanh %332 : vector<2x16xf32>
    %cst_120 = arith.constant 1.000000e+00 : f32
    %334 = vector.broadcast %cst_120 : f32 to vector<2x16xf32>
    %335 = arith.subf %334, %328 : vector<2x16xf32>
    %336 = arith.mulf %335, %333 : vector<2x16xf32>
    %337 = arith.mulf %328, %285 : vector<2x16xf32>
    %338 = arith.addf %336, %337 : vector<2x16xf32>
    %339 = vector.extract_strided_slice %306 {offsets = [0, 0], sizes = [2, 16], strides = [1, 1]} : vector<2x48xf32> to vector<2x16xf32>
    %340 = vector.extract_strided_slice %312 {offsets = [0, 0], sizes = [2, 16], strides = [1, 1]} : vector<2x48xf32> to vector<2x16xf32>
    %341 = arith.addf %339, %340 : vector<2x16xf32>
    %342 = arith.negf %341 : vector<2x16xf32>
    %343 = math.exp %342 : vector<2x16xf32>
    %cst_121 = arith.constant 1.000000e+00 : f32
    %344 = vector.broadcast %cst_121 : f32 to vector<2x16xf32>
    %345 = arith.addf %344, %343 : vector<2x16xf32>
    %346 = arith.divf %344, %345 : vector<2x16xf32>
    %347 = vector.extract_strided_slice %306 {offsets = [0, 16], sizes = [2, 16], strides = [1, 1]} : vector<2x48xf32> to vector<2x16xf32>
    %348 = vector.extract_strided_slice %312 {offsets = [0, 16], sizes = [2, 16], strides = [1, 1]} : vector<2x48xf32> to vector<2x16xf32>
    %349 = arith.addf %347, %348 : vector<2x16xf32>
    %350 = arith.negf %349 : vector<2x16xf32>
    %351 = math.exp %350 : vector<2x16xf32>
    %cst_122 = arith.constant 1.000000e+00 : f32
    %352 = vector.broadcast %cst_122 : f32 to vector<2x16xf32>
    %353 = arith.addf %352, %351 : vector<2x16xf32>
    %354 = arith.divf %352, %353 : vector<2x16xf32>
    %355 = vector.extract_strided_slice %306 {offsets = [0, 32], sizes = [2, 16], strides = [1, 1]} : vector<2x48xf32> to vector<2x16xf32>
    %356 = vector.extract_strided_slice %312 {offsets = [0, 32], sizes = [2, 16], strides = [1, 1]} : vector<2x48xf32> to vector<2x16xf32>
    %357 = arith.mulf %346, %356 : vector<2x16xf32>
    %358 = arith.addf %355, %357 : vector<2x16xf32>
    %359 = math.tanh %358 : vector<2x16xf32>
    %cst_123 = arith.constant 1.000000e+00 : f32
    %360 = vector.broadcast %cst_123 : f32 to vector<2x16xf32>
    %361 = arith.subf %360, %354 : vector<2x16xf32>
    %362 = arith.mulf %361, %359 : vector<2x16xf32>
    %363 = arith.mulf %354, %288 : vector<2x16xf32>
    %364 = arith.addf %362, %363 : vector<2x16xf32>
    %365 = arith.subf %338, %285 : vector<2x16xf32>
    %366 = arith.mulf %302, %365 : vector<2x16xf32>
    %367 = arith.addf %285, %366 : vector<2x16xf32>
    %368 = arith.subf %364, %288 : vector<2x16xf32>
    %369 = arith.mulf %304, %368 : vector<2x16xf32>
    %370 = arith.addf %288, %369 : vector<2x16xf32>
    %371 = arith.mulf %302, %338 : vector<2x16xf32>
    %372 = vector.broadcast %51 : vector<1x16xf32> to vector<2x16xf32>
    %373 = arith.mulf %371, %372 : vector<2x16xf32>
    %cst_124 = arith.constant dense<0.000000e+00> : vector<2xf32>
    %374 = vector.multi_reduction <add>, %373, %cst_124 [1] : vector<2x16xf32> to vector<2xf32>
    %375 = vector.shape_cast %374 : vector<2xf32> to vector<2x1xf32>
    %c0_125 = arith.constant 0 : index
    %c3_126 = arith.constant 3 : index
    %376 = vector.load %arg22[%c0_125, %c3_126] : memref<2x16xf32, #tpu.memory_space<vmem>>, vector<2x1xf32>
    tpu.vector_store %arg22[%c0_125, %c3_126], %375 {strides = array<i32>} : memref<2x16xf32, #tpu.memory_space<vmem>>, vector<2x1xf32>,
    %377 = arith.mulf %304, %364 : vector<2x16xf32>
    %378 = vector.broadcast %52 : vector<1x16xf32> to vector<2x16xf32>
    %379 = arith.mulf %377, %378 : vector<2x16xf32>
    %cst_127 = arith.constant dense<0.000000e+00> : vector<2xf32>
    %380 = vector.multi_reduction <add>, %379, %cst_127 [1] : vector<2x16xf32> to vector<2xf32>
    %381 = vector.shape_cast %380 : vector<2xf32> to vector<2x1xf32>
    %c0_128 = arith.constant 0 : index
    %c12_129 = arith.constant 12 : index
    %382 = vector.load %arg23[%c0_128, %c12_129] : memref<2x16xf32, #tpu.memory_space<vmem>>, vector<2x1xf32>
    tpu.vector_store %arg23[%c0_128, %c12_129], %381 {strides = array<i32>} : memref<2x16xf32, #tpu.memory_space<vmem>>, vector<2x1xf32>,
    %c4_130 = arith.constant 4 : index
    %c0_131 = arith.constant 0 : index
    %c0_132 = arith.constant 0 : index
    %383 = vector.load %arg18[%c4_130, %c0_131, %c0_132] : memref<16x2x16xf32, #tpu.memory_space<vmem>>, vector<1x2x16xf32>
    %384 = vector.shape_cast %383 : vector<1x2x16xf32> to vector<2x16xf32>
    %c11 = arith.constant 11 : index
    %c0_133 = arith.constant 0 : index
    %c0_134 = arith.constant 0 : index
    %385 = vector.load %arg18[%c11, %c0_133, %c0_134] : memref<16x2x16xf32, #tpu.memory_space<vmem>>, vector<1x2x16xf32>
    %386 = vector.shape_cast %385 : vector<1x2x16xf32> to vector<2x16xf32>
    %c8 = arith.constant 8 : index
    %c0_135 = arith.constant 0 : index
    %387 = vector.load %arg20[%c8, %c0_135] : memref<32x48xf32, #tpu.memory_space<vmem>>, vector<2x48xf32>
    %c22 = arith.constant 22 : index
    %c0_136 = arith.constant 0 : index
    %388 = vector.load %arg21[%c22, %c0_136] : memref<32x48xf32, #tpu.memory_space<vmem>>, vector<2x48xf32>
    %cst_137 = arith.constant dense<0.000000e+00> : vector<2x48xf32>
    %389 = tpu.matmul %367, %47, %cst_137 {dimension_numbers = #tpu.dot_dimension_numbers<[1], [0], [0], [1], [0, 0, 1, 1], [], []>} : vector<2x16xf32>, vector<16x48xf32>, vector<2x48xf32> -> vector<2x48xf32>
    %390 = vector.broadcast %48 : vector<1x48xf32> to vector<2x48xf32>
    %391 = arith.addf %389, %390 : vector<2x48xf32>
    %cst_138 = arith.constant dense<0.000000e+00> : vector<2x48xf32>
    %392 = tpu.matmul %370, %49, %cst_138 {dimension_numbers = #tpu.dot_dimension_numbers<[1], [0], [0], [1], [0, 0, 1, 1], [], []>} : vector<2x16xf32>, vector<16x48xf32>, vector<2x48xf32> -> vector<2x48xf32>
    %393 = vector.broadcast %50 : vector<1x48xf32> to vector<2x48xf32>
    %394 = arith.addf %392, %393 : vector<2x48xf32>
    %395 = vector.extract_strided_slice %387 {offsets = [0, 0], sizes = [2, 16], strides = [1, 1]} : vector<2x48xf32> to vector<2x16xf32>
    %396 = vector.extract_strided_slice %391 {offsets = [0, 0], sizes = [2, 16], strides = [1, 1]} : vector<2x48xf32> to vector<2x16xf32>
    %397 = arith.addf %395, %396 : vector<2x16xf32>
    %398 = arith.negf %397 : vector<2x16xf32>
    %399 = math.exp %398 : vector<2x16xf32>
    %cst_139 = arith.constant 1.000000e+00 : f32
    %400 = vector.broadcast %cst_139 : f32 to vector<2x16xf32>
    %401 = arith.addf %400, %399 : vector<2x16xf32>
    %402 = arith.divf %400, %401 : vector<2x16xf32>
    %403 = vector.extract_strided_slice %387 {offsets = [0, 16], sizes = [2, 16], strides = [1, 1]} : vector<2x48xf32> to vector<2x16xf32>
    %404 = vector.extract_strided_slice %391 {offsets = [0, 16], sizes = [2, 16], strides = [1, 1]} : vector<2x48xf32> to vector<2x16xf32>
    %405 = arith.addf %403, %404 : vector<2x16xf32>
    %406 = arith.negf %405 : vector<2x16xf32>
    %407 = math.exp %406 : vector<2x16xf32>
    %cst_140 = arith.constant 1.000000e+00 : f32
    %408 = vector.broadcast %cst_140 : f32 to vector<2x16xf32>
    %409 = arith.addf %408, %407 : vector<2x16xf32>
    %410 = arith.divf %408, %409 : vector<2x16xf32>
    %411 = vector.extract_strided_slice %387 {offsets = [0, 32], sizes = [2, 16], strides = [1, 1]} : vector<2x48xf32> to vector<2x16xf32>
    %412 = vector.extract_strided_slice %391 {offsets = [0, 32], sizes = [2, 16], strides = [1, 1]} : vector<2x48xf32> to vector<2x16xf32>
    %413 = arith.mulf %402, %412 : vector<2x16xf32>
    %414 = arith.addf %411, %413 : vector<2x16xf32>
    %415 = math.tanh %414 : vector<2x16xf32>
    %cst_141 = arith.constant 1.000000e+00 : f32
    %416 = vector.broadcast %cst_141 : f32 to vector<2x16xf32>
    %417 = arith.subf %416, %410 : vector<2x16xf32>
    %418 = arith.mulf %417, %415 : vector<2x16xf32>
    %419 = arith.mulf %410, %367 : vector<2x16xf32>
    %420 = arith.addf %418, %419 : vector<2x16xf32>
    %421 = vector.extract_strided_slice %388 {offsets = [0, 0], sizes = [2, 16], strides = [1, 1]} : vector<2x48xf32> to vector<2x16xf32>
    %422 = vector.extract_strided_slice %394 {offsets = [0, 0], sizes = [2, 16], strides = [1, 1]} : vector<2x48xf32> to vector<2x16xf32>
    %423 = arith.addf %421, %422 : vector<2x16xf32>
    %424 = arith.negf %423 : vector<2x16xf32>
    %425 = math.exp %424 : vector<2x16xf32>
    %cst_142 = arith.constant 1.000000e+00 : f32
    %426 = vector.broadcast %cst_142 : f32 to vector<2x16xf32>
    %427 = arith.addf %426, %425 : vector<2x16xf32>
    %428 = arith.divf %426, %427 : vector<2x16xf32>
    %429 = vector.extract_strided_slice %388 {offsets = [0, 16], sizes = [2, 16], strides = [1, 1]} : vector<2x48xf32> to vector<2x16xf32>
    %430 = vector.extract_strided_slice %394 {offsets = [0, 16], sizes = [2, 16], strides = [1, 1]} : vector<2x48xf32> to vector<2x16xf32>
    %431 = arith.addf %429, %430 : vector<2x16xf32>
    %432 = arith.negf %431 : vector<2x16xf32>
    %433 = math.exp %432 : vector<2x16xf32>
    %cst_143 = arith.constant 1.000000e+00 : f32
    %434 = vector.broadcast %cst_143 : f32 to vector<2x16xf32>
    %435 = arith.addf %434, %433 : vector<2x16xf32>
    %436 = arith.divf %434, %435 : vector<2x16xf32>
    %437 = vector.extract_strided_slice %388 {offsets = [0, 32], sizes = [2, 16], strides = [1, 1]} : vector<2x48xf32> to vector<2x16xf32>
    %438 = vector.extract_strided_slice %394 {offsets = [0, 32], sizes = [2, 16], strides = [1, 1]} : vector<2x48xf32> to vector<2x16xf32>
    %439 = arith.mulf %428, %438 : vector<2x16xf32>
    %440 = arith.addf %437, %439 : vector<2x16xf32>
    %441 = math.tanh %440 : vector<2x16xf32>
    %cst_144 = arith.constant 1.000000e+00 : f32
    %442 = vector.broadcast %cst_144 : f32 to vector<2x16xf32>
    %443 = arith.subf %442, %436 : vector<2x16xf32>
    %444 = arith.mulf %443, %441 : vector<2x16xf32>
    %445 = arith.mulf %436, %370 : vector<2x16xf32>
    %446 = arith.addf %444, %445 : vector<2x16xf32>
    %447 = arith.subf %420, %367 : vector<2x16xf32>
    %448 = arith.mulf %384, %447 : vector<2x16xf32>
    %449 = arith.addf %367, %448 : vector<2x16xf32>
    %450 = arith.subf %446, %370 : vector<2x16xf32>
    %451 = arith.mulf %386, %450 : vector<2x16xf32>
    %452 = arith.addf %370, %451 : vector<2x16xf32>
    %453 = arith.mulf %384, %420 : vector<2x16xf32>
    %454 = vector.broadcast %51 : vector<1x16xf32> to vector<2x16xf32>
    %455 = arith.mulf %453, %454 : vector<2x16xf32>
    %cst_145 = arith.constant dense<0.000000e+00> : vector<2xf32>
    %456 = vector.multi_reduction <add>, %455, %cst_145 [1] : vector<2x16xf32> to vector<2xf32>
    %457 = vector.shape_cast %456 : vector<2xf32> to vector<2x1xf32>
    %c0_146 = arith.constant 0 : index
    %c4_147 = arith.constant 4 : index
    %458 = vector.load %arg22[%c0_146, %c4_147] : memref<2x16xf32, #tpu.memory_space<vmem>>, vector<2x1xf32>
    tpu.vector_store %arg22[%c0_146, %c4_147], %457 {strides = array<i32>} : memref<2x16xf32, #tpu.memory_space<vmem>>, vector<2x1xf32>,
    %459 = arith.mulf %386, %446 : vector<2x16xf32>
    %460 = vector.broadcast %52 : vector<1x16xf32> to vector<2x16xf32>
    %461 = arith.mulf %459, %460 : vector<2x16xf32>
    %cst_148 = arith.constant dense<0.000000e+00> : vector<2xf32>
    %462 = vector.multi_reduction <add>, %461, %cst_148 [1] : vector<2x16xf32> to vector<2xf32>
    %463 = vector.shape_cast %462 : vector<2xf32> to vector<2x1xf32>
    %c0_149 = arith.constant 0 : index
    %c11_150 = arith.constant 11 : index
    %464 = vector.load %arg23[%c0_149, %c11_150] : memref<2x16xf32, #tpu.memory_space<vmem>>, vector<2x1xf32>
    tpu.vector_store %arg23[%c0_149, %c11_150], %463 {strides = array<i32>} : memref<2x16xf32, #tpu.memory_space<vmem>>, vector<2x1xf32>,
    %c5 = arith.constant 5 : index
    %c0_151 = arith.constant 0 : index
    %c0_152 = arith.constant 0 : index
    %465 = vector.load %arg18[%c5, %c0_151, %c0_152] : memref<16x2x16xf32, #tpu.memory_space<vmem>>, vector<1x2x16xf32>
    %466 = vector.shape_cast %465 : vector<1x2x16xf32> to vector<2x16xf32>
    %c10 = arith.constant 10 : index
    %c0_153 = arith.constant 0 : index
    %c0_154 = arith.constant 0 : index
    %467 = vector.load %arg18[%c10, %c0_153, %c0_154] : memref<16x2x16xf32, #tpu.memory_space<vmem>>, vector<1x2x16xf32>
    %468 = vector.shape_cast %467 : vector<1x2x16xf32> to vector<2x16xf32>
    %c10_155 = arith.constant 10 : index
    %c0_156 = arith.constant 0 : index
    %469 = vector.load %arg20[%c10_155, %c0_156] : memref<32x48xf32, #tpu.memory_space<vmem>>, vector<2x48xf32>
    %c20 = arith.constant 20 : index
    %c0_157 = arith.constant 0 : index
    %470 = vector.load %arg21[%c20, %c0_157] : memref<32x48xf32, #tpu.memory_space<vmem>>, vector<2x48xf32>
    %cst_158 = arith.constant dense<0.000000e+00> : vector<2x48xf32>
    %471 = tpu.matmul %449, %47, %cst_158 {dimension_numbers = #tpu.dot_dimension_numbers<[1], [0], [0], [1], [0, 0, 1, 1], [], []>} : vector<2x16xf32>, vector<16x48xf32>, vector<2x48xf32> -> vector<2x48xf32>
    %472 = vector.broadcast %48 : vector<1x48xf32> to vector<2x48xf32>
    %473 = arith.addf %471, %472 : vector<2x48xf32>
    %cst_159 = arith.constant dense<0.000000e+00> : vector<2x48xf32>
    %474 = tpu.matmul %452, %49, %cst_159 {dimension_numbers = #tpu.dot_dimension_numbers<[1], [0], [0], [1], [0, 0, 1, 1], [], []>} : vector<2x16xf32>, vector<16x48xf32>, vector<2x48xf32> -> vector<2x48xf32>
    %475 = vector.broadcast %50 : vector<1x48xf32> to vector<2x48xf32>
    %476 = arith.addf %474, %475 : vector<2x48xf32>
    %477 = vector.extract_strided_slice %469 {offsets = [0, 0], sizes = [2, 16], strides = [1, 1]} : vector<2x48xf32> to vector<2x16xf32>
    %478 = vector.extract_strided_slice %473 {offsets = [0, 0], sizes = [2, 16], strides = [1, 1]} : vector<2x48xf32> to vector<2x16xf32>
    %479 = arith.addf %477, %478 : vector<2x16xf32>
    %480 = arith.negf %479 : vector<2x16xf32>
    %481 = math.exp %480 : vector<2x16xf32>
    %cst_160 = arith.constant 1.000000e+00 : f32
    %482 = vector.broadcast %cst_160 : f32 to vector<2x16xf32>
    %483 = arith.addf %482, %481 : vector<2x16xf32>
    %484 = arith.divf %482, %483 : vector<2x16xf32>
    %485 = vector.extract_strided_slice %469 {offsets = [0, 16], sizes = [2, 16], strides = [1, 1]} : vector<2x48xf32> to vector<2x16xf32>
    %486 = vector.extract_strided_slice %473 {offsets = [0, 16], sizes = [2, 16], strides = [1, 1]} : vector<2x48xf32> to vector<2x16xf32>
    %487 = arith.addf %485, %486 : vector<2x16xf32>
    %488 = arith.negf %487 : vector<2x16xf32>
    %489 = math.exp %488 : vector<2x16xf32>
    %cst_161 = arith.constant 1.000000e+00 : f32
    %490 = vector.broadcast %cst_161 : f32 to vector<2x16xf32>
    %491 = arith.addf %490, %489 : vector<2x16xf32>
    %492 = arith.divf %490, %491 : vector<2x16xf32>
    %493 = vector.extract_strided_slice %469 {offsets = [0, 32], sizes = [2, 16], strides = [1, 1]} : vector<2x48xf32> to vector<2x16xf32>
    %494 = vector.extract_strided_slice %473 {offsets = [0, 32], sizes = [2, 16], strides = [1, 1]} : vector<2x48xf32> to vector<2x16xf32>
    %495 = arith.mulf %484, %494 : vector<2x16xf32>
    %496 = arith.addf %493, %495 : vector<2x16xf32>
    %497 = math.tanh %496 : vector<2x16xf32>
    %cst_162 = arith.constant 1.000000e+00 : f32
    %498 = vector.broadcast %cst_162 : f32 to vector<2x16xf32>
    %499 = arith.subf %498, %492 : vector<2x16xf32>
    %500 = arith.mulf %499, %497 : vector<2x16xf32>
    %501 = arith.mulf %492, %449 : vector<2x16xf32>
    %502 = arith.addf %500, %501 : vector<2x16xf32>
    %503 = vector.extract_strided_slice %470 {offsets = [0, 0], sizes = [2, 16], strides = [1, 1]} : vector<2x48xf32> to vector<2x16xf32>
    %504 = vector.extract_strided_slice %476 {offsets = [0, 0], sizes = [2, 16], strides = [1, 1]} : vector<2x48xf32> to vector<2x16xf32>
    %505 = arith.addf %503, %504 : vector<2x16xf32>
    %506 = arith.negf %505 : vector<2x16xf32>
    %507 = math.exp %506 : vector<2x16xf32>
    %cst_163 = arith.constant 1.000000e+00 : f32
    %508 = vector.broadcast %cst_163 : f32 to vector<2x16xf32>
    %509 = arith.addf %508, %507 : vector<2x16xf32>
    %510 = arith.divf %508, %509 : vector<2x16xf32>
    %511 = vector.extract_strided_slice %470 {offsets = [0, 16], sizes = [2, 16], strides = [1, 1]} : vector<2x48xf32> to vector<2x16xf32>
    %512 = vector.extract_strided_slice %476 {offsets = [0, 16], sizes = [2, 16], strides = [1, 1]} : vector<2x48xf32> to vector<2x16xf32>
    %513 = arith.addf %511, %512 : vector<2x16xf32>
    %514 = arith.negf %513 : vector<2x16xf32>
    %515 = math.exp %514 : vector<2x16xf32>
    %cst_164 = arith.constant 1.000000e+00 : f32
    %516 = vector.broadcast %cst_164 : f32 to vector<2x16xf32>
    %517 = arith.addf %516, %515 : vector<2x16xf32>
    %518 = arith.divf %516, %517 : vector<2x16xf32>
    %519 = vector.extract_strided_slice %470 {offsets = [0, 32], sizes = [2, 16], strides = [1, 1]} : vector<2x48xf32> to vector<2x16xf32>
    %520 = vector.extract_strided_slice %476 {offsets = [0, 32], sizes = [2, 16], strides = [1, 1]} : vector<2x48xf32> to vector<2x16xf32>
    %521 = arith.mulf %510, %520 : vector<2x16xf32>
    %522 = arith.addf %519, %521 : vector<2x16xf32>
    %523 = math.tanh %522 : vector<2x16xf32>
    %cst_165 = arith.constant 1.000000e+00 : f32
    %524 = vector.broadcast %cst_165 : f32 to vector<2x16xf32>
    %525 = arith.subf %524, %518 : vector<2x16xf32>
    %526 = arith.mulf %525, %523 : vector<2x16xf32>
    %527 = arith.mulf %518, %452 : vector<2x16xf32>
    %528 = arith.addf %526, %527 : vector<2x16xf32>
    %529 = arith.subf %502, %449 : vector<2x16xf32>
    %530 = arith.mulf %466, %529 : vector<2x16xf32>
    %531 = arith.addf %449, %530 : vector<2x16xf32>
    %532 = arith.subf %528, %452 : vector<2x16xf32>
    %533 = arith.mulf %468, %532 : vector<2x16xf32>
    %534 = arith.addf %452, %533 : vector<2x16xf32>
    %535 = arith.mulf %466, %502 : vector<2x16xf32>
    %536 = vector.broadcast %51 : vector<1x16xf32> to vector<2x16xf32>
    %537 = arith.mulf %535, %536 : vector<2x16xf32>
    %cst_166 = arith.constant dense<0.000000e+00> : vector<2xf32>
    %538 = vector.multi_reduction <add>, %537, %cst_166 [1] : vector<2x16xf32> to vector<2xf32>
    %539 = vector.shape_cast %538 : vector<2xf32> to vector<2x1xf32>
    %c0_167 = arith.constant 0 : index
    %c5_168 = arith.constant 5 : index
    %540 = vector.load %arg22[%c0_167, %c5_168] : memref<2x16xf32, #tpu.memory_space<vmem>>, vector<2x1xf32>
    tpu.vector_store %arg22[%c0_167, %c5_168], %539 {strides = array<i32>} : memref<2x16xf32, #tpu.memory_space<vmem>>, vector<2x1xf32>,
    %541 = arith.mulf %468, %528 : vector<2x16xf32>
    %542 = vector.broadcast %52 : vector<1x16xf32> to vector<2x16xf32>
    %543 = arith.mulf %541, %542 : vector<2x16xf32>
    %cst_169 = arith.constant dense<0.000000e+00> : vector<2xf32>
    %544 = vector.multi_reduction <add>, %543, %cst_169 [1] : vector<2x16xf32> to vector<2xf32>
    %545 = vector.shape_cast %544 : vector<2xf32> to vector<2x1xf32>
    %c0_170 = arith.constant 0 : index
    %c10_171 = arith.constant 10 : index
    %546 = vector.load %arg23[%c0_170, %c10_171] : memref<2x16xf32, #tpu.memory_space<vmem>>, vector<2x1xf32>
    tpu.vector_store %arg23[%c0_170, %c10_171], %545 {strides = array<i32>} : memref<2x16xf32, #tpu.memory_space<vmem>>, vector<2x1xf32>,
    %c6_172 = arith.constant 6 : index
    %c0_173 = arith.constant 0 : index
    %c0_174 = arith.constant 0 : index
    %547 = vector.load %arg18[%c6_172, %c0_173, %c0_174] : memref<16x2x16xf32, #tpu.memory_space<vmem>>, vector<1x2x16xf32>
    %548 = vector.shape_cast %547 : vector<1x2x16xf32> to vector<2x16xf32>
    %c9 = arith.constant 9 : index
    %c0_175 = arith.constant 0 : index
    %c0_176 = arith.constant 0 : index
    %549 = vector.load %arg18[%c9, %c0_175, %c0_176] : memref<16x2x16xf32, #tpu.memory_space<vmem>>, vector<1x2x16xf32>
    %550 = vector.shape_cast %549 : vector<1x2x16xf32> to vector<2x16xf32>
    %c12_177 = arith.constant 12 : index
    %c0_178 = arith.constant 0 : index
    %551 = vector.load %arg20[%c12_177, %c0_178] : memref<32x48xf32, #tpu.memory_space<vmem>>, vector<2x48xf32>
    %c18 = arith.constant 18 : index
    %c0_179 = arith.constant 0 : index
    %552 = vector.load %arg21[%c18, %c0_179] : memref<32x48xf32, #tpu.memory_space<vmem>>, vector<2x48xf32>
    %cst_180 = arith.constant dense<0.000000e+00> : vector<2x48xf32>
    %553 = tpu.matmul %531, %47, %cst_180 {dimension_numbers = #tpu.dot_dimension_numbers<[1], [0], [0], [1], [0, 0, 1, 1], [], []>} : vector<2x16xf32>, vector<16x48xf32>, vector<2x48xf32> -> vector<2x48xf32>
    %554 = vector.broadcast %48 : vector<1x48xf32> to vector<2x48xf32>
    %555 = arith.addf %553, %554 : vector<2x48xf32>
    %cst_181 = arith.constant dense<0.000000e+00> : vector<2x48xf32>
    %556 = tpu.matmul %534, %49, %cst_181 {dimension_numbers = #tpu.dot_dimension_numbers<[1], [0], [0], [1], [0, 0, 1, 1], [], []>} : vector<2x16xf32>, vector<16x48xf32>, vector<2x48xf32> -> vector<2x48xf32>
    %557 = vector.broadcast %50 : vector<1x48xf32> to vector<2x48xf32>
    %558 = arith.addf %556, %557 : vector<2x48xf32>
    %559 = vector.extract_strided_slice %551 {offsets = [0, 0], sizes = [2, 16], strides = [1, 1]} : vector<2x48xf32> to vector<2x16xf32>
    %560 = vector.extract_strided_slice %555 {offsets = [0, 0], sizes = [2, 16], strides = [1, 1]} : vector<2x48xf32> to vector<2x16xf32>
    %561 = arith.addf %559, %560 : vector<2x16xf32>
    %562 = arith.negf %561 : vector<2x16xf32>
    %563 = math.exp %562 : vector<2x16xf32>
    %cst_182 = arith.constant 1.000000e+00 : f32
    %564 = vector.broadcast %cst_182 : f32 to vector<2x16xf32>
    %565 = arith.addf %564, %563 : vector<2x16xf32>
    %566 = arith.divf %564, %565 : vector<2x16xf32>
    %567 = vector.extract_strided_slice %551 {offsets = [0, 16], sizes = [2, 16], strides = [1, 1]} : vector<2x48xf32> to vector<2x16xf32>
    %568 = vector.extract_strided_slice %555 {offsets = [0, 16], sizes = [2, 16], strides = [1, 1]} : vector<2x48xf32> to vector<2x16xf32>
    %569 = arith.addf %567, %568 : vector<2x16xf32>
    %570 = arith.negf %569 : vector<2x16xf32>
    %571 = math.exp %570 : vector<2x16xf32>
    %cst_183 = arith.constant 1.000000e+00 : f32
    %572 = vector.broadcast %cst_183 : f32 to vector<2x16xf32>
    %573 = arith.addf %572, %571 : vector<2x16xf32>
    %574 = arith.divf %572, %573 : vector<2x16xf32>
    %575 = vector.extract_strided_slice %551 {offsets = [0, 32], sizes = [2, 16], strides = [1, 1]} : vector<2x48xf32> to vector<2x16xf32>
    %576 = vector.extract_strided_slice %555 {offsets = [0, 32], sizes = [2, 16], strides = [1, 1]} : vector<2x48xf32> to vector<2x16xf32>
    %577 = arith.mulf %566, %576 : vector<2x16xf32>
    %578 = arith.addf %575, %577 : vector<2x16xf32>
    %579 = math.tanh %578 : vector<2x16xf32>
    %cst_184 = arith.constant 1.000000e+00 : f32
    %580 = vector.broadcast %cst_184 : f32 to vector<2x16xf32>
    %581 = arith.subf %580, %574 : vector<2x16xf32>
    %582 = arith.mulf %581, %579 : vector<2x16xf32>
    %583 = arith.mulf %574, %531 : vector<2x16xf32>
    %584 = arith.addf %582, %583 : vector<2x16xf32>
    %585 = vector.extract_strided_slice %552 {offsets = [0, 0], sizes = [2, 16], strides = [1, 1]} : vector<2x48xf32> to vector<2x16xf32>
    %586 = vector.extract_strided_slice %558 {offsets = [0, 0], sizes = [2, 16], strides = [1, 1]} : vector<2x48xf32> to vector<2x16xf32>
    %587 = arith.addf %585, %586 : vector<2x16xf32>
    %588 = arith.negf %587 : vector<2x16xf32>
    %589 = math.exp %588 : vector<2x16xf32>
    %cst_185 = arith.constant 1.000000e+00 : f32
    %590 = vector.broadcast %cst_185 : f32 to vector<2x16xf32>
    %591 = arith.addf %590, %589 : vector<2x16xf32>
    %592 = arith.divf %590, %591 : vector<2x16xf32>
    %593 = vector.extract_strided_slice %552 {offsets = [0, 16], sizes = [2, 16], strides = [1, 1]} : vector<2x48xf32> to vector<2x16xf32>
    %594 = vector.extract_strided_slice %558 {offsets = [0, 16], sizes = [2, 16], strides = [1, 1]} : vector<2x48xf32> to vector<2x16xf32>
    %595 = arith.addf %593, %594 : vector<2x16xf32>
    %596 = arith.negf %595 : vector<2x16xf32>
    %597 = math.exp %596 : vector<2x16xf32>
    %cst_186 = arith.constant 1.000000e+00 : f32
    %598 = vector.broadcast %cst_186 : f32 to vector<2x16xf32>
    %599 = arith.addf %598, %597 : vector<2x16xf32>
    %600 = arith.divf %598, %599 : vector<2x16xf32>
    %601 = vector.extract_strided_slice %552 {offsets = [0, 32], sizes = [2, 16], strides = [1, 1]} : vector<2x48xf32> to vector<2x16xf32>
    %602 = vector.extract_strided_slice %558 {offsets = [0, 32], sizes = [2, 16], strides = [1, 1]} : vector<2x48xf32> to vector<2x16xf32>
    %603 = arith.mulf %592, %602 : vector<2x16xf32>
    %604 = arith.addf %601, %603 : vector<2x16xf32>
    %605 = math.tanh %604 : vector<2x16xf32>
    %cst_187 = arith.constant 1.000000e+00 : f32
    %606 = vector.broadcast %cst_187 : f32 to vector<2x16xf32>
    %607 = arith.subf %606, %600 : vector<2x16xf32>
    %608 = arith.mulf %607, %605 : vector<2x16xf32>
    %609 = arith.mulf %600, %534 : vector<2x16xf32>
    %610 = arith.addf %608, %609 : vector<2x16xf32>
    %611 = arith.subf %584, %531 : vector<2x16xf32>
    %612 = arith.mulf %548, %611 : vector<2x16xf32>
    %613 = arith.addf %531, %612 : vector<2x16xf32>
    %614 = arith.subf %610, %534 : vector<2x16xf32>
    %615 = arith.mulf %550, %614 : vector<2x16xf32>
    %616 = arith.addf %534, %615 : vector<2x16xf32>
    %617 = arith.mulf %548, %584 : vector<2x16xf32>
    %618 = vector.broadcast %51 : vector<1x16xf32> to vector<2x16xf32>
    %619 = arith.mulf %617, %618 : vector<2x16xf32>
    %cst_188 = arith.constant dense<0.000000e+00> : vector<2xf32>
    %620 = vector.multi_reduction <add>, %619, %cst_188 [1] : vector<2x16xf32> to vector<2xf32>
    %621 = vector.shape_cast %620 : vector<2xf32> to vector<2x1xf32>
    %c0_189 = arith.constant 0 : index
    %c6_190 = arith.constant 6 : index
    %622 = vector.load %arg22[%c0_189, %c6_190] : memref<2x16xf32, #tpu.memory_space<vmem>>, vector<2x1xf32>
    tpu.vector_store %arg22[%c0_189, %c6_190], %621 {strides = array<i32>} : memref<2x16xf32, #tpu.memory_space<vmem>>, vector<2x1xf32>,
    %623 = arith.mulf %550, %610 : vector<2x16xf32>
    %624 = vector.broadcast %52 : vector<1x16xf32> to vector<2x16xf32>
    %625 = arith.mulf %623, %624 : vector<2x16xf32>
    %cst_191 = arith.constant dense<0.000000e+00> : vector<2xf32>
    %626 = vector.multi_reduction <add>, %625, %cst_191 [1] : vector<2x16xf32> to vector<2xf32>
    %627 = vector.shape_cast %626 : vector<2xf32> to vector<2x1xf32>
    %c0_192 = arith.constant 0 : index
    %c9_193 = arith.constant 9 : index
    %628 = vector.load %arg23[%c0_192, %c9_193] : memref<2x16xf32, #tpu.memory_space<vmem>>, vector<2x1xf32>
    tpu.vector_store %arg23[%c0_192, %c9_193], %627 {strides = array<i32>} : memref<2x16xf32, #tpu.memory_space<vmem>>, vector<2x1xf32>,
    %c7 = arith.constant 7 : index
    %c0_194 = arith.constant 0 : index
    %c0_195 = arith.constant 0 : index
    %629 = vector.load %arg18[%c7, %c0_194, %c0_195] : memref<16x2x16xf32, #tpu.memory_space<vmem>>, vector<1x2x16xf32>
    %630 = vector.shape_cast %629 : vector<1x2x16xf32> to vector<2x16xf32>
    %c8_196 = arith.constant 8 : index
    %c0_197 = arith.constant 0 : index
    %c0_198 = arith.constant 0 : index
    %631 = vector.load %arg18[%c8_196, %c0_197, %c0_198] : memref<16x2x16xf32, #tpu.memory_space<vmem>>, vector<1x2x16xf32>
    %632 = vector.shape_cast %631 : vector<1x2x16xf32> to vector<2x16xf32>
    %c14_199 = arith.constant 14 : index
    %c0_200 = arith.constant 0 : index
    %633 = vector.load %arg20[%c14_199, %c0_200] : memref<32x48xf32, #tpu.memory_space<vmem>>, vector<2x48xf32>
    %c16 = arith.constant 16 : index
    %c0_201 = arith.constant 0 : index
    %634 = vector.load %arg21[%c16, %c0_201] : memref<32x48xf32, #tpu.memory_space<vmem>>, vector<2x48xf32>
    %cst_202 = arith.constant dense<0.000000e+00> : vector<2x48xf32>
    %635 = tpu.matmul %613, %47, %cst_202 {dimension_numbers = #tpu.dot_dimension_numbers<[1], [0], [0], [1], [0, 0, 1, 1], [], []>} : vector<2x16xf32>, vector<16x48xf32>, vector<2x48xf32> -> vector<2x48xf32>
    %636 = vector.broadcast %48 : vector<1x48xf32> to vector<2x48xf32>
    %637 = arith.addf %635, %636 : vector<2x48xf32>
    %cst_203 = arith.constant dense<0.000000e+00> : vector<2x48xf32>
    %638 = tpu.matmul %616, %49, %cst_203 {dimension_numbers = #tpu.dot_dimension_numbers<[1], [0], [0], [1], [0, 0, 1, 1], [], []>} : vector<2x16xf32>, vector<16x48xf32>, vector<2x48xf32> -> vector<2x48xf32>
    %639 = vector.broadcast %50 : vector<1x48xf32> to vector<2x48xf32>
    %640 = arith.addf %638, %639 : vector<2x48xf32>
    %641 = vector.extract_strided_slice %633 {offsets = [0, 0], sizes = [2, 16], strides = [1, 1]} : vector<2x48xf32> to vector<2x16xf32>
    %642 = vector.extract_strided_slice %637 {offsets = [0, 0], sizes = [2, 16], strides = [1, 1]} : vector<2x48xf32> to vector<2x16xf32>
    %643 = arith.addf %641, %642 : vector<2x16xf32>
    %644 = arith.negf %643 : vector<2x16xf32>
    %645 = math.exp %644 : vector<2x16xf32>
    %cst_204 = arith.constant 1.000000e+00 : f32
    %646 = vector.broadcast %cst_204 : f32 to vector<2x16xf32>
    %647 = arith.addf %646, %645 : vector<2x16xf32>
    %648 = arith.divf %646, %647 : vector<2x16xf32>
    %649 = vector.extract_strided_slice %633 {offsets = [0, 16], sizes = [2, 16], strides = [1, 1]} : vector<2x48xf32> to vector<2x16xf32>
    %650 = vector.extract_strided_slice %637 {offsets = [0, 16], sizes = [2, 16], strides = [1, 1]} : vector<2x48xf32> to vector<2x16xf32>
    %651 = arith.addf %649, %650 : vector<2x16xf32>
    %652 = arith.negf %651 : vector<2x16xf32>
    %653 = math.exp %652 : vector<2x16xf32>
    %cst_205 = arith.constant 1.000000e+00 : f32
    %654 = vector.broadcast %cst_205 : f32 to vector<2x16xf32>
    %655 = arith.addf %654, %653 : vector<2x16xf32>
    %656 = arith.divf %654, %655 : vector<2x16xf32>
    %657 = vector.extract_strided_slice %633 {offsets = [0, 32], sizes = [2, 16], strides = [1, 1]} : vector<2x48xf32> to vector<2x16xf32>
    %658 = vector.extract_strided_slice %637 {offsets = [0, 32], sizes = [2, 16], strides = [1, 1]} : vector<2x48xf32> to vector<2x16xf32>
    %659 = arith.mulf %648, %658 : vector<2x16xf32>
    %660 = arith.addf %657, %659 : vector<2x16xf32>
    %661 = math.tanh %660 : vector<2x16xf32>
    %cst_206 = arith.constant 1.000000e+00 : f32
    %662 = vector.broadcast %cst_206 : f32 to vector<2x16xf32>
    %663 = arith.subf %662, %656 : vector<2x16xf32>
    %664 = arith.mulf %663, %661 : vector<2x16xf32>
    %665 = arith.mulf %656, %613 : vector<2x16xf32>
    %666 = arith.addf %664, %665 : vector<2x16xf32>
    %667 = vector.extract_strided_slice %634 {offsets = [0, 0], sizes = [2, 16], strides = [1, 1]} : vector<2x48xf32> to vector<2x16xf32>
    %668 = vector.extract_strided_slice %640 {offsets = [0, 0], sizes = [2, 16], strides = [1, 1]} : vector<2x48xf32> to vector<2x16xf32>
    %669 = arith.addf %667, %668 : vector<2x16xf32>
    %670 = arith.negf %669 : vector<2x16xf32>
    %671 = math.exp %670 : vector<2x16xf32>
    %cst_207 = arith.constant 1.000000e+00 : f32
    %672 = vector.broadcast %cst_207 : f32 to vector<2x16xf32>
    %673 = arith.addf %672, %671 : vector<2x16xf32>
    %674 = arith.divf %672, %673 : vector<2x16xf32>
    %675 = vector.extract_strided_slice %634 {offsets = [0, 16], sizes = [2, 16], strides = [1, 1]} : vector<2x48xf32> to vector<2x16xf32>
    %676 = vector.extract_strided_slice %640 {offsets = [0, 16], sizes = [2, 16], strides = [1, 1]} : vector<2x48xf32> to vector<2x16xf32>
    %677 = arith.addf %675, %676 : vector<2x16xf32>
    %678 = arith.negf %677 : vector<2x16xf32>
    %679 = math.exp %678 : vector<2x16xf32>
    %cst_208 = arith.constant 1.000000e+00 : f32
    %680 = vector.broadcast %cst_208 : f32 to vector<2x16xf32>
    %681 = arith.addf %680, %679 : vector<2x16xf32>
    %682 = arith.divf %680, %681 : vector<2x16xf32>
    %683 = vector.extract_strided_slice %634 {offsets = [0, 32], sizes = [2, 16], strides = [1, 1]} : vector<2x48xf32> to vector<2x16xf32>
    %684 = vector.extract_strided_slice %640 {offsets = [0, 32], sizes = [2, 16], strides = [1, 1]} : vector<2x48xf32> to vector<2x16xf32>
    %685 = arith.mulf %674, %684 : vector<2x16xf32>
    %686 = arith.addf %683, %685 : vector<2x16xf32>
    %687 = math.tanh %686 : vector<2x16xf32>
    %cst_209 = arith.constant 1.000000e+00 : f32
    %688 = vector.broadcast %cst_209 : f32 to vector<2x16xf32>
    %689 = arith.subf %688, %682 : vector<2x16xf32>
    %690 = arith.mulf %689, %687 : vector<2x16xf32>
    %691 = arith.mulf %682, %616 : vector<2x16xf32>
    %692 = arith.addf %690, %691 : vector<2x16xf32>
    %693 = arith.subf %666, %613 : vector<2x16xf32>
    %694 = arith.mulf %630, %693 : vector<2x16xf32>
    %695 = arith.addf %613, %694 : vector<2x16xf32>
    %696 = arith.subf %692, %616 : vector<2x16xf32>
    %697 = arith.mulf %632, %696 : vector<2x16xf32>
    %698 = arith.addf %616, %697 : vector<2x16xf32>
    %699 = arith.mulf %630, %666 : vector<2x16xf32>
    %700 = vector.broadcast %51 : vector<1x16xf32> to vector<2x16xf32>
    %701 = arith.mulf %699, %700 : vector<2x16xf32>
    %cst_210 = arith.constant dense<0.000000e+00> : vector<2xf32>
    %702 = vector.multi_reduction <add>, %701, %cst_210 [1] : vector<2x16xf32> to vector<2xf32>
    %703 = vector.shape_cast %702 : vector<2xf32> to vector<2x1xf32>
    %c0_211 = arith.constant 0 : index
    %c7_212 = arith.constant 7 : index
    %704 = vector.load %arg22[%c0_211, %c7_212] : memref<2x16xf32, #tpu.memory_space<vmem>>, vector<2x1xf32>
    tpu.vector_store %arg22[%c0_211, %c7_212], %703 {strides = array<i32>} : memref<2x16xf32, #tpu.memory_space<vmem>>, vector<2x1xf32>,
    %705 = arith.mulf %632, %692 : vector<2x16xf32>
    %706 = vector.broadcast %52 : vector<1x16xf32> to vector<2x16xf32>
    %707 = arith.mulf %705, %706 : vector<2x16xf32>
    %cst_213 = arith.constant dense<0.000000e+00> : vector<2xf32>
    %708 = vector.multi_reduction <add>, %707, %cst_213 [1] : vector<2x16xf32> to vector<2xf32>
    %709 = vector.shape_cast %708 : vector<2xf32> to vector<2x1xf32>
    %c0_214 = arith.constant 0 : index
    %c8_215 = arith.constant 8 : index
    %710 = vector.load %arg23[%c0_214, %c8_215] : memref<2x16xf32, #tpu.memory_space<vmem>>, vector<2x1xf32>
    tpu.vector_store %arg23[%c0_214, %c8_215], %709 {strides = array<i32>} : memref<2x16xf32, #tpu.memory_space<vmem>>, vector<2x1xf32>,
    %c8_216 = arith.constant 8 : index
    %c0_217 = arith.constant 0 : index
    %c0_218 = arith.constant 0 : index
    %711 = vector.load %arg18[%c8_216, %c0_217, %c0_218] : memref<16x2x16xf32, #tpu.memory_space<vmem>>, vector<1x2x16xf32>
    %712 = vector.shape_cast %711 : vector<1x2x16xf32> to vector<2x16xf32>
    %c7_219 = arith.constant 7 : index
    %c0_220 = arith.constant 0 : index
    %c0_221 = arith.constant 0 : index
    %713 = vector.load %arg18[%c7_219, %c0_220, %c0_221] : memref<16x2x16xf32, #tpu.memory_space<vmem>>, vector<1x2x16xf32>
    %714 = vector.shape_cast %713 : vector<1x2x16xf32> to vector<2x16xf32>
    %c16_222 = arith.constant 16 : index
    %c0_223 = arith.constant 0 : index
    %715 = vector.load %arg20[%c16_222, %c0_223] : memref<32x48xf32, #tpu.memory_space<vmem>>, vector<2x48xf32>
    %c14_224 = arith.constant 14 : index
    %c0_225 = arith.constant 0 : index
    %716 = vector.load %arg21[%c14_224, %c0_225] : memref<32x48xf32, #tpu.memory_space<vmem>>, vector<2x48xf32>
    %cst_226 = arith.constant dense<0.000000e+00> : vector<2x48xf32>
    %717 = tpu.matmul %695, %47, %cst_226 {dimension_numbers = #tpu.dot_dimension_numbers<[1], [0], [0], [1], [0, 0, 1, 1], [], []>} : vector<2x16xf32>, vector<16x48xf32>, vector<2x48xf32> -> vector<2x48xf32>
    %718 = vector.broadcast %48 : vector<1x48xf32> to vector<2x48xf32>
    %719 = arith.addf %717, %718 : vector<2x48xf32>
    %cst_227 = arith.constant dense<0.000000e+00> : vector<2x48xf32>
    %720 = tpu.matmul %698, %49, %cst_227 {dimension_numbers = #tpu.dot_dimension_numbers<[1], [0], [0], [1], [0, 0, 1, 1], [], []>} : vector<2x16xf32>, vector<16x48xf32>, vector<2x48xf32> -> vector<2x48xf32>
    %721 = vector.broadcast %50 : vector<1x48xf32> to vector<2x48xf32>
    %722 = arith.addf %720, %721 : vector<2x48xf32>
    %723 = vector.extract_strided_slice %715 {offsets = [0, 0], sizes = [2, 16], strides = [1, 1]} : vector<2x48xf32> to vector<2x16xf32>
    %724 = vector.extract_strided_slice %719 {offsets = [0, 0], sizes = [2, 16], strides = [1, 1]} : vector<2x48xf32> to vector<2x16xf32>
    %725 = arith.addf %723, %724 : vector<2x16xf32>
    %726 = arith.negf %725 : vector<2x16xf32>
    %727 = math.exp %726 : vector<2x16xf32>
    %cst_228 = arith.constant 1.000000e+00 : f32
    %728 = vector.broadcast %cst_228 : f32 to vector<2x16xf32>
    %729 = arith.addf %728, %727 : vector<2x16xf32>
    %730 = arith.divf %728, %729 : vector<2x16xf32>
    %731 = vector.extract_strided_slice %715 {offsets = [0, 16], sizes = [2, 16], strides = [1, 1]} : vector<2x48xf32> to vector<2x16xf32>
    %732 = vector.extract_strided_slice %719 {offsets = [0, 16], sizes = [2, 16], strides = [1, 1]} : vector<2x48xf32> to vector<2x16xf32>
    %733 = arith.addf %731, %732 : vector<2x16xf32>
    %734 = arith.negf %733 : vector<2x16xf32>
    %735 = math.exp %734 : vector<2x16xf32>
    %cst_229 = arith.constant 1.000000e+00 : f32
    %736 = vector.broadcast %cst_229 : f32 to vector<2x16xf32>
    %737 = arith.addf %736, %735 : vector<2x16xf32>
    %738 = arith.divf %736, %737 : vector<2x16xf32>
    %739 = vector.extract_strided_slice %715 {offsets = [0, 32], sizes = [2, 16], strides = [1, 1]} : vector<2x48xf32> to vector<2x16xf32>
    %740 = vector.extract_strided_slice %719 {offsets = [0, 32], sizes = [2, 16], strides = [1, 1]} : vector<2x48xf32> to vector<2x16xf32>
    %741 = arith.mulf %730, %740 : vector<2x16xf32>
    %742 = arith.addf %739, %741 : vector<2x16xf32>
    %743 = math.tanh %742 : vector<2x16xf32>
    %cst_230 = arith.constant 1.000000e+00 : f32
    %744 = vector.broadcast %cst_230 : f32 to vector<2x16xf32>
    %745 = arith.subf %744, %738 : vector<2x16xf32>
    %746 = arith.mulf %745, %743 : vector<2x16xf32>
    %747 = arith.mulf %738, %695 : vector<2x16xf32>
    %748 = arith.addf %746, %747 : vector<2x16xf32>
    %749 = vector.extract_strided_slice %716 {offsets = [0, 0], sizes = [2, 16], strides = [1, 1]} : vector<2x48xf32> to vector<2x16xf32>
    %750 = vector.extract_strided_slice %722 {offsets = [0, 0], sizes = [2, 16], strides = [1, 1]} : vector<2x48xf32> to vector<2x16xf32>
    %751 = arith.addf %749, %750 : vector<2x16xf32>
    %752 = arith.negf %751 : vector<2x16xf32>
    %753 = math.exp %752 : vector<2x16xf32>
    %cst_231 = arith.constant 1.000000e+00 : f32
    %754 = vector.broadcast %cst_231 : f32 to vector<2x16xf32>
    %755 = arith.addf %754, %753 : vector<2x16xf32>
    %756 = arith.divf %754, %755 : vector<2x16xf32>
    %757 = vector.extract_strided_slice %716 {offsets = [0, 16], sizes = [2, 16], strides = [1, 1]} : vector<2x48xf32> to vector<2x16xf32>
    %758 = vector.extract_strided_slice %722 {offsets = [0, 16], sizes = [2, 16], strides = [1, 1]} : vector<2x48xf32> to vector<2x16xf32>
    %759 = arith.addf %757, %758 : vector<2x16xf32>
    %760 = arith.negf %759 : vector<2x16xf32>
    %761 = math.exp %760 : vector<2x16xf32>
    %cst_232 = arith.constant 1.000000e+00 : f32
    %762 = vector.broadcast %cst_232 : f32 to vector<2x16xf32>
    %763 = arith.addf %762, %761 : vector<2x16xf32>
    %764 = arith.divf %762, %763 : vector<2x16xf32>
    %765 = vector.extract_strided_slice %716 {offsets = [0, 32], sizes = [2, 16], strides = [1, 1]} : vector<2x48xf32> to vector<2x16xf32>
    %766 = vector.extract_strided_slice %722 {offsets = [0, 32], sizes = [2, 16], strides = [1, 1]} : vector<2x48xf32> to vector<2x16xf32>
    %767 = arith.mulf %756, %766 : vector<2x16xf32>
    %768 = arith.addf %765, %767 : vector<2x16xf32>
    %769 = math.tanh %768 : vector<2x16xf32>
    %cst_233 = arith.constant 1.000000e+00 : f32
    %770 = vector.broadcast %cst_233 : f32 to vector<2x16xf32>
    %771 = arith.subf %770, %764 : vector<2x16xf32>
    %772 = arith.mulf %771, %769 : vector<2x16xf32>
    %773 = arith.mulf %764, %698 : vector<2x16xf32>
    %774 = arith.addf %772, %773 : vector<2x16xf32>
    %775 = arith.subf %748, %695 : vector<2x16xf32>
    %776 = arith.mulf %712, %775 : vector<2x16xf32>
    %777 = arith.addf %695, %776 : vector<2x16xf32>
    %778 = arith.subf %774, %698 : vector<2x16xf32>
    %779 = arith.mulf %714, %778 : vector<2x16xf32>
    %780 = arith.addf %698, %779 : vector<2x16xf32>
    %781 = arith.mulf %712, %748 : vector<2x16xf32>
    %782 = vector.broadcast %51 : vector<1x16xf32> to vector<2x16xf32>
    %783 = arith.mulf %781, %782 : vector<2x16xf32>
    %cst_234 = arith.constant dense<0.000000e+00> : vector<2xf32>
    %784 = vector.multi_reduction <add>, %783, %cst_234 [1] : vector<2x16xf32> to vector<2xf32>
    %785 = vector.shape_cast %784 : vector<2xf32> to vector<2x1xf32>
    %c0_235 = arith.constant 0 : index
    %c8_236 = arith.constant 8 : index
    %786 = vector.load %arg22[%c0_235, %c8_236] : memref<2x16xf32, #tpu.memory_space<vmem>>, vector<2x1xf32>
    tpu.vector_store %arg22[%c0_235, %c8_236], %785 {strides = array<i32>} : memref<2x16xf32, #tpu.memory_space<vmem>>, vector<2x1xf32>,
    %787 = arith.mulf %714, %774 : vector<2x16xf32>
    %788 = vector.broadcast %52 : vector<1x16xf32> to vector<2x16xf32>
    %789 = arith.mulf %787, %788 : vector<2x16xf32>
    %cst_237 = arith.constant dense<0.000000e+00> : vector<2xf32>
    %790 = vector.multi_reduction <add>, %789, %cst_237 [1] : vector<2x16xf32> to vector<2xf32>
    %791 = vector.shape_cast %790 : vector<2xf32> to vector<2x1xf32>
    %c0_238 = arith.constant 0 : index
    %c7_239 = arith.constant 7 : index
    %792 = vector.load %arg23[%c0_238, %c7_239] : memref<2x16xf32, #tpu.memory_space<vmem>>, vector<2x1xf32>
    tpu.vector_store %arg23[%c0_238, %c7_239], %791 {strides = array<i32>} : memref<2x16xf32, #tpu.memory_space<vmem>>, vector<2x1xf32>,
    %c9_240 = arith.constant 9 : index
    %c0_241 = arith.constant 0 : index
    %c0_242 = arith.constant 0 : index
    %793 = vector.load %arg18[%c9_240, %c0_241, %c0_242] : memref<16x2x16xf32, #tpu.memory_space<vmem>>, vector<1x2x16xf32>
    %794 = vector.shape_cast %793 : vector<1x2x16xf32> to vector<2x16xf32>
    %c6_243 = arith.constant 6 : index
    %c0_244 = arith.constant 0 : index
    %c0_245 = arith.constant 0 : index
    %795 = vector.load %arg18[%c6_243, %c0_244, %c0_245] : memref<16x2x16xf32, #tpu.memory_space<vmem>>, vector<1x2x16xf32>
    %796 = vector.shape_cast %795 : vector<1x2x16xf32> to vector<2x16xf32>
    %c18_246 = arith.constant 18 : index
    %c0_247 = arith.constant 0 : index
    %797 = vector.load %arg20[%c18_246, %c0_247] : memref<32x48xf32, #tpu.memory_space<vmem>>, vector<2x48xf32>
    %c12_248 = arith.constant 12 : index
    %c0_249 = arith.constant 0 : index
    %798 = vector.load %arg21[%c12_248, %c0_249] : memref<32x48xf32, #tpu.memory_space<vmem>>, vector<2x48xf32>
    %cst_250 = arith.constant dense<0.000000e+00> : vector<2x48xf32>
    %799 = tpu.matmul %777, %47, %cst_250 {dimension_numbers = #tpu.dot_dimension_numbers<[1], [0], [0], [1], [0, 0, 1, 1], [], []>} : vector<2x16xf32>, vector<16x48xf32>, vector<2x48xf32> -> vector<2x48xf32>
    %800 = vector.broadcast %48 : vector<1x48xf32> to vector<2x48xf32>
    %801 = arith.addf %799, %800 : vector<2x48xf32>
    %cst_251 = arith.constant dense<0.000000e+00> : vector<2x48xf32>
    %802 = tpu.matmul %780, %49, %cst_251 {dimension_numbers = #tpu.dot_dimension_numbers<[1], [0], [0], [1], [0, 0, 1, 1], [], []>} : vector<2x16xf32>, vector<16x48xf32>, vector<2x48xf32> -> vector<2x48xf32>
    %803 = vector.broadcast %50 : vector<1x48xf32> to vector<2x48xf32>
    %804 = arith.addf %802, %803 : vector<2x48xf32>
    %805 = vector.extract_strided_slice %797 {offsets = [0, 0], sizes = [2, 16], strides = [1, 1]} : vector<2x48xf32> to vector<2x16xf32>
    %806 = vector.extract_strided_slice %801 {offsets = [0, 0], sizes = [2, 16], strides = [1, 1]} : vector<2x48xf32> to vector<2x16xf32>
    %807 = arith.addf %805, %806 : vector<2x16xf32>
    %808 = arith.negf %807 : vector<2x16xf32>
    %809 = math.exp %808 : vector<2x16xf32>
    %cst_252 = arith.constant 1.000000e+00 : f32
    %810 = vector.broadcast %cst_252 : f32 to vector<2x16xf32>
    %811 = arith.addf %810, %809 : vector<2x16xf32>
    %812 = arith.divf %810, %811 : vector<2x16xf32>
    %813 = vector.extract_strided_slice %797 {offsets = [0, 16], sizes = [2, 16], strides = [1, 1]} : vector<2x48xf32> to vector<2x16xf32>
    %814 = vector.extract_strided_slice %801 {offsets = [0, 16], sizes = [2, 16], strides = [1, 1]} : vector<2x48xf32> to vector<2x16xf32>
    %815 = arith.addf %813, %814 : vector<2x16xf32>
    %816 = arith.negf %815 : vector<2x16xf32>
    %817 = math.exp %816 : vector<2x16xf32>
    %cst_253 = arith.constant 1.000000e+00 : f32
    %818 = vector.broadcast %cst_253 : f32 to vector<2x16xf32>
    %819 = arith.addf %818, %817 : vector<2x16xf32>
    %820 = arith.divf %818, %819 : vector<2x16xf32>
    %821 = vector.extract_strided_slice %797 {offsets = [0, 32], sizes = [2, 16], strides = [1, 1]} : vector<2x48xf32> to vector<2x16xf32>
    %822 = vector.extract_strided_slice %801 {offsets = [0, 32], sizes = [2, 16], strides = [1, 1]} : vector<2x48xf32> to vector<2x16xf32>
    %823 = arith.mulf %812, %822 : vector<2x16xf32>
    %824 = arith.addf %821, %823 : vector<2x16xf32>
    %825 = math.tanh %824 : vector<2x16xf32>
    %cst_254 = arith.constant 1.000000e+00 : f32
    %826 = vector.broadcast %cst_254 : f32 to vector<2x16xf32>
    %827 = arith.subf %826, %820 : vector<2x16xf32>
    %828 = arith.mulf %827, %825 : vector<2x16xf32>
    %829 = arith.mulf %820, %777 : vector<2x16xf32>
    %830 = arith.addf %828, %829 : vector<2x16xf32>
    %831 = vector.extract_strided_slice %798 {offsets = [0, 0], sizes = [2, 16], strides = [1, 1]} : vector<2x48xf32> to vector<2x16xf32>
    %832 = vector.extract_strided_slice %804 {offsets = [0, 0], sizes = [2, 16], strides = [1, 1]} : vector<2x48xf32> to vector<2x16xf32>
    %833 = arith.addf %831, %832 : vector<2x16xf32>
    %834 = arith.negf %833 : vector<2x16xf32>
    %835 = math.exp %834 : vector<2x16xf32>
    %cst_255 = arith.constant 1.000000e+00 : f32
    %836 = vector.broadcast %cst_255 : f32 to vector<2x16xf32>
    %837 = arith.addf %836, %835 : vector<2x16xf32>
    %838 = arith.divf %836, %837 : vector<2x16xf32>
    %839 = vector.extract_strided_slice %798 {offsets = [0, 16], sizes = [2, 16], strides = [1, 1]} : vector<2x48xf32> to vector<2x16xf32>
    %840 = vector.extract_strided_slice %804 {offsets = [0, 16], sizes = [2, 16], strides = [1, 1]} : vector<2x48xf32> to vector<2x16xf32>
    %841 = arith.addf %839, %840 : vector<2x16xf32>
    %842 = arith.negf %841 : vector<2x16xf32>
    %843 = math.exp %842 : vector<2x16xf32>
    %cst_256 = arith.constant 1.000000e+00 : f32
    %844 = vector.broadcast %cst_256 : f32 to vector<2x16xf32>
    %845 = arith.addf %844, %843 : vector<2x16xf32>
    %846 = arith.divf %844, %845 : vector<2x16xf32>
    %847 = vector.extract_strided_slice %798 {offsets = [0, 32], sizes = [2, 16], strides = [1, 1]} : vector<2x48xf32> to vector<2x16xf32>
    %848 = vector.extract_strided_slice %804 {offsets = [0, 32], sizes = [2, 16], strides = [1, 1]} : vector<2x48xf32> to vector<2x16xf32>
    %849 = arith.mulf %838, %848 : vector<2x16xf32>
    %850 = arith.addf %847, %849 : vector<2x16xf32>
    %851 = math.tanh %850 : vector<2x16xf32>
    %cst_257 = arith.constant 1.000000e+00 : f32
    %852 = vector.broadcast %cst_257 : f32 to vector<2x16xf32>
    %853 = arith.subf %852, %846 : vector<2x16xf32>
    %854 = arith.mulf %853, %851 : vector<2x16xf32>
    %855 = arith.mulf %846, %780 : vector<2x16xf32>
    %856 = arith.addf %854, %855 : vector<2x16xf32>
    %857 = arith.subf %830, %777 : vector<2x16xf32>
    %858 = arith.mulf %794, %857 : vector<2x16xf32>
    %859 = arith.addf %777, %858 : vector<2x16xf32>
    %860 = arith.subf %856, %780 : vector<2x16xf32>
    %861 = arith.mulf %796, %860 : vector<2x16xf32>
    %862 = arith.addf %780, %861 : vector<2x16xf32>
    %863 = arith.mulf %794, %830 : vector<2x16xf32>
    %864 = vector.broadcast %51 : vector<1x16xf32> to vector<2x16xf32>
    %865 = arith.mulf %863, %864 : vector<2x16xf32>
    %cst_258 = arith.constant dense<0.000000e+00> : vector<2xf32>
    %866 = vector.multi_reduction <add>, %865, %cst_258 [1] : vector<2x16xf32> to vector<2xf32>
    %867 = vector.shape_cast %866 : vector<2xf32> to vector<2x1xf32>
    %c0_259 = arith.constant 0 : index
    %c9_260 = arith.constant 9 : index
    %868 = vector.load %arg22[%c0_259, %c9_260] : memref<2x16xf32, #tpu.memory_space<vmem>>, vector<2x1xf32>
    tpu.vector_store %arg22[%c0_259, %c9_260], %867 {strides = array<i32>} : memref<2x16xf32, #tpu.memory_space<vmem>>, vector<2x1xf32>,
    %869 = arith.mulf %796, %856 : vector<2x16xf32>
    %870 = vector.broadcast %52 : vector<1x16xf32> to vector<2x16xf32>
    %871 = arith.mulf %869, %870 : vector<2x16xf32>
    %cst_261 = arith.constant dense<0.000000e+00> : vector<2xf32>
    %872 = vector.multi_reduction <add>, %871, %cst_261 [1] : vector<2x16xf32> to vector<2xf32>
    %873 = vector.shape_cast %872 : vector<2xf32> to vector<2x1xf32>
    %c0_262 = arith.constant 0 : index
    %c6_263 = arith.constant 6 : index
    %874 = vector.load %arg23[%c0_262, %c6_263] : memref<2x16xf32, #tpu.memory_space<vmem>>, vector<2x1xf32>
    tpu.vector_store %arg23[%c0_262, %c6_263], %873 {strides = array<i32>} : memref<2x16xf32, #tpu.memory_space<vmem>>, vector<2x1xf32>,
    %c10_264 = arith.constant 10 : index
    %c0_265 = arith.constant 0 : index
    %c0_266 = arith.constant 0 : index
    %875 = vector.load %arg18[%c10_264, %c0_265, %c0_266] : memref<16x2x16xf32, #tpu.memory_space<vmem>>, vector<1x2x16xf32>
    %876 = vector.shape_cast %875 : vector<1x2x16xf32> to vector<2x16xf32>
    %c5_267 = arith.constant 5 : index
    %c0_268 = arith.constant 0 : index
    %c0_269 = arith.constant 0 : index
    %877 = vector.load %arg18[%c5_267, %c0_268, %c0_269] : memref<16x2x16xf32, #tpu.memory_space<vmem>>, vector<1x2x16xf32>
    %878 = vector.shape_cast %877 : vector<1x2x16xf32> to vector<2x16xf32>
    %c20_270 = arith.constant 20 : index
    %c0_271 = arith.constant 0 : index
    %879 = vector.load %arg20[%c20_270, %c0_271] : memref<32x48xf32, #tpu.memory_space<vmem>>, vector<2x48xf32>
    %c10_272 = arith.constant 10 : index
    %c0_273 = arith.constant 0 : index
    %880 = vector.load %arg21[%c10_272, %c0_273] : memref<32x48xf32, #tpu.memory_space<vmem>>, vector<2x48xf32>
    %cst_274 = arith.constant dense<0.000000e+00> : vector<2x48xf32>
    %881 = tpu.matmul %859, %47, %cst_274 {dimension_numbers = #tpu.dot_dimension_numbers<[1], [0], [0], [1], [0, 0, 1, 1], [], []>} : vector<2x16xf32>, vector<16x48xf32>, vector<2x48xf32> -> vector<2x48xf32>
    %882 = vector.broadcast %48 : vector<1x48xf32> to vector<2x48xf32>
    %883 = arith.addf %881, %882 : vector<2x48xf32>
    %cst_275 = arith.constant dense<0.000000e+00> : vector<2x48xf32>
    %884 = tpu.matmul %862, %49, %cst_275 {dimension_numbers = #tpu.dot_dimension_numbers<[1], [0], [0], [1], [0, 0, 1, 1], [], []>} : vector<2x16xf32>, vector<16x48xf32>, vector<2x48xf32> -> vector<2x48xf32>
    %885 = vector.broadcast %50 : vector<1x48xf32> to vector<2x48xf32>
    %886 = arith.addf %884, %885 : vector<2x48xf32>
    %887 = vector.extract_strided_slice %879 {offsets = [0, 0], sizes = [2, 16], strides = [1, 1]} : vector<2x48xf32> to vector<2x16xf32>
    %888 = vector.extract_strided_slice %883 {offsets = [0, 0], sizes = [2, 16], strides = [1, 1]} : vector<2x48xf32> to vector<2x16xf32>
    %889 = arith.addf %887, %888 : vector<2x16xf32>
    %890 = arith.negf %889 : vector<2x16xf32>
    %891 = math.exp %890 : vector<2x16xf32>
    %cst_276 = arith.constant 1.000000e+00 : f32
    %892 = vector.broadcast %cst_276 : f32 to vector<2x16xf32>
    %893 = arith.addf %892, %891 : vector<2x16xf32>
    %894 = arith.divf %892, %893 : vector<2x16xf32>
    %895 = vector.extract_strided_slice %879 {offsets = [0, 16], sizes = [2, 16], strides = [1, 1]} : vector<2x48xf32> to vector<2x16xf32>
    %896 = vector.extract_strided_slice %883 {offsets = [0, 16], sizes = [2, 16], strides = [1, 1]} : vector<2x48xf32> to vector<2x16xf32>
    %897 = arith.addf %895, %896 : vector<2x16xf32>
    %898 = arith.negf %897 : vector<2x16xf32>
    %899 = math.exp %898 : vector<2x16xf32>
    %cst_277 = arith.constant 1.000000e+00 : f32
    %900 = vector.broadcast %cst_277 : f32 to vector<2x16xf32>
    %901 = arith.addf %900, %899 : vector<2x16xf32>
    %902 = arith.divf %900, %901 : vector<2x16xf32>
    %903 = vector.extract_strided_slice %879 {offsets = [0, 32], sizes = [2, 16], strides = [1, 1]} : vector<2x48xf32> to vector<2x16xf32>
    %904 = vector.extract_strided_slice %883 {offsets = [0, 32], sizes = [2, 16], strides = [1, 1]} : vector<2x48xf32> to vector<2x16xf32>
    %905 = arith.mulf %894, %904 : vector<2x16xf32>
    %906 = arith.addf %903, %905 : vector<2x16xf32>
    %907 = math.tanh %906 : vector<2x16xf32>
    %cst_278 = arith.constant 1.000000e+00 : f32
    %908 = vector.broadcast %cst_278 : f32 to vector<2x16xf32>
    %909 = arith.subf %908, %902 : vector<2x16xf32>
    %910 = arith.mulf %909, %907 : vector<2x16xf32>
    %911 = arith.mulf %902, %859 : vector<2x16xf32>
    %912 = arith.addf %910, %911 : vector<2x16xf32>
    %913 = vector.extract_strided_slice %880 {offsets = [0, 0], sizes = [2, 16], strides = [1, 1]} : vector<2x48xf32> to vector<2x16xf32>
    %914 = vector.extract_strided_slice %886 {offsets = [0, 0], sizes = [2, 16], strides = [1, 1]} : vector<2x48xf32> to vector<2x16xf32>
    %915 = arith.addf %913, %914 : vector<2x16xf32>
    %916 = arith.negf %915 : vector<2x16xf32>
    %917 = math.exp %916 : vector<2x16xf32>
    %cst_279 = arith.constant 1.000000e+00 : f32
    %918 = vector.broadcast %cst_279 : f32 to vector<2x16xf32>
    %919 = arith.addf %918, %917 : vector<2x16xf32>
    %920 = arith.divf %918, %919 : vector<2x16xf32>
    %921 = vector.extract_strided_slice %880 {offsets = [0, 16], sizes = [2, 16], strides = [1, 1]} : vector<2x48xf32> to vector<2x16xf32>
    %922 = vector.extract_strided_slice %886 {offsets = [0, 16], sizes = [2, 16], strides = [1, 1]} : vector<2x48xf32> to vector<2x16xf32>
    %923 = arith.addf %921, %922 : vector<2x16xf32>
    %924 = arith.negf %923 : vector<2x16xf32>
    %925 = math.exp %924 : vector<2x16xf32>
    %cst_280 = arith.constant 1.000000e+00 : f32
    %926 = vector.broadcast %cst_280 : f32 to vector<2x16xf32>
    %927 = arith.addf %926, %925 : vector<2x16xf32>
    %928 = arith.divf %926, %927 : vector<2x16xf32>
    %929 = vector.extract_strided_slice %880 {offsets = [0, 32], sizes = [2, 16], strides = [1, 1]} : vector<2x48xf32> to vector<2x16xf32>
    %930 = vector.extract_strided_slice %886 {offsets = [0, 32], sizes = [2, 16], strides = [1, 1]} : vector<2x48xf32> to vector<2x16xf32>
    %931 = arith.mulf %920, %930 : vector<2x16xf32>
    %932 = arith.addf %929, %931 : vector<2x16xf32>
    %933 = math.tanh %932 : vector<2x16xf32>
    %cst_281 = arith.constant 1.000000e+00 : f32
    %934 = vector.broadcast %cst_281 : f32 to vector<2x16xf32>
    %935 = arith.subf %934, %928 : vector<2x16xf32>
    %936 = arith.mulf %935, %933 : vector<2x16xf32>
    %937 = arith.mulf %928, %862 : vector<2x16xf32>
    %938 = arith.addf %936, %937 : vector<2x16xf32>
    %939 = arith.subf %912, %859 : vector<2x16xf32>
    %940 = arith.mulf %876, %939 : vector<2x16xf32>
    %941 = arith.addf %859, %940 : vector<2x16xf32>
    %942 = arith.subf %938, %862 : vector<2x16xf32>
    %943 = arith.mulf %878, %942 : vector<2x16xf32>
    %944 = arith.addf %862, %943 : vector<2x16xf32>
    %945 = arith.mulf %876, %912 : vector<2x16xf32>
    %946 = vector.broadcast %51 : vector<1x16xf32> to vector<2x16xf32>
    %947 = arith.mulf %945, %946 : vector<2x16xf32>
    %cst_282 = arith.constant dense<0.000000e+00> : vector<2xf32>
    %948 = vector.multi_reduction <add>, %947, %cst_282 [1] : vector<2x16xf32> to vector<2xf32>
    %949 = vector.shape_cast %948 : vector<2xf32> to vector<2x1xf32>
    %c0_283 = arith.constant 0 : index
    %c10_284 = arith.constant 10 : index
    %950 = vector.load %arg22[%c0_283, %c10_284] : memref<2x16xf32, #tpu.memory_space<vmem>>, vector<2x1xf32>
    tpu.vector_store %arg22[%c0_283, %c10_284], %949 {strides = array<i32>} : memref<2x16xf32, #tpu.memory_space<vmem>>, vector<2x1xf32>,
    %951 = arith.mulf %878, %938 : vector<2x16xf32>
    %952 = vector.broadcast %52 : vector<1x16xf32> to vector<2x16xf32>
    %953 = arith.mulf %951, %952 : vector<2x16xf32>
    %cst_285 = arith.constant dense<0.000000e+00> : vector<2xf32>
    %954 = vector.multi_reduction <add>, %953, %cst_285 [1] : vector<2x16xf32> to vector<2xf32>
    %955 = vector.shape_cast %954 : vector<2xf32> to vector<2x1xf32>
    %c0_286 = arith.constant 0 : index
    %c5_287 = arith.constant 5 : index
    %956 = vector.load %arg23[%c0_286, %c5_287] : memref<2x16xf32, #tpu.memory_space<vmem>>, vector<2x1xf32>
    tpu.vector_store %arg23[%c0_286, %c5_287], %955 {strides = array<i32>} : memref<2x16xf32, #tpu.memory_space<vmem>>, vector<2x1xf32>,
    %c11_288 = arith.constant 11 : index
    %c0_289 = arith.constant 0 : index
    %c0_290 = arith.constant 0 : index
    %957 = vector.load %arg18[%c11_288, %c0_289, %c0_290] : memref<16x2x16xf32, #tpu.memory_space<vmem>>, vector<1x2x16xf32>
    %958 = vector.shape_cast %957 : vector<1x2x16xf32> to vector<2x16xf32>
    %c4_291 = arith.constant 4 : index
    %c0_292 = arith.constant 0 : index
    %c0_293 = arith.constant 0 : index
    %959 = vector.load %arg18[%c4_291, %c0_292, %c0_293] : memref<16x2x16xf32, #tpu.memory_space<vmem>>, vector<1x2x16xf32>
    %960 = vector.shape_cast %959 : vector<1x2x16xf32> to vector<2x16xf32>
    %c22_294 = arith.constant 22 : index
    %c0_295 = arith.constant 0 : index
    %961 = vector.load %arg20[%c22_294, %c0_295] : memref<32x48xf32, #tpu.memory_space<vmem>>, vector<2x48xf32>
    %c8_296 = arith.constant 8 : index
    %c0_297 = arith.constant 0 : index
    %962 = vector.load %arg21[%c8_296, %c0_297] : memref<32x48xf32, #tpu.memory_space<vmem>>, vector<2x48xf32>
    %cst_298 = arith.constant dense<0.000000e+00> : vector<2x48xf32>
    %963 = tpu.matmul %941, %47, %cst_298 {dimension_numbers = #tpu.dot_dimension_numbers<[1], [0], [0], [1], [0, 0, 1, 1], [], []>} : vector<2x16xf32>, vector<16x48xf32>, vector<2x48xf32> -> vector<2x48xf32>
    %964 = vector.broadcast %48 : vector<1x48xf32> to vector<2x48xf32>
    %965 = arith.addf %963, %964 : vector<2x48xf32>
    %cst_299 = arith.constant dense<0.000000e+00> : vector<2x48xf32>
    %966 = tpu.matmul %944, %49, %cst_299 {dimension_numbers = #tpu.dot_dimension_numbers<[1], [0], [0], [1], [0, 0, 1, 1], [], []>} : vector<2x16xf32>, vector<16x48xf32>, vector<2x48xf32> -> vector<2x48xf32>
    %967 = vector.broadcast %50 : vector<1x48xf32> to vector<2x48xf32>
    %968 = arith.addf %966, %967 : vector<2x48xf32>
    %969 = vector.extract_strided_slice %961 {offsets = [0, 0], sizes = [2, 16], strides = [1, 1]} : vector<2x48xf32> to vector<2x16xf32>
    %970 = vector.extract_strided_slice %965 {offsets = [0, 0], sizes = [2, 16], strides = [1, 1]} : vector<2x48xf32> to vector<2x16xf32>
    %971 = arith.addf %969, %970 : vector<2x16xf32>
    %972 = arith.negf %971 : vector<2x16xf32>
    %973 = math.exp %972 : vector<2x16xf32>
    %cst_300 = arith.constant 1.000000e+00 : f32
    %974 = vector.broadcast %cst_300 : f32 to vector<2x16xf32>
    %975 = arith.addf %974, %973 : vector<2x16xf32>
    %976 = arith.divf %974, %975 : vector<2x16xf32>
    %977 = vector.extract_strided_slice %961 {offsets = [0, 16], sizes = [2, 16], strides = [1, 1]} : vector<2x48xf32> to vector<2x16xf32>
    %978 = vector.extract_strided_slice %965 {offsets = [0, 16], sizes = [2, 16], strides = [1, 1]} : vector<2x48xf32> to vector<2x16xf32>
    %979 = arith.addf %977, %978 : vector<2x16xf32>
    %980 = arith.negf %979 : vector<2x16xf32>
    %981 = math.exp %980 : vector<2x16xf32>
    %cst_301 = arith.constant 1.000000e+00 : f32
    %982 = vector.broadcast %cst_301 : f32 to vector<2x16xf32>
    %983 = arith.addf %982, %981 : vector<2x16xf32>
    %984 = arith.divf %982, %983 : vector<2x16xf32>
    %985 = vector.extract_strided_slice %961 {offsets = [0, 32], sizes = [2, 16], strides = [1, 1]} : vector<2x48xf32> to vector<2x16xf32>
    %986 = vector.extract_strided_slice %965 {offsets = [0, 32], sizes = [2, 16], strides = [1, 1]} : vector<2x48xf32> to vector<2x16xf32>
    %987 = arith.mulf %976, %986 : vector<2x16xf32>
    %988 = arith.addf %985, %987 : vector<2x16xf32>
    %989 = math.tanh %988 : vector<2x16xf32>
    %cst_302 = arith.constant 1.000000e+00 : f32
    %990 = vector.broadcast %cst_302 : f32 to vector<2x16xf32>
    %991 = arith.subf %990, %984 : vector<2x16xf32>
    %992 = arith.mulf %991, %989 : vector<2x16xf32>
    %993 = arith.mulf %984, %941 : vector<2x16xf32>
    %994 = arith.addf %992, %993 : vector<2x16xf32>
    %995 = vector.extract_strided_slice %962 {offsets = [0, 0], sizes = [2, 16], strides = [1, 1]} : vector<2x48xf32> to vector<2x16xf32>
    %996 = vector.extract_strided_slice %968 {offsets = [0, 0], sizes = [2, 16], strides = [1, 1]} : vector<2x48xf32> to vector<2x16xf32>
    %997 = arith.addf %995, %996 : vector<2x16xf32>
    %998 = arith.negf %997 : vector<2x16xf32>
    %999 = math.exp %998 : vector<2x16xf32>
    %cst_303 = arith.constant 1.000000e+00 : f32
    %1000 = vector.broadcast %cst_303 : f32 to vector<2x16xf32>
    %1001 = arith.addf %1000, %999 : vector<2x16xf32>
    %1002 = arith.divf %1000, %1001 : vector<2x16xf32>
    %1003 = vector.extract_strided_slice %962 {offsets = [0, 16], sizes = [2, 16], strides = [1, 1]} : vector<2x48xf32> to vector<2x16xf32>
    %1004 = vector.extract_strided_slice %968 {offsets = [0, 16], sizes = [2, 16], strides = [1, 1]} : vector<2x48xf32> to vector<2x16xf32>
    %1005 = arith.addf %1003, %1004 : vector<2x16xf32>
    %1006 = arith.negf %1005 : vector<2x16xf32>
    %1007 = math.exp %1006 : vector<2x16xf32>
    %cst_304 = arith.constant 1.000000e+00 : f32
    %1008 = vector.broadcast %cst_304 : f32 to vector<2x16xf32>
    %1009 = arith.addf %1008, %1007 : vector<2x16xf32>
    %1010 = arith.divf %1008, %1009 : vector<2x16xf32>
    %1011 = vector.extract_strided_slice %962 {offsets = [0, 32], sizes = [2, 16], strides = [1, 1]} : vector<2x48xf32> to vector<2x16xf32>
    %1012 = vector.extract_strided_slice %968 {offsets = [0, 32], sizes = [2, 16], strides = [1, 1]} : vector<2x48xf32> to vector<2x16xf32>
    %1013 = arith.mulf %1002, %1012 : vector<2x16xf32>
    %1014 = arith.addf %1011, %1013 : vector<2x16xf32>
    %1015 = math.tanh %1014 : vector<2x16xf32>
    %cst_305 = arith.constant 1.000000e+00 : f32
    %1016 = vector.broadcast %cst_305 : f32 to vector<2x16xf32>
    %1017 = arith.subf %1016, %1010 : vector<2x16xf32>
    %1018 = arith.mulf %1017, %1015 : vector<2x16xf32>
    %1019 = arith.mulf %1010, %944 : vector<2x16xf32>
    %1020 = arith.addf %1018, %1019 : vector<2x16xf32>
    %1021 = arith.subf %994, %941 : vector<2x16xf32>
    %1022 = arith.mulf %958, %1021 : vector<2x16xf32>
    %1023 = arith.addf %941, %1022 : vector<2x16xf32>
    %1024 = arith.subf %1020, %944 : vector<2x16xf32>
    %1025 = arith.mulf %960, %1024 : vector<2x16xf32>
    %1026 = arith.addf %944, %1025 : vector<2x16xf32>
    %1027 = arith.mulf %958, %994 : vector<2x16xf32>
    %1028 = vector.broadcast %51 : vector<1x16xf32> to vector<2x16xf32>
    %1029 = arith.mulf %1027, %1028 : vector<2x16xf32>
    %cst_306 = arith.constant dense<0.000000e+00> : vector<2xf32>
    %1030 = vector.multi_reduction <add>, %1029, %cst_306 [1] : vector<2x16xf32> to vector<2xf32>
    %1031 = vector.shape_cast %1030 : vector<2xf32> to vector<2x1xf32>
    %c0_307 = arith.constant 0 : index
    %c11_308 = arith.constant 11 : index
    %1032 = vector.load %arg22[%c0_307, %c11_308] : memref<2x16xf32, #tpu.memory_space<vmem>>, vector<2x1xf32>
    tpu.vector_store %arg22[%c0_307, %c11_308], %1031 {strides = array<i32>} : memref<2x16xf32, #tpu.memory_space<vmem>>, vector<2x1xf32>,
    %1033 = arith.mulf %960, %1020 : vector<2x16xf32>
    %1034 = vector.broadcast %52 : vector<1x16xf32> to vector<2x16xf32>
    %1035 = arith.mulf %1033, %1034 : vector<2x16xf32>
    %cst_309 = arith.constant dense<0.000000e+00> : vector<2xf32>
    %1036 = vector.multi_reduction <add>, %1035, %cst_309 [1] : vector<2x16xf32> to vector<2xf32>
    %1037 = vector.shape_cast %1036 : vector<2xf32> to vector<2x1xf32>
    %c0_310 = arith.constant 0 : index
    %c4_311 = arith.constant 4 : index
    %1038 = vector.load %arg23[%c0_310, %c4_311] : memref<2x16xf32, #tpu.memory_space<vmem>>, vector<2x1xf32>
    tpu.vector_store %arg23[%c0_310, %c4_311], %1037 {strides = array<i32>} : memref<2x16xf32, #tpu.memory_space<vmem>>, vector<2x1xf32>,
    %c12_312 = arith.constant 12 : index
    %c0_313 = arith.constant 0 : index
    %c0_314 = arith.constant 0 : index
    %1039 = vector.load %arg18[%c12_312, %c0_313, %c0_314] : memref<16x2x16xf32, #tpu.memory_space<vmem>>, vector<1x2x16xf32>
    %1040 = vector.shape_cast %1039 : vector<1x2x16xf32> to vector<2x16xf32>
    %c3_315 = arith.constant 3 : index
    %c0_316 = arith.constant 0 : index
    %c0_317 = arith.constant 0 : index
    %1041 = vector.load %arg18[%c3_315, %c0_316, %c0_317] : memref<16x2x16xf32, #tpu.memory_space<vmem>>, vector<1x2x16xf32>
    %1042 = vector.shape_cast %1041 : vector<1x2x16xf32> to vector<2x16xf32>
    %c24_318 = arith.constant 24 : index
    %c0_319 = arith.constant 0 : index
    %1043 = vector.load %arg20[%c24_318, %c0_319] : memref<32x48xf32, #tpu.memory_space<vmem>>, vector<2x48xf32>
    %c6_320 = arith.constant 6 : index
    %c0_321 = arith.constant 0 : index
    %1044 = vector.load %arg21[%c6_320, %c0_321] : memref<32x48xf32, #tpu.memory_space<vmem>>, vector<2x48xf32>
    %cst_322 = arith.constant dense<0.000000e+00> : vector<2x48xf32>
    %1045 = tpu.matmul %1023, %47, %cst_322 {dimension_numbers = #tpu.dot_dimension_numbers<[1], [0], [0], [1], [0, 0, 1, 1], [], []>} : vector<2x16xf32>, vector<16x48xf32>, vector<2x48xf32> -> vector<2x48xf32>
    %1046 = vector.broadcast %48 : vector<1x48xf32> to vector<2x48xf32>
    %1047 = arith.addf %1045, %1046 : vector<2x48xf32>
    %cst_323 = arith.constant dense<0.000000e+00> : vector<2x48xf32>
    %1048 = tpu.matmul %1026, %49, %cst_323 {dimension_numbers = #tpu.dot_dimension_numbers<[1], [0], [0], [1], [0, 0, 1, 1], [], []>} : vector<2x16xf32>, vector<16x48xf32>, vector<2x48xf32> -> vector<2x48xf32>
    %1049 = vector.broadcast %50 : vector<1x48xf32> to vector<2x48xf32>
    %1050 = arith.addf %1048, %1049 : vector<2x48xf32>
    %1051 = vector.extract_strided_slice %1043 {offsets = [0, 0], sizes = [2, 16], strides = [1, 1]} : vector<2x48xf32> to vector<2x16xf32>
    %1052 = vector.extract_strided_slice %1047 {offsets = [0, 0], sizes = [2, 16], strides = [1, 1]} : vector<2x48xf32> to vector<2x16xf32>
    %1053 = arith.addf %1051, %1052 : vector<2x16xf32>
    %1054 = arith.negf %1053 : vector<2x16xf32>
    %1055 = math.exp %1054 : vector<2x16xf32>
    %cst_324 = arith.constant 1.000000e+00 : f32
    %1056 = vector.broadcast %cst_324 : f32 to vector<2x16xf32>
    %1057 = arith.addf %1056, %1055 : vector<2x16xf32>
    %1058 = arith.divf %1056, %1057 : vector<2x16xf32>
    %1059 = vector.extract_strided_slice %1043 {offsets = [0, 16], sizes = [2, 16], strides = [1, 1]} : vector<2x48xf32> to vector<2x16xf32>
    %1060 = vector.extract_strided_slice %1047 {offsets = [0, 16], sizes = [2, 16], strides = [1, 1]} : vector<2x48xf32> to vector<2x16xf32>
    %1061 = arith.addf %1059, %1060 : vector<2x16xf32>
    %1062 = arith.negf %1061 : vector<2x16xf32>
    %1063 = math.exp %1062 : vector<2x16xf32>
    %cst_325 = arith.constant 1.000000e+00 : f32
    %1064 = vector.broadcast %cst_325 : f32 to vector<2x16xf32>
    %1065 = arith.addf %1064, %1063 : vector<2x16xf32>
    %1066 = arith.divf %1064, %1065 : vector<2x16xf32>
    %1067 = vector.extract_strided_slice %1043 {offsets = [0, 32], sizes = [2, 16], strides = [1, 1]} : vector<2x48xf32> to vector<2x16xf32>
    %1068 = vector.extract_strided_slice %1047 {offsets = [0, 32], sizes = [2, 16], strides = [1, 1]} : vector<2x48xf32> to vector<2x16xf32>
    %1069 = arith.mulf %1058, %1068 : vector<2x16xf32>
    %1070 = arith.addf %1067, %1069 : vector<2x16xf32>
    %1071 = math.tanh %1070 : vector<2x16xf32>
    %cst_326 = arith.constant 1.000000e+00 : f32
    %1072 = vector.broadcast %cst_326 : f32 to vector<2x16xf32>
    %1073 = arith.subf %1072, %1066 : vector<2x16xf32>
    %1074 = arith.mulf %1073, %1071 : vector<2x16xf32>
    %1075 = arith.mulf %1066, %1023 : vector<2x16xf32>
    %1076 = arith.addf %1074, %1075 : vector<2x16xf32>
    %1077 = vector.extract_strided_slice %1044 {offsets = [0, 0], sizes = [2, 16], strides = [1, 1]} : vector<2x48xf32> to vector<2x16xf32>
    %1078 = vector.extract_strided_slice %1050 {offsets = [0, 0], sizes = [2, 16], strides = [1, 1]} : vector<2x48xf32> to vector<2x16xf32>
    %1079 = arith.addf %1077, %1078 : vector<2x16xf32>
    %1080 = arith.negf %1079 : vector<2x16xf32>
    %1081 = math.exp %1080 : vector<2x16xf32>
    %cst_327 = arith.constant 1.000000e+00 : f32
    %1082 = vector.broadcast %cst_327 : f32 to vector<2x16xf32>
    %1083 = arith.addf %1082, %1081 : vector<2x16xf32>
    %1084 = arith.divf %1082, %1083 : vector<2x16xf32>
    %1085 = vector.extract_strided_slice %1044 {offsets = [0, 16], sizes = [2, 16], strides = [1, 1]} : vector<2x48xf32> to vector<2x16xf32>
    %1086 = vector.extract_strided_slice %1050 {offsets = [0, 16], sizes = [2, 16], strides = [1, 1]} : vector<2x48xf32> to vector<2x16xf32>
    %1087 = arith.addf %1085, %1086 : vector<2x16xf32>
    %1088 = arith.negf %1087 : vector<2x16xf32>
    %1089 = math.exp %1088 : vector<2x16xf32>
    %cst_328 = arith.constant 1.000000e+00 : f32
    %1090 = vector.broadcast %cst_328 : f32 to vector<2x16xf32>
    %1091 = arith.addf %1090, %1089 : vector<2x16xf32>
    %1092 = arith.divf %1090, %1091 : vector<2x16xf32>
    %1093 = vector.extract_strided_slice %1044 {offsets = [0, 32], sizes = [2, 16], strides = [1, 1]} : vector<2x48xf32> to vector<2x16xf32>
    %1094 = vector.extract_strided_slice %1050 {offsets = [0, 32], sizes = [2, 16], strides = [1, 1]} : vector<2x48xf32> to vector<2x16xf32>
    %1095 = arith.mulf %1084, %1094 : vector<2x16xf32>
    %1096 = arith.addf %1093, %1095 : vector<2x16xf32>
    %1097 = math.tanh %1096 : vector<2x16xf32>
    %cst_329 = arith.constant 1.000000e+00 : f32
    %1098 = vector.broadcast %cst_329 : f32 to vector<2x16xf32>
    %1099 = arith.subf %1098, %1092 : vector<2x16xf32>
    %1100 = arith.mulf %1099, %1097 : vector<2x16xf32>
    %1101 = arith.mulf %1092, %1026 : vector<2x16xf32>
    %1102 = arith.addf %1100, %1101 : vector<2x16xf32>
    %1103 = arith.subf %1076, %1023 : vector<2x16xf32>
    %1104 = arith.mulf %1040, %1103 : vector<2x16xf32>
    %1105 = arith.addf %1023, %1104 : vector<2x16xf32>
    %1106 = arith.subf %1102, %1026 : vector<2x16xf32>
    %1107 = arith.mulf %1042, %1106 : vector<2x16xf32>
    %1108 = arith.addf %1026, %1107 : vector<2x16xf32>
    %1109 = arith.mulf %1040, %1076 : vector<2x16xf32>
    %1110 = vector.broadcast %51 : vector<1x16xf32> to vector<2x16xf32>
    %1111 = arith.mulf %1109, %1110 : vector<2x16xf32>
    %cst_330 = arith.constant dense<0.000000e+00> : vector<2xf32>
    %1112 = vector.multi_reduction <add>, %1111, %cst_330 [1] : vector<2x16xf32> to vector<2xf32>
    %1113 = vector.shape_cast %1112 : vector<2xf32> to vector<2x1xf32>
    %c0_331 = arith.constant 0 : index
    %c12_332 = arith.constant 12 : index
    %1114 = vector.load %arg22[%c0_331, %c12_332] : memref<2x16xf32, #tpu.memory_space<vmem>>, vector<2x1xf32>
    tpu.vector_store %arg22[%c0_331, %c12_332], %1113 {strides = array<i32>} : memref<2x16xf32, #tpu.memory_space<vmem>>, vector<2x1xf32>,
    %1115 = arith.mulf %1042, %1102 : vector<2x16xf32>
    %1116 = vector.broadcast %52 : vector<1x16xf32> to vector<2x16xf32>
    %1117 = arith.mulf %1115, %1116 : vector<2x16xf32>
    %cst_333 = arith.constant dense<0.000000e+00> : vector<2xf32>
    %1118 = vector.multi_reduction <add>, %1117, %cst_333 [1] : vector<2x16xf32> to vector<2xf32>
    %1119 = vector.shape_cast %1118 : vector<2xf32> to vector<2x1xf32>
    %c0_334 = arith.constant 0 : index
    %c3_335 = arith.constant 3 : index
    %1120 = vector.load %arg23[%c0_334, %c3_335] : memref<2x16xf32, #tpu.memory_space<vmem>>, vector<2x1xf32>
    tpu.vector_store %arg23[%c0_334, %c3_335], %1119 {strides = array<i32>} : memref<2x16xf32, #tpu.memory_space<vmem>>, vector<2x1xf32>,
    %c13_336 = arith.constant 13 : index
    %c0_337 = arith.constant 0 : index
    %c0_338 = arith.constant 0 : index
    %1121 = vector.load %arg18[%c13_336, %c0_337, %c0_338] : memref<16x2x16xf32, #tpu.memory_space<vmem>>, vector<1x2x16xf32>
    %1122 = vector.shape_cast %1121 : vector<1x2x16xf32> to vector<2x16xf32>
    %c2_339 = arith.constant 2 : index
    %c0_340 = arith.constant 0 : index
    %c0_341 = arith.constant 0 : index
    %1123 = vector.load %arg18[%c2_339, %c0_340, %c0_341] : memref<16x2x16xf32, #tpu.memory_space<vmem>>, vector<1x2x16xf32>
    %1124 = vector.shape_cast %1123 : vector<1x2x16xf32> to vector<2x16xf32>
    %c26_342 = arith.constant 26 : index
    %c0_343 = arith.constant 0 : index
    %1125 = vector.load %arg20[%c26_342, %c0_343] : memref<32x48xf32, #tpu.memory_space<vmem>>, vector<2x48xf32>
    %c4_344 = arith.constant 4 : index
    %c0_345 = arith.constant 0 : index
    %1126 = vector.load %arg21[%c4_344, %c0_345] : memref<32x48xf32, #tpu.memory_space<vmem>>, vector<2x48xf32>
    %cst_346 = arith.constant dense<0.000000e+00> : vector<2x48xf32>
    %1127 = tpu.matmul %1105, %47, %cst_346 {dimension_numbers = #tpu.dot_dimension_numbers<[1], [0], [0], [1], [0, 0, 1, 1], [], []>} : vector<2x16xf32>, vector<16x48xf32>, vector<2x48xf32> -> vector<2x48xf32>
    %1128 = vector.broadcast %48 : vector<1x48xf32> to vector<2x48xf32>
    %1129 = arith.addf %1127, %1128 : vector<2x48xf32>
    %cst_347 = arith.constant dense<0.000000e+00> : vector<2x48xf32>
    %1130 = tpu.matmul %1108, %49, %cst_347 {dimension_numbers = #tpu.dot_dimension_numbers<[1], [0], [0], [1], [0, 0, 1, 1], [], []>} : vector<2x16xf32>, vector<16x48xf32>, vector<2x48xf32> -> vector<2x48xf32>
    %1131 = vector.broadcast %50 : vector<1x48xf32> to vector<2x48xf32>
    %1132 = arith.addf %1130, %1131 : vector<2x48xf32>
    %1133 = vector.extract_strided_slice %1125 {offsets = [0, 0], sizes = [2, 16], strides = [1, 1]} : vector<2x48xf32> to vector<2x16xf32>
    %1134 = vector.extract_strided_slice %1129 {offsets = [0, 0], sizes = [2, 16], strides = [1, 1]} : vector<2x48xf32> to vector<2x16xf32>
    %1135 = arith.addf %1133, %1134 : vector<2x16xf32>
    %1136 = arith.negf %1135 : vector<2x16xf32>
    %1137 = math.exp %1136 : vector<2x16xf32>
    %cst_348 = arith.constant 1.000000e+00 : f32
    %1138 = vector.broadcast %cst_348 : f32 to vector<2x16xf32>
    %1139 = arith.addf %1138, %1137 : vector<2x16xf32>
    %1140 = arith.divf %1138, %1139 : vector<2x16xf32>
    %1141 = vector.extract_strided_slice %1125 {offsets = [0, 16], sizes = [2, 16], strides = [1, 1]} : vector<2x48xf32> to vector<2x16xf32>
    %1142 = vector.extract_strided_slice %1129 {offsets = [0, 16], sizes = [2, 16], strides = [1, 1]} : vector<2x48xf32> to vector<2x16xf32>
    %1143 = arith.addf %1141, %1142 : vector<2x16xf32>
    %1144 = arith.negf %1143 : vector<2x16xf32>
    %1145 = math.exp %1144 : vector<2x16xf32>
    %cst_349 = arith.constant 1.000000e+00 : f32
    %1146 = vector.broadcast %cst_349 : f32 to vector<2x16xf32>
    %1147 = arith.addf %1146, %1145 : vector<2x16xf32>
    %1148 = arith.divf %1146, %1147 : vector<2x16xf32>
    %1149 = vector.extract_strided_slice %1125 {offsets = [0, 32], sizes = [2, 16], strides = [1, 1]} : vector<2x48xf32> to vector<2x16xf32>
    %1150 = vector.extract_strided_slice %1129 {offsets = [0, 32], sizes = [2, 16], strides = [1, 1]} : vector<2x48xf32> to vector<2x16xf32>
    %1151 = arith.mulf %1140, %1150 : vector<2x16xf32>
    %1152 = arith.addf %1149, %1151 : vector<2x16xf32>
    %1153 = math.tanh %1152 : vector<2x16xf32>
    %cst_350 = arith.constant 1.000000e+00 : f32
    %1154 = vector.broadcast %cst_350 : f32 to vector<2x16xf32>
    %1155 = arith.subf %1154, %1148 : vector<2x16xf32>
    %1156 = arith.mulf %1155, %1153 : vector<2x16xf32>
    %1157 = arith.mulf %1148, %1105 : vector<2x16xf32>
    %1158 = arith.addf %1156, %1157 : vector<2x16xf32>
    %1159 = vector.extract_strided_slice %1126 {offsets = [0, 0], sizes = [2, 16], strides = [1, 1]} : vector<2x48xf32> to vector<2x16xf32>
    %1160 = vector.extract_strided_slice %1132 {offsets = [0, 0], sizes = [2, 16], strides = [1, 1]} : vector<2x48xf32> to vector<2x16xf32>
    %1161 = arith.addf %1159, %1160 : vector<2x16xf32>
    %1162 = arith.negf %1161 : vector<2x16xf32>
    %1163 = math.exp %1162 : vector<2x16xf32>
    %cst_351 = arith.constant 1.000000e+00 : f32
    %1164 = vector.broadcast %cst_351 : f32 to vector<2x16xf32>
    %1165 = arith.addf %1164, %1163 : vector<2x16xf32>
    %1166 = arith.divf %1164, %1165 : vector<2x16xf32>
    %1167 = vector.extract_strided_slice %1126 {offsets = [0, 16], sizes = [2, 16], strides = [1, 1]} : vector<2x48xf32> to vector<2x16xf32>
    %1168 = vector.extract_strided_slice %1132 {offsets = [0, 16], sizes = [2, 16], strides = [1, 1]} : vector<2x48xf32> to vector<2x16xf32>
    %1169 = arith.addf %1167, %1168 : vector<2x16xf32>
    %1170 = arith.negf %1169 : vector<2x16xf32>
    %1171 = math.exp %1170 : vector<2x16xf32>
    %cst_352 = arith.constant 1.000000e+00 : f32
    %1172 = vector.broadcast %cst_352 : f32 to vector<2x16xf32>
    %1173 = arith.addf %1172, %1171 : vector<2x16xf32>
    %1174 = arith.divf %1172, %1173 : vector<2x16xf32>
    %1175 = vector.extract_strided_slice %1126 {offsets = [0, 32], sizes = [2, 16], strides = [1, 1]} : vector<2x48xf32> to vector<2x16xf32>
    %1176 = vector.extract_strided_slice %1132 {offsets = [0, 32], sizes = [2, 16], strides = [1, 1]} : vector<2x48xf32> to vector<2x16xf32>
    %1177 = arith.mulf %1166, %1176 : vector<2x16xf32>
    %1178 = arith.addf %1175, %1177 : vector<2x16xf32>
    %1179 = math.tanh %1178 : vector<2x16xf32>
    %cst_353 = arith.constant 1.000000e+00 : f32
    %1180 = vector.broadcast %cst_353 : f32 to vector<2x16xf32>
    %1181 = arith.subf %1180, %1174 : vector<2x16xf32>
    %1182 = arith.mulf %1181, %1179 : vector<2x16xf32>
    %1183 = arith.mulf %1174, %1108 : vector<2x16xf32>
    %1184 = arith.addf %1182, %1183 : vector<2x16xf32>
    %1185 = arith.subf %1158, %1105 : vector<2x16xf32>
    %1186 = arith.mulf %1122, %1185 : vector<2x16xf32>
    %1187 = arith.addf %1105, %1186 : vector<2x16xf32>
    %1188 = arith.subf %1184, %1108 : vector<2x16xf32>
    %1189 = arith.mulf %1124, %1188 : vector<2x16xf32>
    %1190 = arith.addf %1108, %1189 : vector<2x16xf32>
    %1191 = arith.mulf %1122, %1158 : vector<2x16xf32>
    %1192 = vector.broadcast %51 : vector<1x16xf32> to vector<2x16xf32>
    %1193 = arith.mulf %1191, %1192 : vector<2x16xf32>
    %cst_354 = arith.constant dense<0.000000e+00> : vector<2xf32>
    %1194 = vector.multi_reduction <add>, %1193, %cst_354 [1] : vector<2x16xf32> to vector<2xf32>
    %1195 = vector.shape_cast %1194 : vector<2xf32> to vector<2x1xf32>
    %c0_355 = arith.constant 0 : index
    %c13_356 = arith.constant 13 : index
    %1196 = vector.load %arg22[%c0_355, %c13_356] : memref<2x16xf32, #tpu.memory_space<vmem>>, vector<2x1xf32>
    tpu.vector_store %arg22[%c0_355, %c13_356], %1195 {strides = array<i32>} : memref<2x16xf32, #tpu.memory_space<vmem>>, vector<2x1xf32>,
    %1197 = arith.mulf %1124, %1184 : vector<2x16xf32>
    %1198 = vector.broadcast %52 : vector<1x16xf32> to vector<2x16xf32>
    %1199 = arith.mulf %1197, %1198 : vector<2x16xf32>
    %cst_357 = arith.constant dense<0.000000e+00> : vector<2xf32>
    %1200 = vector.multi_reduction <add>, %1199, %cst_357 [1] : vector<2x16xf32> to vector<2xf32>
    %1201 = vector.shape_cast %1200 : vector<2xf32> to vector<2x1xf32>
    %c0_358 = arith.constant 0 : index
    %c2_359 = arith.constant 2 : index
    %1202 = vector.load %arg23[%c0_358, %c2_359] : memref<2x16xf32, #tpu.memory_space<vmem>>, vector<2x1xf32>
    tpu.vector_store %arg23[%c0_358, %c2_359], %1201 {strides = array<i32>} : memref<2x16xf32, #tpu.memory_space<vmem>>, vector<2x1xf32>,
    %c14_360 = arith.constant 14 : index
    %c0_361 = arith.constant 0 : index
    %c0_362 = arith.constant 0 : index
    %1203 = vector.load %arg18[%c14_360, %c0_361, %c0_362] : memref<16x2x16xf32, #tpu.memory_space<vmem>>, vector<1x2x16xf32>
    %1204 = vector.shape_cast %1203 : vector<1x2x16xf32> to vector<2x16xf32>
    %c1_363 = arith.constant 1 : index
    %c0_364 = arith.constant 0 : index
    %c0_365 = arith.constant 0 : index
    %1205 = vector.load %arg18[%c1_363, %c0_364, %c0_365] : memref<16x2x16xf32, #tpu.memory_space<vmem>>, vector<1x2x16xf32>
    %1206 = vector.shape_cast %1205 : vector<1x2x16xf32> to vector<2x16xf32>
    %c28_366 = arith.constant 28 : index
    %c0_367 = arith.constant 0 : index
    %1207 = vector.load %arg20[%c28_366, %c0_367] : memref<32x48xf32, #tpu.memory_space<vmem>>, vector<2x48xf32>
    %c2_368 = arith.constant 2 : index
    %c0_369 = arith.constant 0 : index
    %1208 = vector.load %arg21[%c2_368, %c0_369] : memref<32x48xf32, #tpu.memory_space<vmem>>, vector<2x48xf32>
    %cst_370 = arith.constant dense<0.000000e+00> : vector<2x48xf32>
    %1209 = tpu.matmul %1187, %47, %cst_370 {dimension_numbers = #tpu.dot_dimension_numbers<[1], [0], [0], [1], [0, 0, 1, 1], [], []>} : vector<2x16xf32>, vector<16x48xf32>, vector<2x48xf32> -> vector<2x48xf32>
    %1210 = vector.broadcast %48 : vector<1x48xf32> to vector<2x48xf32>
    %1211 = arith.addf %1209, %1210 : vector<2x48xf32>
    %cst_371 = arith.constant dense<0.000000e+00> : vector<2x48xf32>
    %1212 = tpu.matmul %1190, %49, %cst_371 {dimension_numbers = #tpu.dot_dimension_numbers<[1], [0], [0], [1], [0, 0, 1, 1], [], []>} : vector<2x16xf32>, vector<16x48xf32>, vector<2x48xf32> -> vector<2x48xf32>
    %1213 = vector.broadcast %50 : vector<1x48xf32> to vector<2x48xf32>
    %1214 = arith.addf %1212, %1213 : vector<2x48xf32>
    %1215 = vector.extract_strided_slice %1207 {offsets = [0, 0], sizes = [2, 16], strides = [1, 1]} : vector<2x48xf32> to vector<2x16xf32>
    %1216 = vector.extract_strided_slice %1211 {offsets = [0, 0], sizes = [2, 16], strides = [1, 1]} : vector<2x48xf32> to vector<2x16xf32>
    %1217 = arith.addf %1215, %1216 : vector<2x16xf32>
    %1218 = arith.negf %1217 : vector<2x16xf32>
    %1219 = math.exp %1218 : vector<2x16xf32>
    %cst_372 = arith.constant 1.000000e+00 : f32
    %1220 = vector.broadcast %cst_372 : f32 to vector<2x16xf32>
    %1221 = arith.addf %1220, %1219 : vector<2x16xf32>
    %1222 = arith.divf %1220, %1221 : vector<2x16xf32>
    %1223 = vector.extract_strided_slice %1207 {offsets = [0, 16], sizes = [2, 16], strides = [1, 1]} : vector<2x48xf32> to vector<2x16xf32>
    %1224 = vector.extract_strided_slice %1211 {offsets = [0, 16], sizes = [2, 16], strides = [1, 1]} : vector<2x48xf32> to vector<2x16xf32>
    %1225 = arith.addf %1223, %1224 : vector<2x16xf32>
    %1226 = arith.negf %1225 : vector<2x16xf32>
    %1227 = math.exp %1226 : vector<2x16xf32>
    %cst_373 = arith.constant 1.000000e+00 : f32
    %1228 = vector.broadcast %cst_373 : f32 to vector<2x16xf32>
    %1229 = arith.addf %1228, %1227 : vector<2x16xf32>
    %1230 = arith.divf %1228, %1229 : vector<2x16xf32>
    %1231 = vector.extract_strided_slice %1207 {offsets = [0, 32], sizes = [2, 16], strides = [1, 1]} : vector<2x48xf32> to vector<2x16xf32>
    %1232 = vector.extract_strided_slice %1211 {offsets = [0, 32], sizes = [2, 16], strides = [1, 1]} : vector<2x48xf32> to vector<2x16xf32>
    %1233 = arith.mulf %1222, %1232 : vector<2x16xf32>
    %1234 = arith.addf %1231, %1233 : vector<2x16xf32>
    %1235 = math.tanh %1234 : vector<2x16xf32>
    %cst_374 = arith.constant 1.000000e+00 : f32
    %1236 = vector.broadcast %cst_374 : f32 to vector<2x16xf32>
    %1237 = arith.subf %1236, %1230 : vector<2x16xf32>
    %1238 = arith.mulf %1237, %1235 : vector<2x16xf32>
    %1239 = arith.mulf %1230, %1187 : vector<2x16xf32>
    %1240 = arith.addf %1238, %1239 : vector<2x16xf32>
    %1241 = vector.extract_strided_slice %1208 {offsets = [0, 0], sizes = [2, 16], strides = [1, 1]} : vector<2x48xf32> to vector<2x16xf32>
    %1242 = vector.extract_strided_slice %1214 {offsets = [0, 0], sizes = [2, 16], strides = [1, 1]} : vector<2x48xf32> to vector<2x16xf32>
    %1243 = arith.addf %1241, %1242 : vector<2x16xf32>
    %1244 = arith.negf %1243 : vector<2x16xf32>
    %1245 = math.exp %1244 : vector<2x16xf32>
    %cst_375 = arith.constant 1.000000e+00 : f32
    %1246 = vector.broadcast %cst_375 : f32 to vector<2x16xf32>
    %1247 = arith.addf %1246, %1245 : vector<2x16xf32>
    %1248 = arith.divf %1246, %1247 : vector<2x16xf32>
    %1249 = vector.extract_strided_slice %1208 {offsets = [0, 16], sizes = [2, 16], strides = [1, 1]} : vector<2x48xf32> to vector<2x16xf32>
    %1250 = vector.extract_strided_slice %1214 {offsets = [0, 16], sizes = [2, 16], strides = [1, 1]} : vector<2x48xf32> to vector<2x16xf32>
    %1251 = arith.addf %1249, %1250 : vector<2x16xf32>
    %1252 = arith.negf %1251 : vector<2x16xf32>
    %1253 = math.exp %1252 : vector<2x16xf32>
    %cst_376 = arith.constant 1.000000e+00 : f32
    %1254 = vector.broadcast %cst_376 : f32 to vector<2x16xf32>
    %1255 = arith.addf %1254, %1253 : vector<2x16xf32>
    %1256 = arith.divf %1254, %1255 : vector<2x16xf32>
    %1257 = vector.extract_strided_slice %1208 {offsets = [0, 32], sizes = [2, 16], strides = [1, 1]} : vector<2x48xf32> to vector<2x16xf32>
    %1258 = vector.extract_strided_slice %1214 {offsets = [0, 32], sizes = [2, 16], strides = [1, 1]} : vector<2x48xf32> to vector<2x16xf32>
    %1259 = arith.mulf %1248, %1258 : vector<2x16xf32>
    %1260 = arith.addf %1257, %1259 : vector<2x16xf32>
    %1261 = math.tanh %1260 : vector<2x16xf32>
    %cst_377 = arith.constant 1.000000e+00 : f32
    %1262 = vector.broadcast %cst_377 : f32 to vector<2x16xf32>
    %1263 = arith.subf %1262, %1256 : vector<2x16xf32>
    %1264 = arith.mulf %1263, %1261 : vector<2x16xf32>
    %1265 = arith.mulf %1256, %1190 : vector<2x16xf32>
    %1266 = arith.addf %1264, %1265 : vector<2x16xf32>
    %1267 = arith.subf %1240, %1187 : vector<2x16xf32>
    %1268 = arith.mulf %1204, %1267 : vector<2x16xf32>
    %1269 = arith.addf %1187, %1268 : vector<2x16xf32>
    %1270 = arith.subf %1266, %1190 : vector<2x16xf32>
    %1271 = arith.mulf %1206, %1270 : vector<2x16xf32>
    %1272 = arith.addf %1190, %1271 : vector<2x16xf32>
    %1273 = arith.mulf %1204, %1240 : vector<2x16xf32>
    %1274 = vector.broadcast %51 : vector<1x16xf32> to vector<2x16xf32>
    %1275 = arith.mulf %1273, %1274 : vector<2x16xf32>
    %cst_378 = arith.constant dense<0.000000e+00> : vector<2xf32>
    %1276 = vector.multi_reduction <add>, %1275, %cst_378 [1] : vector<2x16xf32> to vector<2xf32>
    %1277 = vector.shape_cast %1276 : vector<2xf32> to vector<2x1xf32>
    %c0_379 = arith.constant 0 : index
    %c14_380 = arith.constant 14 : index
    %1278 = vector.load %arg22[%c0_379, %c14_380] : memref<2x16xf32, #tpu.memory_space<vmem>>, vector<2x1xf32>
    tpu.vector_store %arg22[%c0_379, %c14_380], %1277 {strides = array<i32>} : memref<2x16xf32, #tpu.memory_space<vmem>>, vector<2x1xf32>,
    %1279 = arith.mulf %1206, %1266 : vector<2x16xf32>
    %1280 = vector.broadcast %52 : vector<1x16xf32> to vector<2x16xf32>
    %1281 = arith.mulf %1279, %1280 : vector<2x16xf32>
    %cst_381 = arith.constant dense<0.000000e+00> : vector<2xf32>
    %1282 = vector.multi_reduction <add>, %1281, %cst_381 [1] : vector<2x16xf32> to vector<2xf32>
    %1283 = vector.shape_cast %1282 : vector<2xf32> to vector<2x1xf32>
    %c0_382 = arith.constant 0 : index
    %c1_383 = arith.constant 1 : index
    %1284 = vector.load %arg23[%c0_382, %c1_383] : memref<2x16xf32, #tpu.memory_space<vmem>>, vector<2x1xf32>
    tpu.vector_store %arg23[%c0_382, %c1_383], %1283 {strides = array<i32>} : memref<2x16xf32, #tpu.memory_space<vmem>>, vector<2x1xf32>,
    %c15_384 = arith.constant 15 : index
    %c0_385 = arith.constant 0 : index
    %c0_386 = arith.constant 0 : index
    %1285 = vector.load %arg18[%c15_384, %c0_385, %c0_386] : memref<16x2x16xf32, #tpu.memory_space<vmem>>, vector<1x2x16xf32>
    %1286 = vector.shape_cast %1285 : vector<1x2x16xf32> to vector<2x16xf32>
    %c0_387 = arith.constant 0 : index
    %c0_388 = arith.constant 0 : index
    %c0_389 = arith.constant 0 : index
    %1287 = vector.load %arg18[%c0_387, %c0_388, %c0_389] : memref<16x2x16xf32, #tpu.memory_space<vmem>>, vector<1x2x16xf32>
    %1288 = vector.shape_cast %1287 : vector<1x2x16xf32> to vector<2x16xf32>
    %c30_390 = arith.constant 30 : index
    %c0_391 = arith.constant 0 : index
    %1289 = vector.load %arg20[%c30_390, %c0_391] : memref<32x48xf32, #tpu.memory_space<vmem>>, vector<2x48xf32>
    %c0_392 = arith.constant 0 : index
    %c0_393 = arith.constant 0 : index
    %1290 = vector.load %arg21[%c0_392, %c0_393] : memref<32x48xf32, #tpu.memory_space<vmem>>, vector<2x48xf32>
    %cst_394 = arith.constant dense<0.000000e+00> : vector<2x48xf32>
    %1291 = tpu.matmul %1269, %47, %cst_394 {dimension_numbers = #tpu.dot_dimension_numbers<[1], [0], [0], [1], [0, 0, 1, 1], [], []>} : vector<2x16xf32>, vector<16x48xf32>, vector<2x48xf32> -> vector<2x48xf32>
    %1292 = vector.broadcast %48 : vector<1x48xf32> to vector<2x48xf32>
    %1293 = arith.addf %1291, %1292 : vector<2x48xf32>
    %cst_395 = arith.constant dense<0.000000e+00> : vector<2x48xf32>
    %1294 = tpu.matmul %1272, %49, %cst_395 {dimension_numbers = #tpu.dot_dimension_numbers<[1], [0], [0], [1], [0, 0, 1, 1], [], []>} : vector<2x16xf32>, vector<16x48xf32>, vector<2x48xf32> -> vector<2x48xf32>
    %1295 = vector.broadcast %50 : vector<1x48xf32> to vector<2x48xf32>
    %1296 = arith.addf %1294, %1295 : vector<2x48xf32>
    %1297 = vector.extract_strided_slice %1289 {offsets = [0, 0], sizes = [2, 16], strides = [1, 1]} : vector<2x48xf32> to vector<2x16xf32>
    %1298 = vector.extract_strided_slice %1293 {offsets = [0, 0], sizes = [2, 16], strides = [1, 1]} : vector<2x48xf32> to vector<2x16xf32>
    %1299 = arith.addf %1297, %1298 : vector<2x16xf32>
    %1300 = arith.negf %1299 : vector<2x16xf32>
    %1301 = math.exp %1300 : vector<2x16xf32>
    %cst_396 = arith.constant 1.000000e+00 : f32
    %1302 = vector.broadcast %cst_396 : f32 to vector<2x16xf32>
    %1303 = arith.addf %1302, %1301 : vector<2x16xf32>
    %1304 = arith.divf %1302, %1303 : vector<2x16xf32>
    %1305 = vector.extract_strided_slice %1289 {offsets = [0, 16], sizes = [2, 16], strides = [1, 1]} : vector<2x48xf32> to vector<2x16xf32>
    %1306 = vector.extract_strided_slice %1293 {offsets = [0, 16], sizes = [2, 16], strides = [1, 1]} : vector<2x48xf32> to vector<2x16xf32>
    %1307 = arith.addf %1305, %1306 : vector<2x16xf32>
    %1308 = arith.negf %1307 : vector<2x16xf32>
    %1309 = math.exp %1308 : vector<2x16xf32>
    %cst_397 = arith.constant 1.000000e+00 : f32
    %1310 = vector.broadcast %cst_397 : f32 to vector<2x16xf32>
    %1311 = arith.addf %1310, %1309 : vector<2x16xf32>
    %1312 = arith.divf %1310, %1311 : vector<2x16xf32>
    %1313 = vector.extract_strided_slice %1289 {offsets = [0, 32], sizes = [2, 16], strides = [1, 1]} : vector<2x48xf32> to vector<2x16xf32>
    %1314 = vector.extract_strided_slice %1293 {offsets = [0, 32], sizes = [2, 16], strides = [1, 1]} : vector<2x48xf32> to vector<2x16xf32>
    %1315 = arith.mulf %1304, %1314 : vector<2x16xf32>
    %1316 = arith.addf %1313, %1315 : vector<2x16xf32>
    %1317 = math.tanh %1316 : vector<2x16xf32>
    %cst_398 = arith.constant 1.000000e+00 : f32
    %1318 = vector.broadcast %cst_398 : f32 to vector<2x16xf32>
    %1319 = arith.subf %1318, %1312 : vector<2x16xf32>
    %1320 = arith.mulf %1319, %1317 : vector<2x16xf32>
    %1321 = arith.mulf %1312, %1269 : vector<2x16xf32>
    %1322 = arith.addf %1320, %1321 : vector<2x16xf32>
    %1323 = vector.extract_strided_slice %1290 {offsets = [0, 0], sizes = [2, 16], strides = [1, 1]} : vector<2x48xf32> to vector<2x16xf32>
    %1324 = vector.extract_strided_slice %1296 {offsets = [0, 0], sizes = [2, 16], strides = [1, 1]} : vector<2x48xf32> to vector<2x16xf32>
    %1325 = arith.addf %1323, %1324 : vector<2x16xf32>
    %1326 = arith.negf %1325 : vector<2x16xf32>
    %1327 = math.exp %1326 : vector<2x16xf32>
    %cst_399 = arith.constant 1.000000e+00 : f32
    %1328 = vector.broadcast %cst_399 : f32 to vector<2x16xf32>
    %1329 = arith.addf %1328, %1327 : vector<2x16xf32>
    %1330 = arith.divf %1328, %1329 : vector<2x16xf32>
    %1331 = vector.extract_strided_slice %1290 {offsets = [0, 16], sizes = [2, 16], strides = [1, 1]} : vector<2x48xf32> to vector<2x16xf32>
    %1332 = vector.extract_strided_slice %1296 {offsets = [0, 16], sizes = [2, 16], strides = [1, 1]} : vector<2x48xf32> to vector<2x16xf32>
    %1333 = arith.addf %1331, %1332 : vector<2x16xf32>
    %1334 = arith.negf %1333 : vector<2x16xf32>
    %1335 = math.exp %1334 : vector<2x16xf32>
    %cst_400 = arith.constant 1.000000e+00 : f32
    %1336 = vector.broadcast %cst_400 : f32 to vector<2x16xf32>
    %1337 = arith.addf %1336, %1335 : vector<2x16xf32>
    %1338 = arith.divf %1336, %1337 : vector<2x16xf32>
    %1339 = vector.extract_strided_slice %1290 {offsets = [0, 32], sizes = [2, 16], strides = [1, 1]} : vector<2x48xf32> to vector<2x16xf32>
    %1340 = vector.extract_strided_slice %1296 {offsets = [0, 32], sizes = [2, 16], strides = [1, 1]} : vector<2x48xf32> to vector<2x16xf32>
    %1341 = arith.mulf %1330, %1340 : vector<2x16xf32>
    %1342 = arith.addf %1339, %1341 : vector<2x16xf32>
    %1343 = math.tanh %1342 : vector<2x16xf32>
    %cst_401 = arith.constant 1.000000e+00 : f32
    %1344 = vector.broadcast %cst_401 : f32 to vector<2x16xf32>
    %1345 = arith.subf %1344, %1338 : vector<2x16xf32>
    %1346 = arith.mulf %1345, %1343 : vector<2x16xf32>
    %1347 = arith.mulf %1338, %1272 : vector<2x16xf32>
    %1348 = arith.addf %1346, %1347 : vector<2x16xf32>
    %1349 = arith.mulf %1286, %1322 : vector<2x16xf32>
    %1350 = vector.broadcast %51 : vector<1x16xf32> to vector<2x16xf32>
    %1351 = arith.mulf %1349, %1350 : vector<2x16xf32>
    %cst_402 = arith.constant dense<0.000000e+00> : vector<2xf32>
    %1352 = vector.multi_reduction <add>, %1351, %cst_402 [1] : vector<2x16xf32> to vector<2xf32>
    %1353 = vector.shape_cast %1352 : vector<2xf32> to vector<2x1xf32>
    %c0_403 = arith.constant 0 : index
    %c15_404 = arith.constant 15 : index
    %1354 = vector.load %arg22[%c0_403, %c15_404] : memref<2x16xf32, #tpu.memory_space<vmem>>, vector<2x1xf32>
    tpu.vector_store %arg22[%c0_403, %c15_404], %1353 {strides = array<i32>} : memref<2x16xf32, #tpu.memory_space<vmem>>, vector<2x1xf32>,
    %1355 = arith.mulf %1288, %1348 : vector<2x16xf32>
    %1356 = vector.broadcast %52 : vector<1x16xf32> to vector<2x16xf32>
    %1357 = arith.mulf %1355, %1356 : vector<2x16xf32>
    %cst_405 = arith.constant dense<0.000000e+00> : vector<2xf32>
    %1358 = vector.multi_reduction <add>, %1357, %cst_405 [1] : vector<2x16xf32> to vector<2xf32>
    %1359 = vector.shape_cast %1358 : vector<2xf32> to vector<2x1xf32>
    %c0_406 = arith.constant 0 : index
    %c0_407 = arith.constant 0 : index
    %1360 = vector.load %arg23[%c0_406, %c0_407] : memref<2x16xf32, #tpu.memory_space<vmem>>, vector<2x1xf32>
    tpu.vector_store %arg23[%c0_406, %c0_407], %1359 {strides = array<i32>} : memref<2x16xf32, #tpu.memory_space<vmem>>, vector<2x1xf32>,
    %c0_408 = arith.constant 0 : index
    %c0_409 = arith.constant 0 : index
    %1361 = vector.load %arg22[%c0_408, %c0_409] : memref<2x16xf32, #tpu.memory_space<vmem>>, vector<2x16xf32>
    %c0_410 = arith.constant 0 : index
    %c0_411 = arith.constant 0 : index
    %1362 = vector.load %arg23[%c0_410, %c0_411] : memref<2x16xf32, #tpu.memory_space<vmem>>, vector<2x16xf32>
    %1363 = arith.addf %1361, %1362 : vector<2x16xf32>
    %c0_412 = arith.constant 0 : index
    %c0_413 = arith.constant 0 : index
    %1364 = vector.load %arg17[%c0_412, %c0_413] : memref<1x1xf32, #tpu.memory_space<vmem>>, vector<1x1xf32>
    %1365 = vector.broadcast %1364 : vector<1x1xf32> to vector<2x16xf32>
    %1366 = arith.addf %1363, %1365 : vector<2x16xf32>
    %1367 = arith.negf %1366 : vector<2x16xf32>
    %1368 = math.exp %1367 : vector<2x16xf32>
    %cst_414 = arith.constant 1.000000e+00 : f32
    %1369 = vector.broadcast %cst_414 : f32 to vector<2x16xf32>
    %1370 = arith.addf %1369, %1368 : vector<2x16xf32>
    %1371 = arith.divf %1369, %1370 : vector<2x16xf32>
    %c0_415 = arith.constant 0 : index
    %c0_416 = arith.constant 0 : index
    %1372 = vector.load %arg19[%c0_415, %c0_416] : memref<2x16xf32, #tpu.memory_space<vmem>>, vector<2x16xf32>
    tpu.vector_store %arg19[%c0_415, %c0_416], %1371 {strides = array<i32>} : memref<2x16xf32, #tpu.memory_space<vmem>>, vector<2x16xf32>,
    return
  }
}

</mosaic_0001>

<llo_original>
// kernel: tpu_custom_call.1
$region0: #{tpu_custom_call.1}
  #allocation0 [shape = 'u32[]', space=smem, size = 0x4, offset = 0x4, fixed_abs, tag = 'smem constant byte address 0x4 - core index']
  #allocation1 [shape = 'u32[144,128]{1,0:T(1,128)}', space=vmem, size = 0x12000, scoped, tag = 'internal scratch']
  #allocation2 [shape = 'f32[32,48]{1,0:T(8,128)}', space=vmem, size = 0x4000, scoped, tag = 'scratch operand']
  #allocation3 [shape = 'f32[32,48]{1,0:T(8,128)}', space=vmem, size = 0x4000, scoped, tag = 'scratch operand']
  #allocation4 [shape = 'f32[2,16]{1,0:T(2,128)}', space=vmem, size = 0x400, scoped, tag = 'scratch operand']
  #allocation5 [shape = 'f32[2,16]{1,0:T(2,128)}', space=vmem, size = 0x400, scoped, tag = 'scratch operand']
  #allocation6 [shape = 'f32[1,1]{1,0:T(1,128)S(1)}', space=vmem, size = 0x200, scoped, tag = 'scoped memory for tpu_custom_call.1']
  %s0 = inlined_call_operand.vmem [shape: f32[32,24], index: 0, kind: input, shape index: {}]
  %s1 = inlined_call_operand.vmem [shape: f32[24,16], index: 1, kind: input, shape index: {}]
  %s2 = inlined_call_operand.vmem [shape: f32[1,16], index: 2, kind: input, shape index: {}]
  %s3 = inlined_call_operand.hbm [shape: f32[1,16], index: 3, kind: input, shape index: {}]
  %s4 = inlined_call_operand.hbm [shape: f32[1,16], index: 4, kind: input, shape index: {}]
  %s5 = inlined_call_operand.vmem [shape: f32[16,16], index: 5, kind: input, shape index: {}]
  %s6 = inlined_call_operand.hbm [shape: f32[1,16], index: 6, kind: input, shape index: {}]
  %s7 = inlined_call_operand.vmem [shape: f32[16,48], index: 7, kind: input, shape index: {}]
  %s8 = inlined_call_operand.hbm [shape: f32[1,48], index: 8, kind: input, shape index: {}]
  %s9 = inlined_call_operand.vmem [shape: f32[16,48], index: 9, kind: input, shape index: {}]
  %s10 = inlined_call_operand.hbm [shape: f32[1,48], index: 10, kind: input, shape index: {}]
  %s11 = inlined_call_operand.vmem [shape: f32[16,48], index: 11, kind: input, shape index: {}]
  %s12 = inlined_call_operand.vmem [shape: f32[1,48], index: 12, kind: input, shape index: {}]
  %s13 = inlined_call_operand.vmem [shape: f32[16,48], index: 13, kind: input, shape index: {}]
  %s14 = inlined_call_operand.vmem [shape: f32[1,48], index: 14, kind: input, shape index: {}]
  %s15 = inlined_call_operand.vmem [shape: f32[1,16], index: 15, kind: input, shape index: {}]
  %s16 = inlined_call_operand.vmem [shape: f32[1,16], index: 16, kind: input, shape index: {}]
  %s17 = inlined_call_operand.<no memory space> [shape: f32[1,1], index: 17, kind: input, shape index: {}]
  %s18 = inlined_call_operand.vmem [shape: f32[16,2,16], index: 18, kind: input, shape index: {}]
  %s19 = inlined_call_operand.hbm [shape: f32[2,16], index: 19, kind: output, shape index: {}]
  %s20 = sld [smem:[#allocation0]]
  $region106: #{tpu_custom_call.1} parent=0
    _
  %s22 = ssub.s32 1, %s20
  %s23 = scalar_select 0, %s22, %s20
  %v24 = vstv %s17
  %25 = vst [vmem:[#allocation6] sm:$0x1] %v24
  $region1: #{tpu_custom_call.1} parent=0
    #allocation7 [shape = 'u8[512]{0}', space=vmem, size = 0x400, scoped, tag = 'input window, operand 3, single buffered']
    #allocation8 [shape = 's32[1]{0}', space=sflag, size = 0x4, scoped, tag = 'scoped memory for tpu_custom_call.1']
    #allocation9 [shape = 's32[1]{0}', space=sflag, size = 0x4, scoped, tag = 'scoped memory for tpu_custom_call.1']
    #allocation10 [shape = 'u8[512]{0}', space=vmem, size = 0x400, scoped, tag = 'input window, operand 4, single buffered']
    #allocation11 [shape = 's32[1]{0}', space=sflag, size = 0x4, scoped, tag = 'scoped memory for tpu_custom_call.1']
    #allocation12 [shape = 'u8[512]{0}', space=vmem, size = 0x400, scoped, tag = 'input window, operand 6, single buffered']
    #allocation13 [shape = 'u8[512]{0}', space=vmem, size = 0x400, scoped, tag = 'input window, operand 8, single buffered']
    #allocation14 [shape = 's32[1]{0}', space=sflag, size = 0x4, scoped, tag = 'scoped memory for tpu_custom_call.1']
    #allocation15 [shape = 'u8[512]{0}', space=vmem, size = 0x400, scoped, tag = 'input window, operand 10, single buffered']
    #allocation16 [shape = 'u8[1024]{0}', space=vmem, size = 0x400, scoped, tag = 'output window, operand 0, single buffered']
    %26 = vsyncpa [#allocation8], 0
    %27 = vsyncpa [#allocation11], 0
    %28 = vsyncpa [#allocation14], 0
    %29 = vsyncpa [#allocation9], 0
    // Predicated region
    $region2: #{tpu_custom_call.1} parent=1 // pred_check
      _
    $region3: #{tpu_custom_call.1} parent=1 // pred_check_branch
      %31 = sbr.rel (0) target = $region5
    $region4: #{tpu_custom_call.1} parent=1 // pred_region
      _
    $region5: #{tpu_custom_call.1} parent=1 // pred_fallthru
      _
    // Predicated region
    $region6: #{tpu_custom_call.1} parent=1 // pred_check
      _
    $region7: #{tpu_custom_call.1} parent=1 // pred_check_branch
      %33 = sbr.rel (0) target = $region9
    $region8: #{tpu_custom_call.1} parent=1 // pred_region
      _
    $region9: #{tpu_custom_call.1} parent=1 // pred_fallthru
      _
    // Predicated region
    $region10: #{tpu_custom_call.1} parent=1 // pred_check
      _
    $region11: #{tpu_custom_call.1} parent=1 // pred_check_branch
      %35 = sbr.rel (0) target = $region13
    $region12: #{tpu_custom_call.1} parent=1 // pred_region
      _
    $region13: #{tpu_custom_call.1} parent=1 // pred_fallthru
      _
    // Predicated region
    $region14: #{tpu_custom_call.1} parent=1 // pred_check
      _
    $region15: #{tpu_custom_call.1} parent=1 // pred_check_branch
      %37 = sbr.rel (0) target = $region17
    $region16: #{tpu_custom_call.1} parent=1 // pred_region
      %s39 = ssub.s32 16, 16
      %40 = vsyncadd [#allocation8], %s39
      %s42 = sshll.u32 [#allocation7], 4
      %s43 = int_to_ptr.vmem [resolvable:$true] %s42
      %45 = dma.hbm_to_vmem [thread:$0]  %s3, 16, %s43, [#allocation8]
    $region17: #{tpu_custom_call.1} parent=1 // pred_fallthru
      _
    // Predicated region
    $region18: #{tpu_custom_call.1} parent=1 // pred_check
      _
    $region19: #{tpu_custom_call.1} parent=1 // pred_check_branch
      %47 = sbr.rel (0) target = $region21
    $region20: #{tpu_custom_call.1} parent=1 // pred_region
      %s49 = ssub.s32 16, 16
      %50 = vsyncadd [#allocation11], %s49
      %s52 = sshll.u32 [#allocation10], 4
      %s53 = int_to_ptr.vmem [resolvable:$true] %s52
      %55 = dma.hbm_to_vmem [thread:$0]  %s4, 16, %s53, [#allocation11]
    $region21: #{tpu_custom_call.1} parent=1 // pred_fallthru
      _
    // Predicated region
    $region22: #{tpu_custom_call.1} parent=1 // pred_check
      _
    $region23: #{tpu_custom_call.1} parent=1 // pred_check_branch
      %57 = sbr.rel (0) target = $region25
    $region24: #{tpu_custom_call.1} parent=1 // pred_region
      _
    $region25: #{tpu_custom_call.1} parent=1 // pred_fallthru
      _
    // Predicated region
    $region26: #{tpu_custom_call.1} parent=1 // pred_check
      _
    $region27: #{tpu_custom_call.1} parent=1 // pred_check_branch
      %59 = sbr.rel (0) target = $region29
    $region28: #{tpu_custom_call.1} parent=1 // pred_region
      %s61 = ssub.s32 16, 16
      %62 = vsyncadd [#allocation11], %s61
      %s64 = sshll.u32 [#allocation12], 4
      %s65 = int_to_ptr.vmem [resolvable:$true] %s64
      %67 = dma.hbm_to_vmem [thread:$0]  %s6, 16, %s65, [#allocation11]
    $region29: #{tpu_custom_call.1} parent=1 // pred_fallthru
      _
    // Predicated region
    $region30: #{tpu_custom_call.1} parent=1 // pred_check
      _
    $region31: #{tpu_custom_call.1} parent=1 // pred_check_branch
      %69 = sbr.rel (0) target = $region33
    $region32: #{tpu_custom_call.1} parent=1 // pred_region
      _
    $region33: #{tpu_custom_call.1} parent=1 // pred_fallthru
      _
    // Predicated region
    $region34: #{tpu_custom_call.1} parent=1 // pred_check
      _
    $region35: #{tpu_custom_call.1} parent=1 // pred_check_branch
      %71 = sbr.rel (0) target = $region37
    $region36: #{tpu_custom_call.1} parent=1 // pred_region
      %s73 = ssub.s32 16, 16
      %74 = vsyncadd [#allocation14], %s73
      %s76 = sshll.u32 [#allocation13], 4
      %s77 = int_to_ptr.vmem [resolvable:$true] %s76
      %79 = dma.hbm_to_vmem [thread:$0]  %s8, 16, %s77, [#allocation14]
    $region37: #{tpu_custom_call.1} parent=1 // pred_fallthru
      _
    // Predicated region
    $region38: #{tpu_custom_call.1} parent=1 // pred_check
      _
    $region39: #{tpu_custom_call.1} parent=1 // pred_check_branch
      %81 = sbr.rel (0) target = $region41
    $region40: #{tpu_custom_call.1} parent=1 // pred_region
      _
    $region41: #{tpu_custom_call.1} parent=1 // pred_fallthru
      _
    // Predicated region
    $region42: #{tpu_custom_call.1} parent=1 // pred_check
      _
    $region43: #{tpu_custom_call.1} parent=1 // pred_check_branch
      %83 = sbr.rel (0) target = $region45
    $region44: #{tpu_custom_call.1} parent=1 // pred_region
      %s85 = ssub.s32 16, 16
      %86 = vsyncadd [#allocation14], %s85
      %s88 = sshll.u32 [#allocation15], 4
      %s89 = int_to_ptr.vmem [resolvable:$true] %s88
      %91 = dma.hbm_to_vmem [thread:$0]  %s10, 16, %s89, [#allocation14]
    $region45: #{tpu_custom_call.1} parent=1 // pred_fallthru
      _
    // Predicated region
    $region46: #{tpu_custom_call.1} parent=1 // pred_check
      _
    $region47: #{tpu_custom_call.1} parent=1 // pred_check_branch
      %93 = sbr.rel (0) target = $region49
    $region48: #{tpu_custom_call.1} parent=1 // pred_region
      _
    $region49: #{tpu_custom_call.1} parent=1 // pred_fallthru
      _
    // Predicated region
    $region50: #{tpu_custom_call.1} parent=1 // pred_check
      _
    $region51: #{tpu_custom_call.1} parent=1 // pred_check_branch
      %95 = sbr.rel (0) target = $region53
    $region52: #{tpu_custom_call.1} parent=1 // pred_region
      _
    $region53: #{tpu_custom_call.1} parent=1 // pred_fallthru
      _
    // Predicated region
    $region54: #{tpu_custom_call.1} parent=1 // pred_check
      _
    $region55: #{tpu_custom_call.1} parent=1 // pred_check_branch
      %97 = sbr.rel (0) target = $region57
    $region56: #{tpu_custom_call.1} parent=1 // pred_region
      _
    $region57: #{tpu_custom_call.1} parent=1 // pred_fallthru
      _
    // Predicated region
    $region58: #{tpu_custom_call.1} parent=1 // pred_check
      _
    $region59: #{tpu_custom_call.1} parent=1 // pred_check_branch
      %99 = sbr.rel (0) target = $region61
    $region60: #{tpu_custom_call.1} parent=1 // pred_region
      _
    $region61: #{tpu_custom_call.1} parent=1 // pred_fallthru
      _
    // Predicated region
    $region62: #{tpu_custom_call.1} parent=1 // pred_check
      _
    $region63: #{tpu_custom_call.1} parent=1 // pred_check_branch
      %101 = sbr.rel (0) target = $region65
    $region64: #{tpu_custom_call.1} parent=1 // pred_region
      _
    $region65: #{tpu_custom_call.1} parent=1 // pred_fallthru
      _
    // Predicated region
    $region66: #{tpu_custom_call.1} parent=1 // pred_check
      _
    $region67: #{tpu_custom_call.1} parent=1 // pred_check_branch
      %103 = sbr.rel (0) target = $region69
    $region68: #{tpu_custom_call.1} parent=1 // pred_region
      _
    $region69: #{tpu_custom_call.1} parent=1 // pred_fallthru
      _
    // Predicated region
    $region70: #{tpu_custom_call.1} parent=1 // pred_check
      _
    $region71: #{tpu_custom_call.1} parent=1 // pred_check_branch
      %105 = sbr.rel (0) target = $region73
    $region72: #{tpu_custom_call.1} parent=1 // pred_region
      _
    $region73: #{tpu_custom_call.1} parent=1 // pred_fallthru
      _
    // Predicated region
    $region74: #{tpu_custom_call.1} parent=1 // pred_check
      _
    $region75: #{tpu_custom_call.1} parent=1 // pred_check_branch
      %107 = sbr.rel (0) target = $region77
    $region76: #{tpu_custom_call.1} parent=1 // pred_region
      _
    $region77: #{tpu_custom_call.1} parent=1 // pred_fallthru
      _
    // Predicated region
    $region78: #{tpu_custom_call.1} parent=1 // pred_check
      _
    $region79: #{tpu_custom_call.1} parent=1 // pred_check_branch
      %109 = sbr.rel (0) target = $region81
    $region80: #{tpu_custom_call.1} parent=1 // pred_region
      %110 = dma.done [#allocation8], 16
    $region81: #{tpu_custom_call.1} parent=1 // pred_fallthru
      _
    // Predicated region
    $region82: #{tpu_custom_call.1} parent=1 // pred_check
      _
    $region83: #{tpu_custom_call.1} parent=1 // pred_check_branch
      %112 = sbr.rel (0) target = $region85
    $region84: #{tpu_custom_call.1} parent=1 // pred_region
      %113 = dma.done [#allocation11], 16
    $region85: #{tpu_custom_call.1} parent=1 // pred_fallthru
      _
    // Predicated region
    $region86: #{tpu_custom_call.1} parent=1 // pred_check
      _
    $region87: #{tpu_custom_call.1} parent=1 // pred_check_branch
      %115 = sbr.rel (0) target = $region89
    $region88: #{tpu_custom_call.1} parent=1 // pred_region
      %116 = dma.done [#allocation11], 16
    $region89: #{tpu_custom_call.1} parent=1 // pred_fallthru
      _
    // Predicated region
    $region90: #{tpu_custom_call.1} parent=1 // pred_check
      _
    $region91: #{tpu_custom_call.1} parent=1 // pred_check_branch
      %118 = sbr.rel (0) target = $region93
    $region92: #{tpu_custom_call.1} parent=1 // pred_region
      %119 = dma.done [#allocation14], 16
    $region93: #{tpu_custom_call.1} parent=1 // pred_fallthru
      _
    // Predicated region
    $region94: #{tpu_custom_call.1} parent=1 // pred_check
      _
    $region95: #{tpu_custom_call.1} parent=1 // pred_check_branch
      %121 = sbr.rel (0) target = $region97
    $region96: #{tpu_custom_call.1} parent=1 // pred_region
      %122 = dma.done [#allocation14], 16
    $region97: #{tpu_custom_call.1} parent=1 // pred_fallthru
      _
    %v123 = vld [vmem:[%s0] sm:$0xff]
    %v124 = vld [vmem:[%s0 + $0x8] sm:$0xff]
    %v125 = vld [vmem:[%s0 + $0x10] sm:$0xff]
    %v126 = vld [vmem:[%s0 + $0x18] sm:$0xff]
    %v127 = vld [vmem:[%s1] sm:$0xff]
    %v128 = vld [vmem:[%s1 + $0x8] sm:$0xff]
    %v129 = vld [vmem:[%s1 + $0x10] sm:$0xff]
    %v130 = vld [vmem:[%s2] sm:$0x1]
    %v132 = vlaneseq
    %v133 = vshrl.u32 %v132, 7
    %v134 = vsub.s32 0, %v133
    %v135 = vrot.slane %v130, %v134
    %vm137 = vcmask 195584
    %v139 = vsel %vm137, %v123, 0
    %v142 = vsel %vm137, %v124, 0
    %v145 = vsel %vm137, %v125, 0
    %v148 = vsel %vm137, %v126, 0
    %150 = vmatprep.subr.mxu0 0.0
    %151 = vmatpush1.msra.mxu0 %v127
    %152 = vmatprep.subr.mxu0 0.0
    %153 = vmatpush1.msra.mxu0 %v128
    %154 = vmatprep.subr.mxu0 0.0
    %155 = vmatpush1.msra.mxu0 %v129
    %156 = vmatprep.subr.mxu0 0.0
    %157 = vmatpush1.msra.mxu0 0.0
    %158 = vmatprep.subr.mxu0 0.0
    %159 = vmatpush1.msra.mxu0 0.0
    %160 = vmatprep.subr.mxu0 0.0
    %161 = vmatpush1.msra.mxu0 0.0
    %162 = vmatprep.subr.mxu0 0.0
    %163 = vmatpush1.msra.mxu0 0.0
    %164 = vmatprep.subr.mxu0 0.0
    %165 = vmatpush1.msra.mxu0 0.0
    %166 = vmatprep.subr.mxu0 0.0
    %167 = vmatpush1.msra.mxu0 0.0
    %168 = vmatprep.subr.mxu0 0.0
    %169 = vmatpush1.msra.mxu0 0.0
    %170 = vmatprep.subr.mxu0 0.0
    %171 = vmatpush1.msra.mxu0 0.0
    %172 = vmatprep.subr.mxu0 0.0
    %173 = vmatpush1.msra.mxu0 0.0
    %174 = vmatprep.subr.mxu0 0.0
    %175 = vmatpush1.msra.mxu0 0.0
    %176 = vmatprep.subr.mxu0 0.0
    %177 = vmatpush1.msra.mxu0 0.0
    %178 = vmatprep.subr.mxu0 0.0
    %179 = vmatpush1.msra.mxu0 0.0
    %180 = vmatprep.subr.mxu0 0.0
    %181 = vmatpush1.msra.mxu0 0.0
    %182 = vmatprep.subr.mxu0 0.0
    %183 = vmatpush1.msra.mxu0 0.0
    %184 = vmatprep.subr.mxu0 0.0
    %185 = vmatpush1.msra.mxu0 0.0
    %186 = vmatprep.subr.mxu0 0.0
    %187 = vmatpush1.msra.mxu0 0.0
    %188 = vmatprep.subr.mxu0 0.0
    %189 = vmatpush1.msra.mxu0 0.0
    %190 = vmatprep.subr.mxu0 0.0
    %191 = vmatpush1.msra.mxu0 0.0
    %192 = vmatprep.subr.mxu0 0.0
    %193 = vmatpush1.msra.mxu0 0.0
    %194 = vmatprep.subr.mxu0 0.0
    %195 = vmatpush1.msra.mxu0 0.0
    %196 = vmatprep.subr.mxu0 0.0
    %197 = vmatpush1.msra.mxu0 0.0
    %198 = vmatprep.subr.mxu0 0.0
    %199 = vmatpush1.msra.mxu0 0.0
    %200 = vmatprep.subr.mxu0 0.0
    %201 = vmatpush1.msra.mxu0 0.0
    %202 = vmatprep.subr.mxu0 0.0
    %203 = vmatpush1.msra.mxu0 0.0
    %204 = vmatprep.subr.mxu0 0.0
    %205 = vmatpush1.msra.mxu0 0.0
    %206 = vmatprep.subr.mxu0 0.0
    %207 = vmatpush1.msra.mxu0 0.0
    %208 = vmatprep.subr.mxu0 0.0
    %209 = vmatpush1.msra.mxu0 0.0
    %210 = vmatprep.subr.mxu0 0.0
    %211 = vmatpush1.msra.mxu0 0.0
    %212 = vmatprep.subr.mxu0 0.0
    %213 = vmatpush1.msra.mxu0 0.0
    %214 = vmatprep.mubr.f32.mxu0 0.0
    %215 = vmatmul.mubr.f32.gmra.mrb[0].mxu0 %v139
    %v216 = vpop.f32.mrb[0].mxu0
    %v217 = vadd.f32 %v135, %v216
    %v218 = vpop.f32.mrb[0].mxu0
    %219 = vmatprep.mubr.f32.mxu0 0.0
    %220 = vmatmul.mubr.f32.gmra.mrb[0].mxu0 %v142
    %v221 = vpop.f32.mrb[0].mxu0
    %v222 = vadd.f32 %v135, %v221
    %v223 = vpop.f32.mrb[0].mxu0
    %224 = vmatprep.mubr.f32.mxu0 0.0
    %225 = vmatmul.mubr.f32.gmra.mrb[0].mxu0 %v145
    %v226 = vpop.f32.mrb[0].mxu0
    %v227 = vadd.f32 %v135, %v226
    %v228 = vpop.f32.mrb[0].mxu0
    %229 = vmatprep.mubr.f32.mxu0 0.0
    %230 = vmatmul.mubr.f32.gmra.mrb[0].mxu0 %v148
    %v231 = vpop.f32.mrb[0].mxu0
    %v232 = vadd.f32 %v135, %v231
    %v233 = vpop.f32.mrb[0].mxu0
    %234 = vdwg.mxu0
    %vm235 = vcmask 130048
    %v236 = vsel %vm235, %v217, 0.0
    %v237 = vsel %vm235, %v222, 0.0
    %v238 = vadd.f32 %v236, %v237
    %v239 = vsel %vm235, %v227, 0.0
    %v240 = vadd.f32 %v238, %v239
    %v241 = vsel %vm235, %v232, 0.0
    %v242 = vadd.f32 %v240, %v241
    %v243 = vrot.slane %v242, 4
    %v244 = vadd.f32 %v242, %v243
    %v245 = vrot.slane %v244, 2
    %v246 = vadd.f32 %v244, %v245
    %v247 = vrot.slane %v246, 1
    %v248 = vadd.f32 %v246, %v247
    %v249 = vrcp.pop 32.0
    %v250 = vmul.f32 %v248, %v249
    %v251 = vsub.f32 %v217, %v250
    %v252 = vsub.f32 %v222, %v250
    %v253 = vsub.f32 %v227, %v250
    %v254 = vsub.f32 %v232, %v250
    %v255 = vmul.f32 %v251, %v251
    %v256 = vmul.f32 %v252, %v252
    %v257 = vmul.f32 %v253, %v253
    %v258 = vmul.f32 %v254, %v254
    %v259 = vsel %vm235, %v255, 0.0
    %v260 = vsel %vm235, %v256, 0.0
    %v261 = vadd.f32 %v259, %v260
    %v262 = vsel %vm235, %v257, 0.0
    %v263 = vadd.f32 %v261, %v262
    %v264 = vsel %vm235, %v258, 0.0
    %v265 = vadd.f32 %v263, %v264
    %v266 = vrot.slane %v265, 4
    %v267 = vadd.f32 %v265, %v266
    %v268 = vrot.slane %v267, 2
    %v269 = vadd.f32 %v267, %v268
    %v270 = vrot.slane %v269, 1
    %v271 = vadd.f32 %v269, %v270
    %v272 = vmul.f32 %v271, %v249
    %v273 = vadd.f32 %v272, 1e-05
    %v274 = vrsqrt.pop %v273
    %v275 = vmul.f32 %v251, %v274
    %v276 = vmul.f32 %v252, %v274
    %v277 = vmul.f32 %v253, %v274
    %v278 = vmul.f32 %v254, %v274
    %v279 = vld [vmem:[#allocation7] sm:$0x1]
    %v281 = vlaneseq
    %v282 = vshrl.u32 %v281, 7
    %v283 = vsub.s32 0, %v282
    %v284 = vrot.slane %v279, %v283
    %v286 = vmul.f32 %v275, %v284
    %v287 = vmul.f32 %v276, %v284
    %v288 = vmul.f32 %v277, %v284
    %v289 = vmul.f32 %v278, %v284
    %v290 = vld [vmem:[#allocation10] sm:$0x1]
    %v292 = vlaneseq
    %v293 = vshrl.u32 %v292, 7
    %v294 = vsub.s32 0, %v293
    %v295 = vrot.slane %v290, %v294
    %v297 = vadd.f32 %v286, %v295
    %v298 = vadd.f32 %v287, %v295
    %v299 = vadd.f32 %v288, %v295
    %v300 = vadd.f32 %v289, %v295
    %v301 = vld [vmem:[%s5] sm:$0xff]
    %v302 = vld [vmem:[%s5 + $0x8] sm:$0xff]
    %v303 = vld [vmem:[#allocation12] sm:$0x1]
    %v305 = vlaneseq
    %v306 = vshrl.u32 %v305, 7
    %v307 = vsub.s32 0, %v306
    %v308 = vrot.slane %v303, %v307
    %v311 = vsel %vm235, %v297, 0
    %v314 = vsel %vm235, %v298, 0
    %v317 = vsel %vm235, %v299, 0
    %v320 = vsel %vm235, %v300, 0
    %322 = vmatprep.subr.mxu0 0.0
    %323 = vmatpush1.msra.mxu0 %v301
    %324 = vmatprep.subr.mxu0 0.0
    %325 = vmatpush1.msra.mxu0 %v302
    %326 = vmatprep.subr.mxu0 0.0
    %327 = vmatpush1.msra.mxu0 0.0
    %328 = vmatprep.subr.mxu0 0.0
    %329 = vmatpush1.msra.mxu0 0.0
    %330 = vmatprep.subr.mxu0 0.0
    %331 = vmatpush1.msra.mxu0 0.0
    %332 = vmatprep.subr.mxu0 0.0
    %333 = vmatpush1.msra.mxu0 0.0
    %334 = vmatprep.subr.mxu0 0.0
    %335 = vmatpush1.msra.mxu0 0.0
    %336 = vmatprep.subr.mxu0 0.0
    %337 = vmatpush1.msra.mxu0 0.0
    %338 = vmatprep.subr.mxu0 0.0
    %339 = vmatpush1.msra.mxu0 0.0
    %340 = vmatprep.subr.mxu0 0.0
    %341 = vmatpush1.msra.mxu0 0.0
    %342 = vmatprep.subr.mxu0 0.0
    %343 = vmatpush1.msra.mxu0 0.0
    %344 = vmatprep.subr.mxu0 0.0
    %345 = vmatpush1.msra.mxu0 0.0
    %346 = vmatprep.subr.mxu0 0.0
    %347 = vmatpush1.msra.mxu0 0.0
    %348 = vmatprep.subr.mxu0 0.0
    %349 = vmatpush1.msra.mxu0 0.0
    %350 = vmatprep.subr.mxu0 0.0
    %351 = vmatpush1.msra.mxu0 0.0
    %352 = vmatprep.subr.mxu0 0.0
    %353 = vmatpush1.msra.mxu0 0.0
    %354 = vmatprep.subr.mxu0 0.0
    %355 = vmatpush1.msra.mxu0 0.0
    %356 = vmatprep.subr.mxu0 0.0
    %357 = vmatpush1.msra.mxu0 0.0
    %358 = vmatprep.subr.mxu0 0.0
    %359 = vmatpush1.msra.mxu0 0.0
    %360 = vmatprep.subr.mxu0 0.0
    %361 = vmatpush1.msra.mxu0 0.0
    %362 = vmatprep.subr.mxu0 0.0
    %363 = vmatpush1.msra.mxu0 0.0
    %364 = vmatprep.subr.mxu0 0.0
    %365 = vmatpush1.msra.mxu0 0.0
    %366 = vmatprep.subr.mxu0 0.0
    %367 = vmatpush1.msra.mxu0 0.0
    %368 = vmatprep.subr.mxu0 0.0
    %369 = vmatpush1.msra.mxu0 0.0
    %370 = vmatprep.subr.mxu0 0.0
    %371 = vmatpush1.msra.mxu0 0.0
    %372 = vmatprep.subr.mxu0 0.0
    %373 = vmatpush1.msra.mxu0 0.0
    %374 = vmatprep.subr.mxu0 0.0
    %375 = vmatpush1.msra.mxu0 0.0
    %376 = vmatprep.subr.mxu0 0.0
    %377 = vmatpush1.msra.mxu0 0.0
    %378 = vmatprep.subr.mxu0 0.0
    %379 = vmatpush1.msra.mxu0 0.0
    %380 = vmatprep.subr.mxu0 0.0
    %381 = vmatpush1.msra.mxu0 0.0
    %382 = vmatprep.subr.mxu0 0.0
    %383 = vmatpush1.msra.mxu0 0.0
    %384 = vmatprep.subr.mxu0 0.0
    %385 = vmatpush1.msra.mxu0 0.0
    %386 = vmatprep.mubr.f32.mxu0 0.0
    %387 = vmatmul.mubr.f32.gmra.mrb[0].mxu0 %v311
    %v388 = vpop.f32.mrb[0].mxu0
    %v389 = vadd.f32 %v308, %v388
    %v390 = vpop.f32.mrb[0].mxu0
    %391 = vmatprep.mubr.f32.mxu0 0.0
    %392 = vmatmul.mubr.f32.gmra.mrb[0].mxu0 %v314
    %v393 = vpop.f32.mrb[0].mxu0
    %v394 = vadd.f32 %v308, %v393
    %v395 = vpop.f32.mrb[0].mxu0
    %396 = vmatprep.mubr.f32.mxu0 0.0
    %397 = vmatmul.mubr.f32.gmra.mrb[0].mxu0 %v317
    %v398 = vpop.f32.mrb[0].mxu0
    %v399 = vadd.f32 %v308, %v398
    %v400 = vpop.f32.mrb[0].mxu0
    %401 = vmatprep.mubr.f32.mxu0 0.0
    %402 = vmatmul.mubr.f32.gmra.mrb[0].mxu0 %v320
    %v403 = vpop.f32.mrb[0].mxu0
    %v404 = vadd.f32 %v308, %v403
    %v405 = vpop.f32.mrb[0].mxu0
    %406 = vdwg.mxu0
    %v407 = vld [vmem:[%s7] sm:$0xff]
    %v408 = vld [vmem:[%s7 + $0x8] sm:$0xff]
    %v409 = vld [vmem:[#allocation13] sm:$0x1]
    %v411 = vlaneseq
    %v412 = vshrl.u32 %v411, 7
    %v413 = vsub.s32 0, %v412
    %v414 = vrot.slane %v409, %v413
    %v417 = vsel %vm235, %v389, 0
    %v420 = vsel %vm235, %v394, 0
    %v423 = vsel %vm235, %v399, 0
    %v426 = vsel %vm235, %v404, 0
    %428 = vmatprep.subr.mxu0 0.0
    %429 = vmatpush1.msra.mxu0 %v407
    %430 = vmatprep.subr.mxu0 0.0
    %431 = vmatpush1.msra.mxu0 %v408
    %432 = vmatprep.subr.mxu0 0.0
    %433 = vmatpush1.msra.mxu0 0.0
    %434 = vmatprep.subr.mxu0 0.0
    %435 = vmatpush1.msra.mxu0 0.0
    %436 = vmatprep.subr.mxu0 0.0
    %437 = vmatpush1.msra.mxu0 0.0
    %438 = vmatprep.subr.mxu0 0.0
    %439 = vmatpush1.msra.mxu0 0.0
    %440 = vmatprep.subr.mxu0 0.0
    %441 = vmatpush1.msra.mxu0 0.0
    %442 = vmatprep.subr.mxu0 0.0
    %443 = vmatpush1.msra.mxu0 0.0
    %444 = vmatprep.subr.mxu0 0.0
    %445 = vmatpush1.msra.mxu0 0.0
    %446 = vmatprep.subr.mxu0 0.0
    %447 = vmatpush1.msra.mxu0 0.0
    %448 = vmatprep.subr.mxu0 0.0
    %449 = vmatpush1.msra.mxu0 0.0
    %450 = vmatprep.subr.mxu0 0.0
    %451 = vmatpush1.msra.mxu0 0.0
    %452 = vmatprep.subr.mxu0 0.0
    %453 = vmatpush1.msra.mxu0 0.0
    %454 = vmatprep.subr.mxu0 0.0
    %455 = vmatpush1.msra.mxu0 0.0
    %456 = vmatprep.subr.mxu0 0.0
    %457 = vmatpush1.msra.mxu0 0.0
    %458 = vmatprep.subr.mxu0 0.0
    %459 = vmatpush1.msra.mxu0 0.0
    %460 = vmatprep.subr.mxu0 0.0
    %461 = vmatpush1.msra.mxu0 0.0
    %462 = vmatprep.subr.mxu0 0.0
    %463 = vmatpush1.msra.mxu0 0.0
    %464 = vmatprep.subr.mxu0 0.0
    %465 = vmatpush1.msra.mxu0 0.0
    %466 = vmatprep.subr.mxu0 0.0
    %467 = vmatpush1.msra.mxu0 0.0
    %468 = vmatprep.subr.mxu0 0.0
    %469 = vmatpush1.msra.mxu0 0.0
    %470 = vmatprep.subr.mxu0 0.0
    %471 = vmatpush1.msra.mxu0 0.0
    %472 = vmatprep.subr.mxu0 0.0
    %473 = vmatpush1.msra.mxu0 0.0
    %474 = vmatprep.subr.mxu0 0.0
    %475 = vmatpush1.msra.mxu0 0.0
    %476 = vmatprep.subr.mxu0 0.0
    %477 = vmatpush1.msra.mxu0 0.0
    %478 = vmatprep.subr.mxu0 0.0
    %479 = vmatpush1.msra.mxu0 0.0
    %480 = vmatprep.subr.mxu0 0.0
    %481 = vmatpush1.msra.mxu0 0.0
    %482 = vmatprep.subr.mxu0 0.0
    %483 = vmatpush1.msra.mxu0 0.0
    %484 = vmatprep.subr.mxu0 0.0
    %485 = vmatpush1.msra.mxu0 0.0
    %486 = vmatprep.subr.mxu0 0.0
    %487 = vmatpush1.msra.mxu0 0.0
    %488 = vmatprep.subr.mxu0 0.0
    %489 = vmatpush1.msra.mxu0 0.0
    %490 = vmatprep.subr.mxu0 0.0
    %491 = vmatpush1.msra.mxu0 0.0
    %492 = vmatprep.mubr.f32.mxu0 0.0
    %493 = vmatmul.mubr.f32.gmra.mrb[0].mxu0 %v417
    %v494 = vpop.f32.mrb[0].mxu0
    %v495 = vadd.f32 %v414, %v494
    %v496 = vpop.f32.mrb[0].mxu0
    %497 = vmatprep.mubr.f32.mxu0 0.0
    %498 = vmatmul.mubr.f32.gmra.mrb[0].mxu0 %v420
    %v499 = vpop.f32.mrb[0].mxu0
    %v500 = vadd.f32 %v414, %v499
    %v501 = vpop.f32.mrb[0].mxu0
    %502 = vmatprep.mubr.f32.mxu0 0.0
    %503 = vmatmul.mubr.f32.gmra.mrb[0].mxu0 %v423
    %v504 = vpop.f32.mrb[0].mxu0
    %v505 = vadd.f32 %v414, %v504
    %v506 = vpop.f32.mrb[0].mxu0
    %507 = vmatprep.mubr.f32.mxu0 0.0
    %508 = vmatmul.mubr.f32.gmra.mrb[0].mxu0 %v426
    %v509 = vpop.f32.mrb[0].mxu0
    %v510 = vadd.f32 %v414, %v509
    %v511 = vpop.f32.mrb[0].mxu0
    %512 = vdwg.mxu0
    %vm513 = vcmask 392192
    %514 = vst.msk [vmem:[#allocation2] sm:$0xff] %vm513, %v495
    %515 = vst.msk [vmem:[#allocation2 + $0x8] sm:$0xff] %vm513, %v500
    %516 = vst.msk [vmem:[#allocation2 + $0x10] sm:$0xff] %vm513, %v505
    %517 = vst.msk [vmem:[#allocation2 + $0x18] sm:$0xff] %vm513, %v510
    %v518 = vld [vmem:[%s9] sm:$0xff]
    %v519 = vld [vmem:[%s9 + $0x8] sm:$0xff]
    %v520 = vld [vmem:[#allocation15] sm:$0x1]
    %v522 = vlaneseq
    %v523 = vshrl.u32 %v522, 7
    %v524 = vsub.s32 0, %v523
    %v525 = vrot.slane %v520, %v524
    %527 = vmatprep.subr.mxu0 0.0
    %528 = vmatpush1.msra.mxu0 %v518
    %529 = vmatprep.subr.mxu0 0.0
    %530 = vmatpush1.msra.mxu0 %v519
    %531 = vmatprep.subr.mxu0 0.0
    %532 = vmatpush1.msra.mxu0 0.0
    %533 = vmatprep.subr.mxu0 0.0
    %534 = vmatpush1.msra.mxu0 0.0
    %535 = vmatprep.subr.mxu0 0.0
    %536 = vmatpush1.msra.mxu0 0.0
    %537 = vmatprep.subr.mxu0 0.0
    %538 = vmatpush1.msra.mxu0 0.0
    %539 = vmatprep.subr.mxu0 0.0
    %540 = vmatpush1.msra.mxu0 0.0
    %541 = vmatprep.subr.mxu0 0.0
    %542 = vmatpush1.msra.mxu0 0.0
    %543 = vmatprep.subr.mxu0 0.0
    %544 = vmatpush1.msra.mxu0 0.0
    %545 = vmatprep.subr.mxu0 0.0
    %546 = vmatpush1.msra.mxu0 0.0
    %547 = vmatprep.subr.mxu0 0.0
    %548 = vmatpush1.msra.mxu0 0.0
    %549 = vmatprep.subr.mxu0 0.0
    %550 = vmatpush1.msra.mxu0 0.0
    %551 = vmatprep.subr.mxu0 0.0
    %552 = vmatpush1.msra.mxu0 0.0
    %553 = vmatprep.subr.mxu0 0.0
    %554 = vmatpush1.msra.mxu0 0.0
    %555 = vmatprep.subr.mxu0 0.0
    %556 = vmatpush1.msra.mxu0 0.0
    %557 = vmatprep.subr.mxu0 0.0
    %558 = vmatpush1.msra.mxu0 0.0
    %559 = vmatprep.subr.mxu0 0.0
    %560 = vmatpush1.msra.mxu0 0.0
    %561 = vmatprep.subr.mxu0 0.0
    %562 = vmatpush1.msra.mxu0 0.0
    %563 = vmatprep.subr.mxu0 0.0
    %564 = vmatpush1.msra.mxu0 0.0
    %565 = vmatprep.subr.mxu0 0.0
    %566 = vmatpush1.msra.mxu0 0.0
    %567 = vmatprep.subr.mxu0 0.0
    %568 = vmatpush1.msra.mxu0 0.0
    %569 = vmatprep.subr.mxu0 0.0
    %570 = vmatpush1.msra.mxu0 0.0
    %571 = vmatprep.subr.mxu0 0.0
    %572 = vmatpush1.msra.mxu0 0.0
    %573 = vmatprep.subr.mxu0 0.0
    %574 = vmatpush1.msra.mxu0 0.0
    %575 = vmatprep.subr.mxu0 0.0
    %576 = vmatpush1.msra.mxu0 0.0
    %577 = vmatprep.subr.mxu0 0.0
    %578 = vmatpush1.msra.mxu0 0.0
    %579 = vmatprep.subr.mxu0 0.0
    %580 = vmatpush1.msra.mxu0 0.0
    %581 = vmatprep.subr.mxu0 0.0
    %582 = vmatpush1.msra.mxu0 0.0
    %583 = vmatprep.subr.mxu0 0.0
    %584 = vmatpush1.msra.mxu0 0.0
    %585 = vmatprep.subr.mxu0 0.0
    %586 = vmatpush1.msra.mxu0 0.0
    %587 = vmatprep.subr.mxu0 0.0
    %588 = vmatpush1.msra.mxu0 0.0
    %589 = vmatprep.subr.mxu0 0.0
    %590 = vmatpush1.msra.mxu0 0.0
    %591 = vmatprep.mubr.f32.mxu0 0.0
    %592 = vmatmul.mubr.f32.gmra.mrb[0].mxu0 %v417
    %v593 = vpop.f32.mrb[0].mxu0
    %v594 = vadd.f32 %v525, %v593
    %v595 = vpop.f32.mrb[0].mxu0
    %596 = vmatprep.mubr.f32.mxu0 0.0
    %597 = vmatmul.mubr.f32.gmra.mrb[0].mxu0 %v420
    %v598 = vpop.f32.mrb[0].mxu0
    %v599 = vadd.f32 %v525, %v598
    %v600 = vpop.f32.mrb[0].mxu0
    %601 = vmatprep.mubr.f32.mxu0 0.0
    %602 = vmatmul.mubr.f32.gmra.mrb[0].mxu0 %v423
    %v603 = vpop.f32.mrb[0].mxu0
    %v604 = vadd.f32 %v525, %v603
    %v605 = vpop.f32.mrb[0].mxu0
    %606 = vmatprep.mubr.f32.mxu0 0.0
    %607 = vmatmul.mubr.f32.gmra.mrb[0].mxu0 %v426
    %v608 = vpop.f32.mrb[0].mxu0
    %v609 = vadd.f32 %v525, %v608
    %v610 = vpop.f32.mrb[0].mxu0
    %611 = vdwg.mxu0
    %612 = vst.msk [vmem:[#allocation3] sm:$0xff] %vm513, %v594
    %613 = vst.msk [vmem:[#allocation3 + $0x8] sm:$0xff] %vm513, %v599
    %614 = vst.msk [vmem:[#allocation3 + $0x10] sm:$0xff] %vm513, %v604
    %615 = vst.msk [vmem:[#allocation3 + $0x18] sm:$0xff] %vm513, %v609
    %v616 = vld [vmem:[%s11] sm:$0xff]
    %v617 = vld [vmem:[%s11 + $0x8] sm:$0xff]
    %v618 = vld [vmem:[%s12] sm:$0x1]
    %v619 = vld [vmem:[%s13] sm:$0xff]
    %v620 = vld [vmem:[%s13 + $0x8] sm:$0xff]
    %v621 = vld [vmem:[%s14] sm:$0x1]
    %v622 = vld [vmem:[%s15] sm:$0x1]
    %v623 = vld [vmem:[%s16] sm:$0x1]
    %v624 = vld [vmem:[%s18] sm:$0x3]
    %s625 = scalar_lea.vmem %s18, 30
    %v626 = vld [vmem:[%s625] sm:$0x3]
    %v627 = vld [vmem:[#allocation2] sm:$0x3]
    %v628 = vld [vmem:[#allocation3 + $0x1e] sm:$0x3]
    %v630 = vlaneseq
    %v631 = vshrl.u32 %v630, 7
    %v632 = vsub.s32 0, %v631
    %v633 = vrot.slane %v618, %v632
    %v636 = vsel %vm235, 0.0, 0
    %638 = vmatprep.subr.mxu0 0.0
    %639 = vmatpush1.msra.mxu0 %v616
    %640 = vmatprep.subr.mxu0 0.0
    %641 = vmatpush1.msra.mxu0 %v617
    %642 = vmatprep.subr.mxu0 0.0
    %643 = vmatpush1.msra.mxu0 0.0
    %644 = vmatprep.subr.mxu0 0.0
    %645 = vmatpush1.msra.mxu0 0.0
    %646 = vmatprep.subr.mxu0 0.0
    %647 = vmatpush1.msra.mxu0 0.0
    %648 = vmatprep.subr.mxu0 0.0
    %649 = vmatpush1.msra.mxu0 0.0
    %650 = vmatprep.subr.mxu0 0.0
    %651 = vmatpush1.msra.mxu0 0.0
    %652 = vmatprep.subr.mxu0 0.0
    %653 = vmatpush1.msra.mxu0 0.0
    %654 = vmatprep.subr.mxu0 0.0
    %655 = vmatpush1.msra.mxu0 0.0
    %656 = vmatprep.subr.mxu0 0.0
    %657 = vmatpush1.msra.mxu0 0.0
    %658 = vmatprep.subr.mxu0 0.0
    %659 = vmatpush1.msra.mxu0 0.0
    %660 = vmatprep.subr.mxu0 0.0
    %661 = vmatpush1.msra.mxu0 0.0
    %662 = vmatprep.subr.mxu0 0.0
    %663 = vmatpush1.msra.mxu0 0.0
    %664 = vmatprep.subr.mxu0 0.0
    %665 = vmatpush1.msra.mxu0 0.0
    %666 = vmatprep.subr.mxu0 0.0
    %667 = vmatpush1.msra.mxu0 0.0
    %668 = vmatprep.subr.mxu0 0.0
    %669 = vmatpush1.msra.mxu0 0.0
    %670 = vmatprep.subr.mxu0 0.0
    %671 = vmatpush1.msra.mxu0 0.0
    %672 = vmatprep.subr.mxu0 0.0
    %673 = vmatpush1.msra.mxu0 0.0
    %674 = vmatprep.subr.mxu0 0.0
    %675 = vmatpush1.msra.mxu0 0.0
    %676 = vmatprep.subr.mxu0 0.0
    %677 = vmatpush1.msra.mxu0 0.0
    %678 = vmatprep.subr.mxu0 0.0
    %679 = vmatpush1.msra.mxu0 0.0
    %680 = vmatprep.subr.mxu0 0.0
    %681 = vmatpush1.msra.mxu0 0.0
    %682 = vmatprep.subr.mxu0 0.0
    %683 = vmatpush1.msra.mxu0 0.0
    %684 = vmatprep.subr.mxu0 0.0
    %685 = vmatpush1.msra.mxu0 0.0
    %686 = vmatprep.subr.mxu0 0.0
    %687 = vmatpush1.msra.mxu0 0.0
    %688 = vmatprep.subr.mxu0 0.0
    %689 = vmatpush1.msra.mxu0 0.0
    %690 = vmatprep.subr.mxu0 0.0
    %691 = vmatpush1.msra.mxu0 0.0
    %692 = vmatprep.subr.mxu0 0.0
    %693 = vmatpush1.msra.mxu0 0.0
    %694 = vmatprep.subr.mxu0 0.0
    %695 = vmatpush1.msra.mxu0 0.0
    %696 = vmatprep.subr.mxu0 0.0
    %697 = vmatpush1.msra.mxu0 0.0
    %698 = vmatprep.subr.mxu0 0.0
    %699 = vmatpush1.msra.mxu0 0.0
    %700 = vmatprep.subr.mxu0 0.0
    %701 = vmatpush1.msra.mxu0 0.0
    %702 = vmatprep.mubr.f32.mxu0 0.0
    %703 = vmatmul.mubr.f32.gmra.mrb[0].mxu0 %v636
    %v704 = vpop.f32.mrb[0].mxu0
    %v705 = vadd.f32 %v633, %v704
    %v706 = vpop.f32.mrb[0].mxu0
    %707 = vdwg.mxu0
    %v709 = vlaneseq
    %v710 = vshrl.u32 %v709, 7
    %v711 = vsub.s32 0, %v710
    %v712 = vrot.slane %v621, %v711
    %714 = vmatprep.subr.mxu0 0.0
    %715 = vmatpush1.msra.mxu0 %v619
    %716 = vmatprep.subr.mxu0 0.0
    %717 = vmatpush1.msra.mxu0 %v620
    %718 = vmatprep.subr.mxu0 0.0
    %719 = vmatpush1.msra.mxu0 0.0
    %720 = vmatprep.subr.mxu0 0.0
    %721 = vmatpush1.msra.mxu0 0.0
    %722 = vmatprep.subr.mxu0 0.0
    %723 = vmatpush1.msra.mxu0 0.0
    %724 = vmatprep.subr.mxu0 0.0
    %725 = vmatpush1.msra.mxu0 0.0
    %726 = vmatprep.subr.mxu0 0.0
    %727 = vmatpush1.msra.mxu0 0.0
    %728 = vmatprep.subr.mxu0 0.0
    %729 = vmatpush1.msra.mxu0 0.0
    %730 = vmatprep.subr.mxu0 0.0
    %731 = vmatpush1.msra.mxu0 0.0
    %732 = vmatprep.subr.mxu0 0.0
    %733 = vmatpush1.msra.mxu0 0.0
    %734 = vmatprep.subr.mxu0 0.0
    %735 = vmatpush1.msra.mxu0 0.0
    %736 = vmatprep.subr.mxu0 0.0
    %737 = vmatpush1.msra.mxu0 0.0
    %738 = vmatprep.subr.mxu0 0.0
    %739 = vmatpush1.msra.mxu0 0.0
    %740 = vmatprep.subr.mxu0 0.0
    %741 = vmatpush1.msra.mxu0 0.0
    %742 = vmatprep.subr.mxu0 0.0
    %743 = vmatpush1.msra.mxu0 0.0
    %744 = vmatprep.subr.mxu0 0.0
    %745 = vmatpush1.msra.mxu0 0.0
    %746 = vmatprep.subr.mxu0 0.0
    %747 = vmatpush1.msra.mxu0 0.0
    %748 = vmatprep.subr.mxu0 0.0
    %749 = vmatpush1.msra.mxu0 0.0
    %750 = vmatprep.subr.mxu0 0.0
    %751 = vmatpush1.msra.mxu0 0.0
    %752 = vmatprep.subr.mxu0 0.0
    %753 = vmatpush1.msra.mxu0 0.0
    %754 = vmatprep.subr.mxu0 0.0
    %755 = vmatpush1.msra.mxu0 0.0
    %756 = vmatprep.subr.mxu0 0.0
    %757 = vmatpush1.msra.mxu0 0.0
    %758 = vmatprep.subr.mxu0 0.0
    %759 = vmatpush1.msra.mxu0 0.0
    %760 = vmatprep.subr.mxu0 0.0
    %761 = vmatpush1.msra.mxu0 0.0
    %762 = vmatprep.subr.mxu0 0.0
    %763 = vmatpush1.msra.mxu0 0.0
    %764 = vmatprep.subr.mxu0 0.0
    %765 = vmatpush1.msra.mxu0 0.0
    %766 = vmatprep.subr.mxu0 0.0
    %767 = vmatpush1.msra.mxu0 0.0
    %768 = vmatprep.subr.mxu0 0.0
    %769 = vmatpush1.msra.mxu0 0.0
    %770 = vmatprep.subr.mxu0 0.0
    %771 = vmatpush1.msra.mxu0 0.0
    %772 = vmatprep.subr.mxu0 0.0
    %773 = vmatpush1.msra.mxu0 0.0
    %774 = vmatprep.subr.mxu0 0.0
    %775 = vmatpush1.msra.mxu0 0.0
    %776 = vmatprep.subr.mxu0 0.0
    %777 = vmatpush1.msra.mxu0 0.0
    %778 = vmatprep.mubr.f32.mxu0 0.0
    %779 = vmatmul.mubr.f32.gmra.mrb[0].mxu0 %v636
    %v780 = vpop.f32.mrb[0].mxu0
    %v781 = vadd.f32 %v712, %v780
    %v782 = vpop.f32.mrb[0].mxu0
    %783 = vdwg.mxu0
    %v784 = vadd.f32 %v627, %v705
    %v785 = vxor.u32 %v784, 2147483648
    %v786 = vmul.f32 %v785, 1.442695
    %v787 = vpow.pop %v786
    %v788 = vadd.f32 %v787, 1.0
    %v789 = vrcp.pop %v788
    %v790 = vmul.f32 1.0, %v789
    %792 = vrot.lane.b32.xlu0 %v705, 96
    %v793 = vpop.permute.xlu0 %792
    %v795 = vmul.f32 %v790, %v793
    %797 = vrot.lane.b32.xlu0 %v795, 32
    %v798 = vpop.permute.xlu0 %797
    %v800 = vadd.f32 %v627, %v798
    %v801 = vtanh.pop %v800
    %v802 = vsub.f32 1.0, %v790
    %804 = vrot.lane.b32.xlu0 %v801, 112
    %v805 = vpop.permute.xlu0 %804
    %v807 = vmul.f32 %v802, %v805
    %v808 = vmul.f32 %v790, 0.0
    %v809 = vadd.f32 %v807, %v808
    %v810 = vadd.f32 %v628, %v781
    %v811 = vxor.u32 %v810, 2147483648
    %v812 = vmul.f32 %v811, 1.442695
    %v813 = vpow.pop %v812
    %v814 = vadd.f32 %v813, 1.0
    %v815 = vrcp.pop %v814
    %v816 = vmul.f32 1.0, %v815
    %818 = vrot.lane.b32.xlu0 %v781, 96
    %v819 = vpop.permute.xlu0 %818
    %v821 = vmul.f32 %v816, %v819
    %823 = vrot.lane.b32.xlu0 %v821, 32
    %v824 = vpop.permute.xlu0 %823
    %v826 = vadd.f32 %v628, %v824
    %v827 = vtanh.pop %v826
    %v828 = vsub.f32 1.0, %v816
    %830 = vrot.lane.b32.xlu0 %v827, 112
    %v831 = vpop.permute.xlu0 %830
    %v833 = vmul.f32 %v828, %v831
    %v834 = vmul.f32 %v816, 0.0
    %v835 = vadd.f32 %v833, %v834
    %837 = vrot.lane.b32.xlu0 %v809, 112
    %v838 = vpop.permute.xlu0 %837
    %v840 = vmul.f32 %v624, %v838
    %v841 = vadd.f32 %v840, 0.0
    %843 = vrot.lane.b32.xlu0 %v835, 112
    %v844 = vpop.permute.xlu0 %843
    %v846 = vmul.f32 %v626, %v844
    %v847 = vadd.f32 %v846, 0.0
    %v849 = vlaneseq
    %v850 = vshrl.u32 %v849, 7
    %v851 = vsub.s32 0, %v850
    %v852 = vrot.slane %v622, %v851
    %v854 = vmul.f32 %v840, %v852
    %vm855 = vcmask 123904
    %v856 = vsel %vm855, %v854, 0.0
    %857 = vadd.xlane.f32.xlu0 %v856
    %v858 = vpop.xlane.xlu0 %857
    %vm859 = vcmask 1024
    %860 = vst.msk [vmem:[#allocation4] sm:$0x3] %vm859, %v858
    %v862 = vlaneseq
    %v863 = vshrl.u32 %v862, 7
    %v864 = vsub.s32 0, %v863
    %v865 = vrot.slane %v623, %v864
    %v867 = vmul.f32 %v846, %v865
    %v868 = vsel %vm855, %v867, 0.0
    %869 = vadd.xlane.f32.xlu0 %v868
    %v870 = vpop.xlane.xlu0 %869
    %vm871 = vcmask 124024
    %872 = vst.msk [vmem:[#allocation5] sm:$0x3] %vm871, %v870
    %s873 = scalar_lea.vmem %s18, 2
    %v874 = vld [vmem:[%s873] sm:$0x3]
    %s875 = scalar_lea.vmem %s18, 28
    %v876 = vld [vmem:[%s875] sm:$0x3]
    %v877 = vld [vmem:[#allocation2 + $0x2] sm:$0x3]
    %v878 = vld [vmem:[#allocation3 + $0x1c] sm:$0x3]
    %v880 = vsel %vm235, %v841, 0
    %882 = vmatprep.subr.mxu0 0.0
    %883 = vmatpush1.msra.mxu0 %v616
    %884 = vmatprep.subr.mxu0 0.0
    %885 = vmatpush1.msra.mxu0 %v617
    %886 = vmatprep.subr.mxu0 0.0
    %887 = vmatpush1.msra.mxu0 0.0
    %888 = vmatprep.subr.mxu0 0.0
    %889 = vmatpush1.msra.mxu0 0.0
    %890 = vmatprep.subr.mxu0 0.0
    %891 = vmatpush1.msra.mxu0 0.0
    %892 = vmatprep.subr.mxu0 0.0
    %893 = vmatpush1.msra.mxu0 0.0
    %894 = vmatprep.subr.mxu0 0.0
    %895 = vmatpush1.msra.mxu0 0.0
    %896 = vmatprep.subr.mxu0 0.0
    %897 = vmatpush1.msra.mxu0 0.0
    %898 = vmatprep.subr.mxu0 0.0
    %899 = vmatpush1.msra.mxu0 0.0
    %900 = vmatprep.subr.mxu0 0.0
    %901 = vmatpush1.msra.mxu0 0.0
    %902 = vmatprep.subr.mxu0 0.0
    %903 = vmatpush1.msra.mxu0 0.0
    %904 = vmatprep.subr.mxu0 0.0
    %905 = vmatpush1.msra.mxu0 0.0
    %906 = vmatprep.subr.mxu0 0.0
    %907 = vmatpush1.msra.mxu0 0.0
    %908 = vmatprep.subr.mxu0 0.0
    %909 = vmatpush1.msra.mxu0 0.0
    %910 = vmatprep.subr.mxu0 0.0
    %911 = vmatpush1.msra.mxu0 0.0
    %912 = vmatprep.subr.mxu0 0.0
    %913 = vmatpush1.msra.mxu0 0.0
    %914 = vmatprep.subr.mxu0 0.0
    %915 = vmatpush1.msra.mxu0 0.0
    %916 = vmatprep.subr.mxu0 0.0
    %917 = vmatpush1.msra.mxu0 0.0
    %918 = vmatprep.subr.mxu0 0.0
    %919 = vmatpush1.msra.mxu0 0.0
    %920 = vmatprep.subr.mxu0 0.0
    %921 = vmatpush1.msra.mxu0 0.0
    %922 = vmatprep.subr.mxu0 0.0
    %923 = vmatpush1.msra.mxu0 0.0
    %924 = vmatprep.subr.mxu0 0.0
    %925 = vmatpush1.msra.mxu0 0.0
    %926 = vmatprep.subr.mxu0 0.0
    %927 = vmatpush1.msra.mxu0 0.0
    %928 = vmatprep.subr.mxu0 0.0
    %929 = vmatpush1.msra.mxu0 0.0
    %930 = vmatprep.subr.mxu0 0.0
    %931 = vmatpush1.msra.mxu0 0.0
    %932 = vmatprep.subr.mxu0 0.0
    %933 = vmatpush1.msra.mxu0 0.0
    %934 = vmatprep.subr.mxu0 0.0
    %935 = vmatpush1.msra.mxu0 0.0
    %936 = vmatprep.subr.mxu0 0.0
    %937 = vmatpush1.msra.mxu0 0.0
    %938 = vmatprep.subr.mxu0 0.0
    %939 = vmatpush1.msra.mxu0 0.0
    %940 = vmatprep.subr.mxu0 0.0
    %941 = vmatpush1.msra.mxu0 0.0
    %942 = vmatprep.subr.mxu0 0.0
    %943 = vmatpush1.msra.mxu0 0.0
    %944 = vmatprep.subr.mxu0 0.0
    %945 = vmatpush1.msra.mxu0 0.0
    %946 = vmatprep.mubr.f32.mxu0 0.0
    %947 = vmatmul.mubr.f32.gmra.mrb[0].mxu0 %v880
    %v948 = vpop.f32.mrb[0].mxu0
    %v949 = vadd.f32 %v633, %v948
    %v950 = vpop.f32.mrb[0].mxu0
    %951 = vdwg.mxu0
    %v953 = vsel %vm235, %v847, 0
    %955 = vmatprep.subr.mxu0 0.0
    %956 = vmatpush1.msra.mxu0 %v619
    %957 = vmatprep.subr.mxu0 0.0
    %958 = vmatpush1.msra.mxu0 %v620
    %959 = vmatprep.subr.mxu0 0.0
    %960 = vmatpush1.msra.mxu0 0.0
    %961 = vmatprep.subr.mxu0 0.0
    %962 = vmatpush1.msra.mxu0 0.0
    %963 = vmatprep.subr.mxu0 0.0
    %964 = vmatpush1.msra.mxu0 0.0
    %965 = vmatprep.subr.mxu0 0.0
    %966 = vmatpush1.msra.mxu0 0.0
    %967 = vmatprep.subr.mxu0 0.0
    %968 = vmatpush1.msra.mxu0 0.0
    %969 = vmatprep.subr.mxu0 0.0
    %970 = vmatpush1.msra.mxu0 0.0
    %971 = vmatprep.subr.mxu0 0.0
    %972 = vmatpush1.msra.mxu0 0.0
    %973 = vmatprep.subr.mxu0 0.0
    %974 = vmatpush1.msra.mxu0 0.0
    %975 = vmatprep.subr.mxu0 0.0
    %976 = vmatpush1.msra.mxu0 0.0
    %977 = vmatprep.subr.mxu0 0.0
    %978 = vmatpush1.msra.mxu0 0.0
    %979 = vmatprep.subr.mxu0 0.0
    %980 = vmatpush1.msra.mxu0 0.0
    %981 = vmatprep.subr.mxu0 0.0
    %982 = vmatpush1.msra.mxu0 0.0
    %983 = vmatprep.subr.mxu0 0.0
    %984 = vmatpush1.msra.mxu0 0.0
    %985 = vmatprep.subr.mxu0 0.0
    %986 = vmatpush1.msra.mxu0 0.0
    %987 = vmatprep.subr.mxu0 0.0
    %988 = vmatpush1.msra.mxu0 0.0
    %989 = vmatprep.subr.mxu0 0.0
    %990 = vmatpush1.msra.mxu0 0.0
    %991 = vmatprep.subr.mxu0 0.0
    %992 = vmatpush1.msra.mxu0 0.0
    %993 = vmatprep.subr.mxu0 0.0
    %994 = vmatpush1.msra.mxu0 0.0
    %995 = vmatprep.subr.mxu0 0.0
    %996 = vmatpush1.msra.mxu0 0.0
    %997 = vmatprep.subr.mxu0 0.0
    %998 = vmatpush1.msra.mxu0 0.0
    %999 = vmatprep.subr.mxu0 0.0
    %1000 = vmatpush1.msra.mxu0 0.0
    %1001 = vmatprep.subr.mxu0 0.0
    %1002 = vmatpush1.msra.mxu0 0.0
    %1003 = vmatprep.subr.mxu0 0.0
    %1004 = vmatpush1.msra.mxu0 0.0
    %1005 = vmatprep.subr.mxu0 0.0
    %1006 = vmatpush1.msra.mxu0 0.0
    %1007 = vmatprep.subr.mxu0 0.0
    %1008 = vmatpush1.msra.mxu0 0.0
    %1009 = vmatprep.subr.mxu0 0.0
    %1010 = vmatpush1.msra.mxu0 0.0
    %1011 = vmatprep.subr.mxu0 0.0
    %1012 = vmatpush1.msra.mxu0 0.0
    %1013 = vmatprep.subr.mxu0 0.0
    %1014 = vmatpush1.msra.mxu0 0.0
    %1015 = vmatprep.subr.mxu0 0.0
    %1016 = vmatpush1.msra.mxu0 0.0
    %1017 = vmatprep.subr.mxu0 0.0
    %1018 = vmatpush1.msra.mxu0 0.0
    %1019 = vmatprep.mubr.f32.mxu0 0.0
    %1020 = vmatmul.mubr.f32.gmra.mrb[0].mxu0 %v953
    %v1021 = vpop.f32.mrb[0].mxu0
    %v1022 = vadd.f32 %v712, %v1021
    %v1023 = vpop.f32.mrb[0].mxu0
    %1024 = vdwg.mxu0
    %v1025 = vadd.f32 %v877, %v949
    %v1026 = vxor.u32 %v1025, 2147483648
    %v1027 = vmul.f32 %v1026, 1.442695
    %v1028 = vpow.pop %v1027
    %v1029 = vadd.f32 %v1028, 1.0
    %v1030 = vrcp.pop %v1029
    %v1031 = vmul.f32 1.0, %v1030
    %1033 = vrot.lane.b32.xlu0 %v949, 96
    %v1034 = vpop.permute.xlu0 %1033
    %v1036 = vmul.f32 %v1031, %v1034
    %1038 = vrot.lane.b32.xlu0 %v1036, 32
    %v1039 = vpop.permute.xlu0 %1038
    %v1041 = vadd.f32 %v877, %v1039
    %v1042 = vtanh.pop %v1041
    %v1043 = vsub.f32 1.0, %v1031
    %1045 = vrot.lane.b32.xlu0 %v1042, 112
    %v1046 = vpop.permute.xlu0 %1045
    %v1048 = vmul.f32 %v1043, %v1046
    %1049 = vrot.lane.b32.xlu0 %v841, 16
    %v1050 = vpop.permute.xlu0 %1049
    %v1052 = vmul.f32 %v1031, %v1050
    %v1053 = vadd.f32 %v1048, %v1052
    %v1054 = vadd.f32 %v878, %v1022
    %v1055 = vxor.u32 %v1054, 2147483648
    %v1056 = vmul.f32 %v1055, 1.442695
    %v1057 = vpow.pop %v1056
    %v1058 = vadd.f32 %v1057, 1.0
    %v1059 = vrcp.pop %v1058
    %v1060 = vmul.f32 1.0, %v1059
    %1062 = vrot.lane.b32.xlu0 %v1022, 96
    %v1063 = vpop.permute.xlu0 %1062
    %v1065 = vmul.f32 %v1060, %v1063
    %1067 = vrot.lane.b32.xlu0 %v1065, 32
    %v1068 = vpop.permute.xlu0 %1067
    %v1070 = vadd.f32 %v878, %v1068
    %v1071 = vtanh.pop %v1070
    %v1072 = vsub.f32 1.0, %v1060
    %1074 = vrot.lane.b32.xlu0 %v1071, 112
    %v1075 = vpop.permute.xlu0 %1074
    %v1077 = vmul.f32 %v1072, %v1075
    %1078 = vrot.lane.b32.xlu0 %v847, 16
    %v1079 = vpop.permute.xlu0 %1078
    %v1081 = vmul.f32 %v1060, %v1079
    %v1082 = vadd.f32 %v1077, %v1081
    %v1083 = vsub.f32 %v1053, %v1050
    %1085 = vrot.lane.b32.xlu0 %v1083, 112
    %v1086 = vpop.permute.xlu0 %1085
    %v1088 = vmul.f32 %v874, %v1086
    %v1089 = vadd.f32 %v841, %v1088
    %v1090 = vsub.f32 %v1082, %v1079
    %1092 = vrot.lane.b32.xlu0 %v1090, 112
    %v1093 = vpop.permute.xlu0 %1092
    %v1095 = vmul.f32 %v876, %v1093
    %v1096 = vadd.f32 %v847, %v1095
    %1098 = vrot.lane.b32.xlu0 %v1053, 112
    %v1099 = vpop.permute.xlu0 %1098
    %v1101 = vmul.f32 %v874, %v1099
    %v1102 = vmul.f32 %v1101, %v852
    %v1103 = vsel %vm855, %v1102, 0.0
    %1104 = vadd.xlane.f32.xlu0 %v1103
    %v1105 = vpop.xlane.xlu0 %1104
    %vm1106 = vcmask 9224
    %1107 = vst.msk [vmem:[#allocation4] sm:$0x3] %vm1106, %v1105
    %1109 = vrot.lane.b32.xlu0 %v1082, 112
    %v1110 = vpop.permute.xlu0 %1109
    %v1112 = vmul.f32 %v876, %v1110
    %v1113 = vmul.f32 %v1112, %v865
    %v1114 = vsel %vm855, %v1113, 0.0
    %1115 = vadd.xlane.f32.xlu0 %v1114
    %v1116 = vpop.xlane.xlu0 %1115
    %vm1117 = vcmask 115824
    %1118 = vst.msk [vmem:[#allocation5] sm:$0x3] %vm1117, %v1116
    %s1119 = scalar_lea.vmem %s18, 4
    %v1120 = vld [vmem:[%s1119] sm:$0x3]
    %s1121 = scalar_lea.vmem %s18, 26
    %v1122 = vld [vmem:[%s1121] sm:$0x3]
    %v1123 = vld [vmem:[#allocation2 + $0x4] sm:$0x3]
    %v1124 = vld [vmem:[#allocation3 + $0x1a] sm:$0x3]
    %v1126 = vsel %vm235, %v1089, 0
    %1128 = vmatprep.subr.mxu0 0.0
    %1129 = vmatpush1.msra.mxu0 %v616
    %1130 = vmatprep.subr.mxu0 0.0
    %1131 = vmatpush1.msra.mxu0 %v617
    %1132 = vmatprep.subr.mxu0 0.0
    %1133 = vmatpush1.msra.mxu0 0.0
    %1134 = vmatprep.subr.mxu0 0.0
    %1135 = vmatpush1.msra.mxu0 0.0
    %1136 = vmatprep.subr.mxu0 0.0
    %1137 = vmatpush1.msra.mxu0 0.0
    %1138 = vmatprep.subr.mxu0 0.0
    %1139 = vmatpush1.msra.mxu0 0.0
    %1140 = vmatprep.subr.mxu0 0.0
    %1141 = vmatpush1.msra.mxu0 0.0
    %1142 = vmatprep.subr.mxu0 0.0
    %1143 = vmatpush1.msra.mxu0 0.0
    %1144 = vmatprep.subr.mxu0 0.0
    %1145 = vmatpush1.msra.mxu0 0.0
    %1146 = vmatprep.subr.mxu0 0.0
    %1147 = vmatpush1.msra.mxu0 0.0
    %1148 = vmatprep.subr.mxu0 0.0
    %1149 = vmatpush1.msra.mxu0 0.0
    %1150 = vmatprep.subr.mxu0 0.0
    %1151 = vmatpush1.msra.mxu0 0.0
    %1152 = vmatprep.subr.mxu0 0.0
    %1153 = vmatpush1.msra.mxu0 0.0
    %1154 = vmatprep.subr.mxu0 0.0
    %1155 = vmatpush1.msra.mxu0 0.0
    %1156 = vmatprep.subr.mxu0 0.0
    %1157 = vmatpush1.msra.mxu0 0.0
    %1158 = vmatprep.subr.mxu0 0.0
    %1159 = vmatpush1.msra.mxu0 0.0
    %1160 = vmatprep.subr.mxu0 0.0
    %1161 = vmatpush1.msra.mxu0 0.0
    %1162 = vmatprep.subr.mxu0 0.0
    %1163 = vmatpush1.msra.mxu0 0.0
    %1164 = vmatprep.subr.mxu0 0.0
    %1165 = vmatpush1.msra.mxu0 0.0
    %1166 = vmatprep.subr.mxu0 0.0
    %1167 = vmatpush1.msra.mxu0 0.0
    %1168 = vmatprep.subr.mxu0 0.0
    %1169 = vmatpush1.msra.mxu0 0.0
    %1170 = vmatprep.subr.mxu0 0.0
    %1171 = vmatpush1.msra.mxu0 0.0
    %1172 = vmatprep.subr.mxu0 0.0
    %1173 = vmatpush1.msra.mxu0 0.0
    %1174 = vmatprep.subr.mxu0 0.0
    %1175 = vmatpush1.msra.mxu0 0.0
    %1176 = vmatprep.subr.mxu0 0.0
    %1177 = vmatpush1.msra.mxu0 0.0
    %1178 = vmatprep.subr.mxu0 0.0
    %1179 = vmatpush1.msra.mxu0 0.0
    %1180 = vmatprep.subr.mxu0 0.0
    %1181 = vmatpush1.msra.mxu0 0.0
    %1182 = vmatprep.subr.mxu0 0.0
    %1183 = vmatpush1.msra.mxu0 0.0
    %1184 = vmatprep.subr.mxu0 0.0
    %1185 = vmatpush1.msra.mxu0 0.0
    %1186 = vmatprep.subr.mxu0 0.0
    %1187 = vmatpush1.msra.mxu0 0.0
    %1188 = vmatprep.subr.mxu0 0.0
    %1189 = vmatpush1.msra.mxu0 0.0
    %1190 = vmatprep.subr.mxu0 0.0
    %1191 = vmatpush1.msra.mxu0 0.0
    %1192 = vmatprep.mubr.f32.mxu0 0.0
    %1193 = vmatmul.mubr.f32.gmra.mrb[0].mxu0 %v1126
    %v1194 = vpop.f32.mrb[0].mxu0
    %v1195 = vadd.f32 %v633, %v1194
    %v1196 = vpop.f32.mrb[0].mxu0
    %1197 = vdwg.mxu0
    %v1199 = vsel %vm235, %v1096, 0
    %1201 = vmatprep.subr.mxu0 0.0
    %1202 = vmatpush1.msra.mxu0 %v619
    %1203 = vmatprep.subr.mxu0 0.0
    %1204 = vmatpush1.msra.mxu0 %v620
    %1205 = vmatprep.subr.mxu0 0.0
    %1206 = vmatpush1.msra.mxu0 0.0
    %1207 = vmatprep.subr.mxu0 0.0
    %1208 = vmatpush1.msra.mxu0 0.0
    %1209 = vmatprep.subr.mxu0 0.0
    %1210 = vmatpush1.msra.mxu0 0.0
    %1211 = vmatprep.subr.mxu0 0.0
    %1212 = vmatpush1.msra.mxu0 0.0
    %1213 = vmatprep.subr.mxu0 0.0
    %1214 = vmatpush1.msra.mxu0 0.0
    %1215 = vmatprep.subr.mxu0 0.0
    %1216 = vmatpush1.msra.mxu0 0.0
    %1217 = vmatprep.subr.mxu0 0.0
    %1218 = vmatpush1.msra.mxu0 0.0
    %1219 = vmatprep.subr.mxu0 0.0
    %1220 = vmatpush1.msra.mxu0 0.0
    %1221 = vmatprep.subr.mxu0 0.0
    %1222 = vmatpush1.msra.mxu0 0.0
    %1223 = vmatprep.subr.mxu0 0.0
    %1224 = vmatpush1.msra.mxu0 0.0
    %1225 = vmatprep.subr.mxu0 0.0
    %1226 = vmatpush1.msra.mxu0 0.0
    %1227 = vmatprep.subr.mxu0 0.0
    %1228 = vmatpush1.msra.mxu0 0.0
    %1229 = vmatprep.subr.mxu0 0.0
    %1230 = vmatpush1.msra.mxu0 0.0
    %1231 = vmatprep.subr.mxu0 0.0
    %1232 = vmatpush1.msra.mxu0 0.0
    %1233 = vmatprep.subr.mxu0 0.0
    %1234 = vmatpush1.msra.mxu0 0.0
    %1235 = vmatprep.subr.mxu0 0.0
    %1236 = vmatpush1.msra.mxu0 0.0
    %1237 = vmatprep.subr.mxu0 0.0
    %1238 = vmatpush1.msra.mxu0 0.0
    %1239 = vmatprep.subr.mxu0 0.0
    %1240 = vmatpush1.msra.mxu0 0.0
    %1241 = vmatprep.subr.mxu0 0.0
    %1242 = vmatpush1.msra.mxu0 0.0
    %1243 = vmatprep.subr.mxu0 0.0
    %1244 = vmatpush1.msra.mxu0 0.0
    %1245 = vmatprep.subr.mxu0 0.0
    %1246 = vmatpush1.msra.mxu0 0.0
    %1247 = vmatprep.subr.mxu0 0.0
    %1248 = vmatpush1.msra.mxu0 0.0
    %1249 = vmatprep.subr.mxu0 0.0
    %1250 = vmatpush1.msra.mxu0 0.0
    %1251 = vmatprep.subr.mxu0 0.0
    %1252 = vmatpush1.msra.mxu0 0.0
    %1253 = vmatprep.subr.mxu0 0.0
    %1254 = vmatpush1.msra.mxu0 0.0
    %1255 = vmatprep.subr.mxu0 0.0
    %1256 = vmatpush1.msra.mxu0 0.0
    %1257 = vmatprep.subr.mxu0 0.0
    %1258 = vmatpush1.msra.mxu0 0.0
    %1259 = vmatprep.subr.mxu0 0.0
    %1260 = vmatpush1.msra.mxu0 0.0
    %1261 = vmatprep.subr.mxu0 0.0
    %1262 = vmatpush1.msra.mxu0 0.0
    %1263 = vmatprep.subr.mxu0 0.0
    %1264 = vmatpush1.msra.mxu0 0.0
    %1265 = vmatprep.mubr.f32.mxu0 0.0
    %1266 = vmatmul.mubr.f32.gmra.mrb[0].mxu0 %v1199
    %v1267 = vpop.f32.mrb[0].mxu0
    %v1268 = vadd.f32 %v712, %v1267
    %v1269 = vpop.f32.mrb[0].mxu0
    %1270 = vdwg.mxu0
    %v1271 = vadd.f32 %v1123, %v1195
    %v1272 = vxor.u32 %v1271, 2147483648
    %v1273 = vmul.f32 %v1272, 1.442695
    %v1274 = vpow.pop %v1273
    %v1275 = vadd.f32 %v1274, 1.0
    %v1276 = vrcp.pop %v1275
    %v1277 = vmul.f32 1.0, %v1276
    %1279 = vrot.lane.b32.xlu0 %v1195, 96
    %v1280 = vpop.permute.xlu0 %1279
    %v1282 = vmul.f32 %v1277, %v1280
    %1284 = vrot.lane.b32.xlu0 %v1282, 32
    %v1285 = vpop.permute.xlu0 %1284
    %v1287 = vadd.f32 %v1123, %v1285
    %v1288 = vtanh.pop %v1287
    %v1289 = vsub.f32 1.0, %v1277
    %1291 = vrot.lane.b32.xlu0 %v1288, 112
    %v1292 = vpop.permute.xlu0 %1291
    %v1294 = vmul.f32 %v1289, %v1292
    %1295 = vrot.lane.b32.xlu0 %v1089, 16
    %v1296 = vpop.permute.xlu0 %1295
    %v1298 = vmul.f32 %v1277, %v1296
    %v1299 = vadd.f32 %v1294, %v1298
    %v1300 = vadd.f32 %v1124, %v1268
    %v1301 = vxor.u32 %v1300, 2147483648
    %v1302 = vmul.f32 %v1301, 1.442695
    %v1303 = vpow.pop %v1302
    %v1304 = vadd.f32 %v1303, 1.0
    %v1305 = vrcp.pop %v1304
    %v1306 = vmul.f32 1.0, %v1305
    %1308 = vrot.lane.b32.xlu0 %v1268, 96
    %v1309 = vpop.permute.xlu0 %1308
    %v1311 = vmul.f32 %v1306, %v1309
    %1313 = vrot.lane.b32.xlu0 %v1311, 32
    %v1314 = vpop.permute.xlu0 %1313
    %v1316 = vadd.f32 %v1124, %v1314
    %v1317 = vtanh.pop %v1316
    %v1318 = vsub.f32 1.0, %v1306
    %1320 = vrot.lane.b32.xlu0 %v1317, 112
    %v1321 = vpop.permute.xlu0 %1320
    %v1323 = vmul.f32 %v1318, %v1321
    %1324 = vrot.lane.b32.xlu0 %v1096, 16
    %v1325 = vpop.permute.xlu0 %1324
    %v1327 = vmul.f32 %v1306, %v1325
    %v1328 = vadd.f32 %v1323, %v1327
    %v1329 = vsub.f32 %v1299, %v1296
    %1331 = vrot.lane.b32.xlu0 %v1329, 112
    %v1332 = vpop.permute.xlu0 %1331
    %v1334 = vmul.f32 %v1120, %v1332
    %v1335 = vadd.f32 %v1089, %v1334
    %v1336 = vsub.f32 %v1328, %v1325
    %1338 = vrot.lane.b32.xlu0 %v1336, 112
    %v1339 = vpop.permute.xlu0 %1338
    %v1341 = vmul.f32 %v1122, %v1339
    %v1342 = vadd.f32 %v1096, %v1341
    %1344 = vrot.lane.b32.xlu0 %v1299, 112
    %v1345 = vpop.permute.xlu0 %1344
    %v1347 = vmul.f32 %v1120, %v1345
    %v1348 = vmul.f32 %v1347, %v852
    %v1349 = vsel %vm855, %v1348, 0.0
    %1350 = vadd.xlane.f32.xlu0 %v1349
    %v1351 = vpop.xlane.xlu0 %1350
    %vm1352 = vcmask 17424
    %1353 = vst.msk [vmem:[#allocation4] sm:$0x3] %vm1352, %v1351
    %1355 = vrot.lane.b32.xlu0 %v1328, 112
    %v1356 = vpop.permute.xlu0 %1355
    %v1358 = vmul.f32 %v1122, %v1356
    %v1359 = vmul.f32 %v1358, %v865
    %v1360 = vsel %vm855, %v1359, 0.0
    %1361 = vadd.xlane.f32.xlu0 %v1360
    %v1362 = vpop.xlane.xlu0 %1361
    %vm1363 = vcmask 107624
    %1364 = vst.msk [vmem:[#allocation5] sm:$0x3] %vm1363, %v1362
    %s1365 = scalar_lea.vmem %s18, 6
    %v1366 = vld [vmem:[%s1365] sm:$0x3]
    %s1367 = scalar_lea.vmem %s18, 24
    %v1368 = vld [vmem:[%s1367] sm:$0x3]
    %v1369 = vld [vmem:[#allocation2 + $0x6] sm:$0x3]
    %v1370 = vld [vmem:[#allocation3 + $0x18] sm:$0x3]
    %v1372 = vsel %vm235, %v1335, 0
    %1374 = vmatprep.subr.mxu0 0.0
    %1375 = vmatpush1.msra.mxu0 %v616
    %1376 = vmatprep.subr.mxu0 0.0
    %1377 = vmatpush1.msra.mxu0 %v617
    %1378 = vmatprep.subr.mxu0 0.0
    %1379 = vmatpush1.msra.mxu0 0.0
    %1380 = vmatprep.subr.mxu0 0.0
    %1381 = vmatpush1.msra.mxu0 0.0
    %1382 = vmatprep.subr.mxu0 0.0
    %1383 = vmatpush1.msra.mxu0 0.0
    %1384 = vmatprep.subr.mxu0 0.0
    %1385 = vmatpush1.msra.mxu0 0.0
    %1386 = vmatprep.subr.mxu0 0.0
    %1387 = vmatpush1.msra.mxu0 0.0
    %1388 = vmatprep.subr.mxu0 0.0
    %1389 = vmatpush1.msra.mxu0 0.0
    %1390 = vmatprep.subr.mxu0 0.0
    %1391 = vmatpush1.msra.mxu0 0.0
    %1392 = vmatprep.subr.mxu0 0.0
    %1393 = vmatpush1.msra.mxu0 0.0
    %1394 = vmatprep.subr.mxu0 0.0
    %1395 = vmatpush1.msra.mxu0 0.0
    %1396 = vmatprep.subr.mxu0 0.0
    %1397 = vmatpush1.msra.mxu0 0.0
    %1398 = vmatprep.subr.mxu0 0.0
    %1399 = vmatpush1.msra.mxu0 0.0
    %1400 = vmatprep.subr.mxu0 0.0
    %1401 = vmatpush1.msra.mxu0 0.0
    %1402 = vmatprep.subr.mxu0 0.0
    %1403 = vmatpush1.msra.mxu0 0.0
    %1404 = vmatprep.subr.mxu0 0.0
    %1405 = vmatpush1.msra.mxu0 0.0
    %1406 = vmatprep.subr.mxu0 0.0
    %1407 = vmatpush1.msra.mxu0 0.0
    %1408 = vmatprep.subr.mxu0 0.0
    %1409 = vmatpush1.msra.mxu0 0.0
    %1410 = vmatprep.subr.mxu0 0.0
    %1411 = vmatpush1.msra.mxu0 0.0
    %1412 = vmatprep.subr.mxu0 0.0
    %1413 = vmatpush1.msra.mxu0 0.0
    %1414 = vmatprep.subr.mxu0 0.0
    %1415 = vmatpush1.msra.mxu0 0.0
    %1416 = vmatprep.subr.mxu0 0.0
    %1417 = vmatpush1.msra.mxu0 0.0
    %1418 = vmatprep.subr.mxu0 0.0
    %1419 = vmatpush1.msra.mxu0 0.0
    %1420 = vmatprep.subr.mxu0 0.0
    %1421 = vmatpush1.msra.mxu0 0.0
    %1422 = vmatprep.subr.mxu0 0.0
    %1423 = vmatpush1.msra.mxu0 0.0
    %1424 = vmatprep.subr.mxu0 0.0
    %1425 = vmatpush1.msra.mxu0 0.0
    %1426 = vmatprep.subr.mxu0 0.0
    %1427 = vmatpush1.msra.mxu0 0.0
    %1428 = vmatprep.subr.mxu0 0.0
    %1429 = vmatpush1.msra.mxu0 0.0
    %1430 = vmatprep.subr.mxu0 0.0
    %1431 = vmatpush1.msra.mxu0 0.0
    %1432 = vmatprep.subr.mxu0 0.0
    %1433 = vmatpush1.msra.mxu0 0.0
    %1434 = vmatprep.subr.mxu0 0.0
    %1435 = vmatpush1.msra.mxu0 0.0
    %1436 = vmatprep.subr.mxu0 0.0
    %1437 = vmatpush1.msra.mxu0 0.0
    %1438 = vmatprep.mubr.f32.mxu0 0.0
    %1439 = vmatmul.mubr.f32.gmra.mrb[0].mxu0 %v1372
    %v1440 = vpop.f32.mrb[0].mxu0
    %v1441 = vadd.f32 %v633, %v1440
    %v1442 = vpop.f32.mrb[0].mxu0
    %1443 = vdwg.mxu0
    %v1445 = vsel %vm235, %v1342, 0
    %1447 = vmatprep.subr.mxu0 0.0
    %1448 = vmatpush1.msra.mxu0 %v619
    %1449 = vmatprep.subr.mxu0 0.0
    %1450 = vmatpush1.msra.mxu0 %v620
    %1451 = vmatprep.subr.mxu0 0.0
    %1452 = vmatpush1.msra.mxu0 0.0
    %1453 = vmatprep.subr.mxu0 0.0
    %1454 = vmatpush1.msra.mxu0 0.0
    %1455 = vmatprep.subr.mxu0 0.0
    %1456 = vmatpush1.msra.mxu0 0.0
    %1457 = vmatprep.subr.mxu0 0.0
    %1458 = vmatpush1.msra.mxu0 0.0
    %1459 = vmatprep.subr.mxu0 0.0
    %1460 = vmatpush1.msra.mxu0 0.0
    %1461 = vmatprep.subr.mxu0 0.0
    %1462 = vmatpush1.msra.mxu0 0.0
    %1463 = vmatprep.subr.mxu0 0.0
    %1464 = vmatpush1.msra.mxu0 0.0
    %1465 = vmatprep.subr.mxu0 0.0
    %1466 = vmatpush1.msra.mxu0 0.0
    %1467 = vmatprep.subr.mxu0 0.0
    %1468 = vmatpush1.msra.mxu0 0.0
    %1469 = vmatprep.subr.mxu0 0.0
    %1470 = vmatpush1.msra.mxu0 0.0
    %1471 = vmatprep.subr.mxu0 0.0
    %1472 = vmatpush1.msra.mxu0 0.0
    %1473 = vmatprep.subr.mxu0 0.0
    %1474 = vmatpush1.msra.mxu0 0.0
    %1475 = vmatprep.subr.mxu0 0.0
    %1476 = vmatpush1.msra.mxu0 0.0
    %1477 = vmatprep.subr.mxu0 0.0
    %1478 = vmatpush1.msra.mxu0 0.0
    %1479 = vmatprep.subr.mxu0 0.0
    %1480 = vmatpush1.msra.mxu0 0.0
    %1481 = vmatprep.subr.mxu0 0.0
    %1482 = vmatpush1.msra.mxu0 0.0
    %1483 = vmatprep.subr.mxu0 0.0
    %1484 = vmatpush1.msra.mxu0 0.0
    %1485 = vmatprep.subr.mxu0 0.0
    %1486 = vmatpush1.msra.mxu0 0.0
    %1487 = vmatprep.subr.mxu0 0.0
    %1488 = vmatpush1.msra.mxu0 0.0
    %1489 = vmatprep.subr.mxu0 0.0
    %1490 = vmatpush1.msra.mxu0 0.0
    %1491 = vmatprep.subr.mxu0 0.0
    %1492 = vmatpush1.msra.mxu0 0.0
    %1493 = vmatprep.subr.mxu0 0.0
    %1494 = vmatpush1.msra.mxu0 0.0
    %1495 = vmatprep.subr.mxu0 0.0
    %1496 = vmatpush1.msra.mxu0 0.0
    %1497 = vmatprep.subr.mxu0 0.0
    %1498 = vmatpush1.msra.mxu0 0.0
    %1499 = vmatprep.subr.mxu0 0.0
    %1500 = vmatpush1.msra.mxu0 0.0
    %1501 = vmatprep.subr.mxu0 0.0
    %1502 = vmatpush1.msra.mxu0 0.0
    %1503 = vmatprep.subr.mxu0 0.0
    %1504 = vmatpush1.msra.mxu0 0.0
    %1505 = vmatprep.subr.mxu0 0.0
    %1506 = vmatpush1.msra.mxu0 0.0
    %1507 = vmatprep.subr.mxu0 0.0
    %1508 = vmatpush1.msra.mxu0 0.0
    %1509 = vmatprep.subr.mxu0 0.0
    %1510 = vmatpush1.msra.mxu0 0.0
    %1511 = vmatprep.mubr.f32.mxu0 0.0
    %1512 = vmatmul.mubr.f32.gmra.mrb[0].mxu0 %v1445
    %v1513 = vpop.f32.mrb[0].mxu0
    %v1514 = vadd.f32 %v712, %v1513
    %v1515 = vpop.f32.mrb[0].mxu0
    %1516 = vdwg.mxu0
    %v1517 = vadd.f32 %v1369, %v1441
    %v1518 = vxor.u32 %v1517, 2147483648
    %v1519 = vmul.f32 %v1518, 1.442695
    %v1520 = vpow.pop %v1519
    %v1521 = vadd.f32 %v1520, 1.0
    %v1522 = vrcp.pop %v1521
    %v1523 = vmul.f32 1.0, %v1522
    %1525 = vrot.lane.b32.xlu0 %v1441, 96
    %v1526 = vpop.permute.xlu0 %1525
    %v1528 = vmul.f32 %v1523, %v1526
    %1530 = vrot.lane.b32.xlu0 %v1528, 32
    %v1531 = vpop.permute.xlu0 %1530
    %v1533 = vadd.f32 %v1369, %v1531
    %v1534 = vtanh.pop %v1533
    %v1535 = vsub.f32 1.0, %v1523
    %1537 = vrot.lane.b32.xlu0 %v1534, 112
    %v1538 = vpop.permute.xlu0 %1537
    %v1540 = vmul.f32 %v1535, %v1538
    %1541 = vrot.lane.b32.xlu0 %v1335, 16
    %v1542 = vpop.permute.xlu0 %1541
    %v1544 = vmul.f32 %v1523, %v1542
    %v1545 = vadd.f32 %v1540, %v1544
    %v1546 = vadd.f32 %v1370, %v1514
    %v1547 = vxor.u32 %v1546, 2147483648
    %v1548 = vmul.f32 %v1547, 1.442695
    %v1549 = vpow.pop %v1548
    %v1550 = vadd.f32 %v1549, 1.0
    %v1551 = vrcp.pop %v1550
    %v1552 = vmul.f32 1.0, %v1551
    %1554 = vrot.lane.b32.xlu0 %v1514, 96
    %v1555 = vpop.permute.xlu0 %1554
    %v1557 = vmul.f32 %v1552, %v1555
    %1559 = vrot.lane.b32.xlu0 %v1557, 32
    %v1560 = vpop.permute.xlu0 %1559
    %v1562 = vadd.f32 %v1370, %v1560
    %v1563 = vtanh.pop %v1562
    %v1564 = vsub.f32 1.0, %v1552
    %1566 = vrot.lane.b32.xlu0 %v1563, 112
    %v1567 = vpop.permute.xlu0 %1566
    %v1569 = vmul.f32 %v1564, %v1567
    %1570 = vrot.lane.b32.xlu0 %v1342, 16
    %v1571 = vpop.permute.xlu0 %1570
    %v1573 = vmul.f32 %v1552, %v1571
    %v1574 = vadd.f32 %v1569, %v1573
    %v1575 = vsub.f32 %v1545, %v1542
    %1577 = vrot.lane.b32.xlu0 %v1575, 112
    %v1578 = vpop.permute.xlu0 %1577
    %v1580 = vmul.f32 %v1366, %v1578
    %v1581 = vadd.f32 %v1335, %v1580
    %v1582 = vsub.f32 %v1574, %v1571
    %1584 = vrot.lane.b32.xlu0 %v1582, 112
    %v1585 = vpop.permute.xlu0 %1584
    %v1587 = vmul.f32 %v1368, %v1585
    %v1588 = vadd.f32 %v1342, %v1587
    %1590 = vrot.lane.b32.xlu0 %v1545, 112
    %v1591 = vpop.permute.xlu0 %1590
    %v1593 = vmul.f32 %v1366, %v1591
    %v1594 = vmul.f32 %v1593, %v852
    %v1595 = vsel %vm855, %v1594, 0.0
    %1596 = vadd.xlane.f32.xlu0 %v1595
    %v1597 = vpop.xlane.xlu0 %1596
    %vm1598 = vcmask 25624
    %1599 = vst.msk [vmem:[#allocation4] sm:$0x3] %vm1598, %v1597
    %1601 = vrot.lane.b32.xlu0 %v1574, 112
    %v1602 = vpop.permute.xlu0 %1601
    %v1604 = vmul.f32 %v1368, %v1602
    %v1605 = vmul.f32 %v1604, %v865
    %v1606 = vsel %vm855, %v1605, 0.0
    %1607 = vadd.xlane.f32.xlu0 %v1606
    %v1608 = vpop.xlane.xlu0 %1607
    %vm1609 = vcmask 99424
    %1610 = vst.msk [vmem:[#allocation5] sm:$0x3] %vm1609, %v1608
    %s1611 = scalar_lea.vmem %s18, 8
    %v1612 = vld [vmem:[%s1611] sm:$0x3]
    %s1613 = scalar_lea.vmem %s18, 22
    %v1614 = vld [vmem:[%s1613] sm:$0x3]
    %v1615 = vld [vmem:[#allocation2 + $0x8] sm:$0x3]
    %v1616 = vld [vmem:[#allocation3 + $0x16] sm:$0x3]
    %v1618 = vsel %vm235, %v1581, 0
    %1620 = vmatprep.subr.mxu0 0.0
    %1621 = vmatpush1.msra.mxu0 %v616
    %1622 = vmatprep.subr.mxu0 0.0
    %1623 = vmatpush1.msra.mxu0 %v617
    %1624 = vmatprep.subr.mxu0 0.0
    %1625 = vmatpush1.msra.mxu0 0.0
    %1626 = vmatprep.subr.mxu0 0.0
    %1627 = vmatpush1.msra.mxu0 0.0
    %1628 = vmatprep.subr.mxu0 0.0
    %1629 = vmatpush1.msra.mxu0 0.0
    %1630 = vmatprep.subr.mxu0 0.0
    %1631 = vmatpush1.msra.mxu0 0.0
    %1632 = vmatprep.subr.mxu0 0.0
    %1633 = vmatpush1.msra.mxu0 0.0
    %1634 = vmatprep.subr.mxu0 0.0
    %1635 = vmatpush1.msra.mxu0 0.0
    %1636 = vmatprep.subr.mxu0 0.0
    %1637 = vmatpush1.msra.mxu0 0.0
    %1638 = vmatprep.subr.mxu0 0.0
    %1639 = vmatpush1.msra.mxu0 0.0
    %1640 = vmatprep.subr.mxu0 0.0
    %1641 = vmatpush1.msra.mxu0 0.0
    %1642 = vmatprep.subr.mxu0 0.0
    %1643 = vmatpush1.msra.mxu0 0.0
    %1644 = vmatprep.subr.mxu0 0.0
    %1645 = vmatpush1.msra.mxu0 0.0
    %1646 = vmatprep.subr.mxu0 0.0
    %1647 = vmatpush1.msra.mxu0 0.0
    %1648 = vmatprep.subr.mxu0 0.0
    %1649 = vmatpush1.msra.mxu0 0.0
    %1650 = vmatprep.subr.mxu0 0.0
    %1651 = vmatpush1.msra.mxu0 0.0
    %1652 = vmatprep.subr.mxu0 0.0
    %1653 = vmatpush1.msra.mxu0 0.0
    %1654 = vmatprep.subr.mxu0 0.0
    %1655 = vmatpush1.msra.mxu0 0.0
    %1656 = vmatprep.subr.mxu0 0.0
    %1657 = vmatpush1.msra.mxu0 0.0
    %1658 = vmatprep.subr.mxu0 0.0
    %1659 = vmatpush1.msra.mxu0 0.0
    %1660 = vmatprep.subr.mxu0 0.0
    %1661 = vmatpush1.msra.mxu0 0.0
    %1662 = vmatprep.subr.mxu0 0.0
    %1663 = vmatpush1.msra.mxu0 0.0
    %1664 = vmatprep.subr.mxu0 0.0
    %1665 = vmatpush1.msra.mxu0 0.0
    %1666 = vmatprep.subr.mxu0 0.0
    %1667 = vmatpush1.msra.mxu0 0.0
    %1668 = vmatprep.subr.mxu0 0.0
    %1669 = vmatpush1.msra.mxu0 0.0
    %1670 = vmatprep.subr.mxu0 0.0
    %1671 = vmatpush1.msra.mxu0 0.0
    %1672 = vmatprep.subr.mxu0 0.0
    %1673 = vmatpush1.msra.mxu0 0.0
    %1674 = vmatprep.subr.mxu0 0.0
    %1675 = vmatpush1.msra.mxu0 0.0
    %1676 = vmatprep.subr.mxu0 0.0
    %1677 = vmatpush1.msra.mxu0 0.0
    %1678 = vmatprep.subr.mxu0 0.0
    %1679 = vmatpush1.msra.mxu0 0.0
    %1680 = vmatprep.subr.mxu0 0.0
    %1681 = vmatpush1.msra.mxu0 0.0
    %1682 = vmatprep.subr.mxu0 0.0
    %1683 = vmatpush1.msra.mxu0 0.0
    %1684 = vmatprep.mubr.f32.mxu0 0.0
    %1685 = vmatmul.mubr.f32.gmra.mrb[0].mxu0 %v1618
    %v1686 = vpop.f32.mrb[0].mxu0
    %v1687 = vadd.f32 %v633, %v1686
    %v1688 = vpop.f32.mrb[0].mxu0
    %1689 = vdwg.mxu0
    %v1691 = vsel %vm235, %v1588, 0
    %1693 = vmatprep.subr.mxu0 0.0
    %1694 = vmatpush1.msra.mxu0 %v619
    %1695 = vmatprep.subr.mxu0 0.0
    %1696 = vmatpush1.msra.mxu0 %v620
    %1697 = vmatprep.subr.mxu0 0.0
    %1698 = vmatpush1.msra.mxu0 0.0
    %1699 = vmatprep.subr.mxu0 0.0
    %1700 = vmatpush1.msra.mxu0 0.0
    %1701 = vmatprep.subr.mxu0 0.0
    %1702 = vmatpush1.msra.mxu0 0.0
    %1703 = vmatprep.subr.mxu0 0.0
    %1704 = vmatpush1.msra.mxu0 0.0
    %1705 = vmatprep.subr.mxu0 0.0
    %1706 = vmatpush1.msra.mxu0 0.0
    %1707 = vmatprep.subr.mxu0 0.0
    %1708 = vmatpush1.msra.mxu0 0.0
    %1709 = vmatprep.subr.mxu0 0.0
    %1710 = vmatpush1.msra.mxu0 0.0
    %1711 = vmatprep.subr.mxu0 0.0
    %1712 = vmatpush1.msra.mxu0 0.0
    %1713 = vmatprep.subr.mxu0 0.0
    %1714 = vmatpush1.msra.mxu0 0.0
    %1715 = vmatprep.subr.mxu0 0.0
    %1716 = vmatpush1.msra.mxu0 0.0
    %1717 = vmatprep.subr.mxu0 0.0
    %1718 = vmatpush1.msra.mxu0 0.0
    %1719 = vmatprep.subr.mxu0 0.0
    %1720 = vmatpush1.msra.mxu0 0.0
    %1721 = vmatprep.subr.mxu0 0.0
    %1722 = vmatpush1.msra.mxu0 0.0
    %1723 = vmatprep.subr.mxu0 0.0
    %1724 = vmatpush1.msra.mxu0 0.0
    %1725 = vmatprep.subr.mxu0 0.0
    %1726 = vmatpush1.msra.mxu0 0.0
    %1727 = vmatprep.subr.mxu0 0.0
    %1728 = vmatpush1.msra.mxu0 0.0
    %1729 = vmatprep.subr.mxu0 0.0
    %1730 = vmatpush1.msra.mxu0 0.0
    %1731 = vmatprep.subr.mxu0 0.0
    %1732 = vmatpush1.msra.mxu0 0.0
    %1733 = vmatprep.subr.mxu0 0.0
    %1734 = vmatpush1.msra.mxu0 0.0
    %1735 = vmatprep.subr.mxu0 0.0
    %1736 = vmatpush1.msra.mxu0 0.0
    %1737 = vmatprep.subr.mxu0 0.0
    %1738 = vmatpush1.msra.mxu0 0.0
    %1739 = vmatprep.subr.mxu0 0.0
    %1740 = vmatpush1.msra.mxu0 0.0
    %1741 = vmatprep.subr.mxu0 0.0
    %1742 = vmatpush1.msra.mxu0 0.0
    %1743 = vmatprep.subr.mxu0 0.0
    %1744 = vmatpush1.msra.mxu0 0.0
    %1745 = vmatprep.subr.mxu0 0.0
    %1746 = vmatpush1.msra.mxu0 0.0
    %1747 = vmatprep.subr.mxu0 0.0
    %1748 = vmatpush1.msra.mxu0 0.0
    %1749 = vmatprep.subr.mxu0 0.0
    %1750 = vmatpush1.msra.mxu0 0.0
    %1751 = vmatprep.subr.mxu0 0.0
    %1752 = vmatpush1.msra.mxu0 0.0
    %1753 = vmatprep.subr.mxu0 0.0
    %1754 = vmatpush1.msra.mxu0 0.0
    %1755 = vmatprep.subr.mxu0 0.0
    %1756 = vmatpush1.msra.mxu0 0.0
    %1757 = vmatprep.mubr.f32.mxu0 0.0
    %1758 = vmatmul.mubr.f32.gmra.mrb[0].mxu0 %v1691
    %v1759 = vpop.f32.mrb[0].mxu0
    %v1760 = vadd.f32 %v712, %v1759
    %v1761 = vpop.f32.mrb[0].mxu0
    %1762 = vdwg.mxu0
    %v1763 = vadd.f32 %v1615, %v1687
    %v1764 = vxor.u32 %v1763, 2147483648
    %v1765 = vmul.f32 %v1764, 1.442695
    %v1766 = vpow.pop %v1765
    %v1767 = vadd.f32 %v1766, 1.0
    %v1768 = vrcp.pop %v1767
    %v1769 = vmul.f32 1.0, %v1768
    %1771 = vrot.lane.b32.xlu0 %v1687, 96
    %v1772 = vpop.permute.xlu0 %1771
    %v1774 = vmul.f32 %v1769, %v1772
    %1776 = vrot.lane.b32.xlu0 %v1774, 32
    %v1777 = vpop.permute.xlu0 %1776
    %v1779 = vadd.f32 %v1615, %v1777
    %v1780 = vtanh.pop %v1779
    %v1781 = vsub.f32 1.0, %v1769
    %1783 = vrot.lane.b32.xlu0 %v1780, 112
    %v1784 = vpop.permute.xlu0 %1783
    %v1786 = vmul.f32 %v1781, %v1784
    %1787 = vrot.lane.b32.xlu0 %v1581, 16
    %v1788 = vpop.permute.xlu0 %1787
    %v1790 = vmul.f32 %v1769, %v1788
    %v1791 = vadd.f32 %v1786, %v1790
    %v1792 = vadd.f32 %v1616, %v1760
    %v1793 = vxor.u32 %v1792, 2147483648
    %v1794 = vmul.f32 %v1793, 1.442695
    %v1795 = vpow.pop %v1794
    %v1796 = vadd.f32 %v1795, 1.0
    %v1797 = vrcp.pop %v1796
    %v1798 = vmul.f32 1.0, %v1797
    %1800 = vrot.lane.b32.xlu0 %v1760, 96
    %v1801 = vpop.permute.xlu0 %1800
    %v1803 = vmul.f32 %v1798, %v1801
    %1805 = vrot.lane.b32.xlu0 %v1803, 32
    %v1806 = vpop.permute.xlu0 %1805
    %v1808 = vadd.f32 %v1616, %v1806
    %v1809 = vtanh.pop %v1808
    %v1810 = vsub.f32 1.0, %v1798
    %1812 = vrot.lane.b32.xlu0 %v1809, 112
    %v1813 = vpop.permute.xlu0 %1812
    %v1815 = vmul.f32 %v1810, %v1813
    %1816 = vrot.lane.b32.xlu0 %v1588, 16
    %v1817 = vpop.permute.xlu0 %1816
    %v1819 = vmul.f32 %v1798, %v1817
    %v1820 = vadd.f32 %v1815, %v1819
    %v1821 = vsub.f32 %v1791, %v1788
    %1823 = vrot.lane.b32.xlu0 %v1821, 112
    %v1824 = vpop.permute.xlu0 %1823
    %v1826 = vmul.f32 %v1612, %v1824
    %v1827 = vadd.f32 %v1581, %v1826
    %v1828 = vsub.f32 %v1820, %v1817
    %1830 = vrot.lane.b32.xlu0 %v1828, 112
    %v1831 = vpop.permute.xlu0 %1830
    %v1833 = vmul.f32 %v1614, %v1831
    %v1834 = vadd.f32 %v1588, %v1833
    %1836 = vrot.lane.b32.xlu0 %v1791, 112
    %v1837 = vpop.permute.xlu0 %1836
    %v1839 = vmul.f32 %v1612, %v1837
    %v1840 = vmul.f32 %v1839, %v852
    %v1841 = vsel %vm855, %v1840, 0.0
    %1842 = vadd.xlane.f32.xlu0 %v1841
    %v1843 = vpop.xlane.xlu0 %1842
    %vm1844 = vcmask 33824
    %1845 = vst.msk [vmem:[#allocation4] sm:$0x3] %vm1844, %v1843
    %1847 = vrot.lane.b32.xlu0 %v1820, 112
    %v1848 = vpop.permute.xlu0 %1847
    %v1850 = vmul.f32 %v1614, %v1848
    %v1851 = vmul.f32 %v1850, %v865
    %v1852 = vsel %vm855, %v1851, 0.0
    %1853 = vadd.xlane.f32.xlu0 %v1852
    %v1854 = vpop.xlane.xlu0 %1853
    %vm1855 = vcmask 91224
    %1856 = vst.msk [vmem:[#allocation5] sm:$0x3] %vm1855, %v1854
    %s1857 = scalar_lea.vmem %s18, 10
    %v1858 = vld [vmem:[%s1857] sm:$0x3]
    %s1859 = scalar_lea.vmem %s18, 20
    %v1860 = vld [vmem:[%s1859] sm:$0x3]
    %v1861 = vld [vmem:[#allocation2 + $0xa] sm:$0x3]
    %v1862 = vld [vmem:[#allocation3 + $0x14] sm:$0x3]
    %v1864 = vsel %vm235, %v1827, 0
    %1866 = vmatprep.subr.mxu0 0.0
    %1867 = vmatpush1.msra.mxu0 %v616
    %1868 = vmatprep.subr.mxu0 0.0
    %1869 = vmatpush1.msra.mxu0 %v617
    %1870 = vmatprep.subr.mxu0 0.0
    %1871 = vmatpush1.msra.mxu0 0.0
    %1872 = vmatprep.subr.mxu0 0.0
    %1873 = vmatpush1.msra.mxu0 0.0
    %1874 = vmatprep.subr.mxu0 0.0
    %1875 = vmatpush1.msra.mxu0 0.0
    %1876 = vmatprep.subr.mxu0 0.0
    %1877 = vmatpush1.msra.mxu0 0.0
    %1878 = vmatprep.subr.mxu0 0.0
    %1879 = vmatpush1.msra.mxu0 0.0
    %1880 = vmatprep.subr.mxu0 0.0
    %1881 = vmatpush1.msra.mxu0 0.0
    %1882 = vmatprep.subr.mxu0 0.0
    %1883 = vmatpush1.msra.mxu0 0.0
    %1884 = vmatprep.subr.mxu0 0.0
    %1885 = vmatpush1.msra.mxu0 0.0
    %1886 = vmatprep.subr.mxu0 0.0
    %1887 = vmatpush1.msra.mxu0 0.0
    %1888 = vmatprep.subr.mxu0 0.0
    %1889 = vmatpush1.msra.mxu0 0.0
    %1890 = vmatprep.subr.mxu0 0.0
    %1891 = vmatpush1.msra.mxu0 0.0
    %1892 = vmatprep.subr.mxu0 0.0
    %1893 = vmatpush1.msra.mxu0 0.0
    %1894 = vmatprep.subr.mxu0 0.0
    %1895 = vmatpush1.msra.mxu0 0.0
    %1896 = vmatprep.subr.mxu0 0.0
    %1897 = vmatpush1.msra.mxu0 0.0
    %1898 = vmatprep.subr.mxu0 0.0
    %1899 = vmatpush1.msra.mxu0 0.0
    %1900 = vmatprep.subr.mxu0 0.0
    %1901 = vmatpush1.msra.mxu0 0.0
    %1902 = vmatprep.subr.mxu0 0.0
    %1903 = vmatpush1.msra.mxu0 0.0
    %1904 = vmatprep.subr.mxu0 0.0
    %1905 = vmatpush1.msra.mxu0 0.0
    %1906 = vmatprep.subr.mxu0 0.0
    %1907 = vmatpush1.msra.mxu0 0.0
    %1908 = vmatprep.subr.mxu0 0.0
    %1909 = vmatpush1.msra.mxu0 0.0
    %1910 = vmatprep.subr.mxu0 0.0
    %1911 = vmatpush1.msra.mxu0 0.0
    %1912 = vmatprep.subr.mxu0 0.0
    %1913 = vmatpush1.msra.mxu0 0.0
    %1914 = vmatprep.subr.mxu0 0.0
    %1915 = vmatpush1.msra.mxu0 0.0
    %1916 = vmatprep.subr.mxu0 0.0
    %1917 = vmatpush1.msra.mxu0 0.0
    %1918 = vmatprep.subr.mxu0 0.0
    %1919 = vmatpush1.msra.mxu0 0.0
    %1920 = vmatprep.subr.mxu0 0.0
    %1921 = vmatpush1.msra.mxu0 0.0
    %1922 = vmatprep.subr.mxu0 0.0
    %1923 = vmatpush1.msra.mxu0 0.0
    %1924 = vmatprep.subr.mxu0 0.0
    %1925 = vmatpush1.msra.mxu0 0.0
    %1926 = vmatprep.subr.mxu0 0.0
    %1927 = vmatpush1.msra.mxu0 0.0
    %1928 = vmatprep.subr.mxu0 0.0
    %1929 = vmatpush1.msra.mxu0 0.0
    %1930 = vmatprep.mubr.f32.mxu0 0.0
    %1931 = vmatmul.mubr.f32.gmra.mrb[0].mxu0 %v1864
    %v1932 = vpop.f32.mrb[0].mxu0
    %v1933 = vadd.f32 %v633, %v1932
    %v1934 = vpop.f32.mrb[0].mxu0
    %1935 = vdwg.mxu0
    %v1937 = vsel %vm235, %v1834, 0
    %1939 = vmatprep.subr.mxu0 0.0
    %1940 = vmatpush1.msra.mxu0 %v619
    %1941 = vmatprep.subr.mxu0 0.0
    %1942 = vmatpush1.msra.mxu0 %v620
    %1943 = vmatprep.subr.mxu0 0.0
    %1944 = vmatpush1.msra.mxu0 0.0
    %1945 = vmatprep.subr.mxu0 0.0
    %1946 = vmatpush1.msra.mxu0 0.0
    %1947 = vmatprep.subr.mxu0 0.0
    %1948 = vmatpush1.msra.mxu0 0.0
    %1949 = vmatprep.subr.mxu0 0.0
    %1950 = vmatpush1.msra.mxu0 0.0
    %1951 = vmatprep.subr.mxu0 0.0
    %1952 = vmatpush1.msra.mxu0 0.0
    %1953 = vmatprep.subr.mxu0 0.0
    %1954 = vmatpush1.msra.mxu0 0.0
    %1955 = vmatprep.subr.mxu0 0.0
    %1956 = vmatpush1.msra.mxu0 0.0
    %1957 = vmatprep.subr.mxu0 0.0
    %1958 = vmatpush1.msra.mxu0 0.0
    %1959 = vmatprep.subr.mxu0 0.0
    %1960 = vmatpush1.msra.mxu0 0.0
    %1961 = vmatprep.subr.mxu0 0.0
    %1962 = vmatpush1.msra.mxu0 0.0
    %1963 = vmatprep.subr.mxu0 0.0
    %1964 = vmatpush1.msra.mxu0 0.0
    %1965 = vmatprep.subr.mxu0 0.0
    %1966 = vmatpush1.msra.mxu0 0.0
    %1967 = vmatprep.subr.mxu0 0.0
    %1968 = vmatpush1.msra.mxu0 0.0
    %1969 = vmatprep.subr.mxu0 0.0
    %1970 = vmatpush1.msra.mxu0 0.0
    %1971 = vmatprep.subr.mxu0 0.0
    %1972 = vmatpush1.msra.mxu0 0.0
    %1973 = vmatprep.subr.mxu0 0.0
    %1974 = vmatpush1.msra.mxu0 0.0
    %1975 = vmatprep.subr.mxu0 0.0
    %1976 = vmatpush1.msra.mxu0 0.0
    %1977 = vmatprep.subr.mxu0 0.0
    %1978 = vmatpush1.msra.mxu0 0.0
    %1979 = vmatprep.subr.mxu0 0.0
    %1980 = vmatpush1.msra.mxu0 0.0
    %1981 = vmatprep.subr.mxu0 0.0
    %1982 = vmatpush1.msra.mxu0 0.0
    %1983 = vmatprep.subr.mxu0 0.0
    %1984 = vmatpush1.msra.mxu0 0.0
    %1985 = vmatprep.subr.mxu0 0.0
    %1986 = vmatpush1.msra.mxu0 0.0
    %1987 = vmatprep.subr.mxu0 0.0
    %1988 = vmatpush1.msra.mxu0 0.0
    %1989 = vmatprep.subr.mxu0 0.0
    %1990 = vmatpush1.msra.mxu0 0.0
    %1991 = vmatprep.subr.mxu0 0.0
    %1992 = vmatpush1.msra.mxu0 0.0
    %1993 = vmatprep.subr.mxu0 0.0
    %1994 = vmatpush1.msra.mxu0 0.0
    %1995 = vmatprep.subr.mxu0 0.0
    %1996 = vmatpush1.msra.mxu0 0.0
    %1997 = vmatprep.subr.mxu0 0.0
    %1998 = vmatpush1.msra.mxu0 0.0
    %1999 = vmatprep.subr.mxu0 0.0
    %2000 = vmatpush1.msra.mxu0 0.0
    %2001 = vmatprep.subr.mxu0 0.0
    %2002 = vmatpush1.msra.mxu0 0.0
    %2003 = vmatprep.mubr.f32.mxu0 0.0
    %2004 = vmatmul.mubr.f32.gmra.mrb[0].mxu0 %v1937
    %v2005 = vpop.f32.mrb[0].mxu0
    %v2006 = vadd.f32 %v712, %v2005
    %v2007 = vpop.f32.mrb[0].mxu0
    %2008 = vdwg.mxu0
    %v2009 = vadd.f32 %v1861, %v1933
    %v2010 = vxor.u32 %v2009, 2147483648
    %v2011 = vmul.f32 %v2010, 1.442695
    %v2012 = vpow.pop %v2011
    %v2013 = vadd.f32 %v2012, 1.0
    %v2014 = vrcp.pop %v2013
    %v2015 = vmul.f32 1.0, %v2014
    %2017 = vrot.lane.b32.xlu0 %v1933, 96
    %v2018 = vpop.permute.xlu0 %2017
    %v2020 = vmul.f32 %v2015, %v2018
    %2022 = vrot.lane.b32.xlu0 %v2020, 32
    %v2023 = vpop.permute.xlu0 %2022
    %v2025 = vadd.f32 %v1861, %v2023
    %v2026 = vtanh.pop %v2025
    %v2027 = vsub.f32 1.0, %v2015
    %2029 = vrot.lane.b32.xlu0 %v2026, 112
    %v2030 = vpop.permute.xlu0 %2029
    %v2032 = vmul.f32 %v2027, %v2030
    %2033 = vrot.lane.b32.xlu0 %v1827, 16
    %v2034 = vpop.permute.xlu0 %2033
    %v2036 = vmul.f32 %v2015, %v2034
    %v2037 = vadd.f32 %v2032, %v2036
    %v2038 = vadd.f32 %v1862, %v2006
    %v2039 = vxor.u32 %v2038, 2147483648
    %v2040 = vmul.f32 %v2039, 1.442695
    %v2041 = vpow.pop %v2040
    %v2042 = vadd.f32 %v2041, 1.0
    %v2043 = vrcp.pop %v2042
    %v2044 = vmul.f32 1.0, %v2043
    %2046 = vrot.lane.b32.xlu0 %v2006, 96
    %v2047 = vpop.permute.xlu0 %2046
    %v2049 = vmul.f32 %v2044, %v2047
    %2051 = vrot.lane.b32.xlu0 %v2049, 32
    %v2052 = vpop.permute.xlu0 %2051
    %v2054 = vadd.f32 %v1862, %v2052
    %v2055 = vtanh.pop %v2054
    %v2056 = vsub.f32 1.0, %v2044
    %2058 = vrot.lane.b32.xlu0 %v2055, 112
    %v2059 = vpop.permute.xlu0 %2058
    %v2061 = vmul.f32 %v2056, %v2059
    %2062 = vrot.lane.b32.xlu0 %v1834, 16
    %v2063 = vpop.permute.xlu0 %2062
    %v2065 = vmul.f32 %v2044, %v2063
    %v2066 = vadd.f32 %v2061, %v2065
    %v2067 = vsub.f32 %v2037, %v2034
    %2069 = vrot.lane.b32.xlu0 %v2067, 112
    %v2070 = vpop.permute.xlu0 %2069
    %v2072 = vmul.f32 %v1858, %v2070
    %v2073 = vadd.f32 %v1827, %v2072
    %v2074 = vsub.f32 %v2066, %v2063
    %2076 = vrot.lane.b32.xlu0 %v2074, 112
    %v2077 = vpop.permute.xlu0 %2076
    %v2079 = vmul.f32 %v1860, %v2077
    %v2080 = vadd.f32 %v1834, %v2079
    %2082 = vrot.lane.b32.xlu0 %v2037, 112
    %v2083 = vpop.permute.xlu0 %2082
    %v2085 = vmul.f32 %v1858, %v2083
    %v2086 = vmul.f32 %v2085, %v852
    %v2087 = vsel %vm855, %v2086, 0.0
    %2088 = vadd.xlane.f32.xlu0 %v2087
    %v2089 = vpop.xlane.xlu0 %2088
    %vm2090 = vcmask 42024
    %2091 = vst.msk [vmem:[#allocation4] sm:$0x3] %vm2090, %v2089
    %2093 = vrot.lane.b32.xlu0 %v2066, 112
    %v2094 = vpop.permute.xlu0 %2093
    %v2096 = vmul.f32 %v1860, %v2094
    %v2097 = vmul.f32 %v2096, %v865
    %v2098 = vsel %vm855, %v2097, 0.0
    %2099 = vadd.xlane.f32.xlu0 %v2098
    %v2100 = vpop.xlane.xlu0 %2099
    %vm2101 = vcmask 83024
    %2102 = vst.msk [vmem:[#allocation5] sm:$0x3] %vm2101, %v2100
    %s2103 = scalar_lea.vmem %s18, 12
    %v2104 = vld [vmem:[%s2103] sm:$0x3]
    %s2105 = scalar_lea.vmem %s18, 18
    %v2106 = vld [vmem:[%s2105] sm:$0x3]
    %v2107 = vld [vmem:[#allocation2 + $0xc] sm:$0x3]
    %v2108 = vld [vmem:[#allocation3 + $0x12] sm:$0x3]
    %v2110 = vsel %vm235, %v2073, 0
    %2112 = vmatprep.subr.mxu0 0.0
    %2113 = vmatpush1.msra.mxu0 %v616
    %2114 = vmatprep.subr.mxu0 0.0
    %2115 = vmatpush1.msra.mxu0 %v617
    %2116 = vmatprep.subr.mxu0 0.0
    %2117 = vmatpush1.msra.mxu0 0.0
    %2118 = vmatprep.subr.mxu0 0.0
    %2119 = vmatpush1.msra.mxu0 0.0
    %2120 = vmatprep.subr.mxu0 0.0
    %2121 = vmatpush1.msra.mxu0 0.0
    %2122 = vmatprep.subr.mxu0 0.0
    %2123 = vmatpush1.msra.mxu0 0.0
    %2124 = vmatprep.subr.mxu0 0.0
    %2125 = vmatpush1.msra.mxu0 0.0
    %2126 = vmatprep.subr.mxu0 0.0
    %2127 = vmatpush1.msra.mxu0 0.0
    %2128 = vmatprep.subr.mxu0 0.0
    %2129 = vmatpush1.msra.mxu0 0.0
    %2130 = vmatprep.subr.mxu0 0.0
    %2131 = vmatpush1.msra.mxu0 0.0
    %2132 = vmatprep.subr.mxu0 0.0
    %2133 = vmatpush1.msra.mxu0 0.0
    %2134 = vmatprep.subr.mxu0 0.0
    %2135 = vmatpush1.msra.mxu0 0.0
    %2136 = vmatprep.subr.mxu0 0.0
    %2137 = vmatpush1.msra.mxu0 0.0
    %2138 = vmatprep.subr.mxu0 0.0
    %2139 = vmatpush1.msra.mxu0 0.0
    %2140 = vmatprep.subr.mxu0 0.0
    %2141 = vmatpush1.msra.mxu0 0.0
    %2142 = vmatprep.subr.mxu0 0.0
    %2143 = vmatpush1.msra.mxu0 0.0
    %2144 = vmatprep.subr.mxu0 0.0
    %2145 = vmatpush1.msra.mxu0 0.0
    %2146 = vmatprep.subr.mxu0 0.0
    %2147 = vmatpush1.msra.mxu0 0.0
    %2148 = vmatprep.subr.mxu0 0.0
    %2149 = vmatpush1.msra.mxu0 0.0
    %2150 = vmatprep.subr.mxu0 0.0
    %2151 = vmatpush1.msra.mxu0 0.0
    %2152 = vmatprep.subr.mxu0 0.0
    %2153 = vmatpush1.msra.mxu0 0.0
    %2154 = vmatprep.subr.mxu0 0.0
    %2155 = vmatpush1.msra.mxu0 0.0
    %2156 = vmatprep.subr.mxu0 0.0
    %2157 = vmatpush1.msra.mxu0 0.0
    %2158 = vmatprep.subr.mxu0 0.0
    %2159 = vmatpush1.msra.mxu0 0.0
    %2160 = vmatprep.subr.mxu0 0.0
    %2161 = vmatpush1.msra.mxu0 0.0
    %2162 = vmatprep.subr.mxu0 0.0
    %2163 = vmatpush1.msra.mxu0 0.0
    %2164 = vmatprep.subr.mxu0 0.0
    %2165 = vmatpush1.msra.mxu0 0.0
    %2166 = vmatprep.subr.mxu0 0.0
    %2167 = vmatpush1.msra.mxu0 0.0
    %2168 = vmatprep.subr.mxu0 0.0
    %2169 = vmatpush1.msra.mxu0 0.0
    %2170 = vmatprep.subr.mxu0 0.0
    %2171 = vmatpush1.msra.mxu0 0.0
    %2172 = vmatprep.subr.mxu0 0.0
    %2173 = vmatpush1.msra.mxu0 0.0
    %2174 = vmatprep.subr.mxu0 0.0
    %2175 = vmatpush1.msra.mxu0 0.0
    %2176 = vmatprep.mubr.f32.mxu0 0.0
    %2177 = vmatmul.mubr.f32.gmra.mrb[0].mxu0 %v2110
    %v2178 = vpop.f32.mrb[0].mxu0
    %v2179 = vadd.f32 %v633, %v2178
    %v2180 = vpop.f32.mrb[0].mxu0
    %2181 = vdwg.mxu0
    %v2183 = vsel %vm235, %v2080, 0
    %2185 = vmatprep.subr.mxu0 0.0
    %2186 = vmatpush1.msra.mxu0 %v619
    %2187 = vmatprep.subr.mxu0 0.0
    %2188 = vmatpush1.msra.mxu0 %v620
    %2189 = vmatprep.subr.mxu0 0.0
    %2190 = vmatpush1.msra.mxu0 0.0
    %2191 = vmatprep.subr.mxu0 0.0
    %2192 = vmatpush1.msra.mxu0 0.0
    %2193 = vmatprep.subr.mxu0 0.0
    %2194 = vmatpush1.msra.mxu0 0.0
    %2195 = vmatprep.subr.mxu0 0.0
    %2196 = vmatpush1.msra.mxu0 0.0
    %2197 = vmatprep.subr.mxu0 0.0
    %2198 = vmatpush1.msra.mxu0 0.0
    %2199 = vmatprep.subr.mxu0 0.0
    %2200 = vmatpush1.msra.mxu0 0.0
    %2201 = vmatprep.subr.mxu0 0.0
    %2202 = vmatpush1.msra.mxu0 0.0
    %2203 = vmatprep.subr.mxu0 0.0
    %2204 = vmatpush1.msra.mxu0 0.0
    %2205 = vmatprep.subr.mxu0 0.0
    %2206 = vmatpush1.msra.mxu0 0.0
    %2207 = vmatprep.subr.mxu0 0.0
    %2208 = vmatpush1.msra.mxu0 0.0
    %2209 = vmatprep.subr.mxu0 0.0
    %2210 = vmatpush1.msra.mxu0 0.0
    %2211 = vmatprep.subr.mxu0 0.0
    %2212 = vmatpush1.msra.mxu0 0.0
    %2213 = vmatprep.subr.mxu0 0.0
    %2214 = vmatpush1.msra.mxu0 0.0
    %2215 = vmatprep.subr.mxu0 0.0
    %2216 = vmatpush1.msra.mxu0 0.0
    %2217 = vmatprep.subr.mxu0 0.0
    %2218 = vmatpush1.msra.mxu0 0.0
    %2219 = vmatprep.subr.mxu0 0.0
    %2220 = vmatpush1.msra.mxu0 0.0
    %2221 = vmatprep.subr.mxu0 0.0
    %2222 = vmatpush1.msra.mxu0 0.0
    %2223 = vmatprep.subr.mxu0 0.0
    %2224 = vmatpush1.msra.mxu0 0.0
    %2225 = vmatprep.subr.mxu0 0.0
    %2226 = vmatpush1.msra.mxu0 0.0
    %2227 = vmatprep.subr.mxu0 0.0
    %2228 = vmatpush1.msra.mxu0 0.0
    %2229 = vmatprep.subr.mxu0 0.0
    %2230 = vmatpush1.msra.mxu0 0.0
    %2231 = vmatprep.subr.mxu0 0.0
    %2232 = vmatpush1.msra.mxu0 0.0
    %2233 = vmatprep.subr.mxu0 0.0
    %2234 = vmatpush1.msra.mxu0 0.0
    %2235 = vmatprep.subr.mxu0 0.0
    %2236 = vmatpush1.msra.mxu0 0.0
    %2237 = vmatprep.subr.mxu0 0.0
    %2238 = vmatpush1.msra.mxu0 0.0
    %2239 = vmatprep.subr.mxu0 0.0
    %2240 = vmatpush1.msra.mxu0 0.0
    %2241 = vmatprep.subr.mxu0 0.0
    %2242 = vmatpush1.msra.mxu0 0.0
    %2243 = vmatprep.subr.mxu0 0.0
    %2244 = vmatpush1.msra.mxu0 0.0
    %2245 = vmatprep.subr.mxu0 0.0
    %2246 = vmatpush1.msra.mxu0 0.0
    %2247 = vmatprep.subr.mxu0 0.0
    %2248 = vmatpush1.msra.mxu0 0.0
    %2249 = vmatprep.mubr.f32.mxu0 0.0
    %2250 = vmatmul.mubr.f32.gmra.mrb[0].mxu0 %v2183
    %v2251 = vpop.f32.mrb[0].mxu0
    %v2252 = vadd.f32 %v712, %v2251
    %v2253 = vpop.f32.mrb[0].mxu0
    %2254 = vdwg.mxu0
    %v2255 = vadd.f32 %v2107, %v2179
    %v2256 = vxor.u32 %v2255, 2147483648
    %v2257 = vmul.f32 %v2256, 1.442695
    %v2258 = vpow.pop %v2257
    %v2259 = vadd.f32 %v2258, 1.0
    %v2260 = vrcp.pop %v2259
    %v2261 = vmul.f32 1.0, %v2260
    %2263 = vrot.lane.b32.xlu0 %v2179, 96
    %v2264 = vpop.permute.xlu0 %2263
    %v2266 = vmul.f32 %v2261, %v2264
    %2268 = vrot.lane.b32.xlu0 %v2266, 32
    %v2269 = vpop.permute.xlu0 %2268
    %v2271 = vadd.f32 %v2107, %v2269
    %v2272 = vtanh.pop %v2271
    %v2273 = vsub.f32 1.0, %v2261
    %2275 = vrot.lane.b32.xlu0 %v2272, 112
    %v2276 = vpop.permute.xlu0 %2275
    %v2278 = vmul.f32 %v2273, %v2276
    %2279 = vrot.lane.b32.xlu0 %v2073, 16
    %v2280 = vpop.permute.xlu0 %2279
    %v2282 = vmul.f32 %v2261, %v2280
    %v2283 = vadd.f32 %v2278, %v2282
    %v2284 = vadd.f32 %v2108, %v2252
    %v2285 = vxor.u32 %v2284, 2147483648
    %v2286 = vmul.f32 %v2285, 1.442695
    %v2287 = vpow.pop %v2286
    %v2288 = vadd.f32 %v2287, 1.0
    %v2289 = vrcp.pop %v2288
    %v2290 = vmul.f32 1.0, %v2289
    %2292 = vrot.lane.b32.xlu0 %v2252, 96
    %v2293 = vpop.permute.xlu0 %2292
    %v2295 = vmul.f32 %v2290, %v2293
    %2297 = vrot.lane.b32.xlu0 %v2295, 32
    %v2298 = vpop.permute.xlu0 %2297
    %v2300 = vadd.f32 %v2108, %v2298
    %v2301 = vtanh.pop %v2300
    %v2302 = vsub.f32 1.0, %v2290
    %2304 = vrot.lane.b32.xlu0 %v2301, 112
    %v2305 = vpop.permute.xlu0 %2304
    %v2307 = vmul.f32 %v2302, %v2305
    %2308 = vrot.lane.b32.xlu0 %v2080, 16
    %v2309 = vpop.permute.xlu0 %2308
    %v2311 = vmul.f32 %v2290, %v2309
    %v2312 = vadd.f32 %v2307, %v2311
    %v2313 = vsub.f32 %v2283, %v2280
    %2315 = vrot.lane.b32.xlu0 %v2313, 112
    %v2316 = vpop.permute.xlu0 %2315
    %v2318 = vmul.f32 %v2104, %v2316
    %v2319 = vadd.f32 %v2073, %v2318
    %v2320 = vsub.f32 %v2312, %v2309
    %2322 = vrot.lane.b32.xlu0 %v2320, 112
    %v2323 = vpop.permute.xlu0 %2322
    %v2325 = vmul.f32 %v2106, %v2323
    %v2326 = vadd.f32 %v2080, %v2325
    %2328 = vrot.lane.b32.xlu0 %v2283, 112
    %v2329 = vpop.permute.xlu0 %2328
    %v2331 = vmul.f32 %v2104, %v2329
    %v2332 = vmul.f32 %v2331, %v852
    %v2333 = vsel %vm855, %v2332, 0.0
    %2334 = vadd.xlane.f32.xlu0 %v2333
    %v2335 = vpop.xlane.xlu0 %2334
    %vm2336 = vcmask 50224
    %2337 = vst.msk [vmem:[#allocation4] sm:$0x3] %vm2336, %v2335
    %2339 = vrot.lane.b32.xlu0 %v2312, 112
    %v2340 = vpop.permute.xlu0 %2339
    %v2342 = vmul.f32 %v2106, %v2340
    %v2343 = vmul.f32 %v2342, %v865
    %v2344 = vsel %vm855, %v2343, 0.0
    %2345 = vadd.xlane.f32.xlu0 %v2344
    %v2346 = vpop.xlane.xlu0 %2345
    %vm2347 = vcmask 74824
    %2348 = vst.msk [vmem:[#allocation5] sm:$0x3] %vm2347, %v2346
    %s2349 = scalar_lea.vmem %s18, 14
    %v2350 = vld [vmem:[%s2349] sm:$0x3]
    %s2351 = scalar_lea.vmem %s18, 16
    %v2352 = vld [vmem:[%s2351] sm:$0x3]
    %v2353 = vld [vmem:[#allocation2 + $0xe] sm:$0x3]
    %v2354 = vld [vmem:[#allocation3 + $0x10] sm:$0x3]
    %v2356 = vsel %vm235, %v2319, 0
    %2358 = vmatprep.subr.mxu0 0.0
    %2359 = vmatpush1.msra.mxu0 %v616
    %2360 = vmatprep.subr.mxu0 0.0
    %2361 = vmatpush1.msra.mxu0 %v617
    %2362 = vmatprep.subr.mxu0 0.0
    %2363 = vmatpush1.msra.mxu0 0.0
    %2364 = vmatprep.subr.mxu0 0.0
    %2365 = vmatpush1.msra.mxu0 0.0
    %2366 = vmatprep.subr.mxu0 0.0
    %2367 = vmatpush1.msra.mxu0 0.0
    %2368 = vmatprep.subr.mxu0 0.0
    %2369 = vmatpush1.msra.mxu0 0.0
    %2370 = vmatprep.subr.mxu0 0.0
    %2371 = vmatpush1.msra.mxu0 0.0
    %2372 = vmatprep.subr.mxu0 0.0
    %2373 = vmatpush1.msra.mxu0 0.0
    %2374 = vmatprep.subr.mxu0 0.0
    %2375 = vmatpush1.msra.mxu0 0.0
    %2376 = vmatprep.subr.mxu0 0.0
    %2377 = vmatpush1.msra.mxu0 0.0
    %2378 = vmatprep.subr.mxu0 0.0
    %2379 = vmatpush1.msra.mxu0 0.0
    %2380 = vmatprep.subr.mxu0 0.0
    %2381 = vmatpush1.msra.mxu0 0.0
    %2382 = vmatprep.subr.mxu0 0.0
    %2383 = vmatpush1.msra.mxu0 0.0
    %2384 = vmatprep.subr.mxu0 0.0
    %2385 = vmatpush1.msra.mxu0 0.0
    %2386 = vmatprep.subr.mxu0 0.0
    %2387 = vmatpush1.msra.mxu0 0.0
    %2388 = vmatprep.subr.mxu0 0.0
    %2389 = vmatpush1.msra.mxu0 0.0
    %2390 = vmatprep.subr.mxu0 0.0
    %2391 = vmatpush1.msra.mxu0 0.0
    %2392 = vmatprep.subr.mxu0 0.0
    %2393 = vmatpush1.msra.mxu0 0.0
    %2394 = vmatprep.subr.mxu0 0.0
    %2395 = vmatpush1.msra.mxu0 0.0
    %2396 = vmatprep.subr.mxu0 0.0
    %2397 = vmatpush1.msra.mxu0 0.0
    %2398 = vmatprep.subr.mxu0 0.0
    %2399 = vmatpush1.msra.mxu0 0.0
    %2400 = vmatprep.subr.mxu0 0.0
    %2401 = vmatpush1.msra.mxu0 0.0
    %2402 = vmatprep.subr.mxu0 0.0
    %2403 = vmatpush1.msra.mxu0 0.0
    %2404 = vmatprep.subr.mxu0 0.0
    %2405 = vmatpush1.msra.mxu0 0.0
    %2406 = vmatprep.subr.mxu0 0.0
    %2407 = vmatpush1.msra.mxu0 0.0
    %2408 = vmatprep.subr.mxu0 0.0
    %2409 = vmatpush1.msra.mxu0 0.0
    %2410 = vmatprep.subr.mxu0 0.0
    %2411 = vmatpush1.msra.mxu0 0.0
    %2412 = vmatprep.subr.mxu0 0.0
    %2413 = vmatpush1.msra.mxu0 0.0
    %2414 = vmatprep.subr.mxu0 0.0
    %2415 = vmatpush1.msra.mxu0 0.0
    %2416 = vmatprep.subr.mxu0 0.0
    %2417 = vmatpush1.msra.mxu0 0.0
    %2418 = vmatprep.subr.mxu0 0.0
    %2419 = vmatpush1.msra.mxu0 0.0
    %2420 = vmatprep.subr.mxu0 0.0
    %2421 = vmatpush1.msra.mxu0 0.0
    %2422 = vmatprep.mubr.f32.mxu0 0.0
    %2423 = vmatmul.mubr.f32.gmra.mrb[0].mxu0 %v2356
    %v2424 = vpop.f32.mrb[0].mxu0
    %v2425 = vadd.f32 %v633, %v2424
    %v2426 = vpop.f32.mrb[0].mxu0
    %2427 = vdwg.mxu0
    %v2429 = vsel %vm235, %v2326, 0
    %2431 = vmatprep.subr.mxu0 0.0
    %2432 = vmatpush1.msra.mxu0 %v619
    %2433 = vmatprep.subr.mxu0 0.0
    %2434 = vmatpush1.msra.mxu0 %v620
    %2435 = vmatprep.subr.mxu0 0.0
    %2436 = vmatpush1.msra.mxu0 0.0
    %2437 = vmatprep.subr.mxu0 0.0
    %2438 = vmatpush1.msra.mxu0 0.0
    %2439 = vmatprep.subr.mxu0 0.0
    %2440 = vmatpush1.msra.mxu0 0.0
    %2441 = vmatprep.subr.mxu0 0.0
    %2442 = vmatpush1.msra.mxu0 0.0
    %2443 = vmatprep.subr.mxu0 0.0
    %2444 = vmatpush1.msra.mxu0 0.0
    %2445 = vmatprep.subr.mxu0 0.0
    %2446 = vmatpush1.msra.mxu0 0.0
    %2447 = vmatprep.subr.mxu0 0.0
    %2448 = vmatpush1.msra.mxu0 0.0
    %2449 = vmatprep.subr.mxu0 0.0
    %2450 = vmatpush1.msra.mxu0 0.0
    %2451 = vmatprep.subr.mxu0 0.0
    %2452 = vmatpush1.msra.mxu0 0.0
    %2453 = vmatprep.subr.mxu0 0.0
    %2454 = vmatpush1.msra.mxu0 0.0
    %2455 = vmatprep.subr.mxu0 0.0
    %2456 = vmatpush1.msra.mxu0 0.0
    %2457 = vmatprep.subr.mxu0 0.0
    %2458 = vmatpush1.msra.mxu0 0.0
    %2459 = vmatprep.subr.mxu0 0.0
    %2460 = vmatpush1.msra.mxu0 0.0
    %2461 = vmatprep.subr.mxu0 0.0
    %2462 = vmatpush1.msra.mxu0 0.0
    %2463 = vmatprep.subr.mxu0 0.0
    %2464 = vmatpush1.msra.mxu0 0.0
    %2465 = vmatprep.subr.mxu0 0.0
    %2466 = vmatpush1.msra.mxu0 0.0
    %2467 = vmatprep.subr.mxu0 0.0
    %2468 = vmatpush1.msra.mxu0 0.0
    %2469 = vmatprep.subr.mxu0 0.0
    %2470 = vmatpush1.msra.mxu0 0.0
    %2471 = vmatprep.subr.mxu0 0.0
    %2472 = vmatpush1.msra.mxu0 0.0
    %2473 = vmatprep.subr.mxu0 0.0
    %2474 = vmatpush1.msra.mxu0 0.0
    %2475 = vmatprep.subr.mxu0 0.0
    %2476 = vmatpush1.msra.mxu0 0.0
    %2477 = vmatprep.subr.mxu0 0.0
    %2478 = vmatpush1.msra.mxu0 0.0
    %2479 = vmatprep.subr.mxu0 0.0
    %2480 = vmatpush1.msra.mxu0 0.0
    %2481 = vmatprep.subr.mxu0 0.0
    %2482 = vmatpush1.msra.mxu0 0.0
    %2483 = vmatprep.subr.mxu0 0.0
    %2484 = vmatpush1.msra.mxu0 0.0
    %2485 = vmatprep.subr.mxu0 0.0
    %2486 = vmatpush1.msra.mxu0 0.0
    %2487 = vmatprep.subr.mxu0 0.0
    %2488 = vmatpush1.msra.mxu0 0.0
    %2489 = vmatprep.subr.mxu0 0.0
    %2490 = vmatpush1.msra.mxu0 0.0
    %2491 = vmatprep.subr.mxu0 0.0
    %2492 = vmatpush1.msra.mxu0 0.0
    %2493 = vmatprep.subr.mxu0 0.0
    %2494 = vmatpush1.msra.mxu0 0.0
    %2495 = vmatprep.mubr.f32.mxu0 0.0
    %2496 = vmatmul.mubr.f32.gmra.mrb[0].mxu0 %v2429
    %v2497 = vpop.f32.mrb[0].mxu0
    %v2498 = vadd.f32 %v712, %v2497
    %v2499 = vpop.f32.mrb[0].mxu0
    %2500 = vdwg.mxu0
    %v2501 = vadd.f32 %v2353, %v2425
    %v2502 = vxor.u32 %v2501, 2147483648
    %v2503 = vmul.f32 %v2502, 1.442695
    %v2504 = vpow.pop %v2503
    %v2505 = vadd.f32 %v2504, 1.0
    %v2506 = vrcp.pop %v2505
    %v2507 = vmul.f32 1.0, %v2506
    %2509 = vrot.lane.b32.xlu0 %v2425, 96
    %v2510 = vpop.permute.xlu0 %2509
    %v2512 = vmul.f32 %v2507, %v2510
    %2514 = vrot.lane.b32.xlu0 %v2512, 32
    %v2515 = vpop.permute.xlu0 %2514
    %v2517 = vadd.f32 %v2353, %v2515
    %v2518 = vtanh.pop %v2517
    %v2519 = vsub.f32 1.0, %v2507
    %2521 = vrot.lane.b32.xlu0 %v2518, 112
    %v2522 = vpop.permute.xlu0 %2521
    %v2524 = vmul.f32 %v2519, %v2522
    %2525 = vrot.lane.b32.xlu0 %v2319, 16
    %v2526 = vpop.permute.xlu0 %2525
    %v2528 = vmul.f32 %v2507, %v2526
    %v2529 = vadd.f32 %v2524, %v2528
    %v2530 = vadd.f32 %v2354, %v2498
    %v2531 = vxor.u32 %v2530, 2147483648
    %v2532 = vmul.f32 %v2531, 1.442695
    %v2533 = vpow.pop %v2532
    %v2534 = vadd.f32 %v2533, 1.0
    %v2535 = vrcp.pop %v2534
    %v2536 = vmul.f32 1.0, %v2535
    %2538 = vrot.lane.b32.xlu0 %v2498, 96
    %v2539 = vpop.permute.xlu0 %2538
    %v2541 = vmul.f32 %v2536, %v2539
    %2543 = vrot.lane.b32.xlu0 %v2541, 32
    %v2544 = vpop.permute.xlu0 %2543
    %v2546 = vadd.f32 %v2354, %v2544
    %v2547 = vtanh.pop %v2546
    %v2548 = vsub.f32 1.0, %v2536
    %2550 = vrot.lane.b32.xlu0 %v2547, 112
    %v2551 = vpop.permute.xlu0 %2550
    %v2553 = vmul.f32 %v2548, %v2551
    %2554 = vrot.lane.b32.xlu0 %v2326, 16
    %v2555 = vpop.permute.xlu0 %2554
    %v2557 = vmul.f32 %v2536, %v2555
    %v2558 = vadd.f32 %v2553, %v2557
    %v2559 = vsub.f32 %v2529, %v2526
    %2561 = vrot.lane.b32.xlu0 %v2559, 112
    %v2562 = vpop.permute.xlu0 %2561
    %v2564 = vmul.f32 %v2350, %v2562
    %v2565 = vadd.f32 %v2319, %v2564
    %v2566 = vsub.f32 %v2558, %v2555
    %2568 = vrot.lane.b32.xlu0 %v2566, 112
    %v2569 = vpop.permute.xlu0 %2568
    %v2571 = vmul.f32 %v2352, %v2569
    %v2572 = vadd.f32 %v2326, %v2571
    %2574 = vrot.lane.b32.xlu0 %v2529, 112
    %v2575 = vpop.permute.xlu0 %2574
    %v2577 = vmul.f32 %v2350, %v2575
    %v2578 = vmul.f32 %v2577, %v852
    %v2579 = vsel %vm855, %v2578, 0.0
    %2580 = vadd.xlane.f32.xlu0 %v2579
    %v2581 = vpop.xlane.xlu0 %2580
    %vm2582 = vcmask 58424
    %2583 = vst.msk [vmem:[#allocation4] sm:$0x3] %vm2582, %v2581
    %2585 = vrot.lane.b32.xlu0 %v2558, 112
    %v2586 = vpop.permute.xlu0 %2585
    %v2588 = vmul.f32 %v2352, %v2586
    %v2589 = vmul.f32 %v2588, %v865
    %v2590 = vsel %vm855, %v2589, 0.0
    %2591 = vadd.xlane.f32.xlu0 %v2590
    %v2592 = vpop.xlane.xlu0 %2591
    %vm2593 = vcmask 66624
    %2594 = vst.msk [vmem:[#allocation5] sm:$0x3] %vm2593, %v2592
    %v2595 = vld [vmem:[%s2351] sm:$0x3]
    %v2596 = vld [vmem:[%s2349] sm:$0x3]
    %v2597 = vld [vmem:[#allocation2 + $0x10] sm:$0x3]
    %v2598 = vld [vmem:[#allocation3 + $0xe] sm:$0x3]
    %v2600 = vsel %vm235, %v2565, 0
    %2602 = vmatprep.subr.mxu0 0.0
    %2603 = vmatpush1.msra.mxu0 %v616
    %2604 = vmatprep.subr.mxu0 0.0
    %2605 = vmatpush1.msra.mxu0 %v617
    %2606 = vmatprep.subr.mxu0 0.0
    %2607 = vmatpush1.msra.mxu0 0.0
    %2608 = vmatprep.subr.mxu0 0.0
    %2609 = vmatpush1.msra.mxu0 0.0
    %2610 = vmatprep.subr.mxu0 0.0
    %2611 = vmatpush1.msra.mxu0 0.0
    %2612 = vmatprep.subr.mxu0 0.0
    %2613 = vmatpush1.msra.mxu0 0.0
    %2614 = vmatprep.subr.mxu0 0.0
    %2615 = vmatpush1.msra.mxu0 0.0
    %2616 = vmatprep.subr.mxu0 0.0
    %2617 = vmatpush1.msra.mxu0 0.0
    %2618 = vmatprep.subr.mxu0 0.0
    %2619 = vmatpush1.msra.mxu0 0.0
    %2620 = vmatprep.subr.mxu0 0.0
    %2621 = vmatpush1.msra.mxu0 0.0
    %2622 = vmatprep.subr.mxu0 0.0
    %2623 = vmatpush1.msra.mxu0 0.0
    %2624 = vmatprep.subr.mxu0 0.0
    %2625 = vmatpush1.msra.mxu0 0.0
    %2626 = vmatprep.subr.mxu0 0.0
    %2627 = vmatpush1.msra.mxu0 0.0
    %2628 = vmatprep.subr.mxu0 0.0
    %2629 = vmatpush1.msra.mxu0 0.0
    %2630 = vmatprep.subr.mxu0 0.0
    %2631 = vmatpush1.msra.mxu0 0.0
    %2632 = vmatprep.subr.mxu0 0.0
    %2633 = vmatpush1.msra.mxu0 0.0
    %2634 = vmatprep.subr.mxu0 0.0
    %2635 = vmatpush1.msra.mxu0 0.0
    %2636 = vmatprep.subr.mxu0 0.0
    %2637 = vmatpush1.msra.mxu0 0.0
    %2638 = vmatprep.subr.mxu0 0.0
    %2639 = vmatpush1.msra.mxu0 0.0
    %2640 = vmatprep.subr.mxu0 0.0
    %2641 = vmatpush1.msra.mxu0 0.0
    %2642 = vmatprep.subr.mxu0 0.0
    %2643 = vmatpush1.msra.mxu0 0.0
    %2644 = vmatprep.subr.mxu0 0.0
    %2645 = vmatpush1.msra.mxu0 0.0
    %2646 = vmatprep.subr.mxu0 0.0
    %2647 = vmatpush1.msra.mxu0 0.0
    %2648 = vmatprep.subr.mxu0 0.0
    %2649 = vmatpush1.msra.mxu0 0.0
    %2650 = vmatprep.subr.mxu0 0.0
    %2651 = vmatpush1.msra.mxu0 0.0
    %2652 = vmatprep.subr.mxu0 0.0
    %2653 = vmatpush1.msra.mxu0 0.0
    %2654 = vmatprep.subr.mxu0 0.0
    %2655 = vmatpush1.msra.mxu0 0.0
    %2656 = vmatprep.subr.mxu0 0.0
    %2657 = vmatpush1.msra.mxu0 0.0
    %2658 = vmatprep.subr.mxu0 0.0
    %2659 = vmatpush1.msra.mxu0 0.0
    %2660 = vmatprep.subr.mxu0 0.0
    %2661 = vmatpush1.msra.mxu0 0.0
    %2662 = vmatprep.subr.mxu0 0.0
    %2663 = vmatpush1.msra.mxu0 0.0
    %2664 = vmatprep.subr.mxu0 0.0
    %2665 = vmatpush1.msra.mxu0 0.0
    %2666 = vmatprep.mubr.f32.mxu0 0.0
    %2667 = vmatmul.mubr.f32.gmra.mrb[0].mxu0 %v2600
    %v2668 = vpop.f32.mrb[0].mxu0
    %v2669 = vadd.f32 %v633, %v2668
    %v2670 = vpop.f32.mrb[0].mxu0
    %2671 = vdwg.mxu0
    %v2673 = vsel %vm235, %v2572, 0
    %2675 = vmatprep.subr.mxu0 0.0
    %2676 = vmatpush1.msra.mxu0 %v619
    %2677 = vmatprep.subr.mxu0 0.0
    %2678 = vmatpush1.msra.mxu0 %v620
    %2679 = vmatprep.subr.mxu0 0.0
    %2680 = vmatpush1.msra.mxu0 0.0
    %2681 = vmatprep.subr.mxu0 0.0
    %2682 = vmatpush1.msra.mxu0 0.0
    %2683 = vmatprep.subr.mxu0 0.0
    %2684 = vmatpush1.msra.mxu0 0.0
    %2685 = vmatprep.subr.mxu0 0.0
    %2686 = vmatpush1.msra.mxu0 0.0
    %2687 = vmatprep.subr.mxu0 0.0
    %2688 = vmatpush1.msra.mxu0 0.0
    %2689 = vmatprep.subr.mxu0 0.0
    %2690 = vmatpush1.msra.mxu0 0.0
    %2691 = vmatprep.subr.mxu0 0.0
    %2692 = vmatpush1.msra.mxu0 0.0
    %2693 = vmatprep.subr.mxu0 0.0
    %2694 = vmatpush1.msra.mxu0 0.0
    %2695 = vmatprep.subr.mxu0 0.0
    %2696 = vmatpush1.msra.mxu0 0.0
    %2697 = vmatprep.subr.mxu0 0.0
    %2698 = vmatpush1.msra.mxu0 0.0
    %2699 = vmatprep.subr.mxu0 0.0
    %2700 = vmatpush1.msra.mxu0 0.0
    %2701 = vmatprep.subr.mxu0 0.0
    %2702 = vmatpush1.msra.mxu0 0.0
    %2703 = vmatprep.subr.mxu0 0.0
    %2704 = vmatpush1.msra.mxu0 0.0
    %2705 = vmatprep.subr.mxu0 0.0
    %2706 = vmatpush1.msra.mxu0 0.0
    %2707 = vmatprep.subr.mxu0 0.0
    %2708 = vmatpush1.msra.mxu0 0.0
    %2709 = vmatprep.subr.mxu0 0.0
    %2710 = vmatpush1.msra.mxu0 0.0
    %2711 = vmatprep.subr.mxu0 0.0
    %2712 = vmatpush1.msra.mxu0 0.0
    %2713 = vmatprep.subr.mxu0 0.0
    %2714 = vmatpush1.msra.mxu0 0.0
    %2715 = vmatprep.subr.mxu0 0.0
    %2716 = vmatpush1.msra.mxu0 0.0
    %2717 = vmatprep.subr.mxu0 0.0
    %2718 = vmatpush1.msra.mxu0 0.0
    %2719 = vmatprep.subr.mxu0 0.0
    %2720 = vmatpush1.msra.mxu0 0.0
    %2721 = vmatprep.subr.mxu0 0.0
    %2722 = vmatpush1.msra.mxu0 0.0
    %2723 = vmatprep.subr.mxu0 0.0
    %2724 = vmatpush1.msra.mxu0 0.0
    %2725 = vmatprep.subr.mxu0 0.0
    %2726 = vmatpush1.msra.mxu0 0.0
    %2727 = vmatprep.subr.mxu0 0.0
    %2728 = vmatpush1.msra.mxu0 0.0
    %2729 = vmatprep.subr.mxu0 0.0
    %2730 = vmatpush1.msra.mxu0 0.0
    %2731 = vmatprep.subr.mxu0 0.0
    %2732 = vmatpush1.msra.mxu0 0.0
    %2733 = vmatprep.subr.mxu0 0.0
    %2734 = vmatpush1.msra.mxu0 0.0
    %2735 = vmatprep.subr.mxu0 0.0
    %2736 = vmatpush1.msra.mxu0 0.0
    %2737 = vmatprep.subr.mxu0 0.0
    %2738 = vmatpush1.msra.mxu0 0.0
    %2739 = vmatprep.mubr.f32.mxu0 0.0
    %2740 = vmatmul.mubr.f32.gmra.mrb[0].mxu0 %v2673
    %v2741 = vpop.f32.mrb[0].mxu0
    %v2742 = vadd.f32 %v712, %v2741
    %v2743 = vpop.f32.mrb[0].mxu0
    %2744 = vdwg.mxu0
    %v2745 = vadd.f32 %v2597, %v2669
    %v2746 = vxor.u32 %v2745, 2147483648
    %v2747 = vmul.f32 %v2746, 1.442695
    %v2748 = vpow.pop %v2747
    %v2749 = vadd.f32 %v2748, 1.0
    %v2750 = vrcp.pop %v2749
    %v2751 = vmul.f32 1.0, %v2750
    %2753 = vrot.lane.b32.xlu0 %v2669, 96
    %v2754 = vpop.permute.xlu0 %2753
    %v2756 = vmul.f32 %v2751, %v2754
    %2758 = vrot.lane.b32.xlu0 %v2756, 32
    %v2759 = vpop.permute.xlu0 %2758
    %v2761 = vadd.f32 %v2597, %v2759
    %v2762 = vtanh.pop %v2761
    %v2763 = vsub.f32 1.0, %v2751
    %2765 = vrot.lane.b32.xlu0 %v2762, 112
    %v2766 = vpop.permute.xlu0 %2765
    %v2768 = vmul.f32 %v2763, %v2766
    %2769 = vrot.lane.b32.xlu0 %v2565, 16
    %v2770 = vpop.permute.xlu0 %2769
    %v2772 = vmul.f32 %v2751, %v2770
    %v2773 = vadd.f32 %v2768, %v2772
    %v2774 = vadd.f32 %v2598, %v2742
    %v2775 = vxor.u32 %v2774, 2147483648
    %v2776 = vmul.f32 %v2775, 1.442695
    %v2777 = vpow.pop %v2776
    %v2778 = vadd.f32 %v2777, 1.0
    %v2779 = vrcp.pop %v2778
    %v2780 = vmul.f32 1.0, %v2779
    %2782 = vrot.lane.b32.xlu0 %v2742, 96
    %v2783 = vpop.permute.xlu0 %2782
    %v2785 = vmul.f32 %v2780, %v2783
    %2787 = vrot.lane.b32.xlu0 %v2785, 32
    %v2788 = vpop.permute.xlu0 %2787
    %v2790 = vadd.f32 %v2598, %v2788
    %v2791 = vtanh.pop %v2790
    %v2792 = vsub.f32 1.0, %v2780
    %2794 = vrot.lane.b32.xlu0 %v2791, 112
    %v2795 = vpop.permute.xlu0 %2794
    %v2797 = vmul.f32 %v2792, %v2795
    %2798 = vrot.lane.b32.xlu0 %v2572, 16
    %v2799 = vpop.permute.xlu0 %2798
    %v2801 = vmul.f32 %v2780, %v2799
    %v2802 = vadd.f32 %v2797, %v2801
    %v2803 = vsub.f32 %v2773, %v2770
    %2805 = vrot.lane.b32.xlu0 %v2803, 112
    %v2806 = vpop.permute.xlu0 %2805
    %v2808 = vmul.f32 %v2595, %v2806
    %v2809 = vadd.f32 %v2565, %v2808
    %v2810 = vsub.f32 %v2802, %v2799
    %2812 = vrot.lane.b32.xlu0 %v2810, 112
    %v2813 = vpop.permute.xlu0 %2812
    %v2815 = vmul.f32 %v2596, %v2813
    %v2816 = vadd.f32 %v2572, %v2815
    %2818 = vrot.lane.b32.xlu0 %v2773, 112
    %v2819 = vpop.permute.xlu0 %2818
    %v2821 = vmul.f32 %v2595, %v2819
    %v2822 = vmul.f32 %v2821, %v852
    %v2823 = vsel %vm855, %v2822, 0.0
    %2824 = vadd.xlane.f32.xlu0 %v2823
    %v2825 = vpop.xlane.xlu0 %2824
    %2826 = vst.msk [vmem:[#allocation4] sm:$0x3] %vm2593, %v2825
    %2828 = vrot.lane.b32.xlu0 %v2802, 112
    %v2829 = vpop.permute.xlu0 %2828
    %v2831 = vmul.f32 %v2596, %v2829
    %v2832 = vmul.f32 %v2831, %v865
    %v2833 = vsel %vm855, %v2832, 0.0
    %2834 = vadd.xlane.f32.xlu0 %v2833
    %v2835 = vpop.xlane.xlu0 %2834
    %2836 = vst.msk [vmem:[#allocation5] sm:$0x3] %vm2582, %v2835
    %v2837 = vld [vmem:[%s2105] sm:$0x3]
    %v2838 = vld [vmem:[%s2103] sm:$0x3]
    %v2839 = vld [vmem:[#allocation2 + $0x12] sm:$0x3]
    %v2840 = vld [vmem:[#allocation3 + $0xc] sm:$0x3]
    %v2842 = vsel %vm235, %v2809, 0
    %2844 = vmatprep.subr.mxu0 0.0
    %2845 = vmatpush1.msra.mxu0 %v616
    %2846 = vmatprep.subr.mxu0 0.0
    %2847 = vmatpush1.msra.mxu0 %v617
    %2848 = vmatprep.subr.mxu0 0.0
    %2849 = vmatpush1.msra.mxu0 0.0
    %2850 = vmatprep.subr.mxu0 0.0
    %2851 = vmatpush1.msra.mxu0 0.0
    %2852 = vmatprep.subr.mxu0 0.0
    %2853 = vmatpush1.msra.mxu0 0.0
    %2854 = vmatprep.subr.mxu0 0.0
    %2855 = vmatpush1.msra.mxu0 0.0
    %2856 = vmatprep.subr.mxu0 0.0
    %2857 = vmatpush1.msra.mxu0 0.0
    %2858 = vmatprep.subr.mxu0 0.0
    %2859 = vmatpush1.msra.mxu0 0.0
    %2860 = vmatprep.subr.mxu0 0.0
    %2861 = vmatpush1.msra.mxu0 0.0
    %2862 = vmatprep.subr.mxu0 0.0
    %2863 = vmatpush1.msra.mxu0 0.0
    %2864 = vmatprep.subr.mxu0 0.0
    %2865 = vmatpush1.msra.mxu0 0.0
    %2866 = vmatprep.subr.mxu0 0.0
    %2867 = vmatpush1.msra.mxu0 0.0
    %2868 = vmatprep.subr.mxu0 0.0
    %2869 = vmatpush1.msra.mxu0 0.0
    %2870 = vmatprep.subr.mxu0 0.0
    %2871 = vmatpush1.msra.mxu0 0.0
    %2872 = vmatprep.subr.mxu0 0.0
    %2873 = vmatpush1.msra.mxu0 0.0
    %2874 = vmatprep.subr.mxu0 0.0
    %2875 = vmatpush1.msra.mxu0 0.0
    %2876 = vmatprep.subr.mxu0 0.0
    %2877 = vmatpush1.msra.mxu0 0.0
    %2878 = vmatprep.subr.mxu0 0.0
    %2879 = vmatpush1.msra.mxu0 0.0
    %2880 = vmatprep.subr.mxu0 0.0
    %2881 = vmatpush1.msra.mxu0 0.0
    %2882 = vmatprep.subr.mxu0 0.0
    %2883 = vmatpush1.msra.mxu0 0.0
    %2884 = vmatprep.subr.mxu0 0.0
    %2885 = vmatpush1.msra.mxu0 0.0
    %2886 = vmatprep.subr.mxu0 0.0
    %2887 = vmatpush1.msra.mxu0 0.0
    %2888 = vmatprep.subr.mxu0 0.0
    %2889 = vmatpush1.msra.mxu0 0.0
    %2890 = vmatprep.subr.mxu0 0.0
    %2891 = vmatpush1.msra.mxu0 0.0
    %2892 = vmatprep.subr.mxu0 0.0
    %2893 = vmatpush1.msra.mxu0 0.0
    %2894 = vmatprep.subr.mxu0 0.0
    %2895 = vmatpush1.msra.mxu0 0.0
    %2896 = vmatprep.subr.mxu0 0.0
    %2897 = vmatpush1.msra.mxu0 0.0
    %2898 = vmatprep.subr.mxu0 0.0
    %2899 = vmatpush1.msra.mxu0 0.0
    %2900 = vmatprep.subr.mxu0 0.0
    %2901 = vmatpush1.msra.mxu0 0.0
    %2902 = vmatprep.subr.mxu0 0.0
    %2903 = vmatpush1.msra.mxu0 0.0
    %2904 = vmatprep.subr.mxu0 0.0
    %2905 = vmatpush1.msra.mxu0 0.0
    %2906 = vmatprep.subr.mxu0 0.0
    %2907 = vmatpush1.msra.mxu0 0.0
    %2908 = vmatprep.mubr.f32.mxu0 0.0
    %2909 = vmatmul.mubr.f32.gmra.mrb[0].mxu0 %v2842
    %v2910 = vpop.f32.mrb[0].mxu0
    %v2911 = vadd.f32 %v633, %v2910
    %v2912 = vpop.f32.mrb[0].mxu0
    %2913 = vdwg.mxu0
    %v2915 = vsel %vm235, %v2816, 0
    %2917 = vmatprep.subr.mxu0 0.0
    %2918 = vmatpush1.msra.mxu0 %v619
    %2919 = vmatprep.subr.mxu0 0.0
    %2920 = vmatpush1.msra.mxu0 %v620
    %2921 = vmatprep.subr.mxu0 0.0
    %2922 = vmatpush1.msra.mxu0 0.0
    %2923 = vmatprep.subr.mxu0 0.0
    %2924 = vmatpush1.msra.mxu0 0.0
    %2925 = vmatprep.subr.mxu0 0.0
    %2926 = vmatpush1.msra.mxu0 0.0
    %2927 = vmatprep.subr.mxu0 0.0
    %2928 = vmatpush1.msra.mxu0 0.0
    %2929 = vmatprep.subr.mxu0 0.0
    %2930 = vmatpush1.msra.mxu0 0.0
    %2931 = vmatprep.subr.mxu0 0.0
    %2932 = vmatpush1.msra.mxu0 0.0
    %2933 = vmatprep.subr.mxu0 0.0
    %2934 = vmatpush1.msra.mxu0 0.0
    %2935 = vmatprep.subr.mxu0 0.0
    %2936 = vmatpush1.msra.mxu0 0.0
    %2937 = vmatprep.subr.mxu0 0.0
    %2938 = vmatpush1.msra.mxu0 0.0
    %2939 = vmatprep.subr.mxu0 0.0
    %2940 = vmatpush1.msra.mxu0 0.0
    %2941 = vmatprep.subr.mxu0 0.0
    %2942 = vmatpush1.msra.mxu0 0.0
    %2943 = vmatprep.subr.mxu0 0.0
    %2944 = vmatpush1.msra.mxu0 0.0
    %2945 = vmatprep.subr.mxu0 0.0
    %2946 = vmatpush1.msra.mxu0 0.0
    %2947 = vmatprep.subr.mxu0 0.0
    %2948 = vmatpush1.msra.mxu0 0.0
    %2949 = vmatprep.subr.mxu0 0.0
    %2950 = vmatpush1.msra.mxu0 0.0
    %2951 = vmatprep.subr.mxu0 0.0
    %2952 = vmatpush1.msra.mxu0 0.0
    %2953 = vmatprep.subr.mxu0 0.0
    %2954 = vmatpush1.msra.mxu0 0.0
    %2955 = vmatprep.subr.mxu0 0.0
    %2956 = vmatpush1.msra.mxu0 0.0
    %2957 = vmatprep.subr.mxu0 0.0
    %2958 = vmatpush1.msra.mxu0 0.0
    %2959 = vmatprep.subr.mxu0 0.0
    %2960 = vmatpush1.msra.mxu0 0.0
    %2961 = vmatprep.subr.mxu0 0.0
    %2962 = vmatpush1.msra.mxu0 0.0
    %2963 = vmatprep.subr.mxu0 0.0
    %2964 = vmatpush1.msra.mxu0 0.0
    %2965 = vmatprep.subr.mxu0 0.0
    %2966 = vmatpush1.msra.mxu0 0.0
    %2967 = vmatprep.subr.mxu0 0.0
    %2968 = vmatpush1.msra.mxu0 0.0
    %2969 = vmatprep.subr.mxu0 0.0
    %2970 = vmatpush1.msra.mxu0 0.0
    %2971 = vmatprep.subr.mxu0 0.0
    %2972 = vmatpush1.msra.mxu0 0.0
    %2973 = vmatprep.subr.mxu0 0.0
    %2974 = vmatpush1.msra.mxu0 0.0
    %2975 = vmatprep.subr.mxu0 0.0
    %2976 = vmatpush1.msra.mxu0 0.0
    %2977 = vmatprep.subr.mxu0 0.0
    %2978 = vmatpush1.msra.mxu0 0.0
    %2979 = vmatprep.subr.mxu0 0.0
    %2980 = vmatpush1.msra.mxu0 0.0
    %2981 = vmatprep.mubr.f32.mxu0 0.0
    %2982 = vmatmul.mubr.f32.gmra.mrb[0].mxu0 %v2915
    %v2983 = vpop.f32.mrb[0].mxu0
    %v2984 = vadd.f32 %v712, %v2983
    %v2985 = vpop.f32.mrb[0].mxu0
    %2986 = vdwg.mxu0
    %v2987 = vadd.f32 %v2839, %v2911
    %v2988 = vxor.u32 %v2987, 2147483648
    %v2989 = vmul.f32 %v2988, 1.442695
    %v2990 = vpow.pop %v2989
    %v2991 = vadd.f32 %v2990, 1.0
    %v2992 = vrcp.pop %v2991
    %v2993 = vmul.f32 1.0, %v2992
    %2995 = vrot.lane.b32.xlu0 %v2911, 96
    %v2996 = vpop.permute.xlu0 %2995
    %v2998 = vmul.f32 %v2993, %v2996
    %3000 = vrot.lane.b32.xlu0 %v2998, 32
    %v3001 = vpop.permute.xlu0 %3000
    %v3003 = vadd.f32 %v2839, %v3001
    %v3004 = vtanh.pop %v3003
    %v3005 = vsub.f32 1.0, %v2993
    %3007 = vrot.lane.b32.xlu0 %v3004, 112
    %v3008 = vpop.permute.xlu0 %3007
    %v3010 = vmul.f32 %v3005, %v3008
    %3011 = vrot.lane.b32.xlu0 %v2809, 16
    %v3012 = vpop.permute.xlu0 %3011
    %v3014 = vmul.f32 %v2993, %v3012
    %v3015 = vadd.f32 %v3010, %v3014
    %v3016 = vadd.f32 %v2840, %v2984
    %v3017 = vxor.u32 %v3016, 2147483648
    %v3018 = vmul.f32 %v3017, 1.442695
    %v3019 = vpow.pop %v3018
    %v3020 = vadd.f32 %v3019, 1.0
    %v3021 = vrcp.pop %v3020
    %v3022 = vmul.f32 1.0, %v3021
    %3024 = vrot.lane.b32.xlu0 %v2984, 96
    %v3025 = vpop.permute.xlu0 %3024
    %v3027 = vmul.f32 %v3022, %v3025
    %3029 = vrot.lane.b32.xlu0 %v3027, 32
    %v3030 = vpop.permute.xlu0 %3029
    %v3032 = vadd.f32 %v2840, %v3030
    %v3033 = vtanh.pop %v3032
    %v3034 = vsub.f32 1.0, %v3022
    %3036 = vrot.lane.b32.xlu0 %v3033, 112
    %v3037 = vpop.permute.xlu0 %3036
    %v3039 = vmul.f32 %v3034, %v3037
    %3040 = vrot.lane.b32.xlu0 %v2816, 16
    %v3041 = vpop.permute.xlu0 %3040
    %v3043 = vmul.f32 %v3022, %v3041
    %v3044 = vadd.f32 %v3039, %v3043
    %v3045 = vsub.f32 %v3015, %v3012
    %3047 = vrot.lane.b32.xlu0 %v3045, 112
    %v3048 = vpop.permute.xlu0 %3047
    %v3050 = vmul.f32 %v2837, %v3048
    %v3051 = vadd.f32 %v2809, %v3050
    %v3052 = vsub.f32 %v3044, %v3041
    %3054 = vrot.lane.b32.xlu0 %v3052, 112
    %v3055 = vpop.permute.xlu0 %3054
    %v3057 = vmul.f32 %v2838, %v3055
    %v3058 = vadd.f32 %v2816, %v3057
    %3060 = vrot.lane.b32.xlu0 %v3015, 112
    %v3061 = vpop.permute.xlu0 %3060
    %v3063 = vmul.f32 %v2837, %v3061
    %v3064 = vmul.f32 %v3063, %v852
    %v3065 = vsel %vm855, %v3064, 0.0
    %3066 = vadd.xlane.f32.xlu0 %v3065
    %v3067 = vpop.xlane.xlu0 %3066
    %3068 = vst.msk [vmem:[#allocation4] sm:$0x3] %vm2347, %v3067
    %3070 = vrot.lane.b32.xlu0 %v3044, 112
    %v3071 = vpop.permute.xlu0 %3070
    %v3073 = vmul.f32 %v2838, %v3071
    %v3074 = vmul.f32 %v3073, %v865
    %v3075 = vsel %vm855, %v3074, 0.0
    %3076 = vadd.xlane.f32.xlu0 %v3075
    %v3077 = vpop.xlane.xlu0 %3076
    %3078 = vst.msk [vmem:[#allocation5] sm:$0x3] %vm2336, %v3077
    %v3079 = vld [vmem:[%s1859] sm:$0x3]
    %v3080 = vld [vmem:[%s1857] sm:$0x3]
    %v3081 = vld [vmem:[#allocation2 + $0x14] sm:$0x3]
    %v3082 = vld [vmem:[#allocation3 + $0xa] sm:$0x3]
    %v3084 = vsel %vm235, %v3051, 0
    %3086 = vmatprep.subr.mxu0 0.0
    %3087 = vmatpush1.msra.mxu0 %v616
    %3088 = vmatprep.subr.mxu0 0.0
    %3089 = vmatpush1.msra.mxu0 %v617
    %3090 = vmatprep.subr.mxu0 0.0
    %3091 = vmatpush1.msra.mxu0 0.0
    %3092 = vmatprep.subr.mxu0 0.0
    %3093 = vmatpush1.msra.mxu0 0.0
    %3094 = vmatprep.subr.mxu0 0.0
    %3095 = vmatpush1.msra.mxu0 0.0
    %3096 = vmatprep.subr.mxu0 0.0
    %3097 = vmatpush1.msra.mxu0 0.0
    %3098 = vmatprep.subr.mxu0 0.0
    %3099 = vmatpush1.msra.mxu0 0.0
    %3100 = vmatprep.subr.mxu0 0.0
    %3101 = vmatpush1.msra.mxu0 0.0
    %3102 = vmatprep.subr.mxu0 0.0
    %3103 = vmatpush1.msra.mxu0 0.0
    %3104 = vmatprep.subr.mxu0 0.0
    %3105 = vmatpush1.msra.mxu0 0.0
    %3106 = vmatprep.subr.mxu0 0.0
    %3107 = vmatpush1.msra.mxu0 0.0
    %3108 = vmatprep.subr.mxu0 0.0
    %3109 = vmatpush1.msra.mxu0 0.0
    %3110 = vmatprep.subr.mxu0 0.0
    %3111 = vmatpush1.msra.mxu0 0.0
    %3112 = vmatprep.subr.mxu0 0.0
    %3113 = vmatpush1.msra.mxu0 0.0
    %3114 = vmatprep.subr.mxu0 0.0
    %3115 = vmatpush1.msra.mxu0 0.0
    %3116 = vmatprep.subr.mxu0 0.0
    %3117 = vmatpush1.msra.mxu0 0.0
    %3118 = vmatprep.subr.mxu0 0.0
    %3119 = vmatpush1.msra.mxu0 0.0
    %3120 = vmatprep.subr.mxu0 0.0
    %3121 = vmatpush1.msra.mxu0 0.0
    %3122 = vmatprep.subr.mxu0 0.0
    %3123 = vmatpush1.msra.mxu0 0.0
    %3124 = vmatprep.subr.mxu0 0.0
    %3125 = vmatpush1.msra.mxu0 0.0
    %3126 = vmatprep.subr.mxu0 0.0
    %3127 = vmatpush1.msra.mxu0 0.0
    %3128 = vmatprep.subr.mxu0 0.0
    %3129 = vmatpush1.msra.mxu0 0.0
    %3130 = vmatprep.subr.mxu0 0.0
    %3131 = vmatpush1.msra.mxu0 0.0
    %3132 = vmatprep.subr.mxu0 0.0
    %3133 = vmatpush1.msra.mxu0 0.0
    %3134 = vmatprep.subr.mxu0 0.0
    %3135 = vmatpush1.msra.mxu0 0.0
    %3136 = vmatprep.subr.mxu0 0.0
    %3137 = vmatpush1.msra.mxu0 0.0
    %3138 = vmatprep.subr.mxu0 0.0
    %3139 = vmatpush1.msra.mxu0 0.0
    %3140 = vmatprep.subr.mxu0 0.0
    %3141 = vmatpush1.msra.mxu0 0.0
    %3142 = vmatprep.subr.mxu0 0.0
    %3143 = vmatpush1.msra.mxu0 0.0
    %3144 = vmatprep.subr.mxu0 0.0
    %3145 = vmatpush1.msra.mxu0 0.0
    %3146 = vmatprep.subr.mxu0 0.0
    %3147 = vmatpush1.msra.mxu0 0.0
    %3148 = vmatprep.subr.mxu0 0.0
    %3149 = vmatpush1.msra.mxu0 0.0
    %3150 = vmatprep.mubr.f32.mxu0 0.0
    %3151 = vmatmul.mubr.f32.gmra.mrb[0].mxu0 %v3084
    %v3152 = vpop.f32.mrb[0].mxu0
    %v3153 = vadd.f32 %v633, %v3152
    %v3154 = vpop.f32.mrb[0].mxu0
    %3155 = vdwg.mxu0
    %v3157 = vsel %vm235, %v3058, 0
    %3159 = vmatprep.subr.mxu0 0.0
    %3160 = vmatpush1.msra.mxu0 %v619
    %3161 = vmatprep.subr.mxu0 0.0
    %3162 = vmatpush1.msra.mxu0 %v620
    %3163 = vmatprep.subr.mxu0 0.0
    %3164 = vmatpush1.msra.mxu0 0.0
    %3165 = vmatprep.subr.mxu0 0.0
    %3166 = vmatpush1.msra.mxu0 0.0
    %3167 = vmatprep.subr.mxu0 0.0
    %3168 = vmatpush1.msra.mxu0 0.0
    %3169 = vmatprep.subr.mxu0 0.0
    %3170 = vmatpush1.msra.mxu0 0.0
    %3171 = vmatprep.subr.mxu0 0.0
    %3172 = vmatpush1.msra.mxu0 0.0
    %3173 = vmatprep.subr.mxu0 0.0
    %3174 = vmatpush1.msra.mxu0 0.0
    %3175 = vmatprep.subr.mxu0 0.0
    %3176 = vmatpush1.msra.mxu0 0.0
    %3177 = vmatprep.subr.mxu0 0.0
    %3178 = vmatpush1.msra.mxu0 0.0
    %3179 = vmatprep.subr.mxu0 0.0
    %3180 = vmatpush1.msra.mxu0 0.0
    %3181 = vmatprep.subr.mxu0 0.0
    %3182 = vmatpush1.msra.mxu0 0.0
    %3183 = vmatprep.subr.mxu0 0.0
    %3184 = vmatpush1.msra.mxu0 0.0
    %3185 = vmatprep.subr.mxu0 0.0
    %3186 = vmatpush1.msra.mxu0 0.0
    %3187 = vmatprep.subr.mxu0 0.0
    %3188 = vmatpush1.msra.mxu0 0.0
    %3189 = vmatprep.subr.mxu0 0.0
    %3190 = vmatpush1.msra.mxu0 0.0
    %3191 = vmatprep.subr.mxu0 0.0
    %3192 = vmatpush1.msra.mxu0 0.0
    %3193 = vmatprep.subr.mxu0 0.0
    %3194 = vmatpush1.msra.mxu0 0.0
    %3195 = vmatprep.subr.mxu0 0.0
    %3196 = vmatpush1.msra.mxu0 0.0
    %3197 = vmatprep.subr.mxu0 0.0
    %3198 = vmatpush1.msra.mxu0 0.0
    %3199 = vmatprep.subr.mxu0 0.0
    %3200 = vmatpush1.msra.mxu0 0.0
    %3201 = vmatprep.subr.mxu0 0.0
    %3202 = vmatpush1.msra.mxu0 0.0
    %3203 = vmatprep.subr.mxu0 0.0
    %3204 = vmatpush1.msra.mxu0 0.0
    %3205 = vmatprep.subr.mxu0 0.0
    %3206 = vmatpush1.msra.mxu0 0.0
    %3207 = vmatprep.subr.mxu0 0.0
    %3208 = vmatpush1.msra.mxu0 0.0
    %3209 = vmatprep.subr.mxu0 0.0
    %3210 = vmatpush1.msra.mxu0 0.0
    %3211 = vmatprep.subr.mxu0 0.0
    %3212 = vmatpush1.msra.mxu0 0.0
    %3213 = vmatprep.subr.mxu0 0.0
    %3214 = vmatpush1.msra.mxu0 0.0
    %3215 = vmatprep.subr.mxu0 0.0
    %3216 = vmatpush1.msra.mxu0 0.0
    %3217 = vmatprep.subr.mxu0 0.0
    %3218 = vmatpush1.msra.mxu0 0.0
    %3219 = vmatprep.subr.mxu0 0.0
    %3220 = vmatpush1.msra.mxu0 0.0
    %3221 = vmatprep.subr.mxu0 0.0
    %3222 = vmatpush1.msra.mxu0 0.0
    %3223 = vmatprep.mubr.f32.mxu0 0.0
    %3224 = vmatmul.mubr.f32.gmra.mrb[0].mxu0 %v3157
    %v3225 = vpop.f32.mrb[0].mxu0
    %v3226 = vadd.f32 %v712, %v3225
    %v3227 = vpop.f32.mrb[0].mxu0
    %3228 = vdwg.mxu0
    %v3229 = vadd.f32 %v3081, %v3153
    %v3230 = vxor.u32 %v3229, 2147483648
    %v3231 = vmul.f32 %v3230, 1.442695
    %v3232 = vpow.pop %v3231
    %v3233 = vadd.f32 %v3232, 1.0
    %v3234 = vrcp.pop %v3233
    %v3235 = vmul.f32 1.0, %v3234
    %3237 = vrot.lane.b32.xlu0 %v3153, 96
    %v3238 = vpop.permute.xlu0 %3237
    %v3240 = vmul.f32 %v3235, %v3238
    %3242 = vrot.lane.b32.xlu0 %v3240, 32
    %v3243 = vpop.permute.xlu0 %3242
    %v3245 = vadd.f32 %v3081, %v3243
    %v3246 = vtanh.pop %v3245
    %v3247 = vsub.f32 1.0, %v3235
    %3249 = vrot.lane.b32.xlu0 %v3246, 112
    %v3250 = vpop.permute.xlu0 %3249
    %v3252 = vmul.f32 %v3247, %v3250
    %3253 = vrot.lane.b32.xlu0 %v3051, 16
    %v3254 = vpop.permute.xlu0 %3253
    %v3256 = vmul.f32 %v3235, %v3254
    %v3257 = vadd.f32 %v3252, %v3256
    %v3258 = vadd.f32 %v3082, %v3226
    %v3259 = vxor.u32 %v3258, 2147483648
    %v3260 = vmul.f32 %v3259, 1.442695
    %v3261 = vpow.pop %v3260
    %v3262 = vadd.f32 %v3261, 1.0
    %v3263 = vrcp.pop %v3262
    %v3264 = vmul.f32 1.0, %v3263
    %3266 = vrot.lane.b32.xlu0 %v3226, 96
    %v3267 = vpop.permute.xlu0 %3266
    %v3269 = vmul.f32 %v3264, %v3267
    %3271 = vrot.lane.b32.xlu0 %v3269, 32
    %v3272 = vpop.permute.xlu0 %3271
    %v3274 = vadd.f32 %v3082, %v3272
    %v3275 = vtanh.pop %v3274
    %v3276 = vsub.f32 1.0, %v3264
    %3278 = vrot.lane.b32.xlu0 %v3275, 112
    %v3279 = vpop.permute.xlu0 %3278
    %v3281 = vmul.f32 %v3276, %v3279
    %3282 = vrot.lane.b32.xlu0 %v3058, 16
    %v3283 = vpop.permute.xlu0 %3282
    %v3285 = vmul.f32 %v3264, %v3283
    %v3286 = vadd.f32 %v3281, %v3285
    %v3287 = vsub.f32 %v3257, %v3254
    %3289 = vrot.lane.b32.xlu0 %v3287, 112
    %v3290 = vpop.permute.xlu0 %3289
    %v3292 = vmul.f32 %v3079, %v3290
    %v3293 = vadd.f32 %v3051, %v3292
    %v3294 = vsub.f32 %v3286, %v3283
    %3296 = vrot.lane.b32.xlu0 %v3294, 112
    %v3297 = vpop.permute.xlu0 %3296
    %v3299 = vmul.f32 %v3080, %v3297
    %v3300 = vadd.f32 %v3058, %v3299
    %3302 = vrot.lane.b32.xlu0 %v3257, 112
    %v3303 = vpop.permute.xlu0 %3302
    %v3305 = vmul.f32 %v3079, %v3303
    %v3306 = vmul.f32 %v3305, %v852
    %v3307 = vsel %vm855, %v3306, 0.0
    %3308 = vadd.xlane.f32.xlu0 %v3307
    %v3309 = vpop.xlane.xlu0 %3308
    %3310 = vst.msk [vmem:[#allocation4] sm:$0x3] %vm2101, %v3309
    %3312 = vrot.lane.b32.xlu0 %v3286, 112
    %v3313 = vpop.permute.xlu0 %3312
    %v3315 = vmul.f32 %v3080, %v3313
    %v3316 = vmul.f32 %v3315, %v865
    %v3317 = vsel %vm855, %v3316, 0.0
    %3318 = vadd.xlane.f32.xlu0 %v3317
    %v3319 = vpop.xlane.xlu0 %3318
    %3320 = vst.msk [vmem:[#allocation5] sm:$0x3] %vm2090, %v3319
    %v3321 = vld [vmem:[%s1613] sm:$0x3]
    %v3322 = vld [vmem:[%s1611] sm:$0x3]
    %v3323 = vld [vmem:[#allocation2 + $0x16] sm:$0x3]
    %v3324 = vld [vmem:[#allocation3 + $0x8] sm:$0x3]
    %v3326 = vsel %vm235, %v3293, 0
    %3328 = vmatprep.subr.mxu0 0.0
    %3329 = vmatpush1.msra.mxu0 %v616
    %3330 = vmatprep.subr.mxu0 0.0
    %3331 = vmatpush1.msra.mxu0 %v617
    %3332 = vmatprep.subr.mxu0 0.0
    %3333 = vmatpush1.msra.mxu0 0.0
    %3334 = vmatprep.subr.mxu0 0.0
    %3335 = vmatpush1.msra.mxu0 0.0
    %3336 = vmatprep.subr.mxu0 0.0
    %3337 = vmatpush1.msra.mxu0 0.0
    %3338 = vmatprep.subr.mxu0 0.0
    %3339 = vmatpush1.msra.mxu0 0.0
    %3340 = vmatprep.subr.mxu0 0.0
    %3341 = vmatpush1.msra.mxu0 0.0
    %3342 = vmatprep.subr.mxu0 0.0
    %3343 = vmatpush1.msra.mxu0 0.0
    %3344 = vmatprep.subr.mxu0 0.0
    %3345 = vmatpush1.msra.mxu0 0.0
    %3346 = vmatprep.subr.mxu0 0.0
    %3347 = vmatpush1.msra.mxu0 0.0
    %3348 = vmatprep.subr.mxu0 0.0
    %3349 = vmatpush1.msra.mxu0 0.0
    %3350 = vmatprep.subr.mxu0 0.0
    %3351 = vmatpush1.msra.mxu0 0.0
    %3352 = vmatprep.subr.mxu0 0.0
    %3353 = vmatpush1.msra.mxu0 0.0
    %3354 = vmatprep.subr.mxu0 0.0
    %3355 = vmatpush1.msra.mxu0 0.0
    %3356 = vmatprep.subr.mxu0 0.0
    %3357 = vmatpush1.msra.mxu0 0.0
    %3358 = vmatprep.subr.mxu0 0.0
    %3359 = vmatpush1.msra.mxu0 0.0
    %3360 = vmatprep.subr.mxu0 0.0
    %3361 = vmatpush1.msra.mxu0 0.0
    %3362 = vmatprep.subr.mxu0 0.0
    %3363 = vmatpush1.msra.mxu0 0.0
    %3364 = vmatprep.subr.mxu0 0.0
    %3365 = vmatpush1.msra.mxu0 0.0
    %3366 = vmatprep.subr.mxu0 0.0
    %3367 = vmatpush1.msra.mxu0 0.0
    %3368 = vmatprep.subr.mxu0 0.0
    %3369 = vmatpush1.msra.mxu0 0.0
    %3370 = vmatprep.subr.mxu0 0.0
    %3371 = vmatpush1.msra.mxu0 0.0
    %3372 = vmatprep.subr.mxu0 0.0
    %3373 = vmatpush1.msra.mxu0 0.0
    %3374 = vmatprep.subr.mxu0 0.0
    %3375 = vmatpush1.msra.mxu0 0.0
    %3376 = vmatprep.subr.mxu0 0.0
    %3377 = vmatpush1.msra.mxu0 0.0
    %3378 = vmatprep.subr.mxu0 0.0
    %3379 = vmatpush1.msra.mxu0 0.0
    %3380 = vmatprep.subr.mxu0 0.0
    %3381 = vmatpush1.msra.mxu0 0.0
    %3382 = vmatprep.subr.mxu0 0.0
    %3383 = vmatpush1.msra.mxu0 0.0
    %3384 = vmatprep.subr.mxu0 0.0
    %3385 = vmatpush1.msra.mxu0 0.0
    %3386 = vmatprep.subr.mxu0 0.0
    %3387 = vmatpush1.msra.mxu0 0.0
    %3388 = vmatprep.subr.mxu0 0.0
    %3389 = vmatpush1.msra.mxu0 0.0
    %3390 = vmatprep.subr.mxu0 0.0
    %3391 = vmatpush1.msra.mxu0 0.0
    %3392 = vmatprep.mubr.f32.mxu0 0.0
    %3393 = vmatmul.mubr.f32.gmra.mrb[0].mxu0 %v3326
    %v3394 = vpop.f32.mrb[0].mxu0
    %v3395 = vadd.f32 %v633, %v3394
    %v3396 = vpop.f32.mrb[0].mxu0
    %3397 = vdwg.mxu0
    %v3399 = vsel %vm235, %v3300, 0
    %3401 = vmatprep.subr.mxu0 0.0
    %3402 = vmatpush1.msra.mxu0 %v619
    %3403 = vmatprep.subr.mxu0 0.0
    %3404 = vmatpush1.msra.mxu0 %v620
    %3405 = vmatprep.subr.mxu0 0.0
    %3406 = vmatpush1.msra.mxu0 0.0
    %3407 = vmatprep.subr.mxu0 0.0
    %3408 = vmatpush1.msra.mxu0 0.0
    %3409 = vmatprep.subr.mxu0 0.0
    %3410 = vmatpush1.msra.mxu0 0.0
    %3411 = vmatprep.subr.mxu0 0.0
    %3412 = vmatpush1.msra.mxu0 0.0
    %3413 = vmatprep.subr.mxu0 0.0
    %3414 = vmatpush1.msra.mxu0 0.0
    %3415 = vmatprep.subr.mxu0 0.0
    %3416 = vmatpush1.msra.mxu0 0.0
    %3417 = vmatprep.subr.mxu0 0.0
    %3418 = vmatpush1.msra.mxu0 0.0
    %3419 = vmatprep.subr.mxu0 0.0
    %3420 = vmatpush1.msra.mxu0 0.0
    %3421 = vmatprep.subr.mxu0 0.0
    %3422 = vmatpush1.msra.mxu0 0.0
    %3423 = vmatprep.subr.mxu0 0.0
    %3424 = vmatpush1.msra.mxu0 0.0
    %3425 = vmatprep.subr.mxu0 0.0
    %3426 = vmatpush1.msra.mxu0 0.0
    %3427 = vmatprep.subr.mxu0 0.0
    %3428 = vmatpush1.msra.mxu0 0.0
    %3429 = vmatprep.subr.mxu0 0.0
    %3430 = vmatpush1.msra.mxu0 0.0
    %3431 = vmatprep.subr.mxu0 0.0
    %3432 = vmatpush1.msra.mxu0 0.0
    %3433 = vmatprep.subr.mxu0 0.0
    %3434 = vmatpush1.msra.mxu0 0.0
    %3435 = vmatprep.subr.mxu0 0.0
    %3436 = vmatpush1.msra.mxu0 0.0
    %3437 = vmatprep.subr.mxu0 0.0
    %3438 = vmatpush1.msra.mxu0 0.0
    %3439 = vmatprep.subr.mxu0 0.0
    %3440 = vmatpush1.msra.mxu0 0.0
    %3441 = vmatprep.subr.mxu0 0.0
    %3442 = vmatpush1.msra.mxu0 0.0
    %3443 = vmatprep.subr.mxu0 0.0
    %3444 = vmatpush1.msra.mxu0 0.0
    %3445 = vmatprep.subr.mxu0 0.0
    %3446 = vmatpush1.msra.mxu0 0.0
    %3447 = vmatprep.subr.mxu0 0.0
    %3448 = vmatpush1.msra.mxu0 0.0
    %3449 = vmatprep.subr.mxu0 0.0
    %3450 = vmatpush1.msra.mxu0 0.0
    %3451 = vmatprep.subr.mxu0 0.0
    %3452 = vmatpush1.msra.mxu0 0.0
    %3453 = vmatprep.subr.mxu0 0.0
    %3454 = vmatpush1.msra.mxu0 0.0
    %3455 = vmatprep.subr.mxu0 0.0
    %3456 = vmatpush1.msra.mxu0 0.0
    %3457 = vmatprep.subr.mxu0 0.0
    %3458 = vmatpush1.msra.mxu0 0.0
    %3459 = vmatprep.subr.mxu0 0.0
    %3460 = vmatpush1.msra.mxu0 0.0
    %3461 = vmatprep.subr.mxu0 0.0
    %3462 = vmatpush1.msra.mxu0 0.0
    %3463 = vmatprep.subr.mxu0 0.0
    %3464 = vmatpush1.msra.mxu0 0.0
    %3465 = vmatprep.mubr.f32.mxu0 0.0
    %3466 = vmatmul.mubr.f32.gmra.mrb[0].mxu0 %v3399
    %v3467 = vpop.f32.mrb[0].mxu0
    %v3468 = vadd.f32 %v712, %v3467
    %v3469 = vpop.f32.mrb[0].mxu0
    %3470 = vdwg.mxu0
    %v3471 = vadd.f32 %v3323, %v3395
    %v3472 = vxor.u32 %v3471, 2147483648
    %v3473 = vmul.f32 %v3472, 1.442695
    %v3474 = vpow.pop %v3473
    %v3475 = vadd.f32 %v3474, 1.0
    %v3476 = vrcp.pop %v3475
    %v3477 = vmul.f32 1.0, %v3476
    %3479 = vrot.lane.b32.xlu0 %v3395, 96
    %v3480 = vpop.permute.xlu0 %3479
    %v3482 = vmul.f32 %v3477, %v3480
    %3484 = vrot.lane.b32.xlu0 %v3482, 32
    %v3485 = vpop.permute.xlu0 %3484
    %v3487 = vadd.f32 %v3323, %v3485
    %v3488 = vtanh.pop %v3487
    %v3489 = vsub.f32 1.0, %v3477
    %3491 = vrot.lane.b32.xlu0 %v3488, 112
    %v3492 = vpop.permute.xlu0 %3491
    %v3494 = vmul.f32 %v3489, %v3492
    %3495 = vrot.lane.b32.xlu0 %v3293, 16
    %v3496 = vpop.permute.xlu0 %3495
    %v3498 = vmul.f32 %v3477, %v3496
    %v3499 = vadd.f32 %v3494, %v3498
    %v3500 = vadd.f32 %v3324, %v3468
    %v3501 = vxor.u32 %v3500, 2147483648
    %v3502 = vmul.f32 %v3501, 1.442695
    %v3503 = vpow.pop %v3502
    %v3504 = vadd.f32 %v3503, 1.0
    %v3505 = vrcp.pop %v3504
    %v3506 = vmul.f32 1.0, %v3505
    %3508 = vrot.lane.b32.xlu0 %v3468, 96
    %v3509 = vpop.permute.xlu0 %3508
    %v3511 = vmul.f32 %v3506, %v3509
    %3513 = vrot.lane.b32.xlu0 %v3511, 32
    %v3514 = vpop.permute.xlu0 %3513
    %v3516 = vadd.f32 %v3324, %v3514
    %v3517 = vtanh.pop %v3516
    %v3518 = vsub.f32 1.0, %v3506
    %3520 = vrot.lane.b32.xlu0 %v3517, 112
    %v3521 = vpop.permute.xlu0 %3520
    %v3523 = vmul.f32 %v3518, %v3521
    %3524 = vrot.lane.b32.xlu0 %v3300, 16
    %v3525 = vpop.permute.xlu0 %3524
    %v3527 = vmul.f32 %v3506, %v3525
    %v3528 = vadd.f32 %v3523, %v3527
    %v3529 = vsub.f32 %v3499, %v3496
    %3531 = vrot.lane.b32.xlu0 %v3529, 112
    %v3532 = vpop.permute.xlu0 %3531
    %v3534 = vmul.f32 %v3321, %v3532
    %v3535 = vadd.f32 %v3293, %v3534
    %v3536 = vsub.f32 %v3528, %v3525
    %3538 = vrot.lane.b32.xlu0 %v3536, 112
    %v3539 = vpop.permute.xlu0 %3538
    %v3541 = vmul.f32 %v3322, %v3539
    %v3542 = vadd.f32 %v3300, %v3541
    %3544 = vrot.lane.b32.xlu0 %v3499, 112
    %v3545 = vpop.permute.xlu0 %3544
    %v3547 = vmul.f32 %v3321, %v3545
    %v3548 = vmul.f32 %v3547, %v852
    %v3549 = vsel %vm855, %v3548, 0.0
    %3550 = vadd.xlane.f32.xlu0 %v3549
    %v3551 = vpop.xlane.xlu0 %3550
    %3552 = vst.msk [vmem:[#allocation4] sm:$0x3] %vm1855, %v3551
    %3554 = vrot.lane.b32.xlu0 %v3528, 112
    %v3555 = vpop.permute.xlu0 %3554
    %v3557 = vmul.f32 %v3322, %v3555
    %v3558 = vmul.f32 %v3557, %v865
    %v3559 = vsel %vm855, %v3558, 0.0
    %3560 = vadd.xlane.f32.xlu0 %v3559
    %v3561 = vpop.xlane.xlu0 %3560
    %3562 = vst.msk [vmem:[#allocation5] sm:$0x3] %vm1844, %v3561
    %v3563 = vld [vmem:[%s1367] sm:$0x3]
    %v3564 = vld [vmem:[%s1365] sm:$0x3]
    %v3565 = vld [vmem:[#allocation2 + $0x18] sm:$0x3]
    %v3566 = vld [vmem:[#allocation3 + $0x6] sm:$0x3]
    %v3568 = vsel %vm235, %v3535, 0
    %3570 = vmatprep.subr.mxu0 0.0
    %3571 = vmatpush1.msra.mxu0 %v616
    %3572 = vmatprep.subr.mxu0 0.0
    %3573 = vmatpush1.msra.mxu0 %v617
    %3574 = vmatprep.subr.mxu0 0.0
    %3575 = vmatpush1.msra.mxu0 0.0
    %3576 = vmatprep.subr.mxu0 0.0
    %3577 = vmatpush1.msra.mxu0 0.0
    %3578 = vmatprep.subr.mxu0 0.0
    %3579 = vmatpush1.msra.mxu0 0.0
    %3580 = vmatprep.subr.mxu0 0.0
    %3581 = vmatpush1.msra.mxu0 0.0
    %3582 = vmatprep.subr.mxu0 0.0
    %3583 = vmatpush1.msra.mxu0 0.0
    %3584 = vmatprep.subr.mxu0 0.0
    %3585 = vmatpush1.msra.mxu0 0.0
    %3586 = vmatprep.subr.mxu0 0.0
    %3587 = vmatpush1.msra.mxu0 0.0
    %3588 = vmatprep.subr.mxu0 0.0
    %3589 = vmatpush1.msra.mxu0 0.0
    %3590 = vmatprep.subr.mxu0 0.0
    %3591 = vmatpush1.msra.mxu0 0.0
    %3592 = vmatprep.subr.mxu0 0.0
    %3593 = vmatpush1.msra.mxu0 0.0
    %3594 = vmatprep.subr.mxu0 0.0
    %3595 = vmatpush1.msra.mxu0 0.0
    %3596 = vmatprep.subr.mxu0 0.0
    %3597 = vmatpush1.msra.mxu0 0.0
    %3598 = vmatprep.subr.mxu0 0.0
    %3599 = vmatpush1.msra.mxu0 0.0
    %3600 = vmatprep.subr.mxu0 0.0
    %3601 = vmatpush1.msra.mxu0 0.0
    %3602 = vmatprep.subr.mxu0 0.0
    %3603 = vmatpush1.msra.mxu0 0.0
    %3604 = vmatprep.subr.mxu0 0.0
    %3605 = vmatpush1.msra.mxu0 0.0
    %3606 = vmatprep.subr.mxu0 0.0
    %3607 = vmatpush1.msra.mxu0 0.0
    %3608 = vmatprep.subr.mxu0 0.0
    %3609 = vmatpush1.msra.mxu0 0.0
    %3610 = vmatprep.subr.mxu0 0.0
    %3611 = vmatpush1.msra.mxu0 0.0
    %3612 = vmatprep.subr.mxu0 0.0
    %3613 = vmatpush1.msra.mxu0 0.0
    %3614 = vmatprep.subr.mxu0 0.0
    %3615 = vmatpush1.msra.mxu0 0.0
    %3616 = vmatprep.subr.mxu0 0.0
    %3617 = vmatpush1.msra.mxu0 0.0
    %3618 = vmatprep.subr.mxu0 0.0
    %3619 = vmatpush1.msra.mxu0 0.0
    %3620 = vmatprep.subr.mxu0 0.0
    %3621 = vmatpush1.msra.mxu0 0.0
    %3622 = vmatprep.subr.mxu0 0.0
    %3623 = vmatpush1.msra.mxu0 0.0
    %3624 = vmatprep.subr.mxu0 0.0
    %3625 = vmatpush1.msra.mxu0 0.0
    %3626 = vmatprep.subr.mxu0 0.0
    %3627 = vmatpush1.msra.mxu0 0.0
    %3628 = vmatprep.subr.mxu0 0.0
    %3629 = vmatpush1.msra.mxu0 0.0
    %3630 = vmatprep.subr.mxu0 0.0
    %3631 = vmatpush1.msra.mxu0 0.0
    %3632 = vmatprep.subr.mxu0 0.0
    %3633 = vmatpush1.msra.mxu0 0.0
    %3634 = vmatprep.mubr.f32.mxu0 0.0
    %3635 = vmatmul.mubr.f32.gmra.mrb[0].mxu0 %v3568
    %v3636 = vpop.f32.mrb[0].mxu0
    %v3637 = vadd.f32 %v633, %v3636
    %v3638 = vpop.f32.mrb[0].mxu0
    %3639 = vdwg.mxu0
    %v3641 = vsel %vm235, %v3542, 0
    %3643 = vmatprep.subr.mxu0 0.0
    %3644 = vmatpush1.msra.mxu0 %v619
    %3645 = vmatprep.subr.mxu0 0.0
    %3646 = vmatpush1.msra.mxu0 %v620
    %3647 = vmatprep.subr.mxu0 0.0
    %3648 = vmatpush1.msra.mxu0 0.0
    %3649 = vmatprep.subr.mxu0 0.0
    %3650 = vmatpush1.msra.mxu0 0.0
    %3651 = vmatprep.subr.mxu0 0.0
    %3652 = vmatpush1.msra.mxu0 0.0
    %3653 = vmatprep.subr.mxu0 0.0
    %3654 = vmatpush1.msra.mxu0 0.0
    %3655 = vmatprep.subr.mxu0 0.0
    %3656 = vmatpush1.msra.mxu0 0.0
    %3657 = vmatprep.subr.mxu0 0.0
    %3658 = vmatpush1.msra.mxu0 0.0
    %3659 = vmatprep.subr.mxu0 0.0
    %3660 = vmatpush1.msra.mxu0 0.0
    %3661 = vmatprep.subr.mxu0 0.0
    %3662 = vmatpush1.msra.mxu0 0.0
    %3663 = vmatprep.subr.mxu0 0.0
    %3664 = vmatpush1.msra.mxu0 0.0
    %3665 = vmatprep.subr.mxu0 0.0
    %3666 = vmatpush1.msra.mxu0 0.0
    %3667 = vmatprep.subr.mxu0 0.0
    %3668 = vmatpush1.msra.mxu0 0.0
    %3669 = vmatprep.subr.mxu0 0.0
    %3670 = vmatpush1.msra.mxu0 0.0
    %3671 = vmatprep.subr.mxu0 0.0
    %3672 = vmatpush1.msra.mxu0 0.0
    %3673 = vmatprep.subr.mxu0 0.0
    %3674 = vmatpush1.msra.mxu0 0.0
    %3675 = vmatprep.subr.mxu0 0.0
    %3676 = vmatpush1.msra.mxu0 0.0
    %3677 = vmatprep.subr.mxu0 0.0
    %3678 = vmatpush1.msra.mxu0 0.0
    %3679 = vmatprep.subr.mxu0 0.0
    %3680 = vmatpush1.msra.mxu0 0.0
    %3681 = vmatprep.subr.mxu0 0.0
    %3682 = vmatpush1.msra.mxu0 0.0
    %3683 = vmatprep.subr.mxu0 0.0
    %3684 = vmatpush1.msra.mxu0 0.0
    %3685 = vmatprep.subr.mxu0 0.0
    %3686 = vmatpush1.msra.mxu0 0.0
    %3687 = vmatprep.subr.mxu0 0.0
    %3688 = vmatpush1.msra.mxu0 0.0
    %3689 = vmatprep.subr.mxu0 0.0
    %3690 = vmatpush1.msra.mxu0 0.0
    %3691 = vmatprep.subr.mxu0 0.0
    %3692 = vmatpush1.msra.mxu0 0.0
    %3693 = vmatprep.subr.mxu0 0.0
    %3694 = vmatpush1.msra.mxu0 0.0
    %3695 = vmatprep.subr.mxu0 0.0
    %3696 = vmatpush1.msra.mxu0 0.0
    %3697 = vmatprep.subr.mxu0 0.0
    %3698 = vmatpush1.msra.mxu0 0.0
    %3699 = vmatprep.subr.mxu0 0.0
    %3700 = vmatpush1.msra.mxu0 0.0
    %3701 = vmatprep.subr.mxu0 0.0
    %3702 = vmatpush1.msra.mxu0 0.0
    %3703 = vmatprep.subr.mxu0 0.0
    %3704 = vmatpush1.msra.mxu0 0.0
    %3705 = vmatprep.subr.mxu0 0.0
    %3706 = vmatpush1.msra.mxu0 0.0
    %3707 = vmatprep.mubr.f32.mxu0 0.0
    %3708 = vmatmul.mubr.f32.gmra.mrb[0].mxu0 %v3641
    %v3709 = vpop.f32.mrb[0].mxu0
    %v3710 = vadd.f32 %v712, %v3709
    %v3711 = vpop.f32.mrb[0].mxu0
    %3712 = vdwg.mxu0
    %v3713 = vadd.f32 %v3565, %v3637
    %v3714 = vxor.u32 %v3713, 2147483648
    %v3715 = vmul.f32 %v3714, 1.442695
    %v3716 = vpow.pop %v3715
    %v3717 = vadd.f32 %v3716, 1.0
    %v3718 = vrcp.pop %v3717
    %v3719 = vmul.f32 1.0, %v3718
    %3721 = vrot.lane.b32.xlu0 %v3637, 96
    %v3722 = vpop.permute.xlu0 %3721
    %v3724 = vmul.f32 %v3719, %v3722
    %3726 = vrot.lane.b32.xlu0 %v3724, 32
    %v3727 = vpop.permute.xlu0 %3726
    %v3729 = vadd.f32 %v3565, %v3727
    %v3730 = vtanh.pop %v3729
    %v3731 = vsub.f32 1.0, %v3719
    %3733 = vrot.lane.b32.xlu0 %v3730, 112
    %v3734 = vpop.permute.xlu0 %3733
    %v3736 = vmul.f32 %v3731, %v3734
    %3737 = vrot.lane.b32.xlu0 %v3535, 16
    %v3738 = vpop.permute.xlu0 %3737
    %v3740 = vmul.f32 %v3719, %v3738
    %v3741 = vadd.f32 %v3736, %v3740
    %v3742 = vadd.f32 %v3566, %v3710
    %v3743 = vxor.u32 %v3742, 2147483648
    %v3744 = vmul.f32 %v3743, 1.442695
    %v3745 = vpow.pop %v3744
    %v3746 = vadd.f32 %v3745, 1.0
    %v3747 = vrcp.pop %v3746
    %v3748 = vmul.f32 1.0, %v3747
    %3750 = vrot.lane.b32.xlu0 %v3710, 96
    %v3751 = vpop.permute.xlu0 %3750
    %v3753 = vmul.f32 %v3748, %v3751
    %3755 = vrot.lane.b32.xlu0 %v3753, 32
    %v3756 = vpop.permute.xlu0 %3755
    %v3758 = vadd.f32 %v3566, %v3756
    %v3759 = vtanh.pop %v3758
    %v3760 = vsub.f32 1.0, %v3748
    %3762 = vrot.lane.b32.xlu0 %v3759, 112
    %v3763 = vpop.permute.xlu0 %3762
    %v3765 = vmul.f32 %v3760, %v3763
    %3766 = vrot.lane.b32.xlu0 %v3542, 16
    %v3767 = vpop.permute.xlu0 %3766
    %v3769 = vmul.f32 %v3748, %v3767
    %v3770 = vadd.f32 %v3765, %v3769
    %v3771 = vsub.f32 %v3741, %v3738
    %3773 = vrot.lane.b32.xlu0 %v3771, 112
    %v3774 = vpop.permute.xlu0 %3773
    %v3776 = vmul.f32 %v3563, %v3774
    %v3777 = vadd.f32 %v3535, %v3776
    %v3778 = vsub.f32 %v3770, %v3767
    %3780 = vrot.lane.b32.xlu0 %v3778, 112
    %v3781 = vpop.permute.xlu0 %3780
    %v3783 = vmul.f32 %v3564, %v3781
    %v3784 = vadd.f32 %v3542, %v3783
    %3786 = vrot.lane.b32.xlu0 %v3741, 112
    %v3787 = vpop.permute.xlu0 %3786
    %v3789 = vmul.f32 %v3563, %v3787
    %v3790 = vmul.f32 %v3789, %v852
    %v3791 = vsel %vm855, %v3790, 0.0
    %3792 = vadd.xlane.f32.xlu0 %v3791
    %v3793 = vpop.xlane.xlu0 %3792
    %3794 = vst.msk [vmem:[#allocation4] sm:$0x3] %vm1609, %v3793
    %3796 = vrot.lane.b32.xlu0 %v3770, 112
    %v3797 = vpop.permute.xlu0 %3796
    %v3799 = vmul.f32 %v3564, %v3797
    %v3800 = vmul.f32 %v3799, %v865
    %v3801 = vsel %vm855, %v3800, 0.0
    %3802 = vadd.xlane.f32.xlu0 %v3801
    %v3803 = vpop.xlane.xlu0 %3802
    %3804 = vst.msk [vmem:[#allocation5] sm:$0x3] %vm1598, %v3803
    %v3805 = vld [vmem:[%s1121] sm:$0x3]
    %v3806 = vld [vmem:[%s1119] sm:$0x3]
    %v3807 = vld [vmem:[#allocation2 + $0x1a] sm:$0x3]
    %v3808 = vld [vmem:[#allocation3 + $0x4] sm:$0x3]
    %v3810 = vsel %vm235, %v3777, 0
    %3812 = vmatprep.subr.mxu0 0.0
    %3813 = vmatpush1.msra.mxu0 %v616
    %3814 = vmatprep.subr.mxu0 0.0
    %3815 = vmatpush1.msra.mxu0 %v617
    %3816 = vmatprep.subr.mxu0 0.0
    %3817 = vmatpush1.msra.mxu0 0.0
    %3818 = vmatprep.subr.mxu0 0.0
    %3819 = vmatpush1.msra.mxu0 0.0
    %3820 = vmatprep.subr.mxu0 0.0
    %3821 = vmatpush1.msra.mxu0 0.0
    %3822 = vmatprep.subr.mxu0 0.0
    %3823 = vmatpush1.msra.mxu0 0.0
    %3824 = vmatprep.subr.mxu0 0.0
    %3825 = vmatpush1.msra.mxu0 0.0
    %3826 = vmatprep.subr.mxu0 0.0
    %3827 = vmatpush1.msra.mxu0 0.0
    %3828 = vmatprep.subr.mxu0 0.0
    %3829 = vmatpush1.msra.mxu0 0.0
    %3830 = vmatprep.subr.mxu0 0.0
    %3831 = vmatpush1.msra.mxu0 0.0
    %3832 = vmatprep.subr.mxu0 0.0
    %3833 = vmatpush1.msra.mxu0 0.0
    %3834 = vmatprep.subr.mxu0 0.0
    %3835 = vmatpush1.msra.mxu0 0.0
    %3836 = vmatprep.subr.mxu0 0.0
    %3837 = vmatpush1.msra.mxu0 0.0
    %3838 = vmatprep.subr.mxu0 0.0
    %3839 = vmatpush1.msra.mxu0 0.0
    %3840 = vmatprep.subr.mxu0 0.0
    %3841 = vmatpush1.msra.mxu0 0.0
    %3842 = vmatprep.subr.mxu0 0.0
    %3843 = vmatpush1.msra.mxu0 0.0
    %3844 = vmatprep.subr.mxu0 0.0
    %3845 = vmatpush1.msra.mxu0 0.0
    %3846 = vmatprep.subr.mxu0 0.0
    %3847 = vmatpush1.msra.mxu0 0.0
    %3848 = vmatprep.subr.mxu0 0.0
    %3849 = vmatpush1.msra.mxu0 0.0
    %3850 = vmatprep.subr.mxu0 0.0
    %3851 = vmatpush1.msra.mxu0 0.0
    %3852 = vmatprep.subr.mxu0 0.0
    %3853 = vmatpush1.msra.mxu0 0.0
    %3854 = vmatprep.subr.mxu0 0.0
    %3855 = vmatpush1.msra.mxu0 0.0
    %3856 = vmatprep.subr.mxu0 0.0
    %3857 = vmatpush1.msra.mxu0 0.0
    %3858 = vmatprep.subr.mxu0 0.0
    %3859 = vmatpush1.msra.mxu0 0.0
    %3860 = vmatprep.subr.mxu0 0.0
    %3861 = vmatpush1.msra.mxu0 0.0
    %3862 = vmatprep.subr.mxu0 0.0
    %3863 = vmatpush1.msra.mxu0 0.0
    %3864 = vmatprep.subr.mxu0 0.0
    %3865 = vmatpush1.msra.mxu0 0.0
    %3866 = vmatprep.subr.mxu0 0.0
    %3867 = vmatpush1.msra.mxu0 0.0
    %3868 = vmatprep.subr.mxu0 0.0
    %3869 = vmatpush1.msra.mxu0 0.0
    %3870 = vmatprep.subr.mxu0 0.0
    %3871 = vmatpush1.msra.mxu0 0.0
    %3872 = vmatprep.subr.mxu0 0.0
    %3873 = vmatpush1.msra.mxu0 0.0
    %3874 = vmatprep.subr.mxu0 0.0
    %3875 = vmatpush1.msra.mxu0 0.0
    %3876 = vmatprep.mubr.f32.mxu0 0.0
    %3877 = vmatmul.mubr.f32.gmra.mrb[0].mxu0 %v3810
    %v3878 = vpop.f32.mrb[0].mxu0
    %v3879 = vadd.f32 %v633, %v3878
    %v3880 = vpop.f32.mrb[0].mxu0
    %3881 = vdwg.mxu0
    %v3883 = vsel %vm235, %v3784, 0
    %3885 = vmatprep.subr.mxu0 0.0
    %3886 = vmatpush1.msra.mxu0 %v619
    %3887 = vmatprep.subr.mxu0 0.0
    %3888 = vmatpush1.msra.mxu0 %v620
    %3889 = vmatprep.subr.mxu0 0.0
    %3890 = vmatpush1.msra.mxu0 0.0
    %3891 = vmatprep.subr.mxu0 0.0
    %3892 = vmatpush1.msra.mxu0 0.0
    %3893 = vmatprep.subr.mxu0 0.0
    %3894 = vmatpush1.msra.mxu0 0.0
    %3895 = vmatprep.subr.mxu0 0.0
    %3896 = vmatpush1.msra.mxu0 0.0
    %3897 = vmatprep.subr.mxu0 0.0
    %3898 = vmatpush1.msra.mxu0 0.0
    %3899 = vmatprep.subr.mxu0 0.0
    %3900 = vmatpush1.msra.mxu0 0.0
    %3901 = vmatprep.subr.mxu0 0.0
    %3902 = vmatpush1.msra.mxu0 0.0
    %3903 = vmatprep.subr.mxu0 0.0
    %3904 = vmatpush1.msra.mxu0 0.0
    %3905 = vmatprep.subr.mxu0 0.0
    %3906 = vmatpush1.msra.mxu0 0.0
    %3907 = vmatprep.subr.mxu0 0.0
    %3908 = vmatpush1.msra.mxu0 0.0
    %3909 = vmatprep.subr.mxu0 0.0
    %3910 = vmatpush1.msra.mxu0 0.0
    %3911 = vmatprep.subr.mxu0 0.0
    %3912 = vmatpush1.msra.mxu0 0.0
    %3913 = vmatprep.subr.mxu0 0.0
    %3914 = vmatpush1.msra.mxu0 0.0
    %3915 = vmatprep.subr.mxu0 0.0
    %3916 = vmatpush1.msra.mxu0 0.0
    %3917 = vmatprep.subr.mxu0 0.0
    %3918 = vmatpush1.msra.mxu0 0.0
    %3919 = vmatprep.subr.mxu0 0.0
    %3920 = vmatpush1.msra.mxu0 0.0
    %3921 = vmatprep.subr.mxu0 0.0
    %3922 = vmatpush1.msra.mxu0 0.0
    %3923 = vmatprep.subr.mxu0 0.0
    %3924 = vmatpush1.msra.mxu0 0.0
    %3925 = vmatprep.subr.mxu0 0.0
    %3926 = vmatpush1.msra.mxu0 0.0
    %3927 = vmatprep.subr.mxu0 0.0
    %3928 = vmatpush1.msra.mxu0 0.0
    %3929 = vmatprep.subr.mxu0 0.0
    %3930 = vmatpush1.msra.mxu0 0.0
    %3931 = vmatprep.subr.mxu0 0.0
    %3932 = vmatpush1.msra.mxu0 0.0
    %3933 = vmatprep.subr.mxu0 0.0
    %3934 = vmatpush1.msra.mxu0 0.0
    %3935 = vmatprep.subr.mxu0 0.0
    %3936 = vmatpush1.msra.mxu0 0.0
    %3937 = vmatprep.subr.mxu0 0.0
    %3938 = vmatpush1.msra.mxu0 0.0
    %3939 = vmatprep.subr.mxu0 0.0
    %3940 = vmatpush1.msra.mxu0 0.0
    %3941 = vmatprep.subr.mxu0 0.0
    %3942 = vmatpush1.msra.mxu0 0.0
    %3943 = vmatprep.subr.mxu0 0.0
    %3944 = vmatpush1.msra.mxu0 0.0
    %3945 = vmatprep.subr.mxu0 0.0
    %3946 = vmatpush1.msra.mxu0 0.0
    %3947 = vmatprep.subr.mxu0 0.0
    %3948 = vmatpush1.msra.mxu0 0.0
    %3949 = vmatprep.mubr.f32.mxu0 0.0
    %3950 = vmatmul.mubr.f32.gmra.mrb[0].mxu0 %v3883
    %v3951 = vpop.f32.mrb[0].mxu0
    %v3952 = vadd.f32 %v712, %v3951
    %v3953 = vpop.f32.mrb[0].mxu0
    %3954 = vdwg.mxu0
    %v3955 = vadd.f32 %v3807, %v3879
    %v3956 = vxor.u32 %v3955, 2147483648
    %v3957 = vmul.f32 %v3956, 1.442695
    %v3958 = vpow.pop %v3957
    %v3959 = vadd.f32 %v3958, 1.0
    %v3960 = vrcp.pop %v3959
    %v3961 = vmul.f32 1.0, %v3960
    %3963 = vrot.lane.b32.xlu0 %v3879, 96
    %v3964 = vpop.permute.xlu0 %3963
    %v3966 = vmul.f32 %v3961, %v3964
    %3968 = vrot.lane.b32.xlu0 %v3966, 32
    %v3969 = vpop.permute.xlu0 %3968
    %v3971 = vadd.f32 %v3807, %v3969
    %v3972 = vtanh.pop %v3971
    %v3973 = vsub.f32 1.0, %v3961
    %3975 = vrot.lane.b32.xlu0 %v3972, 112
    %v3976 = vpop.permute.xlu0 %3975
    %v3978 = vmul.f32 %v3973, %v3976
    %3979 = vrot.lane.b32.xlu0 %v3777, 16
    %v3980 = vpop.permute.xlu0 %3979
    %v3982 = vmul.f32 %v3961, %v3980
    %v3983 = vadd.f32 %v3978, %v3982
    %v3984 = vadd.f32 %v3808, %v3952
    %v3985 = vxor.u32 %v3984, 2147483648
    %v3986 = vmul.f32 %v3985, 1.442695
    %v3987 = vpow.pop %v3986
    %v3988 = vadd.f32 %v3987, 1.0
    %v3989 = vrcp.pop %v3988
    %v3990 = vmul.f32 1.0, %v3989
    %3992 = vrot.lane.b32.xlu0 %v3952, 96
    %v3993 = vpop.permute.xlu0 %3992
    %v3995 = vmul.f32 %v3990, %v3993
    %3997 = vrot.lane.b32.xlu0 %v3995, 32
    %v3998 = vpop.permute.xlu0 %3997
    %v4000 = vadd.f32 %v3808, %v3998
    %v4001 = vtanh.pop %v4000
    %v4002 = vsub.f32 1.0, %v3990
    %4004 = vrot.lane.b32.xlu0 %v4001, 112
    %v4005 = vpop.permute.xlu0 %4004
    %v4007 = vmul.f32 %v4002, %v4005
    %4008 = vrot.lane.b32.xlu0 %v3784, 16
    %v4009 = vpop.permute.xlu0 %4008
    %v4011 = vmul.f32 %v3990, %v4009
    %v4012 = vadd.f32 %v4007, %v4011
    %v4013 = vsub.f32 %v3983, %v3980
    %4015 = vrot.lane.b32.xlu0 %v4013, 112
    %v4016 = vpop.permute.xlu0 %4015
    %v4018 = vmul.f32 %v3805, %v4016
    %v4019 = vadd.f32 %v3777, %v4018
    %v4020 = vsub.f32 %v4012, %v4009
    %4022 = vrot.lane.b32.xlu0 %v4020, 112
    %v4023 = vpop.permute.xlu0 %4022
    %v4025 = vmul.f32 %v3806, %v4023
    %v4026 = vadd.f32 %v3784, %v4025
    %4028 = vrot.lane.b32.xlu0 %v3983, 112
    %v4029 = vpop.permute.xlu0 %4028
    %v4031 = vmul.f32 %v3805, %v4029
    %v4032 = vmul.f32 %v4031, %v852
    %v4033 = vsel %vm855, %v4032, 0.0
    %4034 = vadd.xlane.f32.xlu0 %v4033
    %v4035 = vpop.xlane.xlu0 %4034
    %4036 = vst.msk [vmem:[#allocation4] sm:$0x3] %vm1363, %v4035
    %4038 = vrot.lane.b32.xlu0 %v4012, 112
    %v4039 = vpop.permute.xlu0 %4038
    %v4041 = vmul.f32 %v3806, %v4039
    %v4042 = vmul.f32 %v4041, %v865
    %v4043 = vsel %vm855, %v4042, 0.0
    %4044 = vadd.xlane.f32.xlu0 %v4043
    %v4045 = vpop.xlane.xlu0 %4044
    %4046 = vst.msk [vmem:[#allocation5] sm:$0x3] %vm1352, %v4045
    %v4047 = vld [vmem:[%s875] sm:$0x3]
    %v4048 = vld [vmem:[%s873] sm:$0x3]
    %v4049 = vld [vmem:[#allocation2 + $0x1c] sm:$0x3]
    %v4050 = vld [vmem:[#allocation3 + $0x2] sm:$0x3]
    %v4052 = vsel %vm235, %v4019, 0
    %4054 = vmatprep.subr.mxu0 0.0
    %4055 = vmatpush1.msra.mxu0 %v616
    %4056 = vmatprep.subr.mxu0 0.0
    %4057 = vmatpush1.msra.mxu0 %v617
    %4058 = vmatprep.subr.mxu0 0.0
    %4059 = vmatpush1.msra.mxu0 0.0
    %4060 = vmatprep.subr.mxu0 0.0
    %4061 = vmatpush1.msra.mxu0 0.0
    %4062 = vmatprep.subr.mxu0 0.0
    %4063 = vmatpush1.msra.mxu0 0.0
    %4064 = vmatprep.subr.mxu0 0.0
    %4065 = vmatpush1.msra.mxu0 0.0
    %4066 = vmatprep.subr.mxu0 0.0
    %4067 = vmatpush1.msra.mxu0 0.0
    %4068 = vmatprep.subr.mxu0 0.0
    %4069 = vmatpush1.msra.mxu0 0.0
    %4070 = vmatprep.subr.mxu0 0.0
    %4071 = vmatpush1.msra.mxu0 0.0
    %4072 = vmatprep.subr.mxu0 0.0
    %4073 = vmatpush1.msra.mxu0 0.0
    %4074 = vmatprep.subr.mxu0 0.0
    %4075 = vmatpush1.msra.mxu0 0.0
    %4076 = vmatprep.subr.mxu0 0.0
    %4077 = vmatpush1.msra.mxu0 0.0
    %4078 = vmatprep.subr.mxu0 0.0
    %4079 = vmatpush1.msra.mxu0 0.0
    %4080 = vmatprep.subr.mxu0 0.0
    %4081 = vmatpush1.msra.mxu0 0.0
    %4082 = vmatprep.subr.mxu0 0.0
    %4083 = vmatpush1.msra.mxu0 0.0
    %4084 = vmatprep.subr.mxu0 0.0
    %4085 = vmatpush1.msra.mxu0 0.0
    %4086 = vmatprep.subr.mxu0 0.0
    %4087 = vmatpush1.msra.mxu0 0.0
    %4088 = vmatprep.subr.mxu0 0.0
    %4089 = vmatpush1.msra.mxu0 0.0
    %4090 = vmatprep.subr.mxu0 0.0
    %4091 = vmatpush1.msra.mxu0 0.0
    %4092 = vmatprep.subr.mxu0 0.0
    %4093 = vmatpush1.msra.mxu0 0.0
    %4094 = vmatprep.subr.mxu0 0.0
    %4095 = vmatpush1.msra.mxu0 0.0
    %4096 = vmatprep.subr.mxu0 0.0
    %4097 = vmatpush1.msra.mxu0 0.0
    %4098 = vmatprep.subr.mxu0 0.0
    %4099 = vmatpush1.msra.mxu0 0.0
    %4100 = vmatprep.subr.mxu0 0.0
    %4101 = vmatpush1.msra.mxu0 0.0
    %4102 = vmatprep.subr.mxu0 0.0
    %4103 = vmatpush1.msra.mxu0 0.0
    %4104 = vmatprep.subr.mxu0 0.0
    %4105 = vmatpush1.msra.mxu0 0.0
    %4106 = vmatprep.subr.mxu0 0.0
    %4107 = vmatpush1.msra.mxu0 0.0
    %4108 = vmatprep.subr.mxu0 0.0
    %4109 = vmatpush1.msra.mxu0 0.0
    %4110 = vmatprep.subr.mxu0 0.0
    %4111 = vmatpush1.msra.mxu0 0.0
    %4112 = vmatprep.subr.mxu0 0.0
    %4113 = vmatpush1.msra.mxu0 0.0
    %4114 = vmatprep.subr.mxu0 0.0
    %4115 = vmatpush1.msra.mxu0 0.0
    %4116 = vmatprep.subr.mxu0 0.0
    %4117 = vmatpush1.msra.mxu0 0.0
    %4118 = vmatprep.mubr.f32.mxu0 0.0
    %4119 = vmatmul.mubr.f32.gmra.mrb[0].mxu0 %v4052
    %v4120 = vpop.f32.mrb[0].mxu0
    %v4121 = vadd.f32 %v633, %v4120
    %v4122 = vpop.f32.mrb[0].mxu0
    %4123 = vdwg.mxu0
    %v4125 = vsel %vm235, %v4026, 0
    %4127 = vmatprep.subr.mxu0 0.0
    %4128 = vmatpush1.msra.mxu0 %v619
    %4129 = vmatprep.subr.mxu0 0.0
    %4130 = vmatpush1.msra.mxu0 %v620
    %4131 = vmatprep.subr.mxu0 0.0
    %4132 = vmatpush1.msra.mxu0 0.0
    %4133 = vmatprep.subr.mxu0 0.0
    %4134 = vmatpush1.msra.mxu0 0.0
    %4135 = vmatprep.subr.mxu0 0.0
    %4136 = vmatpush1.msra.mxu0 0.0
    %4137 = vmatprep.subr.mxu0 0.0
    %4138 = vmatpush1.msra.mxu0 0.0
    %4139 = vmatprep.subr.mxu0 0.0
    %4140 = vmatpush1.msra.mxu0 0.0
    %4141 = vmatprep.subr.mxu0 0.0
    %4142 = vmatpush1.msra.mxu0 0.0
    %4143 = vmatprep.subr.mxu0 0.0
    %4144 = vmatpush1.msra.mxu0 0.0
    %4145 = vmatprep.subr.mxu0 0.0
    %4146 = vmatpush1.msra.mxu0 0.0
    %4147 = vmatprep.subr.mxu0 0.0
    %4148 = vmatpush1.msra.mxu0 0.0
    %4149 = vmatprep.subr.mxu0 0.0
    %4150 = vmatpush1.msra.mxu0 0.0
    %4151 = vmatprep.subr.mxu0 0.0
    %4152 = vmatpush1.msra.mxu0 0.0
    %4153 = vmatprep.subr.mxu0 0.0
    %4154 = vmatpush1.msra.mxu0 0.0
    %4155 = vmatprep.subr.mxu0 0.0
    %4156 = vmatpush1.msra.mxu0 0.0
    %4157 = vmatprep.subr.mxu0 0.0
    %4158 = vmatpush1.msra.mxu0 0.0
    %4159 = vmatprep.subr.mxu0 0.0
    %4160 = vmatpush1.msra.mxu0 0.0
    %4161 = vmatprep.subr.mxu0 0.0
    %4162 = vmatpush1.msra.mxu0 0.0
    %4163 = vmatprep.subr.mxu0 0.0
    %4164 = vmatpush1.msra.mxu0 0.0
    %4165 = vmatprep.subr.mxu0 0.0
    %4166 = vmatpush1.msra.mxu0 0.0
    %4167 = vmatprep.subr.mxu0 0.0
    %4168 = vmatpush1.msra.mxu0 0.0
    %4169 = vmatprep.subr.mxu0 0.0
    %4170 = vmatpush1.msra.mxu0 0.0
    %4171 = vmatprep.subr.mxu0 0.0
    %4172 = vmatpush1.msra.mxu0 0.0
    %4173 = vmatprep.subr.mxu0 0.0
    %4174 = vmatpush1.msra.mxu0 0.0
    %4175 = vmatprep.subr.mxu0 0.0
    %4176 = vmatpush1.msra.mxu0 0.0
    %4177 = vmatprep.subr.mxu0 0.0
    %4178 = vmatpush1.msra.mxu0 0.0
    %4179 = vmatprep.subr.mxu0 0.0
    %4180 = vmatpush1.msra.mxu0 0.0
    %4181 = vmatprep.subr.mxu0 0.0
    %4182 = vmatpush1.msra.mxu0 0.0
    %4183 = vmatprep.subr.mxu0 0.0
    %4184 = vmatpush1.msra.mxu0 0.0
    %4185 = vmatprep.subr.mxu0 0.0
    %4186 = vmatpush1.msra.mxu0 0.0
    %4187 = vmatprep.subr.mxu0 0.0
    %4188 = vmatpush1.msra.mxu0 0.0
    %4189 = vmatprep.subr.mxu0 0.0
    %4190 = vmatpush1.msra.mxu0 0.0
    %4191 = vmatprep.mubr.f32.mxu0 0.0
    %4192 = vmatmul.mubr.f32.gmra.mrb[0].mxu0 %v4125
    %v4193 = vpop.f32.mrb[0].mxu0
    %v4194 = vadd.f32 %v712, %v4193
    %v4195 = vpop.f32.mrb[0].mxu0
    %4196 = vdwg.mxu0
    %v4197 = vadd.f32 %v4049, %v4121
    %v4198 = vxor.u32 %v4197, 2147483648
    %v4199 = vmul.f32 %v4198, 1.442695
    %v4200 = vpow.pop %v4199
    %v4201 = vadd.f32 %v4200, 1.0
    %v4202 = vrcp.pop %v4201
    %v4203 = vmul.f32 1.0, %v4202
    %4205 = vrot.lane.b32.xlu0 %v4121, 96
    %v4206 = vpop.permute.xlu0 %4205
    %v4208 = vmul.f32 %v4203, %v4206
    %4210 = vrot.lane.b32.xlu0 %v4208, 32
    %v4211 = vpop.permute.xlu0 %4210
    %v4213 = vadd.f32 %v4049, %v4211
    %v4214 = vtanh.pop %v4213
    %v4215 = vsub.f32 1.0, %v4203
    %4217 = vrot.lane.b32.xlu0 %v4214, 112
    %v4218 = vpop.permute.xlu0 %4217
    %v4220 = vmul.f32 %v4215, %v4218
    %4221 = vrot.lane.b32.xlu0 %v4019, 16
    %v4222 = vpop.permute.xlu0 %4221
    %v4224 = vmul.f32 %v4203, %v4222
    %v4225 = vadd.f32 %v4220, %v4224
    %v4226 = vadd.f32 %v4050, %v4194
    %v4227 = vxor.u32 %v4226, 2147483648
    %v4228 = vmul.f32 %v4227, 1.442695
    %v4229 = vpow.pop %v4228
    %v4230 = vadd.f32 %v4229, 1.0
    %v4231 = vrcp.pop %v4230
    %v4232 = vmul.f32 1.0, %v4231
    %4234 = vrot.lane.b32.xlu0 %v4194, 96
    %v4235 = vpop.permute.xlu0 %4234
    %v4237 = vmul.f32 %v4232, %v4235
    %4239 = vrot.lane.b32.xlu0 %v4237, 32
    %v4240 = vpop.permute.xlu0 %4239
    %v4242 = vadd.f32 %v4050, %v4240
    %v4243 = vtanh.pop %v4242
    %v4244 = vsub.f32 1.0, %v4232
    %4246 = vrot.lane.b32.xlu0 %v4243, 112
    %v4247 = vpop.permute.xlu0 %4246
    %v4249 = vmul.f32 %v4244, %v4247
    %4250 = vrot.lane.b32.xlu0 %v4026, 16
    %v4251 = vpop.permute.xlu0 %4250
    %v4253 = vmul.f32 %v4232, %v4251
    %v4254 = vadd.f32 %v4249, %v4253
    %v4255 = vsub.f32 %v4225, %v4222
    %4257 = vrot.lane.b32.xlu0 %v4255, 112
    %v4258 = vpop.permute.xlu0 %4257
    %v4260 = vmul.f32 %v4047, %v4258
    %v4261 = vadd.f32 %v4019, %v4260
    %v4262 = vsub.f32 %v4254, %v4251
    %4264 = vrot.lane.b32.xlu0 %v4262, 112
    %v4265 = vpop.permute.xlu0 %4264
    %v4267 = vmul.f32 %v4048, %v4265
    %v4268 = vadd.f32 %v4026, %v4267
    %4270 = vrot.lane.b32.xlu0 %v4225, 112
    %v4271 = vpop.permute.xlu0 %4270
    %v4273 = vmul.f32 %v4047, %v4271
    %v4274 = vmul.f32 %v4273, %v852
    %v4275 = vsel %vm855, %v4274, 0.0
    %4276 = vadd.xlane.f32.xlu0 %v4275
    %v4277 = vpop.xlane.xlu0 %4276
    %4278 = vst.msk [vmem:[#allocation4] sm:$0x3] %vm1117, %v4277
    %4280 = vrot.lane.b32.xlu0 %v4254, 112
    %v4281 = vpop.permute.xlu0 %4280
    %v4283 = vmul.f32 %v4048, %v4281
    %v4284 = vmul.f32 %v4283, %v865
    %v4285 = vsel %vm855, %v4284, 0.0
    %4286 = vadd.xlane.f32.xlu0 %v4285
    %v4287 = vpop.xlane.xlu0 %4286
    %4288 = vst.msk [vmem:[#allocation5] sm:$0x3] %vm1106, %v4287
    %v4289 = vld [vmem:[%s625] sm:$0x3]
    %v4290 = vld [vmem:[%s18] sm:$0x3]
    %v4291 = vld [vmem:[#allocation2 + $0x1e] sm:$0x3]
    %v4292 = vld [vmem:[#allocation3] sm:$0x3]
    %v4294 = vsel %vm235, %v4261, 0
    %4296 = vmatprep.subr.mxu0 0.0
    %4297 = vmatpush1.msra.mxu0 %v616
    %4298 = vmatprep.subr.mxu0 0.0
    %4299 = vmatpush1.msra.mxu0 %v617
    %4300 = vmatprep.subr.mxu0 0.0
    %4301 = vmatpush1.msra.mxu0 0.0
    %4302 = vmatprep.subr.mxu0 0.0
    %4303 = vmatpush1.msra.mxu0 0.0
    %4304 = vmatprep.subr.mxu0 0.0
    %4305 = vmatpush1.msra.mxu0 0.0
    %4306 = vmatprep.subr.mxu0 0.0
    %4307 = vmatpush1.msra.mxu0 0.0
    %4308 = vmatprep.subr.mxu0 0.0
    %4309 = vmatpush1.msra.mxu0 0.0
    %4310 = vmatprep.subr.mxu0 0.0
    %4311 = vmatpush1.msra.mxu0 0.0
    %4312 = vmatprep.subr.mxu0 0.0
    %4313 = vmatpush1.msra.mxu0 0.0
    %4314 = vmatprep.subr.mxu0 0.0
    %4315 = vmatpush1.msra.mxu0 0.0
    %4316 = vmatprep.subr.mxu0 0.0
    %4317 = vmatpush1.msra.mxu0 0.0
    %4318 = vmatprep.subr.mxu0 0.0
    %4319 = vmatpush1.msra.mxu0 0.0
    %4320 = vmatprep.subr.mxu0 0.0
    %4321 = vmatpush1.msra.mxu0 0.0
    %4322 = vmatprep.subr.mxu0 0.0
    %4323 = vmatpush1.msra.mxu0 0.0
    %4324 = vmatprep.subr.mxu0 0.0
    %4325 = vmatpush1.msra.mxu0 0.0
    %4326 = vmatprep.subr.mxu0 0.0
    %4327 = vmatpush1.msra.mxu0 0.0
    %4328 = vmatprep.subr.mxu0 0.0
    %4329 = vmatpush1.msra.mxu0 0.0
    %4330 = vmatprep.subr.mxu0 0.0
    %4331 = vmatpush1.msra.mxu0 0.0
    %4332 = vmatprep.subr.mxu0 0.0
    %4333 = vmatpush1.msra.mxu0 0.0
    %4334 = vmatprep.subr.mxu0 0.0
    %4335 = vmatpush1.msra.mxu0 0.0
    %4336 = vmatprep.subr.mxu0 0.0
    %4337 = vmatpush1.msra.mxu0 0.0
    %4338 = vmatprep.subr.mxu0 0.0
    %4339 = vmatpush1.msra.mxu0 0.0
    %4340 = vmatprep.subr.mxu0 0.0
    %4341 = vmatpush1.msra.mxu0 0.0
    %4342 = vmatprep.subr.mxu0 0.0
    %4343 = vmatpush1.msra.mxu0 0.0
    %4344 = vmatprep.subr.mxu0 0.0
    %4345 = vmatpush1.msra.mxu0 0.0
    %4346 = vmatprep.subr.mxu0 0.0
    %4347 = vmatpush1.msra.mxu0 0.0
    %4348 = vmatprep.subr.mxu0 0.0
    %4349 = vmatpush1.msra.mxu0 0.0
    %4350 = vmatprep.subr.mxu0 0.0
    %4351 = vmatpush1.msra.mxu0 0.0
    %4352 = vmatprep.subr.mxu0 0.0
    %4353 = vmatpush1.msra.mxu0 0.0
    %4354 = vmatprep.subr.mxu0 0.0
    %4355 = vmatpush1.msra.mxu0 0.0
    %4356 = vmatprep.subr.mxu0 0.0
    %4357 = vmatpush1.msra.mxu0 0.0
    %4358 = vmatprep.subr.mxu0 0.0
    %4359 = vmatpush1.msra.mxu0 0.0
    %4360 = vmatprep.mubr.f32.mxu0 0.0
    %4361 = vmatmul.mubr.f32.gmra.mrb[0].mxu0 %v4294
    %v4362 = vpop.f32.mrb[0].mxu0
    %v4363 = vadd.f32 %v633, %v4362
    %v4364 = vpop.f32.mrb[0].mxu0
    %4365 = vdwg.mxu0
    %v4367 = vsel %vm235, %v4268, 0
    %4369 = vmatprep.subr.mxu0 0.0
    %4370 = vmatpush1.msra.mxu0 %v619
    %4371 = vmatprep.subr.mxu0 0.0
    %4372 = vmatpush1.msra.mxu0 %v620
    %4373 = vmatprep.subr.mxu0 0.0
    %4374 = vmatpush1.msra.mxu0 0.0
    %4375 = vmatprep.subr.mxu0 0.0
    %4376 = vmatpush1.msra.mxu0 0.0
    %4377 = vmatprep.subr.mxu0 0.0
    %4378 = vmatpush1.msra.mxu0 0.0
    %4379 = vmatprep.subr.mxu0 0.0
    %4380 = vmatpush1.msra.mxu0 0.0
    %4381 = vmatprep.subr.mxu0 0.0
    %4382 = vmatpush1.msra.mxu0 0.0
    %4383 = vmatprep.subr.mxu0 0.0
    %4384 = vmatpush1.msra.mxu0 0.0
    %4385 = vmatprep.subr.mxu0 0.0
    %4386 = vmatpush1.msra.mxu0 0.0
    %4387 = vmatprep.subr.mxu0 0.0
    %4388 = vmatpush1.msra.mxu0 0.0
    %4389 = vmatprep.subr.mxu0 0.0
    %4390 = vmatpush1.msra.mxu0 0.0
    %4391 = vmatprep.subr.mxu0 0.0
    %4392 = vmatpush1.msra.mxu0 0.0
    %4393 = vmatprep.subr.mxu0 0.0
    %4394 = vmatpush1.msra.mxu0 0.0
    %4395 = vmatprep.subr.mxu0 0.0
    %4396 = vmatpush1.msra.mxu0 0.0
    %4397 = vmatprep.subr.mxu0 0.0
    %4398 = vmatpush1.msra.mxu0 0.0
    %4399 = vmatprep.subr.mxu0 0.0
    %4400 = vmatpush1.msra.mxu0 0.0
    %4401 = vmatprep.subr.mxu0 0.0
    %4402 = vmatpush1.msra.mxu0 0.0
    %4403 = vmatprep.subr.mxu0 0.0
    %4404 = vmatpush1.msra.mxu0 0.0
    %4405 = vmatprep.subr.mxu0 0.0
    %4406 = vmatpush1.msra.mxu0 0.0
    %4407 = vmatprep.subr.mxu0 0.0
    %4408 = vmatpush1.msra.mxu0 0.0
    %4409 = vmatprep.subr.mxu0 0.0
    %4410 = vmatpush1.msra.mxu0 0.0
    %4411 = vmatprep.subr.mxu0 0.0
    %4412 = vmatpush1.msra.mxu0 0.0
    %4413 = vmatprep.subr.mxu0 0.0
    %4414 = vmatpush1.msra.mxu0 0.0
    %4415 = vmatprep.subr.mxu0 0.0
    %4416 = vmatpush1.msra.mxu0 0.0
    %4417 = vmatprep.subr.mxu0 0.0
    %4418 = vmatpush1.msra.mxu0 0.0
    %4419 = vmatprep.subr.mxu0 0.0
    %4420 = vmatpush1.msra.mxu0 0.0
    %4421 = vmatprep.subr.mxu0 0.0
    %4422 = vmatpush1.msra.mxu0 0.0
    %4423 = vmatprep.subr.mxu0 0.0
    %4424 = vmatpush1.msra.mxu0 0.0
    %4425 = vmatprep.subr.mxu0 0.0
    %4426 = vmatpush1.msra.mxu0 0.0
    %4427 = vmatprep.subr.mxu0 0.0
    %4428 = vmatpush1.msra.mxu0 0.0
    %4429 = vmatprep.subr.mxu0 0.0
    %4430 = vmatpush1.msra.mxu0 0.0
    %4431 = vmatprep.subr.mxu0 0.0
    %4432 = vmatpush1.msra.mxu0 0.0
    %4433 = vmatprep.mubr.f32.mxu0 0.0
    %4434 = vmatmul.mubr.f32.gmra.mrb[0].mxu0 %v4367
    %v4435 = vpop.f32.mrb[0].mxu0
    %v4436 = vadd.f32 %v712, %v4435
    %v4437 = vpop.f32.mrb[0].mxu0
    %4438 = vdwg.mxu0
    %v4439 = vadd.f32 %v4291, %v4363
    %v4440 = vxor.u32 %v4439, 2147483648
    %v4441 = vmul.f32 %v4440, 1.442695
    %v4442 = vpow.pop %v4441
    %v4443 = vadd.f32 %v4442, 1.0
    %v4444 = vrcp.pop %v4443
    %v4445 = vmul.f32 1.0, %v4444
    %4447 = vrot.lane.b32.xlu0 %v4363, 96
    %v4448 = vpop.permute.xlu0 %4447
    %v4450 = vmul.f32 %v4445, %v4448
    %4452 = vrot.lane.b32.xlu0 %v4450, 32
    %v4453 = vpop.permute.xlu0 %4452
    %v4455 = vadd.f32 %v4291, %v4453
    %v4456 = vtanh.pop %v4455
    %v4457 = vsub.f32 1.0, %v4445
    %4459 = vrot.lane.b32.xlu0 %v4456, 112
    %v4460 = vpop.permute.xlu0 %4459
    %v4462 = vmul.f32 %v4457, %v4460
    %4463 = vrot.lane.b32.xlu0 %v4261, 16
    %v4464 = vpop.permute.xlu0 %4463
    %v4466 = vmul.f32 %v4445, %v4464
    %v4467 = vadd.f32 %v4462, %v4466
    %v4468 = vadd.f32 %v4292, %v4436
    %v4469 = vxor.u32 %v4468, 2147483648
    %v4470 = vmul.f32 %v4469, 1.442695
    %v4471 = vpow.pop %v4470
    %v4472 = vadd.f32 %v4471, 1.0
    %v4473 = vrcp.pop %v4472
    %v4474 = vmul.f32 1.0, %v4473
    %4476 = vrot.lane.b32.xlu0 %v4436, 96
    %v4477 = vpop.permute.xlu0 %4476
    %v4479 = vmul.f32 %v4474, %v4477
    %4481 = vrot.lane.b32.xlu0 %v4479, 32
    %v4482 = vpop.permute.xlu0 %4481
    %v4484 = vadd.f32 %v4292, %v4482
    %v4485 = vtanh.pop %v4484
    %v4486 = vsub.f32 1.0, %v4474
    %4488 = vrot.lane.b32.xlu0 %v4485, 112
    %v4489 = vpop.permute.xlu0 %4488
    %v4491 = vmul.f32 %v4486, %v4489
    %4492 = vrot.lane.b32.xlu0 %v4268, 16
    %v4493 = vpop.permute.xlu0 %4492
    %v4495 = vmul.f32 %v4474, %v4493
    %v4496 = vadd.f32 %v4491, %v4495
    %4498 = vrot.lane.b32.xlu0 %v4467, 112
    %v4499 = vpop.permute.xlu0 %4498
    %v4501 = vmul.f32 %v4289, %v4499
    %v4502 = vmul.f32 %v4501, %v852
    %v4503 = vsel %vm855, %v4502, 0.0
    %4504 = vadd.xlane.f32.xlu0 %v4503
    %v4505 = vpop.xlane.xlu0 %4504
    %4506 = vst.msk [vmem:[#allocation4] sm:$0x3] %vm871, %v4505
    %4508 = vrot.lane.b32.xlu0 %v4496, 112
    %v4509 = vpop.permute.xlu0 %4508
    %v4511 = vmul.f32 %v4290, %v4509
    %v4512 = vmul.f32 %v4511, %v865
    %v4513 = vsel %vm855, %v4512, 0.0
    %4514 = vadd.xlane.f32.xlu0 %v4513
    %v4515 = vpop.xlane.xlu0 %4514
    %4516 = vst.msk [vmem:[#allocation5] sm:$0x3] %vm859, %v4515
    %v4517 = vld [vmem:[#allocation4] sm:$0x3]
    %v4518 = vld [vmem:[#allocation5] sm:$0x3]
    %v4519 = vadd.f32 %v4517, %v4518
    %v4520 = vld [vmem:[#allocation6] sm:$0x1]
    %v4522 = vlaneseq
    %v4523 = vshrl.u32 %v4522, 7
    %v4524 = vsub.s32 0, %v4523
    %v4525 = vrot.slane %v4520, %v4524
    %4526 = vset.pattern.permute.xlu0 0
    %4527 = vperm.xlu0 %4526, %v4525
    %v4528 = vpop.permute.xlu0 %4527
    %v4530 = vadd.f32 %v4519, %v4528
    %v4531 = vxor.u32 %v4530, 2147483648
    %v4532 = vmul.f32 %v4531, 1.442695
    %v4533 = vpow.pop %v4532
    %v4534 = vadd.f32 %v4533, 1.0
    %v4535 = vrcp.pop %v4534
    %v4536 = vmul.f32 1.0, %v4535
    %4537 = vst.msk [vmem:[#allocation16] sm:$0x3] %vm855, %v4536
    // Predicated region
    $region98: #{tpu_custom_call.1} parent=1 // pred_check
      _
    $region99: #{tpu_custom_call.1} parent=1 // pred_check_branch
      %4539 = sbr.rel (0) target = $region101
    $region100: #{tpu_custom_call.1} parent=1 // pred_region
      %s4541 = ssub.s32 32, 32
      %4542 = vsyncadd [#allocation9], %s4541
      %s4544 = sshll.u32 [#allocation16], 4
      %s4545 = int_to_ptr.vmem [resolvable:$true] %s4544
      %4547 = dma.vmem_to_hbm [thread:$0]  %s4545, 32, %s19, [#allocation9]
    $region101: #{tpu_custom_call.1} parent=1 // pred_fallthru
      _
    // Predicated region
    $region102: #{tpu_custom_call.1} parent=1 // pred_check
      _
    $region103: #{tpu_custom_call.1} parent=1 // pred_check_branch
      %4549 = sbr.rel (0) target = $region105
    $region104: #{tpu_custom_call.1} parent=1 // pred_region
      %4550 = dma.done [#allocation9], 32
    $region105: #{tpu_custom_call.1} parent=1 // pred_fallthru
      _
    %4551 = vsyncpa [#allocation8], 1
    %4552 = vsyncpa [#allocation11], 1
    %4553 = vsyncpa [#allocation14], 1
    %4554 = vsyncpa [#allocation9], 1

</llo_original>
